<compile_context>
chip_gen: v7x
topology: tpu7x:2x2x1
jax: 0.10.0
libtpu: 0.0.40
codegen_flags: <defaults>
</compile_context>

<pallas_src>
import jax
import jax.numpy as jnp
from jax.experimental import pallas as pl
from jax.experimental.pallas import tpu as pltpu

# ---------------- small config consistent with the module structure ----------
B           = 2
IMG         = 16
PATCH       = 4
IN_CH       = 3
EMBED       = 128
HEADS       = 4
HEAD_DIM    = EMBED // HEADS
MLP_HID     = int(EMBED * 4.0)
DEPTH       = 6                      # backbone depth
SELECTED    = [2, 4]                 # selected_layers (feed the two aux heads)
AUX_DEPTH   = 2
NUM_CLASSES = 64
NUM_PATCHES = (IMG // PATCH) ** 2    # 16
N_TOK       = NUM_PATCHES + 1        # 17 (cls + patches)
N_PAD       = 24                     # token axis padded to a sublane multiple
M_PAD       = B * N_PAD              # 48 rows: batch folded into matmul M
PATCH_DIM   = IN_CH * PATCH * PATCH  # 48
L_TOTAL     = DEPTH + 2 * AUX_DEPTH  # 10 stacked blocks: backbone | aux1 | aux2
LPS         = 2                      # transformer layers processed per grid step
N_STEPS     = L_TOTAL // LPS         # 5 grid steps
BB_STEPS    = DEPTH // LPS           # 3 backbone steps
EPS         = 1e-6
BF16        = jnp.bfloat16
NEG_INF     = -1e30


# ---------------- in-kernel helpers ------------------------------------------
def _layernorm(x, w, b):
    mu  = jnp.mean(x, axis=-1, keepdims=True)
    xc  = x - mu
    var = jnp.mean(xc * xc, axis=-1, keepdims=True)
    return xc * jax.lax.rsqrt(var + EPS) * w + b


# ---------------- the single fused kernel -------------------------------------
def vit_fused_kernel(
        # stem inputs (constant block index -> loaded once)
        patches_ref, patchw_ref, patchb_ref, cls_ref, pos_ref,
        # per-layer weights, stacked on a leading depth axis (LPS layers per step)
        ln1w_ref, ln1b_ref, qkvw_ref, qkvb_ref, projw_ref, projb_ref,
        ln2w_ref, ln2b_ref, fc1w_ref, fc1b_ref, fc2w_ref, fc2b_ref,
        # epilogue params: [backbone, aux1, aux2]
        normw_ref, normb_ref, headw_ref, headb_ref,
        # outputs
        logits_ref, feats_ref,
        # scratch: resident activations for the 3 branches
        act_ref):
    d = pl.program_id(0)

    # ---- stem (first grid step only): patch matmul + cls token + pos embed ----
    @pl.when(d == 0)
    def _():
        tok = jnp.dot(patches_ref[...].astype(BF16), patchw_ref[...],
                      preferred_element_type=jnp.float32) + patchb_ref[...]
        tok = tok.reshape(B, NUM_PATCHES, EMBED)
        pad_rows = jnp.zeros((N_PAD - N_TOK, EMBED), jnp.float32)
        per_batch = []
        for b in range(B):
            xb = jnp.concatenate([cls_ref[...], tok[b], pad_rows], axis=0)
            per_batch.append(xb + pos_ref[...])        # pos_ref padded rows are 0
        act_ref[0] = jnp.concatenate(per_batch, axis=0)     # (M_PAD, EMBED)

    # branch this step operates on: 0=backbone (steps 0..2), 1=aux1 (3), 2=aux2 (4)
    branch = jnp.where(d < BB_STEPS, 0, d - (BB_STEPS - 1)).astype(jnp.int32)

    x = act_ref[branch]                                      # (M_PAD, EMBED) f32

    # mask padded key tokens (queries of padded rows are garbage but never read);
    # hoisted out of the per-layer loop.
    kid = jax.lax.broadcasted_iota(jnp.int32, (1, N_PAD), 1)
    key_bias = jnp.where(kid < N_TOK, 0.0, NEG_INF).astype(jnp.float32)
    scale = HEAD_DIM ** -0.5

    for j in range(LPS):                                     # 2 layers per step
        layer_idx = d * LPS + j                              # global stacked index

        # ---------------- attention branch ----------------
        h = _layernorm(x, ln1w_ref[j], ln1b_ref[j])
        qkv = jnp.dot(h.astype(BF16), qkvw_ref[j],
                      preferred_element_type=jnp.float32) + qkvb_ref[j]  # (M,3E)
        projw = projw_ref[j]                                 # (EMBED, EMBED) bf16

        attn = jnp.zeros((M_PAD, EMBED), jnp.float32)
        for hd in range(HEADS):                              # small static unroll
            lo = hd * HEAD_DIM
            hi = lo + HEAD_DIM
            qh = qkv[:, lo:hi].reshape(B, N_PAD, HEAD_DIM)
            kh = qkv[:, EMBED + lo:EMBED + hi].reshape(B, N_PAD, HEAD_DIM)
            vh = qkv[:, 2 * EMBED + lo:2 * EMBED + hi].reshape(B, N_PAD, HEAD_DIM)
            s = jnp.einsum('bqd,bkd->bqk', qh.astype(BF16), kh.astype(BF16),
                           preferred_element_type=jnp.float32) * scale
            s = s + key_bias
            m = jnp.max(s, axis=-1, keepdims=True)
            p = jnp.exp(s - m)
            l = jnp.sum(p, axis=-1, keepdims=True)
            p = p * pl.reciprocal(l, approx=True)
            oh = jnp.einsum('bqk,bkd->bqd', p.astype(BF16), vh.astype(BF16),
                            preferred_element_type=jnp.float32)
            oh = oh.reshape(M_PAD, HEAD_DIM)
            # fold head output through the matching row-slice of proj weight:
            # avoids the lane-axis concatenate of per-head outputs.
            attn = attn + jnp.dot(oh.astype(BF16), projw[lo:hi, :],
                                  preferred_element_type=jnp.float32)
        x = x + attn + projb_ref[j]                          # residual (drop_path=id)

        # ---------------- MLP branch ----------------
        h2 = _layernorm(x, ln2w_ref[j], ln2b_ref[j])
        hm = jnp.dot(h2.astype(BF16), fc1w_ref[j],
                     preferred_element_type=jnp.float32) + fc1b_ref[j]
        # TODO(synk): nn.GELU default is exact erf-GELU; tanh approximation used in-kernel.
        hm = jax.nn.gelu(hm, approximate=True)
        hm = jnp.dot(hm.astype(BF16), fc2w_ref[j],
                     preferred_element_type=jnp.float32) + fc2b_ref[j]
        x = x + hm

        # ---- feature taps after selected backbone blocks (mid-step capable) ----
        xt = x

        @pl.when(layer_idx == SELECTED[0])
        def _():
            act_ref[1] = xt

        @pl.when(layer_idx == SELECTED[1])
        def _():
            act_ref[2] = xt

    act_ref[branch] = x

    # ---- fused epilogue: final LayerNorms + cls-token extraction + heads ----
    @pl.when(d == N_STEPS - 1)
    def _():
        for i in range(3):                                   # backbone, aux1, aux2
            xb = act_ref[i]
            xn = _layernorm(xb, normw_ref[i], normb_ref[i])
            feat = xn.reshape(B, N_PAD, EMBED)[:, 0, :]      # cls-token rows (B, E)
            feats_ref[i] = feat
            logits_ref[i] = (jnp.dot(feat.astype(BF16), headw_ref[i],
                                     preferred_element_type=jnp.float32)
                             + headb_ref[i])


# ---------------- wrapper ------------------------------------------------------
def _const_spec(shape):
    zeros = (0,) * len(shape)
    return pl.BlockSpec(shape, lambda d, _z=zeros: _z)


def _layer_spec(shape):
    tail = (0,) * (len(shape) - 1)
    return pl.BlockSpec(shape, lambda d, _t=tail: (d,) + _t)


def vit_forward(x_img, p):
    # Patchify (Conv2d kernel=stride=PATCH as matmul): pure layout glue.
    hp = IMG // PATCH
    xp = x_img.reshape(B, IN_CH, hp, PATCH, hp, PATCH)
    xp = xp.transpose(0, 2, 4, 1, 3, 5).reshape(B * NUM_PATCHES, PATCH_DIM)

    in_specs = [
        _const_spec((B * NUM_PATCHES, PATCH_DIM)),
        _const_spec((PATCH_DIM, EMBED)),
        _const_spec((1, EMBED)),
        _const_spec((1, EMBED)),
        _const_spec((N_PAD, EMBED)),
        _layer_spec((LPS, 1, EMBED)), _layer_spec((LPS, 1, EMBED)),
        _layer_spec((LPS, EMBED, 3 * EMBED)), _layer_spec((LPS, 1, 3 * EMBED)),
        _layer_spec((LPS, EMBED, EMBED)), _layer_spec((LPS, 1, EMBED)),
        _layer_spec((LPS, 1, EMBED)), _layer_spec((LPS, 1, EMBED)),
        _layer_spec((LPS, EMBED, MLP_HID)), _layer_spec((LPS, 1, MLP_HID)),
        _layer_spec((LPS, MLP_HID, EMBED)), _layer_spec((LPS, 1, EMBED)),
        _const_spec((3, 1, EMBED)), _const_spec((3, 1, EMBED)),
        _const_spec((3, EMBED, NUM_CLASSES)), _const_spec((3, 1, NUM_CLASSES)),
    ]
    out_specs = (
        _const_spec((3, B, NUM_CLASSES)),
        _const_spec((3, B, EMBED)),
    )
    out_shape = (
        jax.ShapeDtypeStruct((3, B, NUM_CLASSES), jnp.float32),
        jax.ShapeDtypeStruct((3, B, EMBED), jnp.float32),
    )

    logits_all, feats_all = pl.pallas_call(
        vit_fused_kernel,
        out_shape=out_shape,
        grid=(N_STEPS,),
        in_specs=in_specs,
        out_specs=out_specs,
        scratch_shapes=[pltpu.VMEM((3, M_PAD, EMBED), jnp.float32)],
        compiler_params=pltpu.CompilerParams(
            dimension_semantics=("arbitrary",)),
    )(xp, p["patch_w"], p["patch_b"], p["cls_token"], p["pos_embed"],
      p["ln1w"], p["ln1b"], p["qkvw"], p["qkvb"], p["projw"], p["projb"],
      p["ln2w"], p["ln2b"], p["fc1w"], p["fc1b"], p["fc2w"], p["fc2b"],
      p["norm_w"], p["norm_b"], p["head_w"], p["head_b"])

    # PyTorch forward returns ([logit1, logit2, logit], [feature1, feature2, feat]);
    # kernel branch order is (backbone, aux1, aux2).
    logits = [logits_all[1], logits_all[2], logits_all[0]]
    feats = [feats_all[1], feats_all[2], feats_all[0]]
    return logits, feats


# ---------------- deterministic parameter init --------------------------------
def init_params(key):
    # Weights are pre-stacked on a leading depth axis: layers 0..5 = backbone
    # blocks, 6..7 = aux1 blocks, 8..9 = aux2 blocks.  MXU weights stored bf16
    # (halves HBM->VMEM streaming); LN params and biases stay f32.
    keys = iter(jax.random.split(key, 16))

    def nrm(shape, std=0.02):
        return jax.random.normal(next(keys), shape, jnp.float32) * std

    L = L_TOTAL
    pos = jnp.pad(nrm((N_TOK, EMBED)), ((0, N_PAD - N_TOK), (0, 0)))
    return dict(
        # Conv2d weight (D, C, p, p) is equivalent to this (C*p*p, D) matrix.
        patch_w=nrm((PATCH_DIM, EMBED)).astype(BF16),
        patch_b=jnp.zeros((1, EMBED), jnp.float32),
        cls_token=nrm((1, EMBED)),
        pos_embed=pos,                                     # padded rows are zero
        ln1w=jnp.ones((L, 1, EMBED), jnp.float32),
        ln1b=jnp.zeros((L, 1, EMBED), jnp.float32),
        qkvw=nrm((L, EMBED, 3 * EMBED)).astype(BF16),
        qkvb=jnp.zeros((L, 1, 3 * EMBED), jnp.float32),
        projw=nrm((L, EMBED, EMBED)).astype(BF16),
        projb=jnp.zeros((L, 1, EMBED), jnp.float32),
        ln2w=jnp.ones((L, 1, EMBED), jnp.float32),
        ln2b=jnp.zeros((L, 1, EMBED), jnp.float32),
        fc1w=nrm((L, EMBED, MLP_HID)).astype(BF16),
        fc1b=jnp.zeros((L, 1, MLP_HID), jnp.float32),
        fc2w=nrm((L, MLP_HID, EMBED)).astype(BF16),
        fc2b=jnp.zeros((L, 1, EMBED), jnp.float32),
        # epilogue params stacked as [backbone, aux1, aux2]
        norm_w=jnp.ones((3, 1, EMBED), jnp.float32),
        norm_b=jnp.zeros((3, 1, EMBED), jnp.float32),
        head_w=nrm((3, EMBED, NUM_CLASSES)).astype(BF16),
        head_b=jnp.zeros((3, 1, NUM_CLASSES), jnp.float32),
        log_scale=jnp.asarray(jnp.log(1.0 / 0.07), jnp.float32),  # unused in forward
    )


# ---------------- main ---------------------------------------------------------
if __name__ == "__main__":
    key = jax.random.PRNGKey(0)
    kp, kx = jax.random.split(key)
    params = init_params(kp)
    x = jax.random.normal(kx, (B, IN_CH, IMG, IMG), jnp.float32)

    fwd = jax.jit(vit_forward)
    logits, features = fwd(x, params)
    jax.block_until_ready((logits, features))

    assert all(l.shape == (B, NUM_CLASSES) for l in logits)
    assert all(f.shape == (B, EMBED) for f in features)
    assert all(bool(jnp.all(jnp.isfinite(l))) for l in logits)
    assert all(bool(jnp.all(jnp.isfinite(f))) for f in features)
    print("KERNEL_OK")
</pallas_src>

<mosaic_0001>
module attributes {stable_mosaic.version = 11 : i64} {
  func.func @vit_fused_kernel(%arg0: i32, %arg1: memref<32x48xf32, #tpu.memory_space<vmem>>, %arg2: memref<48x128xbf16, #tpu.memory_space<vmem>>, %arg3: memref<1x128xf32, #tpu.memory_space<vmem>>, %arg4: memref<1x128xf32, #tpu.memory_space<vmem>>, %arg5: memref<24x128xf32, #tpu.memory_space<vmem>>, %arg6: memref<2x1x128xf32, #tpu.memory_space<vmem>>, %arg7: memref<2x1x128xf32, #tpu.memory_space<vmem>>, %arg8: memref<2x128x384xbf16, #tpu.memory_space<vmem>>, %arg9: memref<2x1x384xf32, #tpu.memory_space<vmem>>, %arg10: memref<2x128x128xbf16, #tpu.memory_space<vmem>>, %arg11: memref<2x1x128xf32, #tpu.memory_space<vmem>>, %arg12: memref<2x1x128xf32, #tpu.memory_space<vmem>>, %arg13: memref<2x1x128xf32, #tpu.memory_space<vmem>>, %arg14: memref<2x128x512xbf16, #tpu.memory_space<vmem>>, %arg15: memref<2x1x512xf32, #tpu.memory_space<vmem>>, %arg16: memref<2x512x128xbf16, #tpu.memory_space<vmem>>, %arg17: memref<2x1x128xf32, #tpu.memory_space<vmem>>, %arg18: memref<3x1x128xf32, #tpu.memory_space<vmem>>, %arg19: memref<3x1x128xf32, #tpu.memory_space<vmem>>, %arg20: memref<3x128x64xbf16, #tpu.memory_space<vmem>>, %arg21: memref<3x1x64xf32, #tpu.memory_space<vmem>>, %arg22: memref<3x2x64xf32, #tpu.memory_space<vmem>>, %arg23: memref<3x2x128xf32, #tpu.memory_space<vmem>>, %arg24: memref<3x48x128xf32, #tpu.memory_space<vmem>>) attributes {dimension_semantics = [#tpu.dimension_semantics<arbitrary>], iteration_bounds = array<i64: 5>, scalar_prefetch = 0 : i64, scratch_operands = 1 : i64, tpu.core_type = #tpu.core_type<tc>, window_params = [{pipeline_mode = #tpu.pipeline_mode<synchronous>, transform_indices = @transform_0, window_bounds = array<i64: 32, 48>}, {pipeline_mode = #tpu.pipeline_mode<synchronous>, transform_indices = @transform_1, window_bounds = array<i64: 48, 128>}, {pipeline_mode = #tpu.pipeline_mode<synchronous>, transform_indices = @transform_2, window_bounds = array<i64: 1, 128>}, {pipeline_mode = #tpu.pipeline_mode<synchronous>, transform_indices = @transform_3, window_bounds = array<i64: 1, 128>}, {pipeline_mode = #tpu.pipeline_mode<synchronous>, transform_indices = @transform_4, window_bounds = array<i64: 24, 128>}, {transform_indices = @transform_5, window_bounds = array<i64: 2, 1, 128>}, {transform_indices = @transform_6, window_bounds = array<i64: 2, 1, 128>}, {transform_indices = @transform_7, window_bounds = array<i64: 2, 128, 384>}, {transform_indices = @transform_8, window_bounds = array<i64: 2, 1, 384>}, {transform_indices = @transform_9, window_bounds = array<i64: 2, 128, 128>}, {transform_indices = @transform_10, window_bounds = array<i64: 2, 1, 128>}, {transform_indices = @transform_11, window_bounds = array<i64: 2, 1, 128>}, {transform_indices = @transform_12, window_bounds = array<i64: 2, 1, 128>}, {transform_indices = @transform_13, window_bounds = array<i64: 2, 128, 512>}, {transform_indices = @transform_14, window_bounds = array<i64: 2, 1, 512>}, {transform_indices = @transform_15, window_bounds = array<i64: 2, 512, 128>}, {transform_indices = @transform_16, window_bounds = array<i64: 2, 1, 128>}, {pipeline_mode = #tpu.pipeline_mode<synchronous>, transform_indices = @transform_17, window_bounds = array<i64: 3, 1, 128>}, {pipeline_mode = #tpu.pipeline_mode<synchronous>, transform_indices = @transform_18, window_bounds = array<i64: 3, 1, 128>}, {pipeline_mode = #tpu.pipeline_mode<synchronous>, transform_indices = @transform_19, window_bounds = array<i64: 3, 128, 64>}, {pipeline_mode = #tpu.pipeline_mode<synchronous>, transform_indices = @transform_20, window_bounds = array<i64: 3, 1, 64>}, {pipeline_mode = #tpu.pipeline_mode<synchronous>, transform_indices = @transform_21, window_bounds = array<i64: 3, 2, 64>}, {pipeline_mode = #tpu.pipeline_mode<synchronous>, transform_indices = @transform_22, window_bounds = array<i64: 3, 2, 128>}]} {
    %c0_i32 = arith.constant 0 : i32
    %0 = arith.cmpi eq, %arg0, %c0_i32 : i32
    %1 = arith.extui %0 : i1 to i32
    %c0_i32_0 = arith.constant 0 : i32
    %2 = arith.cmpi ne, %1, %c0_i32_0 : i32
    scf.if %2 {
      %c0_173 = arith.constant 0 : index
      %c0_174 = arith.constant 0 : index
      %482 = vector.load %arg1[%c0_173, %c0_174] : memref<32x48xf32, #tpu.memory_space<vmem>>, vector<32x48xf32>
      %483 = arith.truncf %482 : vector<32x48xf32> to vector<32x48xbf16>
      %c0_175 = arith.constant 0 : index
      %c0_176 = arith.constant 0 : index
      %484 = vector.load %arg2[%c0_175, %c0_176] : memref<48x128xbf16, #tpu.memory_space<vmem>>, vector<48x128xbf16>
      %cst_177 = arith.constant dense<0.000000e+00> : vector<32x128xf32>
      %485 = tpu.matmul %483, %484, %cst_177 {dimension_numbers = #tpu.dot_dimension_numbers<[1], [0], [0], [1], [0, 0, 1, 1], [], []>} : vector<32x48xbf16>, vector<48x128xbf16>, vector<32x128xf32> -> vector<32x128xf32>
      %c0_178 = arith.constant 0 : index
      %c0_179 = arith.constant 0 : index
      %486 = vector.load %arg3[%c0_178, %c0_179] : memref<1x128xf32, #tpu.memory_space<vmem>>, vector<1x128xf32>
      %487 = vector.broadcast %486 : vector<1x128xf32> to vector<32x128xf32>
      %488 = arith.addf %485, %487 : vector<32x128xf32>
      %489 = vector.shape_cast %488 : vector<32x128xf32> to vector<2x16x128xf32>
      %cst_180 = arith.constant 0.000000e+00 : f32
      %490 = vector.broadcast %cst_180 : f32 to vector<7x128xf32>
      %c0_181 = arith.constant 0 : index
      %c0_182 = arith.constant 0 : index
      %491 = vector.load %arg4[%c0_181, %c0_182] : memref<1x128xf32, #tpu.memory_space<vmem>>, vector<1x128xf32>
      %492 = vector.extract_strided_slice %489 {offsets = [0, 0, 0], sizes = [1, 16, 128], strides = [1, 1, 1]} : vector<2x16x128xf32> to vector<1x16x128xf32>
      %493 = vector.shape_cast %492 : vector<1x16x128xf32> to vector<16x128xf32>
      %494 = tpu.concatenate %491, %493, %490 in 0 : vector<1x128xf32>, vector<16x128xf32>, vector<7x128xf32> -> vector<24x128xf32>
      %c0_183 = arith.constant 0 : index
      %c0_184 = arith.constant 0 : index
      %495 = vector.load %arg5[%c0_183, %c0_184] : memref<24x128xf32, #tpu.memory_space<vmem>>, vector<24x128xf32>
      %496 = arith.addf %494, %495 : vector<24x128xf32>
      %c0_185 = arith.constant 0 : index
      %c0_186 = arith.constant 0 : index
      %497 = vector.load %arg4[%c0_185, %c0_186] : memref<1x128xf32, #tpu.memory_space<vmem>>, vector<1x128xf32>
      %498 = vector.extract_strided_slice %489 {offsets = [1, 0, 0], sizes = [1, 16, 128], strides = [1, 1, 1]} : vector<2x16x128xf32> to vector<1x16x128xf32>
      %499 = vector.shape_cast %498 : vector<1x16x128xf32> to vector<16x128xf32>
      %500 = tpu.concatenate %497, %499, %490 in 0 : vector<1x128xf32>, vector<16x128xf32>, vector<7x128xf32> -> vector<24x128xf32>
      %c0_187 = arith.constant 0 : index
      %c0_188 = arith.constant 0 : index
      %501 = vector.load %arg5[%c0_187, %c0_188] : memref<24x128xf32, #tpu.memory_space<vmem>>, vector<24x128xf32>
      %502 = arith.addf %500, %501 : vector<24x128xf32>
      %503 = tpu.concatenate %496, %502 in 0 : vector<24x128xf32>, vector<24x128xf32> -> vector<48x128xf32>
      %c0_189 = arith.constant 0 : index
      %c0_190 = arith.constant 0 : index
      %c0_191 = arith.constant 0 : index
      %504 = vector.load %arg24[%c0_189, %c0_190, %c0_191] : memref<3x48x128xf32, #tpu.memory_space<vmem>>, vector<1x48x128xf32>
      %505 = vector.shape_cast %504 : vector<1x48x128xf32> to vector<48x128xf32>
      %506 = vector.shape_cast %503 : vector<48x128xf32> to vector<1x48x128xf32>
      tpu.vector_store %arg24[%c0_189, %c0_190, %c0_191], %506 {strides = array<i32>} : memref<3x48x128xf32, #tpu.memory_space<vmem>>, vector<1x48x128xf32>,
    } else {
    }
    %c3_i32 = arith.constant 3 : i32
    %3 = arith.cmpi slt, %arg0, %c3_i32 : i32
    %c2_i32 = arith.constant 2 : i32
    %4 = arith.subi %arg0, %c2_i32 : i32
    %c0_i32_1 = arith.constant 0 : i32
    %5 = arith.select %3, %c0_i32_1, %4 : i32
    %6 = arith.index_cast %5 : i32 to index
    %c0 = arith.constant 0 : index
    %c0_2 = arith.constant 0 : index
    %7 = vector.load %arg24[%6, %c0, %c0_2] : memref<3x48x128xf32, #tpu.memory_space<vmem>>, vector<1x48x128xf32>
    %8 = vector.shape_cast %7 : vector<1x48x128xf32> to vector<48x128xf32>
    %9 = tpu.iota {dimensions = array<i32: 1>} : vector<1x24xi32>
    %c17_i32 = arith.constant 17 : i32
    %10 = vector.broadcast %c17_i32 : i32 to vector<1x24xi32>
    %11 = arith.cmpi slt, %9, %10 : vector<1x24xi32>
    %cst = arith.constant 0.000000e+00 : f32
    %cst_3 = arith.constant -1.000000e+30 : f32
    %12 = vector.broadcast %cst : f32 to vector<1x24xf32>
    %13 = vector.broadcast %cst_3 : f32 to vector<1x24xf32>
    %14 = arith.select %11, %12, %13 : vector<1x24xi1>, vector<1x24xf32>
    %c2_i32_4 = arith.constant 2 : i32
    %15 = arith.muli %arg0, %c2_i32_4 : i32
    %c0_i32_5 = arith.constant 0 : i32
    %16 = arith.addi %15, %c0_i32_5 : i32
    %c0_6 = arith.constant 0 : index
    %c0_7 = arith.constant 0 : index
    %c0_8 = arith.constant 0 : index
    %17 = vector.load %arg6[%c0_6, %c0_7, %c0_8] : memref<2x1x128xf32, #tpu.memory_space<vmem>>, vector<1x1x128xf32>
    %18 = vector.shape_cast %17 : vector<1x1x128xf32> to vector<1x128xf32>
    %c0_9 = arith.constant 0 : index
    %c0_10 = arith.constant 0 : index
    %c0_11 = arith.constant 0 : index
    %19 = vector.load %arg7[%c0_9, %c0_10, %c0_11] : memref<2x1x128xf32, #tpu.memory_space<vmem>>, vector<1x1x128xf32>
    %20 = vector.shape_cast %19 : vector<1x1x128xf32> to vector<1x128xf32>
    %cst_12 = arith.constant dense<0.000000e+00> : vector<48xf32>
    %21 = vector.multi_reduction <add>, %8, %cst_12 [1] : vector<48x128xf32> to vector<48xf32>
    %22 = vector.shape_cast %21 : vector<48xf32> to vector<48x1xf32>
    %cst_13 = arith.constant 1.280000e+02 : f32
    %23 = vector.broadcast %cst_13 : f32 to vector<48x1xf32>
    %24 = arith.divf %22, %23 : vector<48x1xf32>
    %25 = vector.broadcast %24 : vector<48x1xf32> to vector<48x128xf32>
    %26 = arith.subf %8, %25 : vector<48x128xf32>
    %27 = arith.mulf %26, %26 : vector<48x128xf32>
    %cst_14 = arith.constant dense<0.000000e+00> : vector<48xf32>
    %28 = vector.multi_reduction <add>, %27, %cst_14 [1] : vector<48x128xf32> to vector<48xf32>
    %29 = vector.shape_cast %28 : vector<48xf32> to vector<48x1xf32>
    %cst_15 = arith.constant 1.280000e+02 : f32
    %30 = vector.broadcast %cst_15 : f32 to vector<48x1xf32>
    %31 = arith.divf %29, %30 : vector<48x1xf32>
    %cst_16 = arith.constant 9.99999997E-7 : f32
    %32 = vector.broadcast %cst_16 : f32 to vector<48x1xf32>
    %33 = arith.addf %31, %32 : vector<48x1xf32>
    %34 = math.rsqrt %33 : vector<48x1xf32>
    %35 = vector.broadcast %34 : vector<48x1xf32> to vector<48x128xf32>
    %36 = arith.mulf %26, %35 : vector<48x128xf32>
    %37 = vector.broadcast %18 : vector<1x128xf32> to vector<48x128xf32>
    %38 = arith.mulf %36, %37 : vector<48x128xf32>
    %39 = vector.broadcast %20 : vector<1x128xf32> to vector<48x128xf32>
    %40 = arith.addf %38, %39 : vector<48x128xf32>
    %41 = arith.truncf %40 : vector<48x128xf32> to vector<48x128xbf16>
    %c0_17 = arith.constant 0 : index
    %c0_18 = arith.constant 0 : index
    %c0_19 = arith.constant 0 : index
    %42 = vector.load %arg8[%c0_17, %c0_18, %c0_19] : memref<2x128x384xbf16, #tpu.memory_space<vmem>>, vector<1x128x384xbf16>
    %43 = vector.shape_cast %42 : vector<1x128x384xbf16> to vector<128x384xbf16>
    %cst_20 = arith.constant dense<0.000000e+00> : vector<48x384xf32>
    %44 = tpu.matmul %41, %43, %cst_20 {dimension_numbers = #tpu.dot_dimension_numbers<[1], [0], [0], [1], [0, 0, 1, 1], [], []>} : vector<48x128xbf16>, vector<128x384xbf16>, vector<48x384xf32> -> vector<48x384xf32>
    %c0_21 = arith.constant 0 : index
    %c0_22 = arith.constant 0 : index
    %c0_23 = arith.constant 0 : index
    %45 = vector.load %arg9[%c0_21, %c0_22, %c0_23] : memref<2x1x384xf32, #tpu.memory_space<vmem>>, vector<1x1x384xf32>
    %46 = vector.shape_cast %45 : vector<1x1x384xf32> to vector<1x384xf32>
    %47 = vector.broadcast %46 : vector<1x384xf32> to vector<48x384xf32>
    %48 = arith.addf %44, %47 : vector<48x384xf32>
    %c0_24 = arith.constant 0 : index
    %c0_25 = arith.constant 0 : index
    %c0_26 = arith.constant 0 : index
    %49 = vector.load %arg10[%c0_24, %c0_25, %c0_26] : memref<2x128x128xbf16, #tpu.memory_space<vmem>>, vector<1x128x128xbf16>
    %50 = vector.shape_cast %49 : vector<1x128x128xbf16> to vector<128x128xbf16>
    %cst_27 = arith.constant 0.000000e+00 : f32
    %51 = vector.broadcast %cst_27 : f32 to vector<48x128xf32>
    %52 = vector.extract_strided_slice %48 {offsets = [0, 0], sizes = [48, 32], strides = [1, 1]} : vector<48x384xf32> to vector<48x32xf32>
    %53 = vector.shape_cast %52 : vector<48x32xf32> to vector<2x24x32xf32>
    %54 = vector.extract_strided_slice %48 {offsets = [0, 128], sizes = [48, 32], strides = [1, 1]} : vector<48x384xf32> to vector<48x32xf32>
    %55 = vector.shape_cast %54 : vector<48x32xf32> to vector<2x24x32xf32>
    %56 = vector.extract_strided_slice %48 {offsets = [0, 256], sizes = [48, 32], strides = [1, 1]} : vector<48x384xf32> to vector<48x32xf32>
    %57 = vector.shape_cast %56 : vector<48x32xf32> to vector<2x24x32xf32>
    %58 = arith.truncf %53 : vector<2x24x32xf32> to vector<2x24x32xbf16>
    %59 = arith.truncf %55 : vector<2x24x32xf32> to vector<2x24x32xbf16>
    "tpu.trace_start"() <{level = 10 : i32, message = "bqd,bkd->bqk"}> : () -> ()
    %cst_28 = arith.constant dense<0.000000e+00> : vector<2x24x24xf32>
    %60 = tpu.matmul %58, %59, %cst_28 {dimension_numbers = #tpu.dot_dimension_numbers<[2], [2], [1], [1], [0, 0, 0, 1, 1, 1], [0], [0]>} : vector<2x24x32xbf16>, vector<2x24x32xbf16>, vector<2x24x24xf32> -> vector<2x24x24xf32>
    "tpu.trace_stop"() : () -> ()
    %cst_29 = arith.constant 0.176776692 : f32
    %61 = vector.broadcast %cst_29 : f32 to vector<2x24x24xf32>
    %62 = arith.mulf %60, %61 : vector<2x24x24xf32>
    %63 = vector.shape_cast %14 : vector<1x24xf32> to vector<1x1x24xf32>
    %64 = vector.broadcast %63 : vector<1x1x24xf32> to vector<2x24x24xf32>
    %65 = arith.addf %62, %64 : vector<2x24x24xf32>
    %cst_30 = arith.constant dense<0xFF800000> : vector<2x24xf32>
    %66 = vector.multi_reduction <maximumf>, %65, %cst_30 [2] : vector<2x24x24xf32> to vector<2x24xf32>
    %67 = vector.shape_cast %66 : vector<2x24xf32> to vector<2x24x1xf32>
    %68 = vector.broadcast %67 : vector<2x24x1xf32> to vector<2x24x24xf32>
    %69 = arith.subf %65, %68 : vector<2x24x24xf32>
    %70 = math.exp %69 : vector<2x24x24xf32>
    %cst_31 = arith.constant dense<0.000000e+00> : vector<2x24xf32>
    %71 = vector.multi_reduction <add>, %70, %cst_31 [2] : vector<2x24x24xf32> to vector<2x24xf32>
    %72 = vector.shape_cast %71 : vector<2x24xf32> to vector<2x24x1xf32>
    %73 = tpu.reciprocal %72 {approx = true} : vector<2x24x1xf32> -> vector<2x24x1xf32>
    %74 = vector.broadcast %73 : vector<2x24x1xf32> to vector<2x24x24xf32>
    %75 = arith.mulf %70, %74 : vector<2x24x24xf32>
    %76 = arith.truncf %75 : vector<2x24x24xf32> to vector<2x24x24xbf16>
    %77 = arith.truncf %57 : vector<2x24x32xf32> to vector<2x24x32xbf16>
    "tpu.trace_start"() <{level = 10 : i32, message = "bqk,bkd->bqd"}> : () -> ()
    %cst_32 = arith.constant dense<0.000000e+00> : vector<2x24x32xf32>
    %78 = tpu.matmul %76, %77, %cst_32 {dimension_numbers = #tpu.dot_dimension_numbers<[2], [1], [1], [2], [0, 0, 0, 1, 1, 2], [0], [0]>} : vector<2x24x24xbf16>, vector<2x24x32xbf16>, vector<2x24x32xf32> -> vector<2x24x32xf32>
    "tpu.trace_stop"() : () -> ()
    %79 = vector.shape_cast %78 : vector<2x24x32xf32> to vector<48x32xf32>
    %80 = arith.truncf %79 : vector<48x32xf32> to vector<48x32xbf16>
    %81 = vector.extract_strided_slice %50 {offsets = [0, 0], sizes = [32, 128], strides = [1, 1]} : vector<128x128xbf16> to vector<32x128xbf16>
    %cst_33 = arith.constant dense<0.000000e+00> : vector<48x128xf32>
    %82 = tpu.matmul %80, %81, %cst_33 {dimension_numbers = #tpu.dot_dimension_numbers<[1], [0], [0], [1], [0, 0, 1, 1], [], []>} : vector<48x32xbf16>, vector<32x128xbf16>, vector<48x128xf32> -> vector<48x128xf32>
    %83 = arith.addf %51, %82 : vector<48x128xf32>
    %84 = vector.extract_strided_slice %48 {offsets = [0, 32], sizes = [48, 32], strides = [1, 1]} : vector<48x384xf32> to vector<48x32xf32>
    %85 = vector.shape_cast %84 : vector<48x32xf32> to vector<2x24x32xf32>
    %86 = vector.extract_strided_slice %48 {offsets = [0, 160], sizes = [48, 32], strides = [1, 1]} : vector<48x384xf32> to vector<48x32xf32>
    %87 = vector.shape_cast %86 : vector<48x32xf32> to vector<2x24x32xf32>
    %88 = vector.extract_strided_slice %48 {offsets = [0, 288], sizes = [48, 32], strides = [1, 1]} : vector<48x384xf32> to vector<48x32xf32>
    %89 = vector.shape_cast %88 : vector<48x32xf32> to vector<2x24x32xf32>
    %90 = arith.truncf %85 : vector<2x24x32xf32> to vector<2x24x32xbf16>
    %91 = arith.truncf %87 : vector<2x24x32xf32> to vector<2x24x32xbf16>
    "tpu.trace_start"() <{level = 10 : i32, message = "bqd,bkd->bqk"}> : () -> ()
    %cst_34 = arith.constant dense<0.000000e+00> : vector<2x24x24xf32>
    %92 = tpu.matmul %90, %91, %cst_34 {dimension_numbers = #tpu.dot_dimension_numbers<[2], [2], [1], [1], [0, 0, 0, 1, 1, 1], [0], [0]>} : vector<2x24x32xbf16>, vector<2x24x32xbf16>, vector<2x24x24xf32> -> vector<2x24x24xf32>
    "tpu.trace_stop"() : () -> ()
    %cst_35 = arith.constant 0.176776692 : f32
    %93 = vector.broadcast %cst_35 : f32 to vector<2x24x24xf32>
    %94 = arith.mulf %92, %93 : vector<2x24x24xf32>
    %95 = vector.shape_cast %14 : vector<1x24xf32> to vector<1x1x24xf32>
    %96 = vector.broadcast %95 : vector<1x1x24xf32> to vector<2x24x24xf32>
    %97 = arith.addf %94, %96 : vector<2x24x24xf32>
    %cst_36 = arith.constant dense<0xFF800000> : vector<2x24xf32>
    %98 = vector.multi_reduction <maximumf>, %97, %cst_36 [2] : vector<2x24x24xf32> to vector<2x24xf32>
    %99 = vector.shape_cast %98 : vector<2x24xf32> to vector<2x24x1xf32>
    %100 = vector.broadcast %99 : vector<2x24x1xf32> to vector<2x24x24xf32>
    %101 = arith.subf %97, %100 : vector<2x24x24xf32>
    %102 = math.exp %101 : vector<2x24x24xf32>
    %cst_37 = arith.constant dense<0.000000e+00> : vector<2x24xf32>
    %103 = vector.multi_reduction <add>, %102, %cst_37 [2] : vector<2x24x24xf32> to vector<2x24xf32>
    %104 = vector.shape_cast %103 : vector<2x24xf32> to vector<2x24x1xf32>
    %105 = tpu.reciprocal %104 {approx = true} : vector<2x24x1xf32> -> vector<2x24x1xf32>
    %106 = vector.broadcast %105 : vector<2x24x1xf32> to vector<2x24x24xf32>
    %107 = arith.mulf %102, %106 : vector<2x24x24xf32>
    %108 = arith.truncf %107 : vector<2x24x24xf32> to vector<2x24x24xbf16>
    %109 = arith.truncf %89 : vector<2x24x32xf32> to vector<2x24x32xbf16>
    "tpu.trace_start"() <{level = 10 : i32, message = "bqk,bkd->bqd"}> : () -> ()
    %cst_38 = arith.constant dense<0.000000e+00> : vector<2x24x32xf32>
    %110 = tpu.matmul %108, %109, %cst_38 {dimension_numbers = #tpu.dot_dimension_numbers<[2], [1], [1], [2], [0, 0, 0, 1, 1, 2], [0], [0]>} : vector<2x24x24xbf16>, vector<2x24x32xbf16>, vector<2x24x32xf32> -> vector<2x24x32xf32>
    "tpu.trace_stop"() : () -> ()
    %111 = vector.shape_cast %110 : vector<2x24x32xf32> to vector<48x32xf32>
    %112 = arith.truncf %111 : vector<48x32xf32> to vector<48x32xbf16>
    %113 = vector.extract_strided_slice %50 {offsets = [32, 0], sizes = [32, 128], strides = [1, 1]} : vector<128x128xbf16> to vector<32x128xbf16>
    %cst_39 = arith.constant dense<0.000000e+00> : vector<48x128xf32>
    %114 = tpu.matmul %112, %113, %cst_39 {dimension_numbers = #tpu.dot_dimension_numbers<[1], [0], [0], [1], [0, 0, 1, 1], [], []>} : vector<48x32xbf16>, vector<32x128xbf16>, vector<48x128xf32> -> vector<48x128xf32>
    %115 = arith.addf %83, %114 : vector<48x128xf32>
    %116 = vector.extract_strided_slice %48 {offsets = [0, 64], sizes = [48, 32], strides = [1, 1]} : vector<48x384xf32> to vector<48x32xf32>
    %117 = vector.shape_cast %116 : vector<48x32xf32> to vector<2x24x32xf32>
    %118 = vector.extract_strided_slice %48 {offsets = [0, 192], sizes = [48, 32], strides = [1, 1]} : vector<48x384xf32> to vector<48x32xf32>
    %119 = vector.shape_cast %118 : vector<48x32xf32> to vector<2x24x32xf32>
    %120 = vector.extract_strided_slice %48 {offsets = [0, 320], sizes = [48, 32], strides = [1, 1]} : vector<48x384xf32> to vector<48x32xf32>
    %121 = vector.shape_cast %120 : vector<48x32xf32> to vector<2x24x32xf32>
    %122 = arith.truncf %117 : vector<2x24x32xf32> to vector<2x24x32xbf16>
    %123 = arith.truncf %119 : vector<2x24x32xf32> to vector<2x24x32xbf16>
    "tpu.trace_start"() <{level = 10 : i32, message = "bqd,bkd->bqk"}> : () -> ()
    %cst_40 = arith.constant dense<0.000000e+00> : vector<2x24x24xf32>
    %124 = tpu.matmul %122, %123, %cst_40 {dimension_numbers = #tpu.dot_dimension_numbers<[2], [2], [1], [1], [0, 0, 0, 1, 1, 1], [0], [0]>} : vector<2x24x32xbf16>, vector<2x24x32xbf16>, vector<2x24x24xf32> -> vector<2x24x24xf32>
    "tpu.trace_stop"() : () -> ()
    %cst_41 = arith.constant 0.176776692 : f32
    %125 = vector.broadcast %cst_41 : f32 to vector<2x24x24xf32>
    %126 = arith.mulf %124, %125 : vector<2x24x24xf32>
    %127 = vector.shape_cast %14 : vector<1x24xf32> to vector<1x1x24xf32>
    %128 = vector.broadcast %127 : vector<1x1x24xf32> to vector<2x24x24xf32>
    %129 = arith.addf %126, %128 : vector<2x24x24xf32>
    %cst_42 = arith.constant dense<0xFF800000> : vector<2x24xf32>
    %130 = vector.multi_reduction <maximumf>, %129, %cst_42 [2] : vector<2x24x24xf32> to vector<2x24xf32>
    %131 = vector.shape_cast %130 : vector<2x24xf32> to vector<2x24x1xf32>
    %132 = vector.broadcast %131 : vector<2x24x1xf32> to vector<2x24x24xf32>
    %133 = arith.subf %129, %132 : vector<2x24x24xf32>
    %134 = math.exp %133 : vector<2x24x24xf32>
    %cst_43 = arith.constant dense<0.000000e+00> : vector<2x24xf32>
    %135 = vector.multi_reduction <add>, %134, %cst_43 [2] : vector<2x24x24xf32> to vector<2x24xf32>
    %136 = vector.shape_cast %135 : vector<2x24xf32> to vector<2x24x1xf32>
    %137 = tpu.reciprocal %136 {approx = true} : vector<2x24x1xf32> -> vector<2x24x1xf32>
    %138 = vector.broadcast %137 : vector<2x24x1xf32> to vector<2x24x24xf32>
    %139 = arith.mulf %134, %138 : vector<2x24x24xf32>
    %140 = arith.truncf %139 : vector<2x24x24xf32> to vector<2x24x24xbf16>
    %141 = arith.truncf %121 : vector<2x24x32xf32> to vector<2x24x32xbf16>
    "tpu.trace_start"() <{level = 10 : i32, message = "bqk,bkd->bqd"}> : () -> ()
    %cst_44 = arith.constant dense<0.000000e+00> : vector<2x24x32xf32>
    %142 = tpu.matmul %140, %141, %cst_44 {dimension_numbers = #tpu.dot_dimension_numbers<[2], [1], [1], [2], [0, 0, 0, 1, 1, 2], [0], [0]>} : vector<2x24x24xbf16>, vector<2x24x32xbf16>, vector<2x24x32xf32> -> vector<2x24x32xf32>
    "tpu.trace_stop"() : () -> ()
    %143 = vector.shape_cast %142 : vector<2x24x32xf32> to vector<48x32xf32>
    %144 = arith.truncf %143 : vector<48x32xf32> to vector<48x32xbf16>
    %145 = vector.extract_strided_slice %50 {offsets = [64, 0], sizes = [32, 128], strides = [1, 1]} : vector<128x128xbf16> to vector<32x128xbf16>
    %cst_45 = arith.constant dense<0.000000e+00> : vector<48x128xf32>
    %146 = tpu.matmul %144, %145, %cst_45 {dimension_numbers = #tpu.dot_dimension_numbers<[1], [0], [0], [1], [0, 0, 1, 1], [], []>} : vector<48x32xbf16>, vector<32x128xbf16>, vector<48x128xf32> -> vector<48x128xf32>
    %147 = arith.addf %115, %146 : vector<48x128xf32>
    %148 = vector.extract_strided_slice %48 {offsets = [0, 96], sizes = [48, 32], strides = [1, 1]} : vector<48x384xf32> to vector<48x32xf32>
    %149 = vector.shape_cast %148 : vector<48x32xf32> to vector<2x24x32xf32>
    %150 = vector.extract_strided_slice %48 {offsets = [0, 224], sizes = [48, 32], strides = [1, 1]} : vector<48x384xf32> to vector<48x32xf32>
    %151 = vector.shape_cast %150 : vector<48x32xf32> to vector<2x24x32xf32>
    %152 = vector.extract_strided_slice %48 {offsets = [0, 352], sizes = [48, 32], strides = [1, 1]} : vector<48x384xf32> to vector<48x32xf32>
    %153 = vector.shape_cast %152 : vector<48x32xf32> to vector<2x24x32xf32>
    %154 = arith.truncf %149 : vector<2x24x32xf32> to vector<2x24x32xbf16>
    %155 = arith.truncf %151 : vector<2x24x32xf32> to vector<2x24x32xbf16>
    "tpu.trace_start"() <{level = 10 : i32, message = "bqd,bkd->bqk"}> : () -> ()
    %cst_46 = arith.constant dense<0.000000e+00> : vector<2x24x24xf32>
    %156 = tpu.matmul %154, %155, %cst_46 {dimension_numbers = #tpu.dot_dimension_numbers<[2], [2], [1], [1], [0, 0, 0, 1, 1, 1], [0], [0]>} : vector<2x24x32xbf16>, vector<2x24x32xbf16>, vector<2x24x24xf32> -> vector<2x24x24xf32>
    "tpu.trace_stop"() : () -> ()
    %cst_47 = arith.constant 0.176776692 : f32
    %157 = vector.broadcast %cst_47 : f32 to vector<2x24x24xf32>
    %158 = arith.mulf %156, %157 : vector<2x24x24xf32>
    %159 = vector.shape_cast %14 : vector<1x24xf32> to vector<1x1x24xf32>
    %160 = vector.broadcast %159 : vector<1x1x24xf32> to vector<2x24x24xf32>
    %161 = arith.addf %158, %160 : vector<2x24x24xf32>
    %cst_48 = arith.constant dense<0xFF800000> : vector<2x24xf32>
    %162 = vector.multi_reduction <maximumf>, %161, %cst_48 [2] : vector<2x24x24xf32> to vector<2x24xf32>
    %163 = vector.shape_cast %162 : vector<2x24xf32> to vector<2x24x1xf32>
    %164 = vector.broadcast %163 : vector<2x24x1xf32> to vector<2x24x24xf32>
    %165 = arith.subf %161, %164 : vector<2x24x24xf32>
    %166 = math.exp %165 : vector<2x24x24xf32>
    %cst_49 = arith.constant dense<0.000000e+00> : vector<2x24xf32>
    %167 = vector.multi_reduction <add>, %166, %cst_49 [2] : vector<2x24x24xf32> to vector<2x24xf32>
    %168 = vector.shape_cast %167 : vector<2x24xf32> to vector<2x24x1xf32>
    %169 = tpu.reciprocal %168 {approx = true} : vector<2x24x1xf32> -> vector<2x24x1xf32>
    %170 = vector.broadcast %169 : vector<2x24x1xf32> to vector<2x24x24xf32>
    %171 = arith.mulf %166, %170 : vector<2x24x24xf32>
    %172 = arith.truncf %171 : vector<2x24x24xf32> to vector<2x24x24xbf16>
    %173 = arith.truncf %153 : vector<2x24x32xf32> to vector<2x24x32xbf16>
    "tpu.trace_start"() <{level = 10 : i32, message = "bqk,bkd->bqd"}> : () -> ()
    %cst_50 = arith.constant dense<0.000000e+00> : vector<2x24x32xf32>
    %174 = tpu.matmul %172, %173, %cst_50 {dimension_numbers = #tpu.dot_dimension_numbers<[2], [1], [1], [2], [0, 0, 0, 1, 1, 2], [0], [0]>} : vector<2x24x24xbf16>, vector<2x24x32xbf16>, vector<2x24x32xf32> -> vector<2x24x32xf32>
    "tpu.trace_stop"() : () -> ()
    %175 = vector.shape_cast %174 : vector<2x24x32xf32> to vector<48x32xf32>
    %176 = arith.truncf %175 : vector<48x32xf32> to vector<48x32xbf16>
    %177 = vector.extract_strided_slice %50 {offsets = [96, 0], sizes = [32, 128], strides = [1, 1]} : vector<128x128xbf16> to vector<32x128xbf16>
    %cst_51 = arith.constant dense<0.000000e+00> : vector<48x128xf32>
    %178 = tpu.matmul %176, %177, %cst_51 {dimension_numbers = #tpu.dot_dimension_numbers<[1], [0], [0], [1], [0, 0, 1, 1], [], []>} : vector<48x32xbf16>, vector<32x128xbf16>, vector<48x128xf32> -> vector<48x128xf32>
    %179 = arith.addf %147, %178 : vector<48x128xf32>
    %180 = arith.addf %8, %179 : vector<48x128xf32>
    %c0_52 = arith.constant 0 : index
    %c0_53 = arith.constant 0 : index
    %c0_54 = arith.constant 0 : index
    %181 = vector.load %arg11[%c0_52, %c0_53, %c0_54] : memref<2x1x128xf32, #tpu.memory_space<vmem>>, vector<1x1x128xf32>
    %182 = vector.shape_cast %181 : vector<1x1x128xf32> to vector<1x128xf32>
    %183 = vector.broadcast %182 : vector<1x128xf32> to vector<48x128xf32>
    %184 = arith.addf %180, %183 : vector<48x128xf32>
    %c0_55 = arith.constant 0 : index
    %c0_56 = arith.constant 0 : index
    %c0_57 = arith.constant 0 : index
    %185 = vector.load %arg12[%c0_55, %c0_56, %c0_57] : memref<2x1x128xf32, #tpu.memory_space<vmem>>, vector<1x1x128xf32>
    %186 = vector.shape_cast %185 : vector<1x1x128xf32> to vector<1x128xf32>
    %c0_58 = arith.constant 0 : index
    %c0_59 = arith.constant 0 : index
    %c0_60 = arith.constant 0 : index
    %187 = vector.load %arg13[%c0_58, %c0_59, %c0_60] : memref<2x1x128xf32, #tpu.memory_space<vmem>>, vector<1x1x128xf32>
    %188 = vector.shape_cast %187 : vector<1x1x128xf32> to vector<1x128xf32>
    %cst_61 = arith.constant dense<0.000000e+00> : vector<48xf32>
    %189 = vector.multi_reduction <add>, %184, %cst_61 [1] : vector<48x128xf32> to vector<48xf32>
    %190 = vector.shape_cast %189 : vector<48xf32> to vector<48x1xf32>
    %cst_62 = arith.constant 1.280000e+02 : f32
    %191 = vector.broadcast %cst_62 : f32 to vector<48x1xf32>
    %192 = arith.divf %190, %191 : vector<48x1xf32>
    %193 = vector.broadcast %192 : vector<48x1xf32> to vector<48x128xf32>
    %194 = arith.subf %184, %193 : vector<48x128xf32>
    %195 = arith.mulf %194, %194 : vector<48x128xf32>
    %cst_63 = arith.constant dense<0.000000e+00> : vector<48xf32>
    %196 = vector.multi_reduction <add>, %195, %cst_63 [1] : vector<48x128xf32> to vector<48xf32>
    %197 = vector.shape_cast %196 : vector<48xf32> to vector<48x1xf32>
    %cst_64 = arith.constant 1.280000e+02 : f32
    %198 = vector.broadcast %cst_64 : f32 to vector<48x1xf32>
    %199 = arith.divf %197, %198 : vector<48x1xf32>
    %cst_65 = arith.constant 9.99999997E-7 : f32
    %200 = vector.broadcast %cst_65 : f32 to vector<48x1xf32>
    %201 = arith.addf %199, %200 : vector<48x1xf32>
    %202 = math.rsqrt %201 : vector<48x1xf32>
    %203 = vector.broadcast %202 : vector<48x1xf32> to vector<48x128xf32>
    %204 = arith.mulf %194, %203 : vector<48x128xf32>
    %205 = vector.broadcast %186 : vector<1x128xf32> to vector<48x128xf32>
    %206 = arith.mulf %204, %205 : vector<48x128xf32>
    %207 = vector.broadcast %188 : vector<1x128xf32> to vector<48x128xf32>
    %208 = arith.addf %206, %207 : vector<48x128xf32>
    %209 = arith.truncf %208 : vector<48x128xf32> to vector<48x128xbf16>
    %c0_66 = arith.constant 0 : index
    %c0_67 = arith.constant 0 : index
    %c0_68 = arith.constant 0 : index
    %210 = vector.load %arg14[%c0_66, %c0_67, %c0_68] : memref<2x128x512xbf16, #tpu.memory_space<vmem>>, vector<1x128x512xbf16>
    %211 = vector.shape_cast %210 : vector<1x128x512xbf16> to vector<128x512xbf16>
    %cst_69 = arith.constant dense<0.000000e+00> : vector<48x512xf32>
    %212 = tpu.matmul %209, %211, %cst_69 {dimension_numbers = #tpu.dot_dimension_numbers<[1], [0], [0], [1], [0, 0, 1, 1], [], []>} : vector<48x128xbf16>, vector<128x512xbf16>, vector<48x512xf32> -> vector<48x512xf32>
    %c0_70 = arith.constant 0 : index
    %c0_71 = arith.constant 0 : index
    %c0_72 = arith.constant 0 : index
    %213 = vector.load %arg15[%c0_70, %c0_71, %c0_72] : memref<2x1x512xf32, #tpu.memory_space<vmem>>, vector<1x1x512xf32>
    %214 = vector.shape_cast %213 : vector<1x1x512xf32> to vector<1x512xf32>
    %215 = vector.broadcast %214 : vector<1x512xf32> to vector<48x512xf32>
    %216 = arith.addf %212, %215 : vector<48x512xf32>
    %217 = arith.mulf %216, %216 : vector<48x512xf32>
    %218 = arith.mulf %216, %217 : vector<48x512xf32>
    %cst_73 = arith.constant 4.471500e-02 : f32
    %219 = vector.broadcast %cst_73 : f32 to vector<48x512xf32>
    %220 = arith.mulf %219, %218 : vector<48x512xf32>
    %221 = arith.addf %216, %220 : vector<48x512xf32>
    %cst_74 = arith.constant 0.797884583 : f32
    %222 = vector.broadcast %cst_74 : f32 to vector<48x512xf32>
    %223 = arith.mulf %222, %221 : vector<48x512xf32>
    %224 = math.tanh %223 : vector<48x512xf32>
    %cst_75 = arith.constant 1.000000e+00 : f32
    %225 = vector.broadcast %cst_75 : f32 to vector<48x512xf32>
    %226 = arith.addf %225, %224 : vector<48x512xf32>
    %cst_76 = arith.constant 5.000000e-01 : f32
    %227 = vector.broadcast %cst_76 : f32 to vector<48x512xf32>
    %228 = arith.mulf %227, %226 : vector<48x512xf32>
    %229 = arith.mulf %216, %228 : vector<48x512xf32>
    %230 = arith.truncf %229 : vector<48x512xf32> to vector<48x512xbf16>
    %c0_77 = arith.constant 0 : index
    %c0_78 = arith.constant 0 : index
    %c0_79 = arith.constant 0 : index
    %231 = vector.load %arg16[%c0_77, %c0_78, %c0_79] : memref<2x512x128xbf16, #tpu.memory_space<vmem>>, vector<1x512x128xbf16>
    %232 = vector.shape_cast %231 : vector<1x512x128xbf16> to vector<512x128xbf16>
    %cst_80 = arith.constant dense<0.000000e+00> : vector<48x128xf32>
    %233 = tpu.matmul %230, %232, %cst_80 {dimension_numbers = #tpu.dot_dimension_numbers<[1], [0], [0], [1], [0, 0, 1, 1], [], []>} : vector<48x512xbf16>, vector<512x128xbf16>, vector<48x128xf32> -> vector<48x128xf32>
    %c0_81 = arith.constant 0 : index
    %c0_82 = arith.constant 0 : index
    %c0_83 = arith.constant 0 : index
    %234 = vector.load %arg17[%c0_81, %c0_82, %c0_83] : memref<2x1x128xf32, #tpu.memory_space<vmem>>, vector<1x1x128xf32>
    %235 = vector.shape_cast %234 : vector<1x1x128xf32> to vector<1x128xf32>
    %236 = vector.broadcast %235 : vector<1x128xf32> to vector<48x128xf32>
    %237 = arith.addf %233, %236 : vector<48x128xf32>
    %238 = arith.addf %184, %237 : vector<48x128xf32>
    %c2_i32_84 = arith.constant 2 : i32
    %239 = arith.cmpi eq, %16, %c2_i32_84 : i32
    %240 = arith.extui %239 : i1 to i32
    %c0_i32_85 = arith.constant 0 : i32
    %241 = arith.cmpi ne, %240, %c0_i32_85 : i32
    scf.if %241 {
      %c1_173 = arith.constant 1 : index
      %c0_174 = arith.constant 0 : index
      %c0_175 = arith.constant 0 : index
      %482 = vector.load %arg24[%c1_173, %c0_174, %c0_175] : memref<3x48x128xf32, #tpu.memory_space<vmem>>, vector<1x48x128xf32>
      %483 = vector.shape_cast %482 : vector<1x48x128xf32> to vector<48x128xf32>
      %484 = vector.shape_cast %238 : vector<48x128xf32> to vector<1x48x128xf32>
      tpu.vector_store %arg24[%c1_173, %c0_174, %c0_175], %484 {strides = array<i32>} : memref<3x48x128xf32, #tpu.memory_space<vmem>>, vector<1x48x128xf32>,
    } else {
    }
    %c4_i32 = arith.constant 4 : i32
    %242 = arith.cmpi eq, %16, %c4_i32 : i32
    %243 = arith.extui %242 : i1 to i32
    %c0_i32_86 = arith.constant 0 : i32
    %244 = arith.cmpi ne, %243, %c0_i32_86 : i32
    scf.if %244 {
      %c2 = arith.constant 2 : index
      %c0_173 = arith.constant 0 : index
      %c0_174 = arith.constant 0 : index
      %482 = vector.load %arg24[%c2, %c0_173, %c0_174] : memref<3x48x128xf32, #tpu.memory_space<vmem>>, vector<1x48x128xf32>
      %483 = vector.shape_cast %482 : vector<1x48x128xf32> to vector<48x128xf32>
      %484 = vector.shape_cast %238 : vector<48x128xf32> to vector<1x48x128xf32>
      tpu.vector_store %arg24[%c2, %c0_173, %c0_174], %484 {strides = array<i32>} : memref<3x48x128xf32, #tpu.memory_space<vmem>>, vector<1x48x128xf32>,
    } else {
    }
    %c2_i32_87 = arith.constant 2 : i32
    %245 = arith.muli %arg0, %c2_i32_87 : i32
    %c1_i32 = arith.constant 1 : i32
    %246 = arith.addi %245, %c1_i32 : i32
    %c1 = arith.constant 1 : index
    %c0_88 = arith.constant 0 : index
    %c0_89 = arith.constant 0 : index
    %247 = vector.load %arg6[%c1, %c0_88, %c0_89] : memref<2x1x128xf32, #tpu.memory_space<vmem>>, vector<1x1x128xf32>
    %248 = vector.shape_cast %247 : vector<1x1x128xf32> to vector<1x128xf32>
    %c1_90 = arith.constant 1 : index
    %c0_91 = arith.constant 0 : index
    %c0_92 = arith.constant 0 : index
    %249 = vector.load %arg7[%c1_90, %c0_91, %c0_92] : memref<2x1x128xf32, #tpu.memory_space<vmem>>, vector<1x1x128xf32>
    %250 = vector.shape_cast %249 : vector<1x1x128xf32> to vector<1x128xf32>
    %cst_93 = arith.constant dense<0.000000e+00> : vector<48xf32>
    %251 = vector.multi_reduction <add>, %238, %cst_93 [1] : vector<48x128xf32> to vector<48xf32>
    %252 = vector.shape_cast %251 : vector<48xf32> to vector<48x1xf32>
    %cst_94 = arith.constant 1.280000e+02 : f32
    %253 = vector.broadcast %cst_94 : f32 to vector<48x1xf32>
    %254 = arith.divf %252, %253 : vector<48x1xf32>
    %255 = vector.broadcast %254 : vector<48x1xf32> to vector<48x128xf32>
    %256 = arith.subf %238, %255 : vector<48x128xf32>
    %257 = arith.mulf %256, %256 : vector<48x128xf32>
    %cst_95 = arith.constant dense<0.000000e+00> : vector<48xf32>
    %258 = vector.multi_reduction <add>, %257, %cst_95 [1] : vector<48x128xf32> to vector<48xf32>
    %259 = vector.shape_cast %258 : vector<48xf32> to vector<48x1xf32>
    %cst_96 = arith.constant 1.280000e+02 : f32
    %260 = vector.broadcast %cst_96 : f32 to vector<48x1xf32>
    %261 = arith.divf %259, %260 : vector<48x1xf32>
    %cst_97 = arith.constant 9.99999997E-7 : f32
    %262 = vector.broadcast %cst_97 : f32 to vector<48x1xf32>
    %263 = arith.addf %261, %262 : vector<48x1xf32>
    %264 = math.rsqrt %263 : vector<48x1xf32>
    %265 = vector.broadcast %264 : vector<48x1xf32> to vector<48x128xf32>
    %266 = arith.mulf %256, %265 : vector<48x128xf32>
    %267 = vector.broadcast %248 : vector<1x128xf32> to vector<48x128xf32>
    %268 = arith.mulf %266, %267 : vector<48x128xf32>
    %269 = vector.broadcast %250 : vector<1x128xf32> to vector<48x128xf32>
    %270 = arith.addf %268, %269 : vector<48x128xf32>
    %271 = arith.truncf %270 : vector<48x128xf32> to vector<48x128xbf16>
    %c1_98 = arith.constant 1 : index
    %c0_99 = arith.constant 0 : index
    %c0_100 = arith.constant 0 : index
    %272 = vector.load %arg8[%c1_98, %c0_99, %c0_100] : memref<2x128x384xbf16, #tpu.memory_space<vmem>>, vector<1x128x384xbf16>
    %273 = vector.shape_cast %272 : vector<1x128x384xbf16> to vector<128x384xbf16>
    %cst_101 = arith.constant dense<0.000000e+00> : vector<48x384xf32>
    %274 = tpu.matmul %271, %273, %cst_101 {dimension_numbers = #tpu.dot_dimension_numbers<[1], [0], [0], [1], [0, 0, 1, 1], [], []>} : vector<48x128xbf16>, vector<128x384xbf16>, vector<48x384xf32> -> vector<48x384xf32>
    %c1_102 = arith.constant 1 : index
    %c0_103 = arith.constant 0 : index
    %c0_104 = arith.constant 0 : index
    %275 = vector.load %arg9[%c1_102, %c0_103, %c0_104] : memref<2x1x384xf32, #tpu.memory_space<vmem>>, vector<1x1x384xf32>
    %276 = vector.shape_cast %275 : vector<1x1x384xf32> to vector<1x384xf32>
    %277 = vector.broadcast %276 : vector<1x384xf32> to vector<48x384xf32>
    %278 = arith.addf %274, %277 : vector<48x384xf32>
    %c1_105 = arith.constant 1 : index
    %c0_106 = arith.constant 0 : index
    %c0_107 = arith.constant 0 : index
    %279 = vector.load %arg10[%c1_105, %c0_106, %c0_107] : memref<2x128x128xbf16, #tpu.memory_space<vmem>>, vector<1x128x128xbf16>
    %280 = vector.shape_cast %279 : vector<1x128x128xbf16> to vector<128x128xbf16>
    %cst_108 = arith.constant 0.000000e+00 : f32
    %281 = vector.broadcast %cst_108 : f32 to vector<48x128xf32>
    %282 = vector.extract_strided_slice %278 {offsets = [0, 0], sizes = [48, 32], strides = [1, 1]} : vector<48x384xf32> to vector<48x32xf32>
    %283 = vector.shape_cast %282 : vector<48x32xf32> to vector<2x24x32xf32>
    %284 = vector.extract_strided_slice %278 {offsets = [0, 128], sizes = [48, 32], strides = [1, 1]} : vector<48x384xf32> to vector<48x32xf32>
    %285 = vector.shape_cast %284 : vector<48x32xf32> to vector<2x24x32xf32>
    %286 = vector.extract_strided_slice %278 {offsets = [0, 256], sizes = [48, 32], strides = [1, 1]} : vector<48x384xf32> to vector<48x32xf32>
    %287 = vector.shape_cast %286 : vector<48x32xf32> to vector<2x24x32xf32>
    %288 = arith.truncf %283 : vector<2x24x32xf32> to vector<2x24x32xbf16>
    %289 = arith.truncf %285 : vector<2x24x32xf32> to vector<2x24x32xbf16>
    "tpu.trace_start"() <{level = 10 : i32, message = "bqd,bkd->bqk"}> : () -> ()
    %cst_109 = arith.constant dense<0.000000e+00> : vector<2x24x24xf32>
    %290 = tpu.matmul %288, %289, %cst_109 {dimension_numbers = #tpu.dot_dimension_numbers<[2], [2], [1], [1], [0, 0, 0, 1, 1, 1], [0], [0]>} : vector<2x24x32xbf16>, vector<2x24x32xbf16>, vector<2x24x24xf32> -> vector<2x24x24xf32>
    "tpu.trace_stop"() : () -> ()
    %cst_110 = arith.constant 0.176776692 : f32
    %291 = vector.broadcast %cst_110 : f32 to vector<2x24x24xf32>
    %292 = arith.mulf %290, %291 : vector<2x24x24xf32>
    %293 = vector.shape_cast %14 : vector<1x24xf32> to vector<1x1x24xf32>
    %294 = vector.broadcast %293 : vector<1x1x24xf32> to vector<2x24x24xf32>
    %295 = arith.addf %292, %294 : vector<2x24x24xf32>
    %cst_111 = arith.constant dense<0xFF800000> : vector<2x24xf32>
    %296 = vector.multi_reduction <maximumf>, %295, %cst_111 [2] : vector<2x24x24xf32> to vector<2x24xf32>
    %297 = vector.shape_cast %296 : vector<2x24xf32> to vector<2x24x1xf32>
    %298 = vector.broadcast %297 : vector<2x24x1xf32> to vector<2x24x24xf32>
    %299 = arith.subf %295, %298 : vector<2x24x24xf32>
    %300 = math.exp %299 : vector<2x24x24xf32>
    %cst_112 = arith.constant dense<0.000000e+00> : vector<2x24xf32>
    %301 = vector.multi_reduction <add>, %300, %cst_112 [2] : vector<2x24x24xf32> to vector<2x24xf32>
    %302 = vector.shape_cast %301 : vector<2x24xf32> to vector<2x24x1xf32>
    %303 = tpu.reciprocal %302 {approx = true} : vector<2x24x1xf32> -> vector<2x24x1xf32>
    %304 = vector.broadcast %303 : vector<2x24x1xf32> to vector<2x24x24xf32>
    %305 = arith.mulf %300, %304 : vector<2x24x24xf32>
    %306 = arith.truncf %305 : vector<2x24x24xf32> to vector<2x24x24xbf16>
    %307 = arith.truncf %287 : vector<2x24x32xf32> to vector<2x24x32xbf16>
    "tpu.trace_start"() <{level = 10 : i32, message = "bqk,bkd->bqd"}> : () -> ()
    %cst_113 = arith.constant dense<0.000000e+00> : vector<2x24x32xf32>
    %308 = tpu.matmul %306, %307, %cst_113 {dimension_numbers = #tpu.dot_dimension_numbers<[2], [1], [1], [2], [0, 0, 0, 1, 1, 2], [0], [0]>} : vector<2x24x24xbf16>, vector<2x24x32xbf16>, vector<2x24x32xf32> -> vector<2x24x32xf32>
    "tpu.trace_stop"() : () -> ()
    %309 = vector.shape_cast %308 : vector<2x24x32xf32> to vector<48x32xf32>
    %310 = arith.truncf %309 : vector<48x32xf32> to vector<48x32xbf16>
    %311 = vector.extract_strided_slice %280 {offsets = [0, 0], sizes = [32, 128], strides = [1, 1]} : vector<128x128xbf16> to vector<32x128xbf16>
    %cst_114 = arith.constant dense<0.000000e+00> : vector<48x128xf32>
    %312 = tpu.matmul %310, %311, %cst_114 {dimension_numbers = #tpu.dot_dimension_numbers<[1], [0], [0], [1], [0, 0, 1, 1], [], []>} : vector<48x32xbf16>, vector<32x128xbf16>, vector<48x128xf32> -> vector<48x128xf32>
    %313 = arith.addf %281, %312 : vector<48x128xf32>
    %314 = vector.extract_strided_slice %278 {offsets = [0, 32], sizes = [48, 32], strides = [1, 1]} : vector<48x384xf32> to vector<48x32xf32>
    %315 = vector.shape_cast %314 : vector<48x32xf32> to vector<2x24x32xf32>
    %316 = vector.extract_strided_slice %278 {offsets = [0, 160], sizes = [48, 32], strides = [1, 1]} : vector<48x384xf32> to vector<48x32xf32>
    %317 = vector.shape_cast %316 : vector<48x32xf32> to vector<2x24x32xf32>
    %318 = vector.extract_strided_slice %278 {offsets = [0, 288], sizes = [48, 32], strides = [1, 1]} : vector<48x384xf32> to vector<48x32xf32>
    %319 = vector.shape_cast %318 : vector<48x32xf32> to vector<2x24x32xf32>
    %320 = arith.truncf %315 : vector<2x24x32xf32> to vector<2x24x32xbf16>
    %321 = arith.truncf %317 : vector<2x24x32xf32> to vector<2x24x32xbf16>
    "tpu.trace_start"() <{level = 10 : i32, message = "bqd,bkd->bqk"}> : () -> ()
    %cst_115 = arith.constant dense<0.000000e+00> : vector<2x24x24xf32>
    %322 = tpu.matmul %320, %321, %cst_115 {dimension_numbers = #tpu.dot_dimension_numbers<[2], [2], [1], [1], [0, 0, 0, 1, 1, 1], [0], [0]>} : vector<2x24x32xbf16>, vector<2x24x32xbf16>, vector<2x24x24xf32> -> vector<2x24x24xf32>
    "tpu.trace_stop"() : () -> ()
    %cst_116 = arith.constant 0.176776692 : f32
    %323 = vector.broadcast %cst_116 : f32 to vector<2x24x24xf32>
    %324 = arith.mulf %322, %323 : vector<2x24x24xf32>
    %325 = vector.shape_cast %14 : vector<1x24xf32> to vector<1x1x24xf32>
    %326 = vector.broadcast %325 : vector<1x1x24xf32> to vector<2x24x24xf32>
    %327 = arith.addf %324, %326 : vector<2x24x24xf32>
    %cst_117 = arith.constant dense<0xFF800000> : vector<2x24xf32>
    %328 = vector.multi_reduction <maximumf>, %327, %cst_117 [2] : vector<2x24x24xf32> to vector<2x24xf32>
    %329 = vector.shape_cast %328 : vector<2x24xf32> to vector<2x24x1xf32>
    %330 = vector.broadcast %329 : vector<2x24x1xf32> to vector<2x24x24xf32>
    %331 = arith.subf %327, %330 : vector<2x24x24xf32>
    %332 = math.exp %331 : vector<2x24x24xf32>
    %cst_118 = arith.constant dense<0.000000e+00> : vector<2x24xf32>
    %333 = vector.multi_reduction <add>, %332, %cst_118 [2] : vector<2x24x24xf32> to vector<2x24xf32>
    %334 = vector.shape_cast %333 : vector<2x24xf32> to vector<2x24x1xf32>
    %335 = tpu.reciprocal %334 {approx = true} : vector<2x24x1xf32> -> vector<2x24x1xf32>
    %336 = vector.broadcast %335 : vector<2x24x1xf32> to vector<2x24x24xf32>
    %337 = arith.mulf %332, %336 : vector<2x24x24xf32>
    %338 = arith.truncf %337 : vector<2x24x24xf32> to vector<2x24x24xbf16>
    %339 = arith.truncf %319 : vector<2x24x32xf32> to vector<2x24x32xbf16>
    "tpu.trace_start"() <{level = 10 : i32, message = "bqk,bkd->bqd"}> : () -> ()
    %cst_119 = arith.constant dense<0.000000e+00> : vector<2x24x32xf32>
    %340 = tpu.matmul %338, %339, %cst_119 {dimension_numbers = #tpu.dot_dimension_numbers<[2], [1], [1], [2], [0, 0, 0, 1, 1, 2], [0], [0]>} : vector<2x24x24xbf16>, vector<2x24x32xbf16>, vector<2x24x32xf32> -> vector<2x24x32xf32>
    "tpu.trace_stop"() : () -> ()
    %341 = vector.shape_cast %340 : vector<2x24x32xf32> to vector<48x32xf32>
    %342 = arith.truncf %341 : vector<48x32xf32> to vector<48x32xbf16>
    %343 = vector.extract_strided_slice %280 {offsets = [32, 0], sizes = [32, 128], strides = [1, 1]} : vector<128x128xbf16> to vector<32x128xbf16>
    %cst_120 = arith.constant dense<0.000000e+00> : vector<48x128xf32>
    %344 = tpu.matmul %342, %343, %cst_120 {dimension_numbers = #tpu.dot_dimension_numbers<[1], [0], [0], [1], [0, 0, 1, 1], [], []>} : vector<48x32xbf16>, vector<32x128xbf16>, vector<48x128xf32> -> vector<48x128xf32>
    %345 = arith.addf %313, %344 : vector<48x128xf32>
    %346 = vector.extract_strided_slice %278 {offsets = [0, 64], sizes = [48, 32], strides = [1, 1]} : vector<48x384xf32> to vector<48x32xf32>
    %347 = vector.shape_cast %346 : vector<48x32xf32> to vector<2x24x32xf32>
    %348 = vector.extract_strided_slice %278 {offsets = [0, 192], sizes = [48, 32], strides = [1, 1]} : vector<48x384xf32> to vector<48x32xf32>
    %349 = vector.shape_cast %348 : vector<48x32xf32> to vector<2x24x32xf32>
    %350 = vector.extract_strided_slice %278 {offsets = [0, 320], sizes = [48, 32], strides = [1, 1]} : vector<48x384xf32> to vector<48x32xf32>
    %351 = vector.shape_cast %350 : vector<48x32xf32> to vector<2x24x32xf32>
    %352 = arith.truncf %347 : vector<2x24x32xf32> to vector<2x24x32xbf16>
    %353 = arith.truncf %349 : vector<2x24x32xf32> to vector<2x24x32xbf16>
    "tpu.trace_start"() <{level = 10 : i32, message = "bqd,bkd->bqk"}> : () -> ()
    %cst_121 = arith.constant dense<0.000000e+00> : vector<2x24x24xf32>
    %354 = tpu.matmul %352, %353, %cst_121 {dimension_numbers = #tpu.dot_dimension_numbers<[2], [2], [1], [1], [0, 0, 0, 1, 1, 1], [0], [0]>} : vector<2x24x32xbf16>, vector<2x24x32xbf16>, vector<2x24x24xf32> -> vector<2x24x24xf32>
    "tpu.trace_stop"() : () -> ()
    %cst_122 = arith.constant 0.176776692 : f32
    %355 = vector.broadcast %cst_122 : f32 to vector<2x24x24xf32>
    %356 = arith.mulf %354, %355 : vector<2x24x24xf32>
    %357 = vector.shape_cast %14 : vector<1x24xf32> to vector<1x1x24xf32>
    %358 = vector.broadcast %357 : vector<1x1x24xf32> to vector<2x24x24xf32>
    %359 = arith.addf %356, %358 : vector<2x24x24xf32>
    %cst_123 = arith.constant dense<0xFF800000> : vector<2x24xf32>
    %360 = vector.multi_reduction <maximumf>, %359, %cst_123 [2] : vector<2x24x24xf32> to vector<2x24xf32>
    %361 = vector.shape_cast %360 : vector<2x24xf32> to vector<2x24x1xf32>
    %362 = vector.broadcast %361 : vector<2x24x1xf32> to vector<2x24x24xf32>
    %363 = arith.subf %359, %362 : vector<2x24x24xf32>
    %364 = math.exp %363 : vector<2x24x24xf32>
    %cst_124 = arith.constant dense<0.000000e+00> : vector<2x24xf32>
    %365 = vector.multi_reduction <add>, %364, %cst_124 [2] : vector<2x24x24xf32> to vector<2x24xf32>
    %366 = vector.shape_cast %365 : vector<2x24xf32> to vector<2x24x1xf32>
    %367 = tpu.reciprocal %366 {approx = true} : vector<2x24x1xf32> -> vector<2x24x1xf32>
    %368 = vector.broadcast %367 : vector<2x24x1xf32> to vector<2x24x24xf32>
    %369 = arith.mulf %364, %368 : vector<2x24x24xf32>
    %370 = arith.truncf %369 : vector<2x24x24xf32> to vector<2x24x24xbf16>
    %371 = arith.truncf %351 : vector<2x24x32xf32> to vector<2x24x32xbf16>
    "tpu.trace_start"() <{level = 10 : i32, message = "bqk,bkd->bqd"}> : () -> ()
    %cst_125 = arith.constant dense<0.000000e+00> : vector<2x24x32xf32>
    %372 = tpu.matmul %370, %371, %cst_125 {dimension_numbers = #tpu.dot_dimension_numbers<[2], [1], [1], [2], [0, 0, 0, 1, 1, 2], [0], [0]>} : vector<2x24x24xbf16>, vector<2x24x32xbf16>, vector<2x24x32xf32> -> vector<2x24x32xf32>
    "tpu.trace_stop"() : () -> ()
    %373 = vector.shape_cast %372 : vector<2x24x32xf32> to vector<48x32xf32>
    %374 = arith.truncf %373 : vector<48x32xf32> to vector<48x32xbf16>
    %375 = vector.extract_strided_slice %280 {offsets = [64, 0], sizes = [32, 128], strides = [1, 1]} : vector<128x128xbf16> to vector<32x128xbf16>
    %cst_126 = arith.constant dense<0.000000e+00> : vector<48x128xf32>
    %376 = tpu.matmul %374, %375, %cst_126 {dimension_numbers = #tpu.dot_dimension_numbers<[1], [0], [0], [1], [0, 0, 1, 1], [], []>} : vector<48x32xbf16>, vector<32x128xbf16>, vector<48x128xf32> -> vector<48x128xf32>
    %377 = arith.addf %345, %376 : vector<48x128xf32>
    %378 = vector.extract_strided_slice %278 {offsets = [0, 96], sizes = [48, 32], strides = [1, 1]} : vector<48x384xf32> to vector<48x32xf32>
    %379 = vector.shape_cast %378 : vector<48x32xf32> to vector<2x24x32xf32>
    %380 = vector.extract_strided_slice %278 {offsets = [0, 224], sizes = [48, 32], strides = [1, 1]} : vector<48x384xf32> to vector<48x32xf32>
    %381 = vector.shape_cast %380 : vector<48x32xf32> to vector<2x24x32xf32>
    %382 = vector.extract_strided_slice %278 {offsets = [0, 352], sizes = [48, 32], strides = [1, 1]} : vector<48x384xf32> to vector<48x32xf32>
    %383 = vector.shape_cast %382 : vector<48x32xf32> to vector<2x24x32xf32>
    %384 = arith.truncf %379 : vector<2x24x32xf32> to vector<2x24x32xbf16>
    %385 = arith.truncf %381 : vector<2x24x32xf32> to vector<2x24x32xbf16>
    "tpu.trace_start"() <{level = 10 : i32, message = "bqd,bkd->bqk"}> : () -> ()
    %cst_127 = arith.constant dense<0.000000e+00> : vector<2x24x24xf32>
    %386 = tpu.matmul %384, %385, %cst_127 {dimension_numbers = #tpu.dot_dimension_numbers<[2], [2], [1], [1], [0, 0, 0, 1, 1, 1], [0], [0]>} : vector<2x24x32xbf16>, vector<2x24x32xbf16>, vector<2x24x24xf32> -> vector<2x24x24xf32>
    "tpu.trace_stop"() : () -> ()
    %cst_128 = arith.constant 0.176776692 : f32
    %387 = vector.broadcast %cst_128 : f32 to vector<2x24x24xf32>
    %388 = arith.mulf %386, %387 : vector<2x24x24xf32>
    %389 = vector.shape_cast %14 : vector<1x24xf32> to vector<1x1x24xf32>
    %390 = vector.broadcast %389 : vector<1x1x24xf32> to vector<2x24x24xf32>
    %391 = arith.addf %388, %390 : vector<2x24x24xf32>
    %cst_129 = arith.constant dense<0xFF800000> : vector<2x24xf32>
    %392 = vector.multi_reduction <maximumf>, %391, %cst_129 [2] : vector<2x24x24xf32> to vector<2x24xf32>
    %393 = vector.shape_cast %392 : vector<2x24xf32> to vector<2x24x1xf32>
    %394 = vector.broadcast %393 : vector<2x24x1xf32> to vector<2x24x24xf32>
    %395 = arith.subf %391, %394 : vector<2x24x24xf32>
    %396 = math.exp %395 : vector<2x24x24xf32>
    %cst_130 = arith.constant dense<0.000000e+00> : vector<2x24xf32>
    %397 = vector.multi_reduction <add>, %396, %cst_130 [2] : vector<2x24x24xf32> to vector<2x24xf32>
    %398 = vector.shape_cast %397 : vector<2x24xf32> to vector<2x24x1xf32>
    %399 = tpu.reciprocal %398 {approx = true} : vector<2x24x1xf32> -> vector<2x24x1xf32>
    %400 = vector.broadcast %399 : vector<2x24x1xf32> to vector<2x24x24xf32>
    %401 = arith.mulf %396, %400 : vector<2x24x24xf32>
    %402 = arith.truncf %401 : vector<2x24x24xf32> to vector<2x24x24xbf16>
    %403 = arith.truncf %383 : vector<2x24x32xf32> to vector<2x24x32xbf16>
    "tpu.trace_start"() <{level = 10 : i32, message = "bqk,bkd->bqd"}> : () -> ()
    %cst_131 = arith.constant dense<0.000000e+00> : vector<2x24x32xf32>
    %404 = tpu.matmul %402, %403, %cst_131 {dimension_numbers = #tpu.dot_dimension_numbers<[2], [1], [1], [2], [0, 0, 0, 1, 1, 2], [0], [0]>} : vector<2x24x24xbf16>, vector<2x24x32xbf16>, vector<2x24x32xf32> -> vector<2x24x32xf32>
    "tpu.trace_stop"() : () -> ()
    %405 = vector.shape_cast %404 : vector<2x24x32xf32> to vector<48x32xf32>
    %406 = arith.truncf %405 : vector<48x32xf32> to vector<48x32xbf16>
    %407 = vector.extract_strided_slice %280 {offsets = [96, 0], sizes = [32, 128], strides = [1, 1]} : vector<128x128xbf16> to vector<32x128xbf16>
    %cst_132 = arith.constant dense<0.000000e+00> : vector<48x128xf32>
    %408 = tpu.matmul %406, %407, %cst_132 {dimension_numbers = #tpu.dot_dimension_numbers<[1], [0], [0], [1], [0, 0, 1, 1], [], []>} : vector<48x32xbf16>, vector<32x128xbf16>, vector<48x128xf32> -> vector<48x128xf32>
    %409 = arith.addf %377, %408 : vector<48x128xf32>
    %410 = arith.addf %238, %409 : vector<48x128xf32>
    %c1_133 = arith.constant 1 : index
    %c0_134 = arith.constant 0 : index
    %c0_135 = arith.constant 0 : index
    %411 = vector.load %arg11[%c1_133, %c0_134, %c0_135] : memref<2x1x128xf32, #tpu.memory_space<vmem>>, vector<1x1x128xf32>
    %412 = vector.shape_cast %411 : vector<1x1x128xf32> to vector<1x128xf32>
    %413 = vector.broadcast %412 : vector<1x128xf32> to vector<48x128xf32>
    %414 = arith.addf %410, %413 : vector<48x128xf32>
    %c1_136 = arith.constant 1 : index
    %c0_137 = arith.constant 0 : index
    %c0_138 = arith.constant 0 : index
    %415 = vector.load %arg12[%c1_136, %c0_137, %c0_138] : memref<2x1x128xf32, #tpu.memory_space<vmem>>, vector<1x1x128xf32>
    %416 = vector.shape_cast %415 : vector<1x1x128xf32> to vector<1x128xf32>
    %c1_139 = arith.constant 1 : index
    %c0_140 = arith.constant 0 : index
    %c0_141 = arith.constant 0 : index
    %417 = vector.load %arg13[%c1_139, %c0_140, %c0_141] : memref<2x1x128xf32, #tpu.memory_space<vmem>>, vector<1x1x128xf32>
    %418 = vector.shape_cast %417 : vector<1x1x128xf32> to vector<1x128xf32>
    %cst_142 = arith.constant dense<0.000000e+00> : vector<48xf32>
    %419 = vector.multi_reduction <add>, %414, %cst_142 [1] : vector<48x128xf32> to vector<48xf32>
    %420 = vector.shape_cast %419 : vector<48xf32> to vector<48x1xf32>
    %cst_143 = arith.constant 1.280000e+02 : f32
    %421 = vector.broadcast %cst_143 : f32 to vector<48x1xf32>
    %422 = arith.divf %420, %421 : vector<48x1xf32>
    %423 = vector.broadcast %422 : vector<48x1xf32> to vector<48x128xf32>
    %424 = arith.subf %414, %423 : vector<48x128xf32>
    %425 = arith.mulf %424, %424 : vector<48x128xf32>
    %cst_144 = arith.constant dense<0.000000e+00> : vector<48xf32>
    %426 = vector.multi_reduction <add>, %425, %cst_144 [1] : vector<48x128xf32> to vector<48xf32>
    %427 = vector.shape_cast %426 : vector<48xf32> to vector<48x1xf32>
    %cst_145 = arith.constant 1.280000e+02 : f32
    %428 = vector.broadcast %cst_145 : f32 to vector<48x1xf32>
    %429 = arith.divf %427, %428 : vector<48x1xf32>
    %cst_146 = arith.constant 9.99999997E-7 : f32
    %430 = vector.broadcast %cst_146 : f32 to vector<48x1xf32>
    %431 = arith.addf %429, %430 : vector<48x1xf32>
    %432 = math.rsqrt %431 : vector<48x1xf32>
    %433 = vector.broadcast %432 : vector<48x1xf32> to vector<48x128xf32>
    %434 = arith.mulf %424, %433 : vector<48x128xf32>
    %435 = vector.broadcast %416 : vector<1x128xf32> to vector<48x128xf32>
    %436 = arith.mulf %434, %435 : vector<48x128xf32>
    %437 = vector.broadcast %418 : vector<1x128xf32> to vector<48x128xf32>
    %438 = arith.addf %436, %437 : vector<48x128xf32>
    %439 = arith.truncf %438 : vector<48x128xf32> to vector<48x128xbf16>
    %c1_147 = arith.constant 1 : index
    %c0_148 = arith.constant 0 : index
    %c0_149 = arith.constant 0 : index
    %440 = vector.load %arg14[%c1_147, %c0_148, %c0_149] : memref<2x128x512xbf16, #tpu.memory_space<vmem>>, vector<1x128x512xbf16>
    %441 = vector.shape_cast %440 : vector<1x128x512xbf16> to vector<128x512xbf16>
    %cst_150 = arith.constant dense<0.000000e+00> : vector<48x512xf32>
    %442 = tpu.matmul %439, %441, %cst_150 {dimension_numbers = #tpu.dot_dimension_numbers<[1], [0], [0], [1], [0, 0, 1, 1], [], []>} : vector<48x128xbf16>, vector<128x512xbf16>, vector<48x512xf32> -> vector<48x512xf32>
    %c1_151 = arith.constant 1 : index
    %c0_152 = arith.constant 0 : index
    %c0_153 = arith.constant 0 : index
    %443 = vector.load %arg15[%c1_151, %c0_152, %c0_153] : memref<2x1x512xf32, #tpu.memory_space<vmem>>, vector<1x1x512xf32>
    %444 = vector.shape_cast %443 : vector<1x1x512xf32> to vector<1x512xf32>
    %445 = vector.broadcast %444 : vector<1x512xf32> to vector<48x512xf32>
    %446 = arith.addf %442, %445 : vector<48x512xf32>
    %447 = arith.mulf %446, %446 : vector<48x512xf32>
    %448 = arith.mulf %446, %447 : vector<48x512xf32>
    %cst_154 = arith.constant 4.471500e-02 : f32
    %449 = vector.broadcast %cst_154 : f32 to vector<48x512xf32>
    %450 = arith.mulf %449, %448 : vector<48x512xf32>
    %451 = arith.addf %446, %450 : vector<48x512xf32>
    %cst_155 = arith.constant 0.797884583 : f32
    %452 = vector.broadcast %cst_155 : f32 to vector<48x512xf32>
    %453 = arith.mulf %452, %451 : vector<48x512xf32>
    %454 = math.tanh %453 : vector<48x512xf32>
    %cst_156 = arith.constant 1.000000e+00 : f32
    %455 = vector.broadcast %cst_156 : f32 to vector<48x512xf32>
    %456 = arith.addf %455, %454 : vector<48x512xf32>
    %cst_157 = arith.constant 5.000000e-01 : f32
    %457 = vector.broadcast %cst_157 : f32 to vector<48x512xf32>
    %458 = arith.mulf %457, %456 : vector<48x512xf32>
    %459 = arith.mulf %446, %458 : vector<48x512xf32>
    %460 = arith.truncf %459 : vector<48x512xf32> to vector<48x512xbf16>
    %c1_158 = arith.constant 1 : index
    %c0_159 = arith.constant 0 : index
    %c0_160 = arith.constant 0 : index
    %461 = vector.load %arg16[%c1_158, %c0_159, %c0_160] : memref<2x512x128xbf16, #tpu.memory_space<vmem>>, vector<1x512x128xbf16>
    %462 = vector.shape_cast %461 : vector<1x512x128xbf16> to vector<512x128xbf16>
    %cst_161 = arith.constant dense<0.000000e+00> : vector<48x128xf32>
    %463 = tpu.matmul %460, %462, %cst_161 {dimension_numbers = #tpu.dot_dimension_numbers<[1], [0], [0], [1], [0, 0, 1, 1], [], []>} : vector<48x512xbf16>, vector<512x128xbf16>, vector<48x128xf32> -> vector<48x128xf32>
    %c1_162 = arith.constant 1 : index
    %c0_163 = arith.constant 0 : index
    %c0_164 = arith.constant 0 : index
    %464 = vector.load %arg17[%c1_162, %c0_163, %c0_164] : memref<2x1x128xf32, #tpu.memory_space<vmem>>, vector<1x1x128xf32>
    %465 = vector.shape_cast %464 : vector<1x1x128xf32> to vector<1x128xf32>
    %466 = vector.broadcast %465 : vector<1x128xf32> to vector<48x128xf32>
    %467 = arith.addf %463, %466 : vector<48x128xf32>
    %468 = arith.addf %414, %467 : vector<48x128xf32>
    %c2_i32_165 = arith.constant 2 : i32
    %469 = arith.cmpi eq, %246, %c2_i32_165 : i32
    %470 = arith.extui %469 : i1 to i32
    %c0_i32_166 = arith.constant 0 : i32
    %471 = arith.cmpi ne, %470, %c0_i32_166 : i32
    scf.if %471 {
      %c1_173 = arith.constant 1 : index
      %c0_174 = arith.constant 0 : index
      %c0_175 = arith.constant 0 : index
      %482 = vector.load %arg24[%c1_173, %c0_174, %c0_175] : memref<3x48x128xf32, #tpu.memory_space<vmem>>, vector<1x48x128xf32>
      %483 = vector.shape_cast %482 : vector<1x48x128xf32> to vector<48x128xf32>
      %484 = vector.shape_cast %468 : vector<48x128xf32> to vector<1x48x128xf32>
      tpu.vector_store %arg24[%c1_173, %c0_174, %c0_175], %484 {strides = array<i32>} : memref<3x48x128xf32, #tpu.memory_space<vmem>>, vector<1x48x128xf32>,
    } else {
    }
    %c4_i32_167 = arith.constant 4 : i32
    %472 = arith.cmpi eq, %246, %c4_i32_167 : i32
    %473 = arith.extui %472 : i1 to i32
    %c0_i32_168 = arith.constant 0 : i32
    %474 = arith.cmpi ne, %473, %c0_i32_168 : i32
    scf.if %474 {
      %c2 = arith.constant 2 : index
      %c0_173 = arith.constant 0 : index
      %c0_174 = arith.constant 0 : index
      %482 = vector.load %arg24[%c2, %c0_173, %c0_174] : memref<3x48x128xf32, #tpu.memory_space<vmem>>, vector<1x48x128xf32>
      %483 = vector.shape_cast %482 : vector<1x48x128xf32> to vector<48x128xf32>
      %484 = vector.shape_cast %468 : vector<48x128xf32> to vector<1x48x128xf32>
      tpu.vector_store %arg24[%c2, %c0_173, %c0_174], %484 {strides = array<i32>} : memref<3x48x128xf32, #tpu.memory_space<vmem>>, vector<1x48x128xf32>,
    } else {
    }
    %475 = arith.index_cast %5 : i32 to index
    %c0_169 = arith.constant 0 : index
    %c0_170 = arith.constant 0 : index
    %476 = vector.load %arg24[%475, %c0_169, %c0_170] : memref<3x48x128xf32, #tpu.memory_space<vmem>>, vector<1x48x128xf32>
    %477 = vector.shape_cast %476 : vector<1x48x128xf32> to vector<48x128xf32>
    %478 = vector.shape_cast %468 : vector<48x128xf32> to vector<1x48x128xf32>
    tpu.vector_store %arg24[%475, %c0_169, %c0_170], %478 {strides = array<i32>} : memref<3x48x128xf32, #tpu.memory_space<vmem>>, vector<1x48x128xf32>,
    %c4_i32_171 = arith.constant 4 : i32
    %479 = arith.cmpi eq, %arg0, %c4_i32_171 : i32
    %480 = arith.extui %479 : i1 to i32
    %c0_i32_172 = arith.constant 0 : i32
    %481 = arith.cmpi ne, %480, %c0_i32_172 : i32
    scf.if %481 {
      %c0_173 = arith.constant 0 : index
      %c0_174 = arith.constant 0 : index
      %c0_175 = arith.constant 0 : index
      %482 = vector.load %arg24[%c0_173, %c0_174, %c0_175] : memref<3x48x128xf32, #tpu.memory_space<vmem>>, vector<1x48x128xf32>
      %483 = vector.shape_cast %482 : vector<1x48x128xf32> to vector<48x128xf32>
      %c0_176 = arith.constant 0 : index
      %c0_177 = arith.constant 0 : index
      %c0_178 = arith.constant 0 : index
      %484 = vector.load %arg18[%c0_176, %c0_177, %c0_178] : memref<3x1x128xf32, #tpu.memory_space<vmem>>, vector<1x1x128xf32>
      %485 = vector.shape_cast %484 : vector<1x1x128xf32> to vector<1x128xf32>
      %c0_179 = arith.constant 0 : index
      %c0_180 = arith.constant 0 : index
      %c0_181 = arith.constant 0 : index
      %486 = vector.load %arg19[%c0_179, %c0_180, %c0_181] : memref<3x1x128xf32, #tpu.memory_space<vmem>>, vector<1x1x128xf32>
      %487 = vector.shape_cast %486 : vector<1x1x128xf32> to vector<1x128xf32>
      %cst_182 = arith.constant dense<0.000000e+00> : vector<48xf32>
      %488 = vector.multi_reduction <add>, %483, %cst_182 [1] : vector<48x128xf32> to vector<48xf32>
      %489 = vector.shape_cast %488 : vector<48xf32> to vector<48x1xf32>
      %cst_183 = arith.constant 1.280000e+02 : f32
      %490 = vector.broadcast %cst_183 : f32 to vector<48x1xf32>
      %491 = arith.divf %489, %490 : vector<48x1xf32>
      %492 = vector.broadcast %491 : vector<48x1xf32> to vector<48x128xf32>
      %493 = arith.subf %483, %492 : vector<48x128xf32>
      %494 = arith.mulf %493, %493 : vector<48x128xf32>
      %cst_184 = arith.constant dense<0.000000e+00> : vector<48xf32>
      %495 = vector.multi_reduction <add>, %494, %cst_184 [1] : vector<48x128xf32> to vector<48xf32>
      %496 = vector.shape_cast %495 : vector<48xf32> to vector<48x1xf32>
      %cst_185 = arith.constant 1.280000e+02 : f32
      %497 = vector.broadcast %cst_185 : f32 to vector<48x1xf32>
      %498 = arith.divf %496, %497 : vector<48x1xf32>
      %cst_186 = arith.constant 9.99999997E-7 : f32
      %499 = vector.broadcast %cst_186 : f32 to vector<48x1xf32>
      %500 = arith.addf %498, %499 : vector<48x1xf32>
      %501 = math.rsqrt %500 : vector<48x1xf32>
      %502 = vector.broadcast %501 : vector<48x1xf32> to vector<48x128xf32>
      %503 = arith.mulf %493, %502 : vector<48x128xf32>
      %504 = vector.broadcast %485 : vector<1x128xf32> to vector<48x128xf32>
      %505 = arith.mulf %503, %504 : vector<48x128xf32>
      %506 = vector.broadcast %487 : vector<1x128xf32> to vector<48x128xf32>
      %507 = arith.addf %505, %506 : vector<48x128xf32>
      %508 = vector.shape_cast %507 : vector<48x128xf32> to vector<2x24x128xf32>
      %509 = vector.extract_strided_slice %508 {offsets = [0, 0, 0], sizes = [2, 1, 128], strides = [1, 1, 1]} : vector<2x24x128xf32> to vector<2x1x128xf32>
      %510 = vector.shape_cast %509 : vector<2x1x128xf32> to vector<2x128xf32>
      %c0_187 = arith.constant 0 : index
      %c0_188 = arith.constant 0 : index
      %c0_189 = arith.constant 0 : index
      %511 = vector.load %arg23[%c0_187, %c0_188, %c0_189] : memref<3x2x128xf32, #tpu.memory_space<vmem>>, vector<1x2x128xf32>
      %512 = vector.shape_cast %511 : vector<1x2x128xf32> to vector<2x128xf32>
      %513 = vector.shape_cast %510 : vector<2x128xf32> to vector<1x2x128xf32>
      tpu.vector_store %arg23[%c0_187, %c0_188, %c0_189], %513 {strides = array<i32>} : memref<3x2x128xf32, #tpu.memory_space<vmem>>, vector<1x2x128xf32>,
      %514 = arith.truncf %510 : vector<2x128xf32> to vector<2x128xbf16>
      %c0_190 = arith.constant 0 : index
      %c0_191 = arith.constant 0 : index
      %c0_192 = arith.constant 0 : index
      %515 = vector.load %arg20[%c0_190, %c0_191, %c0_192] : memref<3x128x64xbf16, #tpu.memory_space<vmem>>, vector<1x128x64xbf16>
      %516 = vector.shape_cast %515 : vector<1x128x64xbf16> to vector<128x64xbf16>
      %cst_193 = arith.constant dense<0.000000e+00> : vector<2x64xf32>
      %517 = tpu.matmul %514, %516, %cst_193 {dimension_numbers = #tpu.dot_dimension_numbers<[1], [0], [0], [1], [0, 0, 1, 1], [], []>} : vector<2x128xbf16>, vector<128x64xbf16>, vector<2x64xf32> -> vector<2x64xf32>
      %c0_194 = arith.constant 0 : index
      %c0_195 = arith.constant 0 : index
      %c0_196 = arith.constant 0 : index
      %518 = vector.load %arg21[%c0_194, %c0_195, %c0_196] : memref<3x1x64xf32, #tpu.memory_space<vmem>>, vector<1x1x64xf32>
      %519 = vector.shape_cast %518 : vector<1x1x64xf32> to vector<1x64xf32>
      %520 = vector.broadcast %519 : vector<1x64xf32> to vector<2x64xf32>
      %521 = arith.addf %517, %520 : vector<2x64xf32>
      %c0_197 = arith.constant 0 : index
      %c0_198 = arith.constant 0 : index
      %c0_199 = arith.constant 0 : index
      %522 = vector.load %arg22[%c0_197, %c0_198, %c0_199] : memref<3x2x64xf32, #tpu.memory_space<vmem>>, vector<1x2x64xf32>
      %523 = vector.shape_cast %522 : vector<1x2x64xf32> to vector<2x64xf32>
      %524 = vector.shape_cast %521 : vector<2x64xf32> to vector<1x2x64xf32>
      tpu.vector_store %arg22[%c0_197, %c0_198, %c0_199], %524 {strides = array<i32>} : memref<3x2x64xf32, #tpu.memory_space<vmem>>, vector<1x2x64xf32>,
      %c1_200 = arith.constant 1 : index
      %c0_201 = arith.constant 0 : index
      %c0_202 = arith.constant 0 : index
      %525 = vector.load %arg24[%c1_200, %c0_201, %c0_202] : memref<3x48x128xf32, #tpu.memory_space<vmem>>, vector<1x48x128xf32>
      %526 = vector.shape_cast %525 : vector<1x48x128xf32> to vector<48x128xf32>
      %c1_203 = arith.constant 1 : index
      %c0_204 = arith.constant 0 : index
      %c0_205 = arith.constant 0 : index
      %527 = vector.load %arg18[%c1_203, %c0_204, %c0_205] : memref<3x1x128xf32, #tpu.memory_space<vmem>>, vector<1x1x128xf32>
      %528 = vector.shape_cast %527 : vector<1x1x128xf32> to vector<1x128xf32>
      %c1_206 = arith.constant 1 : index
      %c0_207 = arith.constant 0 : index
      %c0_208 = arith.constant 0 : index
      %529 = vector.load %arg19[%c1_206, %c0_207, %c0_208] : memref<3x1x128xf32, #tpu.memory_space<vmem>>, vector<1x1x128xf32>
      %530 = vector.shape_cast %529 : vector<1x1x128xf32> to vector<1x128xf32>
      %cst_209 = arith.constant dense<0.000000e+00> : vector<48xf32>
      %531 = vector.multi_reduction <add>, %526, %cst_209 [1] : vector<48x128xf32> to vector<48xf32>
      %532 = vector.shape_cast %531 : vector<48xf32> to vector<48x1xf32>
      %cst_210 = arith.constant 1.280000e+02 : f32
      %533 = vector.broadcast %cst_210 : f32 to vector<48x1xf32>
      %534 = arith.divf %532, %533 : vector<48x1xf32>
      %535 = vector.broadcast %534 : vector<48x1xf32> to vector<48x128xf32>
      %536 = arith.subf %526, %535 : vector<48x128xf32>
      %537 = arith.mulf %536, %536 : vector<48x128xf32>
      %cst_211 = arith.constant dense<0.000000e+00> : vector<48xf32>
      %538 = vector.multi_reduction <add>, %537, %cst_211 [1] : vector<48x128xf32> to vector<48xf32>
      %539 = vector.shape_cast %538 : vector<48xf32> to vector<48x1xf32>
      %cst_212 = arith.constant 1.280000e+02 : f32
      %540 = vector.broadcast %cst_212 : f32 to vector<48x1xf32>
      %541 = arith.divf %539, %540 : vector<48x1xf32>
      %cst_213 = arith.constant 9.99999997E-7 : f32
      %542 = vector.broadcast %cst_213 : f32 to vector<48x1xf32>
      %543 = arith.addf %541, %542 : vector<48x1xf32>
      %544 = math.rsqrt %543 : vector<48x1xf32>
      %545 = vector.broadcast %544 : vector<48x1xf32> to vector<48x128xf32>
      %546 = arith.mulf %536, %545 : vector<48x128xf32>
      %547 = vector.broadcast %528 : vector<1x128xf32> to vector<48x128xf32>
      %548 = arith.mulf %546, %547 : vector<48x128xf32>
      %549 = vector.broadcast %530 : vector<1x128xf32> to vector<48x128xf32>
      %550 = arith.addf %548, %549 : vector<48x128xf32>
      %551 = vector.shape_cast %550 : vector<48x128xf32> to vector<2x24x128xf32>
      %552 = vector.extract_strided_slice %551 {offsets = [0, 0, 0], sizes = [2, 1, 128], strides = [1, 1, 1]} : vector<2x24x128xf32> to vector<2x1x128xf32>
      %553 = vector.shape_cast %552 : vector<2x1x128xf32> to vector<2x128xf32>
      %c1_214 = arith.constant 1 : index
      %c0_215 = arith.constant 0 : index
      %c0_216 = arith.constant 0 : index
      %554 = vector.load %arg23[%c1_214, %c0_215, %c0_216] : memref<3x2x128xf32, #tpu.memory_space<vmem>>, vector<1x2x128xf32>
      %555 = vector.shape_cast %554 : vector<1x2x128xf32> to vector<2x128xf32>
      %556 = vector.shape_cast %553 : vector<2x128xf32> to vector<1x2x128xf32>
      tpu.vector_store %arg23[%c1_214, %c0_215, %c0_216], %556 {strides = array<i32>} : memref<3x2x128xf32, #tpu.memory_space<vmem>>, vector<1x2x128xf32>,
      %557 = arith.truncf %553 : vector<2x128xf32> to vector<2x128xbf16>
      %c1_217 = arith.constant 1 : index
      %c0_218 = arith.constant 0 : index
      %c0_219 = arith.constant 0 : index
      %558 = vector.load %arg20[%c1_217, %c0_218, %c0_219] : memref<3x128x64xbf16, #tpu.memory_space<vmem>>, vector<1x128x64xbf16>
      %559 = vector.shape_cast %558 : vector<1x128x64xbf16> to vector<128x64xbf16>
      %cst_220 = arith.constant dense<0.000000e+00> : vector<2x64xf32>
      %560 = tpu.matmul %557, %559, %cst_220 {dimension_numbers = #tpu.dot_dimension_numbers<[1], [0], [0], [1], [0, 0, 1, 1], [], []>} : vector<2x128xbf16>, vector<128x64xbf16>, vector<2x64xf32> -> vector<2x64xf32>
      %c1_221 = arith.constant 1 : index
      %c0_222 = arith.constant 0 : index
      %c0_223 = arith.constant 0 : index
      %561 = vector.load %arg21[%c1_221, %c0_222, %c0_223] : memref<3x1x64xf32, #tpu.memory_space<vmem>>, vector<1x1x64xf32>
      %562 = vector.shape_cast %561 : vector<1x1x64xf32> to vector<1x64xf32>
      %563 = vector.broadcast %562 : vector<1x64xf32> to vector<2x64xf32>
      %564 = arith.addf %560, %563 : vector<2x64xf32>
      %c1_224 = arith.constant 1 : index
      %c0_225 = arith.constant 0 : index
      %c0_226 = arith.constant 0 : index
      %565 = vector.load %arg22[%c1_224, %c0_225, %c0_226] : memref<3x2x64xf32, #tpu.memory_space<vmem>>, vector<1x2x64xf32>
      %566 = vector.shape_cast %565 : vector<1x2x64xf32> to vector<2x64xf32>
      %567 = vector.shape_cast %564 : vector<2x64xf32> to vector<1x2x64xf32>
      tpu.vector_store %arg22[%c1_224, %c0_225, %c0_226], %567 {strides = array<i32>} : memref<3x2x64xf32, #tpu.memory_space<vmem>>, vector<1x2x64xf32>,
      %c2 = arith.constant 2 : index
      %c0_227 = arith.constant 0 : index
      %c0_228 = arith.constant 0 : index
      %568 = vector.load %arg24[%c2, %c0_227, %c0_228] : memref<3x48x128xf32, #tpu.memory_space<vmem>>, vector<1x48x128xf32>
      %569 = vector.shape_cast %568 : vector<1x48x128xf32> to vector<48x128xf32>
      %c2_229 = arith.constant 2 : index
      %c0_230 = arith.constant 0 : index
      %c0_231 = arith.constant 0 : index
      %570 = vector.load %arg18[%c2_229, %c0_230, %c0_231] : memref<3x1x128xf32, #tpu.memory_space<vmem>>, vector<1x1x128xf32>
      %571 = vector.shape_cast %570 : vector<1x1x128xf32> to vector<1x128xf32>
      %c2_232 = arith.constant 2 : index
      %c0_233 = arith.constant 0 : index
      %c0_234 = arith.constant 0 : index
      %572 = vector.load %arg19[%c2_232, %c0_233, %c0_234] : memref<3x1x128xf32, #tpu.memory_space<vmem>>, vector<1x1x128xf32>
      %573 = vector.shape_cast %572 : vector<1x1x128xf32> to vector<1x128xf32>
      %cst_235 = arith.constant dense<0.000000e+00> : vector<48xf32>
      %574 = vector.multi_reduction <add>, %569, %cst_235 [1] : vector<48x128xf32> to vector<48xf32>
      %575 = vector.shape_cast %574 : vector<48xf32> to vector<48x1xf32>
      %cst_236 = arith.constant 1.280000e+02 : f32
      %576 = vector.broadcast %cst_236 : f32 to vector<48x1xf32>
      %577 = arith.divf %575, %576 : vector<48x1xf32>
      %578 = vector.broadcast %577 : vector<48x1xf32> to vector<48x128xf32>
      %579 = arith.subf %569, %578 : vector<48x128xf32>
      %580 = arith.mulf %579, %579 : vector<48x128xf32>
      %cst_237 = arith.constant dense<0.000000e+00> : vector<48xf32>
      %581 = vector.multi_reduction <add>, %580, %cst_237 [1] : vector<48x128xf32> to vector<48xf32>
      %582 = vector.shape_cast %581 : vector<48xf32> to vector<48x1xf32>
      %cst_238 = arith.constant 1.280000e+02 : f32
      %583 = vector.broadcast %cst_238 : f32 to vector<48x1xf32>
      %584 = arith.divf %582, %583 : vector<48x1xf32>
      %cst_239 = arith.constant 9.99999997E-7 : f32
      %585 = vector.broadcast %cst_239 : f32 to vector<48x1xf32>
      %586 = arith.addf %584, %585 : vector<48x1xf32>
      %587 = math.rsqrt %586 : vector<48x1xf32>
      %588 = vector.broadcast %587 : vector<48x1xf32> to vector<48x128xf32>
      %589 = arith.mulf %579, %588 : vector<48x128xf32>
      %590 = vector.broadcast %571 : vector<1x128xf32> to vector<48x128xf32>
      %591 = arith.mulf %589, %590 : vector<48x128xf32>
      %592 = vector.broadcast %573 : vector<1x128xf32> to vector<48x128xf32>
      %593 = arith.addf %591, %592 : vector<48x128xf32>
      %594 = vector.shape_cast %593 : vector<48x128xf32> to vector<2x24x128xf32>
      %595 = vector.extract_strided_slice %594 {offsets = [0, 0, 0], sizes = [2, 1, 128], strides = [1, 1, 1]} : vector<2x24x128xf32> to vector<2x1x128xf32>
      %596 = vector.shape_cast %595 : vector<2x1x128xf32> to vector<2x128xf32>
      %c2_240 = arith.constant 2 : index
      %c0_241 = arith.constant 0 : index
      %c0_242 = arith.constant 0 : index
      %597 = vector.load %arg23[%c2_240, %c0_241, %c0_242] : memref<3x2x128xf32, #tpu.memory_space<vmem>>, vector<1x2x128xf32>
      %598 = vector.shape_cast %597 : vector<1x2x128xf32> to vector<2x128xf32>
      %599 = vector.shape_cast %596 : vector<2x128xf32> to vector<1x2x128xf32>
      tpu.vector_store %arg23[%c2_240, %c0_241, %c0_242], %599 {strides = array<i32>} : memref<3x2x128xf32, #tpu.memory_space<vmem>>, vector<1x2x128xf32>,
      %600 = arith.truncf %596 : vector<2x128xf32> to vector<2x128xbf16>
      %c2_243 = arith.constant 2 : index
      %c0_244 = arith.constant 0 : index
      %c0_245 = arith.constant 0 : index
      %601 = vector.load %arg20[%c2_243, %c0_244, %c0_245] : memref<3x128x64xbf16, #tpu.memory_space<vmem>>, vector<1x128x64xbf16>
      %602 = vector.shape_cast %601 : vector<1x128x64xbf16> to vector<128x64xbf16>
      %cst_246 = arith.constant dense<0.000000e+00> : vector<2x64xf32>
      %603 = tpu.matmul %600, %602, %cst_246 {dimension_numbers = #tpu.dot_dimension_numbers<[1], [0], [0], [1], [0, 0, 1, 1], [], []>} : vector<2x128xbf16>, vector<128x64xbf16>, vector<2x64xf32> -> vector<2x64xf32>
      %c2_247 = arith.constant 2 : index
      %c0_248 = arith.constant 0 : index
      %c0_249 = arith.constant 0 : index
      %604 = vector.load %arg21[%c2_247, %c0_248, %c0_249] : memref<3x1x64xf32, #tpu.memory_space<vmem>>, vector<1x1x64xf32>
      %605 = vector.shape_cast %604 : vector<1x1x64xf32> to vector<1x64xf32>
      %606 = vector.broadcast %605 : vector<1x64xf32> to vector<2x64xf32>
      %607 = arith.addf %603, %606 : vector<2x64xf32>
      %c2_250 = arith.constant 2 : index
      %c0_251 = arith.constant 0 : index
      %c0_252 = arith.constant 0 : index
      %608 = vector.load %arg22[%c2_250, %c0_251, %c0_252] : memref<3x2x64xf32, #tpu.memory_space<vmem>>, vector<1x2x64xf32>
      %609 = vector.shape_cast %608 : vector<1x2x64xf32> to vector<2x64xf32>
      %610 = vector.shape_cast %607 : vector<2x64xf32> to vector<1x2x64xf32>
      tpu.vector_store %arg22[%c2_250, %c0_251, %c0_252], %610 {strides = array<i32>} : memref<3x2x64xf32, #tpu.memory_space<vmem>>, vector<1x2x64xf32>,
    } else {
    }
    return
  }
  func.func @transform_0(%arg0: i32) -> (i32, i32) {
    %c0_i32 = arith.constant 0 : i32
    %c0_i32_0 = arith.constant 0 : i32
    %c0_i32_1 = arith.constant 0 : i32
    return %c0_i32, %c0_i32_0 : i32, i32
  }
  func.func @transform_1(%arg0: i32) -> (i32, i32) {
    %c0_i32 = arith.constant 0 : i32
    %c0_i32_0 = arith.constant 0 : i32
    %c0_i32_1 = arith.constant 0 : i32
    return %c0_i32, %c0_i32_0 : i32, i32
  }
  func.func @transform_2(%arg0: i32) -> (i32, i32) {
    %c0_i32 = arith.constant 0 : i32
    %c0_i32_0 = arith.constant 0 : i32
    %c0_i32_1 = arith.constant 0 : i32
    return %c0_i32, %c0_i32_0 : i32, i32
  }
  func.func @transform_3(%arg0: i32) -> (i32, i32) {
    %c0_i32 = arith.constant 0 : i32
    %c0_i32_0 = arith.constant 0 : i32
    %c0_i32_1 = arith.constant 0 : i32
    return %c0_i32, %c0_i32_0 : i32, i32
  }
  func.func @transform_4(%arg0: i32) -> (i32, i32) {
    %c0_i32 = arith.constant 0 : i32
    %c0_i32_0 = arith.constant 0 : i32
    %c0_i32_1 = arith.constant 0 : i32
    return %c0_i32, %c0_i32_0 : i32, i32
  }
  func.func @transform_5(%arg0: i32) -> (i32, i32, i32) {
    %c0_i32 = arith.constant 0 : i32
    %c0_i32_0 = arith.constant 0 : i32
    %c0_i32_1 = arith.constant 0 : i32
    return %arg0, %c0_i32, %c0_i32_0 : i32, i32, i32
  }
  func.func @transform_6(%arg0: i32) -> (i32, i32, i32) {
    %c0_i32 = arith.constant 0 : i32
    %c0_i32_0 = arith.constant 0 : i32
    %c0_i32_1 = arith.constant 0 : i32
    return %arg0, %c0_i32, %c0_i32_0 : i32, i32, i32
  }
  func.func @transform_7(%arg0: i32) -> (i32, i32, i32) {
    %c0_i32 = arith.constant 0 : i32
    %c0_i32_0 = arith.constant 0 : i32
    %c0_i32_1 = arith.constant 0 : i32
    return %arg0, %c0_i32, %c0_i32_0 : i32, i32, i32
  }
  func.func @transform_8(%arg0: i32) -> (i32, i32, i32) {
    %c0_i32 = arith.constant 0 : i32
    %c0_i32_0 = arith.constant 0 : i32
    %c0_i32_1 = arith.constant 0 : i32
    return %arg0, %c0_i32, %c0_i32_0 : i32, i32, i32
  }
  func.func @transform_9(%arg0: i32) -> (i32, i32, i32) {
    %c0_i32 = arith.constant 0 : i32
    %c0_i32_0 = arith.constant 0 : i32
    %c0_i32_1 = arith.constant 0 : i32
    return %arg0, %c0_i32, %c0_i32_0 : i32, i32, i32
  }
  func.func @transform_10(%arg0: i32) -> (i32, i32, i32) {
    %c0_i32 = arith.constant 0 : i32
    %c0_i32_0 = arith.constant 0 : i32
    %c0_i32_1 = arith.constant 0 : i32
    return %arg0, %c0_i32, %c0_i32_0 : i32, i32, i32
  }
  func.func @transform_11(%arg0: i32) -> (i32, i32, i32) {
    %c0_i32 = arith.constant 0 : i32
    %c0_i32_0 = arith.constant 0 : i32
    %c0_i32_1 = arith.constant 0 : i32
    return %arg0, %c0_i32, %c0_i32_0 : i32, i32, i32
  }
  func.func @transform_12(%arg0: i32) -> (i32, i32, i32) {
    %c0_i32 = arith.constant 0 : i32
    %c0_i32_0 = arith.constant 0 : i32
    %c0_i32_1 = arith.constant 0 : i32
    return %arg0, %c0_i32, %c0_i32_0 : i32, i32, i32
  }
  func.func @transform_13(%arg0: i32) -> (i32, i32, i32) {
    %c0_i32 = arith.constant 0 : i32
    %c0_i32_0 = arith.constant 0 : i32
    %c0_i32_1 = arith.constant 0 : i32
    return %arg0, %c0_i32, %c0_i32_0 : i32, i32, i32
  }
  func.func @transform_14(%arg0: i32) -> (i32, i32, i32) {
    %c0_i32 = arith.constant 0 : i32
    %c0_i32_0 = arith.constant 0 : i32
    %c0_i32_1 = arith.constant 0 : i32
    return %arg0, %c0_i32, %c0_i32_0 : i32, i32, i32
  }
  func.func @transform_15(%arg0: i32) -> (i32, i32, i32) {
    %c0_i32 = arith.constant 0 : i32
    %c0_i32_0 = arith.constant 0 : i32
    %c0_i32_1 = arith.constant 0 : i32
    return %arg0, %c0_i32, %c0_i32_0 : i32, i32, i32
  }
  func.func @transform_16(%arg0: i32) -> (i32, i32, i32) {
    %c0_i32 = arith.constant 0 : i32
    %c0_i32_0 = arith.constant 0 : i32
    %c0_i32_1 = arith.constant 0 : i32
    return %arg0, %c0_i32, %c0_i32_0 : i32, i32, i32
  }
  func.func @transform_17(%arg0: i32) -> (i32, i32, i32) {
    %c0_i32 = arith.constant 0 : i32
    %c0_i32_0 = arith.constant 0 : i32
    %c0_i32_1 = arith.constant 0 : i32
    %c0_i32_2 = arith.constant 0 : i32
    return %c0_i32, %c0_i32_0, %c0_i32_1 : i32, i32, i32
  }
  func.func @transform_18(%arg0: i32) -> (i32, i32, i32) {
    %c0_i32 = arith.constant 0 : i32
    %c0_i32_0 = arith.constant 0 : i32
    %c0_i32_1 = arith.constant 0 : i32
    %c0_i32_2 = arith.constant 0 : i32
    return %c0_i32, %c0_i32_0, %c0_i32_1 : i32, i32, i32
  }
  func.func @transform_19(%arg0: i32) -> (i32, i32, i32) {
    %c0_i32 = arith.constant 0 : i32
    %c0_i32_0 = arith.constant 0 : i32
    %c0_i32_1 = arith.constant 0 : i32
    %c0_i32_2 = arith.constant 0 : i32
    return %c0_i32, %c0_i32_0, %c0_i32_1 : i32, i32, i32
  }
  func.func @transform_20(%arg0: i32) -> (i32, i32, i32) {
    %c0_i32 = arith.constant 0 : i32
    %c0_i32_0 = arith.constant 0 : i32
    %c0_i32_1 = arith.constant 0 : i32
    %c0_i32_2 = arith.constant 0 : i32
    return %c0_i32, %c0_i32_0, %c0_i32_1 : i32, i32, i32
  }
  func.func @transform_21(%arg0: i32) -> (i32, i32, i32) {
    %c0_i32 = arith.constant 0 : i32
    %c0_i32_0 = arith.constant 0 : i32
    %c0_i32_1 = arith.constant 0 : i32
    %c0_i32_2 = arith.constant 0 : i32
    return %c0_i32, %c0_i32_0, %c0_i32_1 : i32, i32, i32
  }
  func.func @transform_22(%arg0: i32) -> (i32, i32, i32) {
    %c0_i32 = arith.constant 0 : i32
    %c0_i32_0 = arith.constant 0 : i32
    %c0_i32_1 = arith.constant 0 : i32
    %c0_i32_2 = arith.constant 0 : i32
    return %c0_i32, %c0_i32_0, %c0_i32_1 : i32, i32, i32
  }
}

</mosaic_0001>

<llo_original>
// kernel: vit_forward.1
$region0: #{vit_forward.1}
  #allocation0 [shape = 'u32[]', space=smem, size = 0x4, offset = 0x4, fixed_abs, tag = 'smem constant byte address 0x4 - core index']
  #allocation1 [shape = 'u32[144,128]{1,0:T(1,128)}', space=vmem, size = 0x12000, scoped, tag = 'internal scratch']
  #allocation2 [shape = 'f32[3,48,128]{2,1,0:T(8,128)}', space=vmem, size = 0x12000, scoped, tag = 'scratch operand']
  %s0 = inlined_call_operand.vmem [shape: f32[32,48], index: 0, kind: input, shape index: {}]
  %s1 = inlined_call_operand.hbm [shape: bf16[48,128], index: 1, kind: input, shape index: {}]
  %s2 = inlined_call_operand.hbm [shape: f32[1,128], index: 2, kind: input, shape index: {}]
  %s3 = inlined_call_operand.hbm [shape: f32[1,128], index: 3, kind: input, shape index: {}]
  %s4 = inlined_call_operand.hbm [shape: f32[24,128], index: 4, kind: input, shape index: {}]
  %s5 = inlined_call_operand.hbm [shape: f32[10,1,128], index: 5, kind: input, shape index: {}]
  %s6 = inlined_call_operand.hbm [shape: f32[10,1,128], index: 6, kind: input, shape index: {}]
  %s7 = inlined_call_operand.vmem [shape: bf16[10,128,384], index: 7, kind: input, shape index: {}]
  %s8 = inlined_call_operand.hbm [shape: f32[10,1,384], index: 8, kind: input, shape index: {}]
  %s9 = inlined_call_operand.hbm [shape: bf16[10,128,128], index: 9, kind: input, shape index: {}]
  %s10 = inlined_call_operand.hbm [shape: f32[10,1,128], index: 10, kind: input, shape index: {}]
  %s11 = inlined_call_operand.hbm [shape: f32[10,1,128], index: 11, kind: input, shape index: {}]
  %s12 = inlined_call_operand.hbm [shape: f32[10,1,128], index: 12, kind: input, shape index: {}]
  %s13 = inlined_call_operand.hbm [shape: bf16[10,128,512], index: 13, kind: input, shape index: {}]
  %s14 = inlined_call_operand.hbm [shape: f32[10,1,512], index: 14, kind: input, shape index: {}]
  %s15 = inlined_call_operand.hbm [shape: bf16[10,512,128], index: 15, kind: input, shape index: {}]
  %s16 = inlined_call_operand.hbm [shape: f32[10,1,128], index: 16, kind: input, shape index: {}]
  %s17 = inlined_call_operand.hbm [shape: f32[3,1,128], index: 17, kind: input, shape index: {}]
  %s18 = inlined_call_operand.hbm [shape: f32[3,1,128], index: 18, kind: input, shape index: {}]
  %s19 = inlined_call_operand.vmem [shape: bf16[3,128,64], index: 19, kind: input, shape index: {}]
  %s20 = inlined_call_operand.hbm [shape: f32[3,1,64], index: 20, kind: input, shape index: {}]
  %s21 = inlined_call_operand.vmem [shape: f32[3,2,64], index: 21, kind: output, shape index: {0}]
  %s22 = inlined_call_operand.vmem [shape: f32[3,2,128], index: 22, kind: output, shape index: {1}]
  %23 = xla_tuple %s21, %s22
  %s24 = sld [smem:[#allocation0]]
  $region221: #{vit_forward.1} parent=0
    _
  %s26 = ssub.s32 1, %s24
  %s27 = scalar_select 0, %s26, %s24
  $region1: #{vit_forward.1} parent=0
    #allocation3 [shape = 'u8[12288]{0}', space=vmem, size = 0x3000, scoped, tag = 'input window, operand 1, single buffered']
    #allocation4 [shape = 's32[2]{0}', space=sflag, size = 0x8, scoped, tag = 'scoped memory for vit_forward.1']
    #allocation5 [shape = 'u8[512]{0}', space=vmem, size = 0x400, scoped, tag = 'input window, operand 2, single buffered']
    #allocation6 [shape = 's32[1]{0}', space=sflag, size = 0x4, scoped, tag = 'scoped memory for vit_forward.1']
    #allocation7 [shape = 'u8[512]{0}', space=vmem, size = 0x400, scoped, tag = 'input window, operand 3, single buffered']
    #allocation8 [shape = 'u8[12288]{0}', space=vmem, size = 0x3000, scoped, tag = 'input window, operand 4, single buffered']
    #allocation9 [shape = 's32[1]{0}', space=sflag, size = 0x4, scoped, tag = 'scoped memory for vit_forward.1']
    #allocation10 [shape = 'u8[2048]{0}', space=vmem, size = 0x800, scoped, tag = 'input window, operand 5']
    #allocation11 [shape = 'u8[2048]{0}', space=vmem, size = 0x800, scoped, tag = 'input window, operand 6']
    #allocation12 [shape = 'u8[6144]{0}', space=vmem, size = 0x1800, scoped, tag = 'input window, operand 8']
    #allocation13 [shape = 'u8[131072]{0}', space=vmem, size = 0x20000, scoped, tag = 'input window, operand 9']
    #allocation14 [shape = 'u8[2048]{0}', space=vmem, size = 0x800, scoped, tag = 'input window, operand 10']
    #allocation15 [shape = 'u8[2048]{0}', space=vmem, size = 0x800, scoped, tag = 'input window, operand 11']
    #allocation16 [shape = 'u8[2048]{0}', space=vmem, size = 0x800, scoped, tag = 'input window, operand 12']
    #allocation17 [shape = 'u8[524288]{0}', space=vmem, size = 0x80000, scoped, tag = 'input window, operand 13']
    #allocation18 [shape = 'u8[8192]{0}', space=vmem, size = 0x2000, scoped, tag = 'input window, operand 14']
    #allocation19 [shape = 'u8[524288]{0}', space=vmem, size = 0x80000, scoped, tag = 'input window, operand 15']
    #allocation20 [shape = 'u8[2048]{0}', space=vmem, size = 0x800, scoped, tag = 'input window, operand 16']
    #allocation21 [shape = 'u8[1536]{0}', space=vmem, size = 0x800, scoped, tag = 'input window, operand 17, single buffered']
    #allocation22 [shape = 'u8[1536]{0}', space=vmem, size = 0x800, scoped, tag = 'input window, operand 18, single buffered']
    #allocation23 [shape = 'u8[1536]{0}', space=vmem, size = 0x800, scoped, tag = 'input window, operand 20, single buffered']
    #allocation24 [shape = 's32[1]{0}', space=sflag, size = 0x4, scoped, tag = 'scoped memory for vit_forward.1']
    %28 = vsyncpa [#allocation4], 0
    %29 = vsyncpa [#allocation6], 0
    %30 = vsyncpa [#allocation9], 0
    %31 = vsyncpa [#allocation24], 0
    loop: start=0, step=1, limit=7
    $region2: #{vit_forward.1} parent=1 // loop_pre_header
      _
    $region3: #{vit_forward.1} parent=1 // loop_header
      %s33 = sphi 0, %s37
      %p34 = scmp.ge.s32.totalorder %s33, 7
      %s41 = sphi 0, %s41
      %s43 = sphi 0, %s41
      %s44 = sphi 0, %s43
      %s58 = sphi 0, %s44
      %s62 = sphi 0, %s62
      %s64 = sphi 0, %s62
      %s65 = sphi 0, %s64
      %s79 = sphi 0, %s65
      %s83 = sphi 0, %s83
      %s85 = sphi 0, %s83
      %s86 = sphi 0, %s85
      %s100 = sphi 0, %s86
      %s104 = sphi 0, %s104
      %s106 = sphi 0, %s104
      %s107 = sphi 0, %s106
      %s121 = sphi 0, %s107
      %s125 = sphi 0, %s125
      %s127 = sphi 0, %s125
      %s128 = sphi 0, %s127
      %s142 = sphi 0, %s128
      %s148 = sphi 0, %s150
      %s151 = sphi 0, %s148
      %s152 = sphi 0, %s151
      %s168 = sphi 0, %s152
      %s174 = sphi 0, %s176
      %s177 = sphi 0, %s174
      %s178 = sphi 0, %s177
      %s194 = sphi 0, %s178
      %s200 = sphi 0, %s202
      %s203 = sphi 0, %s200
      %s204 = sphi 0, %s203
      %s220 = sphi 0, %s204
      %s226 = sphi 0, %s228
      %s229 = sphi 0, %s226
      %s230 = sphi 0, %s229
      %s246 = sphi 0, %s230
      %s252 = sphi 0, %s254
      %s255 = sphi 0, %s252
      %s256 = sphi 0, %s255
      %s272 = sphi 0, %s256
      %s278 = sphi 0, %s280
      %s281 = sphi 0, %s278
      %s282 = sphi 0, %s281
      %s298 = sphi 0, %s282
      %s304 = sphi 0, %s306
      %s307 = sphi 0, %s304
      %s308 = sphi 0, %s307
      %s324 = sphi 0, %s308
      %s330 = sphi 0, %s332
      %s333 = sphi 0, %s330
      %s334 = sphi 0, %s333
      %s350 = sphi 0, %s334
      %s356 = sphi 0, %s358
      %s359 = sphi 0, %s356
      %s360 = sphi 0, %s359
      %s376 = sphi 0, %s360
      %s382 = sphi 0, %s384
      %s385 = sphi 0, %s382
      %s386 = sphi 0, %s385
      %s402 = sphi 0, %s386
      %s408 = sphi 0, %s410
      %s411 = sphi 0, %s408
      %s412 = sphi 0, %s411
      %s428 = sphi 0, %s412
      %s434 = sphi 0, %s436
      %s437 = sphi 0, %s434
      %s438 = sphi 0, %s437
      %s454 = sphi 0, %s438
      %s458 = sphi 0, %s458
      %s460 = sphi 0, %s458
      %s461 = sphi 0, %s460
      %s475 = sphi 0, %s461
      %s479 = sphi 0, %s479
      %s481 = sphi 0, %s479
      %s482 = sphi 0, %s481
      %s496 = sphi 0, %s482
      %s500 = sphi 0, %s500
      %s502 = sphi 0, %s500
      %s503 = sphi 0, %s502
      %s517 = sphi 0, %s503
      %s521 = sphi 0, %s521
      %s523 = sphi 0, %s521
      %s524 = sphi 0, %s523
      %s538 = sphi 0, %s524
      %s542 = sphi 0, %s542
      %s544 = sphi 0, %s542
      %s545 = sphi 0, %s544
      %s559 = sphi 0, %s545
      %s563 = sphi 0, %s563
      %s565 = sphi 0, %s563
      %s566 = sphi 0, %s565
      %s580 = sphi 0, %s566
    $region4: #{vit_forward.1} parent=1 // loop_header_branch
      %36 = sbr.rel (%p34) target = $region8
    $region5: #{vit_forward.1} parent=1 // loop_body
      %s38 = ssub.s32 %s33, 1
      %s39 = ssub.s32 %s33, 2
      %s40 = sadd.s32 %s33, 1
      %s42 = sadd.s32 %s41, 1
      %p45 = scmp.eq.s32.totalorder %s33, 4
      %p46 = scmp.ne.s32.totalorder %s41, %s43
      %p47 = scmp.eq.s32.totalorder %s33, 0
      %p48 = por %p46, %p47
      %p49 = scmp.ne.s32.totalorder %s41, %s43
      %p50 = scmp.eq.s32.totalorder %s38, 4
      %p51 = por %p49, %p50
      %p52 = scmp.ne.s32.totalorder %s43, %s44
      %p53 = scmp.eq.s32.totalorder %s38, 0
      %p54 = por %p52, %p53
      %p55 = scmp.ne.s32.totalorder %s43, %s44
      %p56 = scmp.eq.s32.totalorder %s39, 4
      %p57 = por %p55, %p56
      %p59 = scmp.ne.s32.totalorder %s44, %s58
      %p60 = scmp.eq.s32.totalorder %s39, 0
      %p61 = por %p59, %p60
      %s63 = sadd.s32 %s62, 1
      %p66 = scmp.eq.s32.totalorder %s33, 4
      %p67 = scmp.ne.s32.totalorder %s62, %s64
      %p68 = scmp.eq.s32.totalorder %s33, 0
      %p69 = por %p67, %p68
      %p70 = scmp.ne.s32.totalorder %s62, %s64
      %p71 = scmp.eq.s32.totalorder %s38, 4
      %p72 = por %p70, %p71
      %p73 = scmp.ne.s32.totalorder %s64, %s65
      %p74 = scmp.eq.s32.totalorder %s38, 0
      %p75 = por %p73, %p74
      %p76 = scmp.ne.s32.totalorder %s64, %s65
      %p77 = scmp.eq.s32.totalorder %s39, 4
      %p78 = por %p76, %p77
      %p80 = scmp.ne.s32.totalorder %s65, %s79
      %p81 = scmp.eq.s32.totalorder %s39, 0
      %p82 = por %p80, %p81
      %s84 = sadd.s32 %s83, 1
      %p87 = scmp.eq.s32.totalorder %s33, 4
      %p88 = scmp.ne.s32.totalorder %s83, %s85
      %p89 = scmp.eq.s32.totalorder %s33, 0
      %p90 = por %p88, %p89
      %p91 = scmp.ne.s32.totalorder %s83, %s85
      %p92 = scmp.eq.s32.totalorder %s38, 4
      %p93 = por %p91, %p92
      %p94 = scmp.ne.s32.totalorder %s85, %s86
      %p95 = scmp.eq.s32.totalorder %s38, 0
      %p96 = por %p94, %p95
      %p97 = scmp.ne.s32.totalorder %s85, %s86
      %p98 = scmp.eq.s32.totalorder %s39, 4
      %p99 = por %p97, %p98
      %p101 = scmp.ne.s32.totalorder %s86, %s100
      %p102 = scmp.eq.s32.totalorder %s39, 0
      %p103 = por %p101, %p102
      %s105 = sadd.s32 %s104, 1
      %p108 = scmp.eq.s32.totalorder %s33, 4
      %p109 = scmp.ne.s32.totalorder %s104, %s106
      %p110 = scmp.eq.s32.totalorder %s33, 0
      %p111 = por %p109, %p110
      %p112 = scmp.ne.s32.totalorder %s104, %s106
      %p113 = scmp.eq.s32.totalorder %s38, 4
      %p114 = por %p112, %p113
      %p115 = scmp.ne.s32.totalorder %s106, %s107
      %p116 = scmp.eq.s32.totalorder %s38, 0
      %p117 = por %p115, %p116
      %p118 = scmp.ne.s32.totalorder %s106, %s107
      %p119 = scmp.eq.s32.totalorder %s39, 4
      %p120 = por %p118, %p119
      %p122 = scmp.ne.s32.totalorder %s107, %s121
      %p123 = scmp.eq.s32.totalorder %s39, 0
      %p124 = por %p122, %p123
      %s126 = sadd.s32 %s125, 1
      %p129 = scmp.eq.s32.totalorder %s33, 4
      %p130 = scmp.ne.s32.totalorder %s125, %s127
      %p131 = scmp.eq.s32.totalorder %s33, 0
      %p132 = por %p130, %p131
      %p133 = scmp.ne.s32.totalorder %s125, %s127
      %p134 = scmp.eq.s32.totalorder %s38, 4
      %p135 = por %p133, %p134
      %p136 = scmp.ne.s32.totalorder %s127, %s128
      %p137 = scmp.eq.s32.totalorder %s38, 0
      %p138 = por %p136, %p137
      %p139 = scmp.ne.s32.totalorder %s127, %s128
      %p140 = scmp.eq.s32.totalorder %s39, 4
      %p141 = por %p139, %p140
      %p143 = scmp.ne.s32.totalorder %s128, %s142
      %p144 = scmp.eq.s32.totalorder %s39, 0
      %p145 = por %p143, %p144
      %s146 = ssub.s32 %s33, %s40
      %p147 = scmp.eq.s32.totalorder %s146, 0
      %s149 = sadd.s32 %s148, 1
      %s150 = scalar_select %p147, %s148, %s149
      %p153 = pneg %p147
      %p154 = scmp.eq.s32.totalorder %s33, 4
      %p155 = por %p153, %p154
      %p156 = scmp.ne.s32.totalorder %s148, %s151
      %p157 = scmp.eq.s32.totalorder %s33, 0
      %p158 = por %p156, %p157
      %p159 = scmp.ne.s32.totalorder %s148, %s151
      %p160 = scmp.eq.s32.totalorder %s38, 4
      %p161 = por %p159, %p160
      %p162 = scmp.ne.s32.totalorder %s151, %s152
      %p163 = scmp.eq.s32.totalorder %s38, 0
      %p164 = por %p162, %p163
      %p165 = scmp.ne.s32.totalorder %s151, %s152
      %p166 = scmp.eq.s32.totalorder %s39, 4
      %p167 = por %p165, %p166
      %p169 = scmp.ne.s32.totalorder %s152, %s168
      %p170 = scmp.eq.s32.totalorder %s39, 0
      %p171 = por %p169, %p170
      %s172 = ssub.s32 %s33, %s40
      %p173 = scmp.eq.s32.totalorder %s172, 0
      %s175 = sadd.s32 %s174, 1
      %s176 = scalar_select %p173, %s174, %s175
      %p179 = pneg %p173
      %p180 = scmp.eq.s32.totalorder %s33, 4
      %p181 = por %p179, %p180
      %p182 = scmp.ne.s32.totalorder %s174, %s177
      %p183 = scmp.eq.s32.totalorder %s33, 0
      %p184 = por %p182, %p183
      %p185 = scmp.ne.s32.totalorder %s174, %s177
      %p186 = scmp.eq.s32.totalorder %s38, 4
      %p187 = por %p185, %p186
      %p188 = scmp.ne.s32.totalorder %s177, %s178
      %p189 = scmp.eq.s32.totalorder %s38, 0
      %p190 = por %p188, %p189
      %p191 = scmp.ne.s32.totalorder %s177, %s178
      %p192 = scmp.eq.s32.totalorder %s39, 4
      %p193 = por %p191, %p192
      %p195 = scmp.ne.s32.totalorder %s178, %s194
      %p196 = scmp.eq.s32.totalorder %s39, 0
      %p197 = por %p195, %p196
      %s198 = ssub.s32 %s33, %s40
      %p199 = scmp.eq.s32.totalorder %s198, 0
      %s201 = sadd.s32 %s200, 1
      %s202 = scalar_select %p199, %s200, %s201
      %p205 = pneg %p199
      %p206 = scmp.eq.s32.totalorder %s33, 4
      %p207 = por %p205, %p206
      %p208 = scmp.ne.s32.totalorder %s200, %s203
      %p209 = scmp.eq.s32.totalorder %s33, 0
      %p210 = por %p208, %p209
      %p211 = scmp.ne.s32.totalorder %s200, %s203
      %p212 = scmp.eq.s32.totalorder %s38, 4
      %p213 = por %p211, %p212
      %p214 = scmp.ne.s32.totalorder %s203, %s204
      %p215 = scmp.eq.s32.totalorder %s38, 0
      %p216 = por %p214, %p215
      %p217 = scmp.ne.s32.totalorder %s203, %s204
      %p218 = scmp.eq.s32.totalorder %s39, 4
      %p219 = por %p217, %p218
      %p221 = scmp.ne.s32.totalorder %s204, %s220
      %p222 = scmp.eq.s32.totalorder %s39, 0
      %p223 = por %p221, %p222
      %s224 = ssub.s32 %s33, %s40
      %p225 = scmp.eq.s32.totalorder %s224, 0
      %s227 = sadd.s32 %s226, 1
      %s228 = scalar_select %p225, %s226, %s227
      %p231 = pneg %p225
      %p232 = scmp.eq.s32.totalorder %s33, 4
      %p233 = por %p231, %p232
      %p234 = scmp.ne.s32.totalorder %s226, %s229
      %p235 = scmp.eq.s32.totalorder %s33, 0
      %p236 = por %p234, %p235
      %p237 = scmp.ne.s32.totalorder %s226, %s229
      %p238 = scmp.eq.s32.totalorder %s38, 4
      %p239 = por %p237, %p238
      %p240 = scmp.ne.s32.totalorder %s229, %s230
      %p241 = scmp.eq.s32.totalorder %s38, 0
      %p242 = por %p240, %p241
      %p243 = scmp.ne.s32.totalorder %s229, %s230
      %p244 = scmp.eq.s32.totalorder %s39, 4
      %p245 = por %p243, %p244
      %p247 = scmp.ne.s32.totalorder %s230, %s246
      %p248 = scmp.eq.s32.totalorder %s39, 0
      %p249 = por %p247, %p248
      %s250 = ssub.s32 %s33, %s40
      %p251 = scmp.eq.s32.totalorder %s250, 0
      %s253 = sadd.s32 %s252, 1
      %s254 = scalar_select %p251, %s252, %s253
      %p257 = pneg %p251
      %p258 = scmp.eq.s32.totalorder %s33, 4
      %p259 = por %p257, %p258
      %p260 = scmp.ne.s32.totalorder %s252, %s255
      %p261 = scmp.eq.s32.totalorder %s33, 0
      %p262 = por %p260, %p261
      %p263 = scmp.ne.s32.totalorder %s252, %s255
      %p264 = scmp.eq.s32.totalorder %s38, 4
      %p265 = por %p263, %p264
      %p266 = scmp.ne.s32.totalorder %s255, %s256
      %p267 = scmp.eq.s32.totalorder %s38, 0
      %p268 = por %p266, %p267
      %p269 = scmp.ne.s32.totalorder %s255, %s256
      %p270 = scmp.eq.s32.totalorder %s39, 4
      %p271 = por %p269, %p270
      %p273 = scmp.ne.s32.totalorder %s256, %s272
      %p274 = scmp.eq.s32.totalorder %s39, 0
      %p275 = por %p273, %p274
      %s276 = ssub.s32 %s33, %s40
      %p277 = scmp.eq.s32.totalorder %s276, 0
      %s279 = sadd.s32 %s278, 1
      %s280 = scalar_select %p277, %s278, %s279
      %p283 = pneg %p277
      %p284 = scmp.eq.s32.totalorder %s33, 4
      %p285 = por %p283, %p284
      %p286 = scmp.ne.s32.totalorder %s278, %s281
      %p287 = scmp.eq.s32.totalorder %s33, 0
      %p288 = por %p286, %p287
      %p289 = scmp.ne.s32.totalorder %s278, %s281
      %p290 = scmp.eq.s32.totalorder %s38, 4
      %p291 = por %p289, %p290
      %p292 = scmp.ne.s32.totalorder %s281, %s282
      %p293 = scmp.eq.s32.totalorder %s38, 0
      %p294 = por %p292, %p293
      %p295 = scmp.ne.s32.totalorder %s281, %s282
      %p296 = scmp.eq.s32.totalorder %s39, 4
      %p297 = por %p295, %p296
      %p299 = scmp.ne.s32.totalorder %s282, %s298
      %p300 = scmp.eq.s32.totalorder %s39, 0
      %p301 = por %p299, %p300
      %s302 = ssub.s32 %s33, %s40
      %p303 = scmp.eq.s32.totalorder %s302, 0
      %s305 = sadd.s32 %s304, 1
      %s306 = scalar_select %p303, %s304, %s305
      %p309 = pneg %p303
      %p310 = scmp.eq.s32.totalorder %s33, 4
      %p311 = por %p309, %p310
      %p312 = scmp.ne.s32.totalorder %s304, %s307
      %p313 = scmp.eq.s32.totalorder %s33, 0
      %p314 = por %p312, %p313
      %p315 = scmp.ne.s32.totalorder %s304, %s307
      %p316 = scmp.eq.s32.totalorder %s38, 4
      %p317 = por %p315, %p316
      %p318 = scmp.ne.s32.totalorder %s307, %s308
      %p319 = scmp.eq.s32.totalorder %s38, 0
      %p320 = por %p318, %p319
      %p321 = scmp.ne.s32.totalorder %s307, %s308
      %p322 = scmp.eq.s32.totalorder %s39, 4
      %p323 = por %p321, %p322
      %p325 = scmp.ne.s32.totalorder %s308, %s324
      %p326 = scmp.eq.s32.totalorder %s39, 0
      %p327 = por %p325, %p326
      %s328 = ssub.s32 %s33, %s40
      %p329 = scmp.eq.s32.totalorder %s328, 0
      %s331 = sadd.s32 %s330, 1
      %s332 = scalar_select %p329, %s330, %s331
      %p335 = pneg %p329
      %p336 = scmp.eq.s32.totalorder %s33, 4
      %p337 = por %p335, %p336
      %p338 = scmp.ne.s32.totalorder %s330, %s333
      %p339 = scmp.eq.s32.totalorder %s33, 0
      %p340 = por %p338, %p339
      %p341 = scmp.ne.s32.totalorder %s330, %s333
      %p342 = scmp.eq.s32.totalorder %s38, 4
      %p343 = por %p341, %p342
      %p344 = scmp.ne.s32.totalorder %s333, %s334
      %p345 = scmp.eq.s32.totalorder %s38, 0
      %p346 = por %p344, %p345
      %p347 = scmp.ne.s32.totalorder %s333, %s334
      %p348 = scmp.eq.s32.totalorder %s39, 4
      %p349 = por %p347, %p348
      %p351 = scmp.ne.s32.totalorder %s334, %s350
      %p352 = scmp.eq.s32.totalorder %s39, 0
      %p353 = por %p351, %p352
      %s354 = ssub.s32 %s33, %s40
      %p355 = scmp.eq.s32.totalorder %s354, 0
      %s357 = sadd.s32 %s356, 1
      %s358 = scalar_select %p355, %s356, %s357
      %p361 = pneg %p355
      %p362 = scmp.eq.s32.totalorder %s33, 4
      %p363 = por %p361, %p362
      %p364 = scmp.ne.s32.totalorder %s356, %s359
      %p365 = scmp.eq.s32.totalorder %s33, 0
      %p366 = por %p364, %p365
      %p367 = scmp.ne.s32.totalorder %s356, %s359
      %p368 = scmp.eq.s32.totalorder %s38, 4
      %p369 = por %p367, %p368
      %p370 = scmp.ne.s32.totalorder %s359, %s360
      %p371 = scmp.eq.s32.totalorder %s38, 0
      %p372 = por %p370, %p371
      %p373 = scmp.ne.s32.totalorder %s359, %s360
      %p374 = scmp.eq.s32.totalorder %s39, 4
      %p375 = por %p373, %p374
      %p377 = scmp.ne.s32.totalorder %s360, %s376
      %p378 = scmp.eq.s32.totalorder %s39, 0
      %p379 = por %p377, %p378
      %s380 = ssub.s32 %s33, %s40
      %p381 = scmp.eq.s32.totalorder %s380, 0
      %s383 = sadd.s32 %s382, 1
      %s384 = scalar_select %p381, %s382, %s383
      %p387 = pneg %p381
      %p388 = scmp.eq.s32.totalorder %s33, 4
      %p389 = por %p387, %p388
      %p390 = scmp.ne.s32.totalorder %s382, %s385
      %p391 = scmp.eq.s32.totalorder %s33, 0
      %p392 = por %p390, %p391
      %p393 = scmp.ne.s32.totalorder %s382, %s385
      %p394 = scmp.eq.s32.totalorder %s38, 4
      %p395 = por %p393, %p394
      %p396 = scmp.ne.s32.totalorder %s385, %s386
      %p397 = scmp.eq.s32.totalorder %s38, 0
      %p398 = por %p396, %p397
      %p399 = scmp.ne.s32.totalorder %s385, %s386
      %p400 = scmp.eq.s32.totalorder %s39, 4
      %p401 = por %p399, %p400
      %p403 = scmp.ne.s32.totalorder %s386, %s402
      %p404 = scmp.eq.s32.totalorder %s39, 0
      %p405 = por %p403, %p404
      %s406 = ssub.s32 %s33, %s40
      %p407 = scmp.eq.s32.totalorder %s406, 0
      %s409 = sadd.s32 %s408, 1
      %s410 = scalar_select %p407, %s408, %s409
      %p413 = pneg %p407
      %p414 = scmp.eq.s32.totalorder %s33, 4
      %p415 = por %p413, %p414
      %p416 = scmp.ne.s32.totalorder %s408, %s411
      %p417 = scmp.eq.s32.totalorder %s33, 0
      %p418 = por %p416, %p417
      %p419 = scmp.ne.s32.totalorder %s408, %s411
      %p420 = scmp.eq.s32.totalorder %s38, 4
      %p421 = por %p419, %p420
      %p422 = scmp.ne.s32.totalorder %s411, %s412
      %p423 = scmp.eq.s32.totalorder %s38, 0
      %p424 = por %p422, %p423
      %p425 = scmp.ne.s32.totalorder %s411, %s412
      %p426 = scmp.eq.s32.totalorder %s39, 4
      %p427 = por %p425, %p426
      %p429 = scmp.ne.s32.totalorder %s412, %s428
      %p430 = scmp.eq.s32.totalorder %s39, 0
      %p431 = por %p429, %p430
      %s432 = ssub.s32 %s33, %s40
      %p433 = scmp.eq.s32.totalorder %s432, 0
      %s435 = sadd.s32 %s434, 1
      %s436 = scalar_select %p433, %s434, %s435
      %p439 = pneg %p433
      %p440 = scmp.eq.s32.totalorder %s33, 4
      %p441 = por %p439, %p440
      %p442 = scmp.ne.s32.totalorder %s434, %s437
      %p443 = scmp.eq.s32.totalorder %s33, 0
      %p444 = por %p442, %p443
      %p445 = scmp.ne.s32.totalorder %s434, %s437
      %p446 = scmp.eq.s32.totalorder %s38, 4
      %p447 = por %p445, %p446
      %p448 = scmp.ne.s32.totalorder %s437, %s438
      %p449 = scmp.eq.s32.totalorder %s38, 0
      %p450 = por %p448, %p449
      %p451 = scmp.ne.s32.totalorder %s437, %s438
      %p452 = scmp.eq.s32.totalorder %s39, 4
      %p453 = por %p451, %p452
      %p455 = scmp.ne.s32.totalorder %s438, %s454
      %p456 = scmp.eq.s32.totalorder %s39, 0
      %p457 = por %p455, %p456
      %s459 = sadd.s32 %s458, 1
      %p462 = scmp.eq.s32.totalorder %s33, 4
      %p463 = scmp.ne.s32.totalorder %s458, %s460
      %p464 = scmp.eq.s32.totalorder %s33, 0
      %p465 = por %p463, %p464
      %p466 = scmp.ne.s32.totalorder %s458, %s460
      %p467 = scmp.eq.s32.totalorder %s38, 4
      %p468 = por %p466, %p467
      %p469 = scmp.ne.s32.totalorder %s460, %s461
      %p470 = scmp.eq.s32.totalorder %s38, 0
      %p471 = por %p469, %p470
      %p472 = scmp.ne.s32.totalorder %s460, %s461
      %p473 = scmp.eq.s32.totalorder %s39, 4
      %p474 = por %p472, %p473
      %p476 = scmp.ne.s32.totalorder %s461, %s475
      %p477 = scmp.eq.s32.totalorder %s39, 0
      %p478 = por %p476, %p477
      %s480 = sadd.s32 %s479, 1
      %p483 = scmp.eq.s32.totalorder %s33, 4
      %p484 = scmp.ne.s32.totalorder %s479, %s481
      %p485 = scmp.eq.s32.totalorder %s33, 0
      %p486 = por %p484, %p485
      %p487 = scmp.ne.s32.totalorder %s479, %s481
      %p488 = scmp.eq.s32.totalorder %s38, 4
      %p489 = por %p487, %p488
      %p490 = scmp.ne.s32.totalorder %s481, %s482
      %p491 = scmp.eq.s32.totalorder %s38, 0
      %p492 = por %p490, %p491
      %p493 = scmp.ne.s32.totalorder %s481, %s482
      %p494 = scmp.eq.s32.totalorder %s39, 4
      %p495 = por %p493, %p494
      %p497 = scmp.ne.s32.totalorder %s482, %s496
      %p498 = scmp.eq.s32.totalorder %s39, 0
      %p499 = por %p497, %p498
      %s501 = sadd.s32 %s500, 1
      %p504 = scmp.eq.s32.totalorder %s33, 4
      %p505 = scmp.ne.s32.totalorder %s500, %s502
      %p506 = scmp.eq.s32.totalorder %s33, 0
      %p507 = por %p505, %p506
      %p508 = scmp.ne.s32.totalorder %s500, %s502
      %p509 = scmp.eq.s32.totalorder %s38, 4
      %p510 = por %p508, %p509
      %p511 = scmp.ne.s32.totalorder %s502, %s503
      %p512 = scmp.eq.s32.totalorder %s38, 0
      %p513 = por %p511, %p512
      %p514 = scmp.ne.s32.totalorder %s502, %s503
      %p515 = scmp.eq.s32.totalorder %s39, 4
      %p516 = por %p514, %p515
      %p518 = scmp.ne.s32.totalorder %s503, %s517
      %p519 = scmp.eq.s32.totalorder %s39, 0
      %p520 = por %p518, %p519
      %s522 = sadd.s32 %s521, 1
      %p525 = scmp.eq.s32.totalorder %s33, 4
      %p526 = scmp.ne.s32.totalorder %s521, %s523
      %p527 = scmp.eq.s32.totalorder %s33, 0
      %p528 = por %p526, %p527
      %p529 = scmp.ne.s32.totalorder %s521, %s523
      %p530 = scmp.eq.s32.totalorder %s38, 4
      %p531 = por %p529, %p530
      %p532 = scmp.ne.s32.totalorder %s523, %s524
      %p533 = scmp.eq.s32.totalorder %s38, 0
      %p534 = por %p532, %p533
      %p535 = scmp.ne.s32.totalorder %s523, %s524
      %p536 = scmp.eq.s32.totalorder %s39, 4
      %p537 = por %p535, %p536
      %p539 = scmp.ne.s32.totalorder %s524, %s538
      %p540 = scmp.eq.s32.totalorder %s39, 0
      %p541 = por %p539, %p540
      %s543 = sadd.s32 %s542, 1
      %p546 = scmp.eq.s32.totalorder %s33, 4
      %p547 = scmp.ne.s32.totalorder %s542, %s544
      %p548 = scmp.eq.s32.totalorder %s33, 0
      %p549 = por %p547, %p548
      %p550 = scmp.ne.s32.totalorder %s542, %s544
      %p551 = scmp.eq.s32.totalorder %s38, 4
      %p552 = por %p550, %p551
      %p553 = scmp.ne.s32.totalorder %s544, %s545
      %p554 = scmp.eq.s32.totalorder %s38, 0
      %p555 = por %p553, %p554
      %p556 = scmp.ne.s32.totalorder %s544, %s545
      %p557 = scmp.eq.s32.totalorder %s39, 4
      %p558 = por %p556, %p557
      %p560 = scmp.ne.s32.totalorder %s545, %s559
      %p561 = scmp.eq.s32.totalorder %s39, 0
      %p562 = por %p560, %p561
      %s564 = sadd.s32 %s563, 1
      %p567 = scmp.eq.s32.totalorder %s33, 4
      %p568 = scmp.ne.s32.totalorder %s563, %s565
      %p569 = scmp.eq.s32.totalorder %s33, 0
      %p570 = por %p568, %p569
      %p571 = scmp.ne.s32.totalorder %s563, %s565
      %p572 = scmp.eq.s32.totalorder %s38, 4
      %p573 = por %p571, %p572
      %p574 = scmp.ne.s32.totalorder %s565, %s566
      %p575 = scmp.eq.s32.totalorder %s38, 0
      %p576 = por %p574, %p575
      %p577 = scmp.ne.s32.totalorder %s565, %s566
      %p578 = scmp.eq.s32.totalorder %s39, 4
      %p579 = por %p577, %p578
      %p581 = scmp.ne.s32.totalorder %s566, %s580
      %p582 = scmp.eq.s32.totalorder %s39, 0
      %p583 = por %p581, %p582
      %p584 = scmp.le.s32.totalorder 1, %s33
      %p585 = scmp.lt.s32.totalorder %s33, 6
      %p586 = pnand %p584, %p585
      %p587 = pneg %p586
      // Predicated region
      $region9: #{vit_forward.1} parent=5 // pred_check
        _
      $region10: #{vit_forward.1} parent=5 // pred_check_branch
        %589 = sbr.rel (%p586) target = $region12
      $region11: #{vit_forward.1} parent=5 // pred_region
        %s590 = ssub.s32 %s33, 1
        // Predicated region
        $region13: #{vit_forward.1} parent=11 // pred_check
          %p591 = pneg %p54
        $region14: #{vit_forward.1} parent=11 // pred_check_branch
          %593 = sbr.rel (%p591) target = $region16
        $region15: #{vit_forward.1} parent=11 // pred_region
          _
        $region16: #{vit_forward.1} parent=11 // pred_fallthru
          _
        // Predicated region
        $region17: #{vit_forward.1} parent=11 // pred_check
          %p594 = pneg %p75
        $region18: #{vit_forward.1} parent=11 // pred_check_branch
          %596 = sbr.rel (%p594) target = $region20
        $region19: #{vit_forward.1} parent=11 // pred_region
          %s598 = ssub.s32 384, 384
          %599 = vsyncadd [#allocation4], %s598
          %s600 = sshll.u32 [#allocation3], 4
          %s601 = int_to_ptr.vmem [resolvable:$true] %s600
          %606 = dma.hbm_to_vmem [thread:$0]  %s1, 384, %s601, [#allocation4], 64, 64, 4
        $region20: #{vit_forward.1} parent=11 // pred_fallthru
          _
        // Predicated region
        $region21: #{vit_forward.1} parent=11 // pred_check
          %p607 = pneg %p96
        $region22: #{vit_forward.1} parent=11 // pred_check_branch
          %609 = sbr.rel (%p607) target = $region24
        $region23: #{vit_forward.1} parent=11 // pred_region
          %s611 = ssub.s32 16, 16
          %612 = vsyncadd [#allocation6], %s611
          %s614 = sshll.u32 [#allocation5], 4
          %s615 = int_to_ptr.vmem [resolvable:$true] %s614
          %617 = dma.hbm_to_vmem [thread:$0]  %s2, 16, %s615, [#allocation6]
        $region24: #{vit_forward.1} parent=11 // pred_fallthru
          _
        // Predicated region
        $region25: #{vit_forward.1} parent=11 // pred_check
          %p618 = pneg %p117
        $region26: #{vit_forward.1} parent=11 // pred_check_branch
          %620 = sbr.rel (%p618) target = $region28
        $region27: #{vit_forward.1} parent=11 // pred_region
          %s622 = ssub.s32 16, 16
          %623 = vsyncadd [#allocation6], %s622
          %s625 = sshll.u32 [#allocation7], 4
          %s626 = int_to_ptr.vmem [resolvable:$true] %s625
          %628 = dma.hbm_to_vmem [thread:$0]  %s3, 16, %s626, [#allocation6]
        $region28: #{vit_forward.1} parent=11 // pred_fallthru
          _
        // Predicated region
        $region29: #{vit_forward.1} parent=11 // pred_check
          %p629 = pneg %p138
        $region30: #{vit_forward.1} parent=11 // pred_check_branch
          %631 = sbr.rel (%p629) target = $region32
        $region31: #{vit_forward.1} parent=11 // pred_region
          %s633 = ssub.s32 384, 384
          %634 = vsyncadd [#allocation9], %s633
          %s635 = sshll.u32 [#allocation8], 4
          %s636 = int_to_ptr.vmem [resolvable:$true] %s635
          %641 = dma.hbm_to_vmem [thread:$0]  %s4, 384, %s636, [#allocation9], 128, 128, 8
        $region32: #{vit_forward.1} parent=11 // pred_fallthru
          _
        // Predicated region
        $region33: #{vit_forward.1} parent=11 // pred_check
          %p642 = pneg %p471
        $region34: #{vit_forward.1} parent=11 // pred_check_branch
          %644 = sbr.rel (%p642) target = $region36
        $region35: #{vit_forward.1} parent=11 // pred_region
          %s646 = ssub.s32 48, 48
          %647 = vsyncadd [#allocation6], %s646
          %s648 = sshll.u32 [#allocation21], 4
          %s649 = int_to_ptr.vmem [resolvable:$true] %s648
          %654 = dma.hbm_to_vmem [thread:$0]  %s17, 48, %s649, [#allocation6], 16, 16, 1
        $region36: #{vit_forward.1} parent=11 // pred_fallthru
          _
        // Predicated region
        $region37: #{vit_forward.1} parent=11 // pred_check
          %p655 = pneg %p492
        $region38: #{vit_forward.1} parent=11 // pred_check_branch
          %657 = sbr.rel (%p655) target = $region40
        $region39: #{vit_forward.1} parent=11 // pred_region
          %s659 = ssub.s32 48, 48
          %660 = vsyncadd [#allocation9], %s659
          %s661 = sshll.u32 [#allocation22], 4
          %s662 = int_to_ptr.vmem [resolvable:$true] %s661
          %667 = dma.hbm_to_vmem [thread:$0]  %s18, 48, %s662, [#allocation9], 16, 16, 1
        $region40: #{vit_forward.1} parent=11 // pred_fallthru
          _
        // Predicated region
        $region41: #{vit_forward.1} parent=11 // pred_check
          %p668 = pneg %p513
        $region42: #{vit_forward.1} parent=11 // pred_check_branch
          %670 = sbr.rel (%p668) target = $region44
        $region43: #{vit_forward.1} parent=11 // pred_region
          _
        $region44: #{vit_forward.1} parent=11 // pred_fallthru
          _
        // Predicated region
        $region45: #{vit_forward.1} parent=11 // pred_check
          %p671 = pneg %p534
        $region46: #{vit_forward.1} parent=11 // pred_check_branch
          %673 = sbr.rel (%p671) target = $region48
        $region47: #{vit_forward.1} parent=11 // pred_region
          %s675 = ssub.s32 48, 48
          %676 = vsyncadd [#allocation24], %s675
          %s677 = sshll.u32 [#allocation23], 4
          %s678 = int_to_ptr.vmem [resolvable:$true] %s677
          %683 = dma.hbm_to_vmem [thread:$0]  %s20, 48, %s678, [#allocation24], 16, 16, 1
        $region48: #{vit_forward.1} parent=11 // pred_fallthru
          _
      $region12: #{vit_forward.1} parent=5 // pred_fallthru
        _
      %p684 = scmp.lt.s32.totalorder %s33, 5
      // Predicated region
      $region49: #{vit_forward.1} parent=5 // pred_check
        %p685 = pneg %p684
      $region50: #{vit_forward.1} parent=5 // pred_check_branch
        %687 = sbr.rel (%p685) target = $region52
      $region51: #{vit_forward.1} parent=5 // pred_region
        // Predicated region
        $region53: #{vit_forward.1} parent=51 // pred_check
          %p688 = pneg %p158
        $region54: #{vit_forward.1} parent=51 // pred_check_branch
          %690 = sbr.rel (%p688) target = $region56
        $region55: #{vit_forward.1} parent=51 // pred_region
          %s691 = sand.u32 %s33, 1
          %s692 = scalar_lea.sflag [#allocation4], %s691
          %s693 = sand.u32 %s148, 1
          %s694 = smul.addr %s693, 2
          %s695 = scalar_lea.vmem [#allocation10], %s694
          %s696 = smul.u32 2, %s33
          %s698 = ssub.s32 32, 32
          %699 = vsyncadd %s692, %s698
          %s700 = smul.addr %s696, 16
          %s701 = scalar_lea.hbm %s5, %s700
          %s702 = sshll.u32 %s695, 4
          %s703 = int_to_ptr.vmem [resolvable:$true] %s702
          %708 = dma.hbm_to_vmem [thread:$0]  %s701, 32, %s703, %s692, 16, 16, 1
        $region56: #{vit_forward.1} parent=51 // pred_fallthru
          _
        // Predicated region
        $region57: #{vit_forward.1} parent=51 // pred_check
          %p709 = pneg %p184
        $region58: #{vit_forward.1} parent=51 // pred_check_branch
          %711 = sbr.rel (%p709) target = $region60
        $region59: #{vit_forward.1} parent=51 // pred_region
          %s712 = sand.u32 %s33, 1
          %s713 = scalar_lea.sflag [#allocation4], %s712
          %s714 = sand.u32 %s174, 1
          %s715 = smul.addr %s714, 2
          %s716 = scalar_lea.vmem [#allocation11], %s715
          %s717 = smul.u32 2, %s33
          %s719 = ssub.s32 32, 32
          %720 = vsyncadd %s713, %s719
          %s721 = smul.addr %s717, 16
          %s722 = scalar_lea.hbm %s6, %s721
          %s723 = sshll.u32 %s716, 4
          %s724 = int_to_ptr.vmem [resolvable:$true] %s723
          %729 = dma.hbm_to_vmem [thread:$0]  %s722, 32, %s724, %s713, 16, 16, 1
        $region60: #{vit_forward.1} parent=51 // pred_fallthru
          _
        // Predicated region
        $region61: #{vit_forward.1} parent=51 // pred_check
          %p730 = pneg %p210
        $region62: #{vit_forward.1} parent=51 // pred_check_branch
          %732 = sbr.rel (%p730) target = $region64
        $region63: #{vit_forward.1} parent=51 // pred_region
          %s733 = smul.u32 2, %s33
          %p734 = scmp.lt.s32.totalorder %s733, 9
          %s735 = scalar_select %p734, %s733, 9
          %s736 = smul.addr %s735, 48
          %s737 = smul.addr %s736, 4
          %s738 = scalar_lea.vmem %s7, %s737
          %s739 = smul.u32 2, %s33
        $region64: #{vit_forward.1} parent=51 // pred_fallthru
          _
        // Predicated region
        $region65: #{vit_forward.1} parent=51 // pred_check
          %p740 = pneg %p236
        $region66: #{vit_forward.1} parent=51 // pred_check_branch
          %742 = sbr.rel (%p740) target = $region68
        $region67: #{vit_forward.1} parent=51 // pred_region
          %s743 = sand.u32 %s33, 1
          %s744 = scalar_lea.sflag [#allocation4], %s743
          %s745 = sand.u32 %s226, 1
          %s746 = smul.addr %s745, 6
          %s747 = scalar_lea.vmem [#allocation12], %s746
          %s748 = smul.u32 2, %s33
          %s750 = ssub.s32 96, 96
          %751 = vsyncadd %s744, %s750
          %s752 = smul.addr %s748, 3
          %s753 = smul.addr %s752, 16
          %s754 = scalar_lea.hbm %s8, %s753
          %s755 = sshll.u32 %s747, 4
          %s756 = int_to_ptr.vmem [resolvable:$true] %s755
          %761 = dma.hbm_to_vmem [thread:$0]  %s754, 96, %s756, %s744, 48, 48, 3
        $region68: #{vit_forward.1} parent=51 // pred_fallthru
          _
        // Predicated region
        $region69: #{vit_forward.1} parent=51 // pred_check
          %p762 = pneg %p262
        $region70: #{vit_forward.1} parent=51 // pred_check_branch
          %764 = sbr.rel (%p762) target = $region72
        $region71: #{vit_forward.1} parent=51 // pred_region
          %s765 = sand.u32 %s33, 1
          %s766 = scalar_lea.sflag [#allocation4], %s765
          %s767 = sand.u32 %s252, 1
          %s768 = smul.addr %s767, 128
          %s769 = scalar_lea.vmem [#allocation13], %s768
          %s770 = smul.u32 2, %s33
          %s772 = ssub.s32 2048, 2048
          %773 = vsyncadd %s766, %s772
          %s774 = smul.addr %s770, 16
          %s775 = smul.addr %s774, 64
          %s776 = scalar_lea.hbm %s9, %s775
          %s777 = sshll.u32 %s769, 4
          %s778 = int_to_ptr.vmem [resolvable:$true] %s777
          %783 = dma.hbm_to_vmem [thread:$0]  %s776, 2048, %s778, %s766, 64, 64, 4
        $region72: #{vit_forward.1} parent=51 // pred_fallthru
          _
        // Predicated region
        $region73: #{vit_forward.1} parent=51 // pred_check
          %p784 = pneg %p288
        $region74: #{vit_forward.1} parent=51 // pred_check_branch
          %786 = sbr.rel (%p784) target = $region76
        $region75: #{vit_forward.1} parent=51 // pred_region
          %s787 = sand.u32 %s33, 1
          %s788 = scalar_lea.sflag [#allocation4], %s787
          %s789 = sand.u32 %s278, 1
          %s790 = smul.addr %s789, 2
          %s791 = scalar_lea.vmem [#allocation14], %s790
          %s792 = smul.u32 2, %s33
          %s794 = ssub.s32 32, 32
          %795 = vsyncadd %s788, %s794
          %s796 = smul.addr %s792, 16
          %s797 = scalar_lea.hbm %s10, %s796
          %s798 = sshll.u32 %s791, 4
          %s799 = int_to_ptr.vmem [resolvable:$true] %s798
          %804 = dma.hbm_to_vmem [thread:$0]  %s797, 32, %s799, %s788, 16, 16, 1
        $region76: #{vit_forward.1} parent=51 // pred_fallthru
          _
        // Predicated region
        $region77: #{vit_forward.1} parent=51 // pred_check
          %p805 = pneg %p314
        $region78: #{vit_forward.1} parent=51 // pred_check_branch
          %807 = sbr.rel (%p805) target = $region80
        $region79: #{vit_forward.1} parent=51 // pred_region
          %s808 = sand.u32 %s33, 1
          %s809 = scalar_lea.sflag [#allocation4], %s808
          %s810 = sand.u32 %s304, 1
          %s811 = smul.addr %s810, 2
          %s812 = scalar_lea.vmem [#allocation15], %s811
          %s813 = smul.u32 2, %s33
          %s815 = ssub.s32 32, 32
          %816 = vsyncadd %s809, %s815
          %s817 = smul.addr %s813, 16
          %s818 = scalar_lea.hbm %s11, %s817
          %s819 = sshll.u32 %s812, 4
          %s820 = int_to_ptr.vmem [resolvable:$true] %s819
          %825 = dma.hbm_to_vmem [thread:$0]  %s818, 32, %s820, %s809, 16, 16, 1
        $region80: #{vit_forward.1} parent=51 // pred_fallthru
          _
        // Predicated region
        $region81: #{vit_forward.1} parent=51 // pred_check
          %p826 = pneg %p340
        $region82: #{vit_forward.1} parent=51 // pred_check_branch
          %828 = sbr.rel (%p826) target = $region84
        $region83: #{vit_forward.1} parent=51 // pred_region
          %s829 = sand.u32 %s33, 1
          %s830 = scalar_lea.sflag [#allocation4], %s829
          %s831 = sand.u32 %s330, 1
          %s832 = smul.addr %s831, 2
          %s833 = scalar_lea.vmem [#allocation16], %s832
          %s834 = smul.u32 2, %s33
          %s836 = ssub.s32 32, 32
          %837 = vsyncadd %s830, %s836
          %s838 = smul.addr %s834, 16
          %s839 = scalar_lea.hbm %s12, %s838
          %s840 = sshll.u32 %s833, 4
          %s841 = int_to_ptr.vmem [resolvable:$true] %s840
          %846 = dma.hbm_to_vmem [thread:$0]  %s839, 32, %s841, %s830, 16, 16, 1
        $region84: #{vit_forward.1} parent=51 // pred_fallthru
          _
        // Predicated region
        $region85: #{vit_forward.1} parent=51 // pred_check
          %p847 = pneg %p366
        $region86: #{vit_forward.1} parent=51 // pred_check_branch
          %849 = sbr.rel (%p847) target = $region88
        $region87: #{vit_forward.1} parent=51 // pred_region
          %s850 = sand.u32 %s33, 1
          %s851 = scalar_lea.sflag [#allocation4], %s850
          %s852 = sand.u32 %s356, 1
          %s853 = smul.addr %s852, 512
          %s854 = scalar_lea.vmem [#allocation17], %s853
          %s855 = smul.u32 2, %s33
          %s857 = ssub.s32 8192, 8192
          %858 = vsyncadd %s851, %s857
          %s859 = smul.addr %s855, 64
          %s860 = smul.addr %s859, 64
          %s861 = scalar_lea.hbm %s13, %s860
          %s862 = sshll.u32 %s854, 4
          %s863 = int_to_ptr.vmem [resolvable:$true] %s862
          %868 = dma.hbm_to_vmem [thread:$0]  %s861, 8192, %s863, %s851, 256, 256, 16
        $region88: #{vit_forward.1} parent=51 // pred_fallthru
          _
        // Predicated region
        $region89: #{vit_forward.1} parent=51 // pred_check
          %p869 = pneg %p392
        $region90: #{vit_forward.1} parent=51 // pred_check_branch
          %871 = sbr.rel (%p869) target = $region92
        $region91: #{vit_forward.1} parent=51 // pred_region
          %s872 = sand.u32 %s33, 1
          %s873 = scalar_lea.sflag [#allocation4], %s872
          %s874 = sand.u32 %s382, 1
          %s875 = smul.addr %s874, 8
          %s876 = scalar_lea.vmem [#allocation18], %s875
          %s877 = smul.u32 2, %s33
          %s879 = ssub.s32 128, 128
          %880 = vsyncadd %s873, %s879
          %s881 = smul.addr %s877, 4
          %s882 = smul.addr %s881, 16
          %s883 = scalar_lea.hbm %s14, %s882
          %s884 = sshll.u32 %s876, 4
          %s885 = int_to_ptr.vmem [resolvable:$true] %s884
          %890 = dma.hbm_to_vmem [thread:$0]  %s883, 128, %s885, %s873, 64, 64, 4
        $region92: #{vit_forward.1} parent=51 // pred_fallthru
          _
        // Predicated region
        $region93: #{vit_forward.1} parent=51 // pred_check
          %p891 = pneg %p418
        $region94: #{vit_forward.1} parent=51 // pred_check_branch
          %893 = sbr.rel (%p891) target = $region96
        $region95: #{vit_forward.1} parent=51 // pred_region
          %s894 = sand.u32 %s33, 1
          %s895 = scalar_lea.sflag [#allocation4], %s894
          %s896 = sand.u32 %s408, 1
          %s897 = smul.addr %s896, 512
          %s898 = scalar_lea.vmem [#allocation19], %s897
          %s899 = smul.u32 2, %s33
          %s901 = ssub.s32 8192, 8192
          %902 = vsyncadd %s895, %s901
          %s903 = smul.addr %s899, 64
          %s904 = smul.addr %s903, 64
          %s905 = scalar_lea.hbm %s15, %s904
          %s906 = sshll.u32 %s898, 4
          %s907 = int_to_ptr.vmem [resolvable:$true] %s906
          %912 = dma.hbm_to_vmem [thread:$0]  %s905, 8192, %s907, %s895, 64, 64, 4
        $region96: #{vit_forward.1} parent=51 // pred_fallthru
          _
        // Predicated region
        $region97: #{vit_forward.1} parent=51 // pred_check
          %p913 = pneg %p444
        $region98: #{vit_forward.1} parent=51 // pred_check_branch
          %915 = sbr.rel (%p913) target = $region100
        $region99: #{vit_forward.1} parent=51 // pred_region
          %s916 = sand.u32 %s33, 1
          %s917 = scalar_lea.sflag [#allocation4], %s916
          %s918 = sand.u32 %s434, 1
          %s919 = smul.addr %s918, 2
          %s920 = scalar_lea.vmem [#allocation20], %s919
          %s921 = smul.u32 2, %s33
          %s923 = ssub.s32 32, 32
          %924 = vsyncadd %s917, %s923
          %s925 = smul.addr %s921, 16
          %s926 = scalar_lea.hbm %s16, %s925
          %s927 = sshll.u32 %s920, 4
          %s928 = int_to_ptr.vmem [resolvable:$true] %s927
          %933 = dma.hbm_to_vmem [thread:$0]  %s926, 32, %s928, %s917, 16, 16, 1
        $region100: #{vit_forward.1} parent=51 // pred_fallthru
          _
      $region52: #{vit_forward.1} parent=5 // pred_fallthru
        _
      %p934 = scmp.le.s32.totalorder 1, %s33
      %p935 = scmp.lt.s32.totalorder %s33, 6
      %p936 = pnand %p934, %p935
      %p937 = pneg %p936
      // Predicated region
      $region101: #{vit_forward.1} parent=5 // pred_check
        _
      $region102: #{vit_forward.1} parent=5 // pred_check_branch
        %939 = sbr.rel (%p936) target = $region104
      $region103: #{vit_forward.1} parent=5 // pred_region
        %s940 = ssub.s32 %s33, 1
        // Predicated region
        $region105: #{vit_forward.1} parent=103 // pred_check
          %p941 = pneg %p75
        $region106: #{vit_forward.1} parent=103 // pred_check_branch
          %943 = sbr.rel (%p941) target = $region108
        $region107: #{vit_forward.1} parent=103 // pred_region
          %944 = dma.done [#allocation4], 384
        $region108: #{vit_forward.1} parent=103 // pred_fallthru
          _
        // Predicated region
        $region109: #{vit_forward.1} parent=103 // pred_check
          %p945 = pneg %p96
        $region110: #{vit_forward.1} parent=103 // pred_check_branch
          %947 = sbr.rel (%p945) target = $region112
        $region111: #{vit_forward.1} parent=103 // pred_region
          %948 = dma.done [#allocation6], 16
        $region112: #{vit_forward.1} parent=103 // pred_fallthru
          _
        // Predicated region
        $region113: #{vit_forward.1} parent=103 // pred_check
          %p949 = pneg %p117
        $region114: #{vit_forward.1} parent=103 // pred_check_branch
          %951 = sbr.rel (%p949) target = $region116
        $region115: #{vit_forward.1} parent=103 // pred_region
          %952 = dma.done [#allocation6], 16
        $region116: #{vit_forward.1} parent=103 // pred_fallthru
          _
        // Predicated region
        $region117: #{vit_forward.1} parent=103 // pred_check
          %p953 = pneg %p138
        $region118: #{vit_forward.1} parent=103 // pred_check_branch
          %955 = sbr.rel (%p953) target = $region120
        $region119: #{vit_forward.1} parent=103 // pred_region
          %956 = dma.done [#allocation9], 384
        $region120: #{vit_forward.1} parent=103 // pred_fallthru
          _
        %s957 = sand.u32 %s38, 1
        %s958 = scalar_lea.sflag [#allocation4], %s957
        %s959 = sand.u32 %s151, 1
        %s960 = smul.addr %s959, 2
        %s961 = scalar_lea.vmem [#allocation10], %s960
        // Predicated region
        $region121: #{vit_forward.1} parent=103 // pred_check
          %p962 = pneg %p164
        $region122: #{vit_forward.1} parent=103 // pred_check_branch
          %964 = sbr.rel (%p962) target = $region124
        $region123: #{vit_forward.1} parent=103 // pred_region
          %965 = dma.done %s958, 32
        $region124: #{vit_forward.1} parent=103 // pred_fallthru
          _
        %s966 = sand.u32 %s38, 1
        %s967 = scalar_lea.sflag [#allocation4], %s966
        %s968 = sand.u32 %s177, 1
        %s969 = smul.addr %s968, 2
        %s970 = scalar_lea.vmem [#allocation11], %s969
        // Predicated region
        $region125: #{vit_forward.1} parent=103 // pred_check
          %p971 = pneg %p190
        $region126: #{vit_forward.1} parent=103 // pred_check_branch
          %973 = sbr.rel (%p971) target = $region128
        $region127: #{vit_forward.1} parent=103 // pred_region
          %974 = dma.done %s967, 32
        $region128: #{vit_forward.1} parent=103 // pred_fallthru
          _
        %s975 = sand.u32 %s38, 1
        %s976 = scalar_lea.sflag [#allocation4], %s975
        %s977 = sand.u32 %s229, 1
        %s978 = smul.addr %s977, 6
        %s979 = scalar_lea.vmem [#allocation12], %s978
        // Predicated region
        $region129: #{vit_forward.1} parent=103 // pred_check
          %p980 = pneg %p242
        $region130: #{vit_forward.1} parent=103 // pred_check_branch
          %982 = sbr.rel (%p980) target = $region132
        $region131: #{vit_forward.1} parent=103 // pred_region
          %983 = dma.done %s976, 96
        $region132: #{vit_forward.1} parent=103 // pred_fallthru
          _
        %s984 = sand.u32 %s38, 1
        %s985 = scalar_lea.sflag [#allocation4], %s984
        %s986 = sand.u32 %s255, 1
        %s987 = smul.addr %s986, 128
        %s988 = scalar_lea.vmem [#allocation13], %s987
        // Predicated region
        $region133: #{vit_forward.1} parent=103 // pred_check
          %p989 = pneg %p268
        $region134: #{vit_forward.1} parent=103 // pred_check_branch
          %991 = sbr.rel (%p989) target = $region136
        $region135: #{vit_forward.1} parent=103 // pred_region
          %992 = dma.done %s985, 2048
        $region136: #{vit_forward.1} parent=103 // pred_fallthru
          _
        %s993 = sand.u32 %s38, 1
        %s994 = scalar_lea.sflag [#allocation4], %s993
        %s995 = sand.u32 %s281, 1
        %s996 = smul.addr %s995, 2
        %s997 = scalar_lea.vmem [#allocation14], %s996
        // Predicated region
        $region137: #{vit_forward.1} parent=103 // pred_check
          %p998 = pneg %p294
        $region138: #{vit_forward.1} parent=103 // pred_check_branch
          %1000 = sbr.rel (%p998) target = $region140
        $region139: #{vit_forward.1} parent=103 // pred_region
          %1001 = dma.done %s994, 32
        $region140: #{vit_forward.1} parent=103 // pred_fallthru
          _
        %s1002 = sand.u32 %s38, 1
        %s1003 = scalar_lea.sflag [#allocation4], %s1002
        %s1004 = sand.u32 %s307, 1
        %s1005 = smul.addr %s1004, 2
        %s1006 = scalar_lea.vmem [#allocation15], %s1005
        // Predicated region
        $region141: #{vit_forward.1} parent=103 // pred_check
          %p1007 = pneg %p320
        $region142: #{vit_forward.1} parent=103 // pred_check_branch
          %1009 = sbr.rel (%p1007) target = $region144
        $region143: #{vit_forward.1} parent=103 // pred_region
          %1010 = dma.done %s1003, 32
        $region144: #{vit_forward.1} parent=103 // pred_fallthru
          _
        %s1011 = sand.u32 %s38, 1
        %s1012 = scalar_lea.sflag [#allocation4], %s1011
        %s1013 = sand.u32 %s333, 1
        %s1014 = smul.addr %s1013, 2
        %s1015 = scalar_lea.vmem [#allocation16], %s1014
        // Predicated region
        $region145: #{vit_forward.1} parent=103 // pred_check
          %p1016 = pneg %p346
        $region146: #{vit_forward.1} parent=103 // pred_check_branch
          %1018 = sbr.rel (%p1016) target = $region148
        $region147: #{vit_forward.1} parent=103 // pred_region
          %1019 = dma.done %s1012, 32
        $region148: #{vit_forward.1} parent=103 // pred_fallthru
          _
        %s1020 = sand.u32 %s38, 1
        %s1021 = scalar_lea.sflag [#allocation4], %s1020
        %s1022 = sand.u32 %s359, 1
        %s1023 = smul.addr %s1022, 512
        %s1024 = scalar_lea.vmem [#allocation17], %s1023
        // Predicated region
        $region149: #{vit_forward.1} parent=103 // pred_check
          %p1025 = pneg %p372
        $region150: #{vit_forward.1} parent=103 // pred_check_branch
          %1027 = sbr.rel (%p1025) target = $region152
        $region151: #{vit_forward.1} parent=103 // pred_region
          %1028 = dma.done %s1021, 8192
        $region152: #{vit_forward.1} parent=103 // pred_fallthru
          _
        %s1029 = sand.u32 %s38, 1
        %s1030 = scalar_lea.sflag [#allocation4], %s1029
        %s1031 = sand.u32 %s385, 1
        %s1032 = smul.addr %s1031, 8
        %s1033 = scalar_lea.vmem [#allocation18], %s1032
        // Predicated region
        $region153: #{vit_forward.1} parent=103 // pred_check
          %p1034 = pneg %p398
        $region154: #{vit_forward.1} parent=103 // pred_check_branch
          %1036 = sbr.rel (%p1034) target = $region156
        $region155: #{vit_forward.1} parent=103 // pred_region
          %1037 = dma.done %s1030, 128
        $region156: #{vit_forward.1} parent=103 // pred_fallthru
          _
        %s1038 = sand.u32 %s38, 1
        %s1039 = scalar_lea.sflag [#allocation4], %s1038
        %s1040 = sand.u32 %s411, 1
        %s1041 = smul.addr %s1040, 512
        %s1042 = scalar_lea.vmem [#allocation19], %s1041
        // Predicated region
        $region157: #{vit_forward.1} parent=103 // pred_check
          %p1043 = pneg %p424
        $region158: #{vit_forward.1} parent=103 // pred_check_branch
          %1045 = sbr.rel (%p1043) target = $region160
        $region159: #{vit_forward.1} parent=103 // pred_region
          %1046 = dma.done %s1039, 8192
        $region160: #{vit_forward.1} parent=103 // pred_fallthru
          _
        %s1047 = sand.u32 %s38, 1
        %s1048 = scalar_lea.sflag [#allocation4], %s1047
        %s1049 = sand.u32 %s437, 1
        %s1050 = smul.addr %s1049, 2
        %s1051 = scalar_lea.vmem [#allocation20], %s1050
        // Predicated region
        $region161: #{vit_forward.1} parent=103 // pred_check
          %p1052 = pneg %p450
        $region162: #{vit_forward.1} parent=103 // pred_check_branch
          %1054 = sbr.rel (%p1052) target = $region164
        $region163: #{vit_forward.1} parent=103 // pred_region
          %1055 = dma.done %s1048, 32
        $region164: #{vit_forward.1} parent=103 // pred_fallthru
          _
        // Predicated region
        $region165: #{vit_forward.1} parent=103 // pred_check
          %p1056 = pneg %p471
        $region166: #{vit_forward.1} parent=103 // pred_check_branch
          %1058 = sbr.rel (%p1056) target = $region168
        $region167: #{vit_forward.1} parent=103 // pred_region
          %1059 = dma.done [#allocation6], 48
        $region168: #{vit_forward.1} parent=103 // pred_fallthru
          _
        // Predicated region
        $region169: #{vit_forward.1} parent=103 // pred_check
          %p1060 = pneg %p492
        $region170: #{vit_forward.1} parent=103 // pred_check_branch
          %1062 = sbr.rel (%p1060) target = $region172
        $region171: #{vit_forward.1} parent=103 // pred_region
          %1063 = dma.done [#allocation9], 48
        $region172: #{vit_forward.1} parent=103 // pred_fallthru
          _
        // Predicated region
        $region173: #{vit_forward.1} parent=103 // pred_check
          %p1064 = pneg %p534
        $region174: #{vit_forward.1} parent=103 // pred_check_branch
          %1066 = sbr.rel (%p1064) target = $region176
        $region175: #{vit_forward.1} parent=103 // pred_region
          %1067 = dma.done [#allocation24], 48
        $region176: #{vit_forward.1} parent=103 // pred_fallthru
          _
        %p1068 = pneg %p54
        %p1069 = pneg %p51
        %p1070 = pneg %p75
        %p1071 = pneg %p72
        %p1072 = pneg %p96
        %p1073 = pneg %p93
        %p1074 = pneg %p117
        %p1075 = pneg %p114
        %p1076 = pneg %p138
        %p1077 = pneg %p135
        %s1078 = sand.u32 %s38, 1
        %s1079 = scalar_lea.sflag [#allocation4], %s1078
        %s1080 = sand.u32 %s151, 1
        %s1081 = smul.addr %s1080, 2
        %s1082 = scalar_lea.vmem [#allocation10], %s1081
        %p1083 = pneg %p164
        %p1084 = pneg %p161
        %s1085 = sand.u32 %s38, 1
        %s1086 = scalar_lea.sflag [#allocation4], %s1085
        %s1087 = sand.u32 %s177, 1
        %s1088 = smul.addr %s1087, 2
        %s1089 = scalar_lea.vmem [#allocation11], %s1088
        %p1090 = pneg %p190
        %p1091 = pneg %p187
        %s1092 = smul.u32 2, %s38
        %p1093 = scmp.lt.s32.totalorder %s1092, 9
        %s1094 = scalar_select %p1093, %s1092, 9
        %s1095 = smul.addr %s1094, 48
        %s1096 = smul.addr %s1095, 4
        %s1097 = scalar_lea.vmem %s7, %s1096
        %p1098 = pneg %p216
        %p1099 = pneg %p213
        %s1100 = sand.u32 %s38, 1
        %s1101 = scalar_lea.sflag [#allocation4], %s1100
        %s1102 = sand.u32 %s229, 1
        %s1103 = smul.addr %s1102, 6
        %s1104 = scalar_lea.vmem [#allocation12], %s1103
        %p1105 = pneg %p242
        %p1106 = pneg %p239
        %s1107 = sand.u32 %s38, 1
        %s1108 = scalar_lea.sflag [#allocation4], %s1107
        %s1109 = sand.u32 %s255, 1
        %s1110 = smul.addr %s1109, 128
        %s1111 = scalar_lea.vmem [#allocation13], %s1110
        %p1112 = pneg %p268
        %p1113 = pneg %p265
        %s1114 = sand.u32 %s38, 1
        %s1115 = scalar_lea.sflag [#allocation4], %s1114
        %s1116 = sand.u32 %s281, 1
        %s1117 = smul.addr %s1116, 2
        %s1118 = scalar_lea.vmem [#allocation14], %s1117
        %p1119 = pneg %p294
        %p1120 = pneg %p291
        %s1121 = sand.u32 %s38, 1
        %s1122 = scalar_lea.sflag [#allocation4], %s1121
        %s1123 = sand.u32 %s307, 1
        %s1124 = smul.addr %s1123, 2
        %s1125 = scalar_lea.vmem [#allocation15], %s1124
        %p1126 = pneg %p320
        %p1127 = pneg %p317
        %s1128 = sand.u32 %s38, 1
        %s1129 = scalar_lea.sflag [#allocation4], %s1128
        %s1130 = sand.u32 %s333, 1
        %s1131 = smul.addr %s1130, 2
        %s1132 = scalar_lea.vmem [#allocation16], %s1131
        %p1133 = pneg %p346
        %p1134 = pneg %p343
        %s1135 = sand.u32 %s38, 1
        %s1136 = scalar_lea.sflag [#allocation4], %s1135
        %s1137 = sand.u32 %s359, 1
        %s1138 = smul.addr %s1137, 512
        %s1139 = scalar_lea.vmem [#allocation17], %s1138
        %p1140 = pneg %p372
        %p1141 = pneg %p369
        %s1142 = sand.u32 %s38, 1
        %s1143 = scalar_lea.sflag [#allocation4], %s1142
        %s1144 = sand.u32 %s385, 1
        %s1145 = smul.addr %s1144, 8
        %s1146 = scalar_lea.vmem [#allocation18], %s1145
        %p1147 = pneg %p398
        %p1148 = pneg %p395
        %s1149 = sand.u32 %s38, 1
        %s1150 = scalar_lea.sflag [#allocation4], %s1149
        %s1151 = sand.u32 %s411, 1
        %s1152 = smul.addr %s1151, 512
        %s1153 = scalar_lea.vmem [#allocation19], %s1152
        %p1154 = pneg %p424
        %p1155 = pneg %p421
        %s1156 = sand.u32 %s38, 1
        %s1157 = scalar_lea.sflag [#allocation4], %s1156
        %s1158 = sand.u32 %s437, 1
        %s1159 = smul.addr %s1158, 2
        %s1160 = scalar_lea.vmem [#allocation20], %s1159
        %p1161 = pneg %p450
        %p1162 = pneg %p447
        %p1163 = pneg %p471
        %p1164 = pneg %p468
        %p1165 = pneg %p492
        %p1166 = pneg %p489
        %p1167 = pneg %p513
        %p1168 = pneg %p510
        %p1169 = pneg %p534
        %p1170 = pneg %p531
        %p1171 = pneg %p555
        %p1172 = pneg %p552
        %p1173 = pneg %p576
        %p1174 = pneg %p573
        %s1175 = smul.u32 2, %s38
        %s1176 = smul.u32 2, %s38
        %s1177 = smul.u32 2, %s38
        %p1178 = scmp.lt.s32.totalorder %s1177, 9
        %s1179 = scalar_select %p1178, %s1177, 9
        %s1180 = smul.addr %s1179, 48
        %s1181 = smul.addr %s1180, 4
        %s1182 = scalar_lea.vmem %s7, %s1181
        %s1183 = smul.u32 2, %s38
        %s1184 = smul.u32 2, %s38
        %s1185 = smul.u32 2, %s38
        %s1186 = smul.u32 2, %s38
        %s1187 = smul.u32 2, %s38
        %s1188 = smul.u32 2, %s38
        %s1189 = smul.u32 2, %s38
        %s1190 = smul.u32 2, %s38
        %s1191 = smul.u32 2, %s38
        %s1192 = smul.u32 2, %s38
        %p1194 = scmp.eq.s32.totalorder %s38, 0
        // Predicated region
        $region177: #{vit_forward.1} parent=103 // pred_check
          %p1195 = pneg %p1194
        $region178: #{vit_forward.1} parent=103 // pred_check_branch
          %1197 = sbr.rel (%p1195) target = $region180
        $region179: #{vit_forward.1} parent=103 // pred_region
          %v1198 = vld [vmem:[%s0] sm:$0xff]
          %v1199 = vld [vmem:[%s0 + $0x8] sm:$0xff]
          %v1200 = vld [vmem:[%s0 + $0x10] sm:$0xff]
          %v1201 = vld [vmem:[%s0 + $0x18] sm:$0xff]
          %v1202 = vpack.c.bf16 %v1199, %v1198
          %v1203 = vpack.c.bf16 %v1201, %v1200
          %v1204 = vld [vmem:[#allocation3] sm:$0xf]
          %v1205 = vld [vmem:[#allocation3 + $0x4] sm:$0xf]
          %v1206 = vld [vmem:[#allocation3 + $0x8] sm:$0xf]
          %v1207 = vld [vmem:[#allocation3 + $0xc] sm:$0xf]
          %v1208 = vld [vmem:[#allocation3 + $0x10] sm:$0xf]
          %v1209 = vld [vmem:[#allocation3 + $0x14] sm:$0xf]
          %v1210 = vld [vmem:[#allocation5] sm:$0x1]
          %v1212 = vlaneseq
          %v1213 = vshrl.u32 %v1212, 7
          %v1214 = vsub.s32 0, %v1213
          %v1215 = vrot.slane %v1210, %v1214
          %v1223 = vunpack.c.l.b16 %v1204
          %v1224 = vunpack.c.l.b16 %v1205
          %v1225 = vunpack.c.l.b16 %v1206
          %v1226 = vunpack.c.l.b16 %v1207
          %v1227 = vunpack.c.l.b16 %v1208
          %v1228 = vunpack.c.l.b16 %v1209
          %v1229 = vpack.c.b16 %v1224, %v1223
          %v1230 = vpack.c.b16 %v1226, %v1225
          %v1231 = vpack.c.b16 %v1228, %v1227
          %vm1235 = vcmask 392192
          %v1237 = vsel %vm1235, %v1202, 0
          %v1240 = vsel %vm1235, %v1203, 0
          %1242 = vmatprep.subr.bf16.mxu0 0
          %1243 = vmatpush1.bf16.msra.mxu0 %v1229
          %1244 = vmatprep.subr.bf16.mxu0 0
          %1245 = vmatpush1.bf16.msra.mxu0 %v1230
          %1246 = vmatprep.subr.bf16.mxu0 0
          %1247 = vmatpush1.bf16.msra.mxu0 %v1231
          %1248 = vmatprep.subr.bf16.mxu0 0
          %1249 = vmatpush1.bf16.msra.mxu0 0
          %1250 = vmatprep.subr.bf16.mxu0 0
          %1251 = vmatpush1.bf16.msra.mxu0 0
          %1252 = vmatprep.subr.bf16.mxu0 0
          %1253 = vmatpush1.bf16.msra.mxu0 0
          %1254 = vmatprep.subr.bf16.mxu0 0
          %1255 = vmatpush1.bf16.msra.mxu0 0
          %1256 = vmatprep.subr.bf16.mxu0 0
          %1257 = vmatpush1.bf16.msra.mxu0 0
          %1258 = vmatprep.subr.bf16.mxu0 0
          %1259 = vmatpush1.bf16.msra.mxu0 0
          %1260 = vmatprep.subr.bf16.mxu0 0
          %1261 = vmatpush1.bf16.msra.mxu0 0
          %1262 = vmatprep.subr.bf16.mxu0 0
          %1263 = vmatpush1.bf16.msra.mxu0 0
          %1264 = vmatprep.subr.bf16.mxu0 0
          %1265 = vmatpush1.bf16.msra.mxu0 0
          %1266 = vmatprep.subr.bf16.mxu0 0
          %1267 = vmatpush1.bf16.msra.mxu0 0
          %1268 = vmatprep.subr.bf16.mxu0 0
          %1269 = vmatpush1.bf16.msra.mxu0 0
          %1270 = vmatprep.subr.bf16.mxu0 0
          %1271 = vmatpush1.bf16.msra.mxu0 0
          %1272 = vmatprep.subr.bf16.mxu0 0
          %1273 = vmatpush1.bf16.msra.mxu0 0
          %1274 = vmatprep.mubr.bf16.mxu0 0
          %1275 = vmatmul.mubr.bf16.gmra.mrb[0].mxu0 %v1237
          %v1276 = vpop.f32.mrb[0].mxu0
          %v1277 = vadd.f32 %v1215, %v1276
          %v1278 = vpop.f32.mrb[0].mxu0
          %v1279 = vpop.f32.mrb[0].mxu0
          %v1280 = vadd.f32 %v1215, %v1279
          %v1281 = vpop.f32.mrb[0].mxu0
          %1282 = vmatprep.mubr.bf16.mxu0 0
          %1283 = vmatmul.mubr.bf16.gmra.mrb[0].mxu0 %v1240
          %v1284 = vpop.f32.mrb[0].mxu0
          %v1285 = vadd.f32 %v1215, %v1284
          %v1286 = vpop.f32.mrb[0].mxu0
          %v1287 = vpop.f32.mrb[0].mxu0
          %v1288 = vadd.f32 %v1215, %v1287
          %v1289 = vpop.f32.mrb[0].mxu0
          %1290 = vdwg.mxu0
          %v1291 = vld [vmem:[#allocation7] sm:$0x1]
          %vm1294 = vcmask 1040384
          %v1295 = vrot.slane %v1277, 7
          %v1296 = vrot.slane %v1280, 7
          %v1297 = vsel %vm1294, %v1295, %v1296
          %v1301 = vsel %vm1294, %v1291, %v1295
          %v1302 = vsel %vm1294, %v1296, 0.0
          %v1303 = vld [vmem:[#allocation8] sm:$0xff]
          %v1304 = vld [vmem:[#allocation8 + $0x8] sm:$0xff]
          %v1305 = vld [vmem:[#allocation8 + $0x10] sm:$0xff]
          %v1306 = vadd.f32 %v1301, %v1303
          %v1307 = vadd.f32 %v1297, %v1304
          %v1308 = vadd.f32 %v1302, %v1305
          %v1311 = vrot.slane %v1285, 7
          %v1312 = vrot.slane %v1288, 7
          %v1313 = vsel %vm1294, %v1311, %v1312
          %v1317 = vsel %vm1294, %v1291, %v1311
          %v1318 = vsel %vm1294, %v1312, 0.0
          %v1319 = vadd.f32 %v1317, %v1303
          %v1320 = vadd.f32 %v1313, %v1304
          %v1321 = vadd.f32 %v1318, %v1305
          %1322 = vst [vmem:[#allocation2] sm:$0xff] %v1306
          %1323 = vst [vmem:[#allocation2 + $0x8] sm:$0xff] %v1307
          %1324 = vst [vmem:[#allocation2 + $0x10] sm:$0xff] %v1308
          %1325 = vst [vmem:[#allocation2 + $0x18] sm:$0xff] %v1319
          %1326 = vst [vmem:[#allocation2 + $0x20] sm:$0xff] %v1320
          %1327 = vst [vmem:[#allocation2 + $0x28] sm:$0xff] %v1321
        $region180: #{vit_forward.1} parent=103 // pred_fallthru
          _
        %p1328 = scmp.lt.s32.totalorder %s38, 3
        %s1329 = ssub.s32 %s38, 2
        %s1330 = scalar_select %p1328, 0, %s1329
        %s1331 = smul.u32 %s1330, 48
        %s1332 = scalar_lea.vmem [#allocation2], %s1331
        %v1333 = vld [vmem:[%s1332] sm:$0xff]
        %v1334 = vld [vmem:[%s1332 + $0x8] sm:$0xff]
        %v1335 = vld [vmem:[%s1332 + $0x10] sm:$0xff]
        %v1336 = vld [vmem:[%s1332 + $0x18] sm:$0xff]
        %v1337 = vld [vmem:[%s1332 + $0x20] sm:$0xff]
        %v1338 = vld [vmem:[%s1332 + $0x28] sm:$0xff]
        %v1339 = vlaneseq
        %v1340 = vand.u32 %v1339, 127
        %vm1341 = vcmp.lt.s32.totalorder %v1340, 17
        %v1342 = vsel %vm1341, 0.0, -1e+30
        %s1343 = smul.u32 %s38, 2
        %v1344 = vld [vmem:[%s961] sm:$0x1]
        %v1345 = vld [vmem:[%s970] sm:$0x1]
        %1346 = vadd.xlane.f32.xlu0 %v1333
        %v1347 = vpop.xlane.xlu0 %1346
        %1348 = vadd.xlane.f32.xlu0 %v1334
        %v1349 = vpop.xlane.xlu0 %1348
        %1350 = vadd.xlane.f32.xlu0 %v1335
        %v1351 = vpop.xlane.xlu0 %1350
        %1352 = vadd.xlane.f32.xlu0 %v1336
        %v1353 = vpop.xlane.xlu0 %1352
        %1354 = vadd.xlane.f32.xlu0 %v1337
        %v1355 = vpop.xlane.xlu0 %1354
        %1356 = vadd.xlane.f32.xlu0 %v1338
        %v1357 = vpop.xlane.xlu0 %1356
        %v1358 = vrcp.pop 128.0
        %v1359 = vmul.f32 %v1347, %v1358
        %v1360 = vmul.f32 %v1349, %v1358
        %v1361 = vmul.f32 %v1351, %v1358
        %v1362 = vmul.f32 %v1353, %v1358
        %v1363 = vmul.f32 %v1355, %v1358
        %v1364 = vmul.f32 %v1357, %v1358
        %v1365 = vsub.f32 %v1333, %v1359
        %v1366 = vsub.f32 %v1334, %v1360
        %v1367 = vsub.f32 %v1335, %v1361
        %v1368 = vsub.f32 %v1336, %v1362
        %v1369 = vsub.f32 %v1337, %v1363
        %v1370 = vsub.f32 %v1338, %v1364
        %v1371 = vmul.f32 %v1365, %v1365
        %v1372 = vmul.f32 %v1366, %v1366
        %v1373 = vmul.f32 %v1367, %v1367
        %v1374 = vmul.f32 %v1368, %v1368
        %v1375 = vmul.f32 %v1369, %v1369
        %v1376 = vmul.f32 %v1370, %v1370
        %1377 = vadd.xlane.f32.xlu0 %v1371
        %v1378 = vpop.xlane.xlu0 %1377
        %1379 = vadd.xlane.f32.xlu0 %v1372
        %v1380 = vpop.xlane.xlu0 %1379
        %1381 = vadd.xlane.f32.xlu0 %v1373
        %v1382 = vpop.xlane.xlu0 %1381
        %1383 = vadd.xlane.f32.xlu0 %v1374
        %v1384 = vpop.xlane.xlu0 %1383
        %1385 = vadd.xlane.f32.xlu0 %v1375
        %v1386 = vpop.xlane.xlu0 %1385
        %1387 = vadd.xlane.f32.xlu0 %v1376
        %v1388 = vpop.xlane.xlu0 %1387
        %v1389 = vmul.f32 %v1378, %v1358
        %v1390 = vmul.f32 %v1380, %v1358
        %v1391 = vmul.f32 %v1382, %v1358
        %v1392 = vmul.f32 %v1384, %v1358
        %v1393 = vmul.f32 %v1386, %v1358
        %v1394 = vmul.f32 %v1388, %v1358
        %v1395 = vadd.f32 %v1389, 1e-06
        %v1396 = vadd.f32 %v1390, 1e-06
        %v1397 = vadd.f32 %v1391, 1e-06
        %v1398 = vadd.f32 %v1392, 1e-06
        %v1399 = vadd.f32 %v1393, 1e-06
        %v1400 = vadd.f32 %v1394, 1e-06
        %v1401 = vrsqrt.pop %v1395
        %v1402 = vrsqrt.pop %v1396
        %v1403 = vrsqrt.pop %v1397
        %v1404 = vrsqrt.pop %v1398
        %v1405 = vrsqrt.pop %v1399
        %v1406 = vrsqrt.pop %v1400
        %v1407 = vmul.f32 %v1365, %v1401
        %v1408 = vmul.f32 %v1366, %v1402
        %v1409 = vmul.f32 %v1367, %v1403
        %v1410 = vmul.f32 %v1368, %v1404
        %v1411 = vmul.f32 %v1369, %v1405
        %v1412 = vmul.f32 %v1370, %v1406
        %v1414 = vlaneseq
        %v1415 = vshrl.u32 %v1414, 7
        %v1416 = vsub.s32 0, %v1415
        %v1417 = vrot.slane %v1344, %v1416
        %v1419 = vmul.f32 %v1407, %v1417
        %v1420 = vmul.f32 %v1408, %v1417
        %v1421 = vmul.f32 %v1409, %v1417
        %v1422 = vmul.f32 %v1410, %v1417
        %v1423 = vmul.f32 %v1411, %v1417
        %v1424 = vmul.f32 %v1412, %v1417
        %v1426 = vlaneseq
        %v1427 = vshrl.u32 %v1426, 7
        %v1428 = vsub.s32 0, %v1427
        %v1429 = vrot.slane %v1345, %v1428
        %v1431 = vadd.f32 %v1419, %v1429
        %v1432 = vadd.f32 %v1420, %v1429
        %v1433 = vadd.f32 %v1421, %v1429
        %v1434 = vadd.f32 %v1422, %v1429
        %v1435 = vadd.f32 %v1423, %v1429
        %v1436 = vadd.f32 %v1424, %v1429
        %v1437 = vpack.c.bf16 %v1432, %v1431
        %v1438 = vpack.c.bf16 %v1434, %v1433
        %v1439 = vpack.c.bf16 %v1436, %v1435
        %v1440 = vld [vmem:[%s1182] sm:$0xff]
        %v1441 = vld [vmem:[%s1182 + $0x8] sm:$0xf]
        %v1442 = vld [vmem:[%s1182 + $0xc] sm:$0xff]
        %v1443 = vld [vmem:[%s1182 + $0x14] sm:$0xf]
        %v1444 = vld [vmem:[%s1182 + $0x18] sm:$0xff]
        %v1445 = vld [vmem:[%s1182 + $0x20] sm:$0xf]
        %v1446 = vld [vmem:[%s1182 + $0x24] sm:$0xff]
        %v1447 = vld [vmem:[%s1182 + $0x2c] sm:$0xf]
        %v1448 = vld [vmem:[%s1182 + $0x30] sm:$0xff]
        %v1449 = vld [vmem:[%s1182 + $0x38] sm:$0xf]
        %v1450 = vld [vmem:[%s1182 + $0x3c] sm:$0xff]
        %v1451 = vld [vmem:[%s1182 + $0x44] sm:$0xf]
        %v1452 = vld [vmem:[%s1182 + $0x48] sm:$0xff]
        %v1453 = vld [vmem:[%s1182 + $0x50] sm:$0xf]
        %v1454 = vld [vmem:[%s1182 + $0x54] sm:$0xff]
        %v1455 = vld [vmem:[%s1182 + $0x5c] sm:$0xf]
        %v1456 = vld [vmem:[%s1182 + $0x60] sm:$0xff]
        %v1457 = vld [vmem:[%s1182 + $0x68] sm:$0xf]
        %v1458 = vld [vmem:[%s1182 + $0x6c] sm:$0xff]
        %v1459 = vld [vmem:[%s1182 + $0x74] sm:$0xf]
        %v1460 = vld [vmem:[%s1182 + $0x78] sm:$0xff]
        %v1461 = vld [vmem:[%s1182 + $0x80] sm:$0xf]
        %v1462 = vld [vmem:[%s1182 + $0x84] sm:$0xff]
        %v1463 = vld [vmem:[%s1182 + $0x8c] sm:$0xf]
        %v1464 = vld [vmem:[%s1182 + $0x90] sm:$0xff]
        %v1465 = vld [vmem:[%s1182 + $0x98] sm:$0xf]
        %v1466 = vld [vmem:[%s1182 + $0x9c] sm:$0xff]
        %v1467 = vld [vmem:[%s1182 + $0xa4] sm:$0xf]
        %v1468 = vld [vmem:[%s1182 + $0xa8] sm:$0xff]
        %v1469 = vld [vmem:[%s1182 + $0xb0] sm:$0xf]
        %v1470 = vld [vmem:[%s1182 + $0xb4] sm:$0xff]
        %v1471 = vld [vmem:[%s1182 + $0xbc] sm:$0xf]
        %v1472 = vld [vmem:[%s979] sm:$0x7]
        %v1474 = vlaneseq
        %v1475 = vshrl.u32 %v1474, 7
        %v1476 = vsub.s32 0, %v1475
        %v1477 = vrot.slane %v1472, %v1476
        %v1478 = vlaneseq
        %v1479 = vshrl.u32 %v1478, 7
        %v1480 = vsub.s32 1, %v1479
        %v1481 = vrot.slane %v1472, %v1480
        %v1482 = vlaneseq
        %v1483 = vshrl.u32 %v1482, 7
        %v1484 = vsub.s32 2, %v1483
        %v1485 = vrot.slane %v1472, %v1484
        %v1521 = vunpack.c.l.b16 %v1440
        %v1522 = vunpack.c.h.b16 %v1440
        %v1523 = vunpack.c.l.b16 %v1441
        %v1524 = vunpack.c.l.b16 %v1442
        %v1525 = vunpack.c.h.b16 %v1442
        %v1526 = vunpack.c.l.b16 %v1443
        %v1527 = vunpack.c.l.b16 %v1444
        %v1528 = vunpack.c.h.b16 %v1444
        %v1529 = vunpack.c.l.b16 %v1445
        %v1530 = vunpack.c.l.b16 %v1446
        %v1531 = vunpack.c.h.b16 %v1446
        %v1532 = vunpack.c.l.b16 %v1447
        %v1533 = vunpack.c.l.b16 %v1448
        %v1534 = vunpack.c.h.b16 %v1448
        %v1535 = vunpack.c.l.b16 %v1449
        %v1536 = vunpack.c.l.b16 %v1450
        %v1537 = vunpack.c.h.b16 %v1450
        %v1538 = vunpack.c.l.b16 %v1451
        %v1539 = vunpack.c.l.b16 %v1452
        %v1540 = vunpack.c.h.b16 %v1452
        %v1541 = vunpack.c.l.b16 %v1453
        %v1542 = vunpack.c.l.b16 %v1454
        %v1543 = vunpack.c.h.b16 %v1454
        %v1544 = vunpack.c.l.b16 %v1455
        %v1545 = vunpack.c.l.b16 %v1456
        %v1546 = vunpack.c.h.b16 %v1456
        %v1547 = vunpack.c.l.b16 %v1457
        %v1548 = vunpack.c.l.b16 %v1458
        %v1549 = vunpack.c.h.b16 %v1458
        %v1550 = vunpack.c.l.b16 %v1459
        %v1551 = vunpack.c.l.b16 %v1460
        %v1552 = vunpack.c.h.b16 %v1460
        %v1553 = vunpack.c.l.b16 %v1461
        %v1554 = vunpack.c.l.b16 %v1462
        %v1555 = vunpack.c.h.b16 %v1462
        %v1556 = vunpack.c.l.b16 %v1463
        %v1557 = vunpack.c.l.b16 %v1464
        %v1558 = vunpack.c.h.b16 %v1464
        %v1559 = vunpack.c.l.b16 %v1465
        %v1560 = vunpack.c.l.b16 %v1466
        %v1561 = vunpack.c.h.b16 %v1466
        %v1562 = vunpack.c.l.b16 %v1467
        %v1563 = vunpack.c.l.b16 %v1468
        %v1564 = vunpack.c.h.b16 %v1468
        %v1565 = vunpack.c.l.b16 %v1469
        %v1566 = vunpack.c.l.b16 %v1470
        %v1567 = vunpack.c.h.b16 %v1470
        %v1568 = vunpack.c.l.b16 %v1471
        %v1569 = vpack.c.b16 %v1524, %v1521
        %v1570 = vpack.c.b16 %v1525, %v1522
        %v1571 = vpack.c.b16 %v1526, %v1523
        %v1572 = vpack.c.b16 %v1530, %v1527
        %v1573 = vpack.c.b16 %v1531, %v1528
        %v1574 = vpack.c.b16 %v1532, %v1529
        %v1575 = vpack.c.b16 %v1536, %v1533
        %v1576 = vpack.c.b16 %v1537, %v1534
        %v1577 = vpack.c.b16 %v1538, %v1535
        %v1578 = vpack.c.b16 %v1542, %v1539
        %v1579 = vpack.c.b16 %v1543, %v1540
        %v1580 = vpack.c.b16 %v1544, %v1541
        %v1581 = vpack.c.b16 %v1548, %v1545
        %v1582 = vpack.c.b16 %v1549, %v1546
        %v1583 = vpack.c.b16 %v1550, %v1547
        %v1584 = vpack.c.b16 %v1554, %v1551
        %v1585 = vpack.c.b16 %v1555, %v1552
        %v1586 = vpack.c.b16 %v1556, %v1553
        %v1587 = vpack.c.b16 %v1560, %v1557
        %v1588 = vpack.c.b16 %v1561, %v1558
        %v1589 = vpack.c.b16 %v1562, %v1559
        %v1590 = vpack.c.b16 %v1566, %v1563
        %v1591 = vpack.c.b16 %v1567, %v1564
        %v1592 = vpack.c.b16 %v1568, %v1565
        %1617 = vmatprep.subr.bf16.mxu0 %v1570
        %1618 = vmatpush1.bf16.msra.mxu0 %v1569
        %1619 = vmatprep.subr.bf16.mxu0 %v1573
        %1620 = vmatpush1.bf16.msra.mxu0 %v1572
        %1621 = vmatprep.subr.bf16.mxu0 %v1576
        %1622 = vmatpush1.bf16.msra.mxu0 %v1575
        %1623 = vmatprep.subr.bf16.mxu0 %v1579
        %1624 = vmatpush1.bf16.msra.mxu0 %v1578
        %1625 = vmatprep.subr.bf16.mxu0 %v1582
        %1626 = vmatpush1.bf16.msra.mxu0 %v1581
        %1627 = vmatprep.subr.bf16.mxu0 %v1585
        %1628 = vmatpush1.bf16.msra.mxu0 %v1584
        %1629 = vmatprep.subr.bf16.mxu0 %v1588
        %1630 = vmatpush1.bf16.msra.mxu0 %v1587
        %1631 = vmatprep.subr.bf16.mxu0 %v1591
        %1632 = vmatpush1.bf16.msra.mxu0 %v1590
        %1633 = vmatprep.subr.bf16.mxu0 0
        %1634 = vmatpush1.bf16.msra.mxu0 0
        %1635 = vmatprep.subr.bf16.mxu0 0
        %1636 = vmatpush1.bf16.msra.mxu0 0
        %1637 = vmatprep.subr.bf16.mxu0 0
        %1638 = vmatpush1.bf16.msra.mxu0 0
        %1639 = vmatprep.subr.bf16.mxu0 0
        %1640 = vmatpush1.bf16.msra.mxu0 0
        %1641 = vmatprep.subr.bf16.mxu0 0
        %1642 = vmatpush1.bf16.msra.mxu0 0
        %1643 = vmatprep.subr.bf16.mxu0 0
        %1644 = vmatpush1.bf16.msra.mxu0 0
        %1645 = vmatprep.subr.bf16.mxu0 0
        %1646 = vmatpush1.bf16.msra.mxu0 0
        %1647 = vmatprep.subr.bf16.mxu0 0
        %1648 = vmatpush1.bf16.msra.mxu0 0
        %1649 = vmatprep.mubr.bf16.mxu0 0
        %1650 = vmatmul.mubr.bf16.gmra.mrb[0].mxu0 %v1437
        %v1651 = vpop.f32.mrb[0].mxu0
        %v1652 = vadd.f32 %v1477, %v1651
        %v1653 = vpop.f32.mrb[0].mxu0
        %v1654 = vadd.f32 %v1481, %v1653
        %v1655 = vpop.f32.mrb[0].mxu0
        %v1656 = vadd.f32 %v1477, %v1655
        %v1657 = vpop.f32.mrb[0].mxu0
        %v1658 = vadd.f32 %v1481, %v1657
        %1659 = vmatprep.mubr.bf16.mxu0 0
        %1660 = vmatmul.mubr.bf16.gmra.mrb[0].mxu0 %v1438
        %v1661 = vpop.f32.mrb[0].mxu0
        %v1662 = vadd.f32 %v1477, %v1661
        %v1663 = vpop.f32.mrb[0].mxu0
        %v1664 = vadd.f32 %v1481, %v1663
        %v1665 = vpop.f32.mrb[0].mxu0
        %v1666 = vadd.f32 %v1477, %v1665
        %v1667 = vpop.f32.mrb[0].mxu0
        %v1668 = vadd.f32 %v1481, %v1667
        %1669 = vmatprep.mubr.bf16.mxu0 0
        %1670 = vmatmul.mubr.bf16.gmra.mrb[0].mxu0 %v1439
        %v1671 = vpop.f32.mrb[0].mxu0
        %v1672 = vadd.f32 %v1477, %v1671
        %v1673 = vpop.f32.mrb[0].mxu0
        %v1674 = vadd.f32 %v1481, %v1673
        %v1675 = vpop.f32.mrb[0].mxu0
        %v1676 = vadd.f32 %v1477, %v1675
        %v1677 = vpop.f32.mrb[0].mxu0
        %v1678 = vadd.f32 %v1481, %v1677
        %1679 = vdwg.mxu0
        %1680 = vmatprep.subr.bf16.mxu0 0
        %1681 = vmatpush1.bf16.msra.mxu0 %v1571
        %1682 = vmatprep.subr.bf16.mxu0 0
        %1683 = vmatpush1.bf16.msra.mxu0 %v1574
        %1684 = vmatprep.subr.bf16.mxu0 0
        %1685 = vmatpush1.bf16.msra.mxu0 %v1577
        %1686 = vmatprep.subr.bf16.mxu0 0
        %1687 = vmatpush1.bf16.msra.mxu0 %v1580
        %1688 = vmatprep.subr.bf16.mxu0 0
        %1689 = vmatpush1.bf16.msra.mxu0 %v1583
        %1690 = vmatprep.subr.bf16.mxu0 0
        %1691 = vmatpush1.bf16.msra.mxu0 %v1586
        %1692 = vmatprep.subr.bf16.mxu0 0
        %1693 = vmatpush1.bf16.msra.mxu0 %v1589
        %1694 = vmatprep.subr.bf16.mxu0 0
        %1695 = vmatpush1.bf16.msra.mxu0 %v1592
        %1696 = vmatprep.subr.bf16.mxu0 0
        %1697 = vmatpush1.bf16.msra.mxu0 0
        %1698 = vmatprep.subr.bf16.mxu0 0
        %1699 = vmatpush1.bf16.msra.mxu0 0
        %1700 = vmatprep.subr.bf16.mxu0 0
        %1701 = vmatpush1.bf16.msra.mxu0 0
        %1702 = vmatprep.subr.bf16.mxu0 0
        %1703 = vmatpush1.bf16.msra.mxu0 0
        %1704 = vmatprep.subr.bf16.mxu0 0
        %1705 = vmatpush1.bf16.msra.mxu0 0
        %1706 = vmatprep.subr.bf16.mxu0 0
        %1707 = vmatpush1.bf16.msra.mxu0 0
        %1708 = vmatprep.subr.bf16.mxu0 0
        %1709 = vmatpush1.bf16.msra.mxu0 0
        %1710 = vmatprep.subr.bf16.mxu0 0
        %1711 = vmatpush1.bf16.msra.mxu0 0
        %1712 = vmatprep.mubr.bf16.mxu0 0
        %1713 = vmatmul.mubr.bf16.gmra.mrb[0].mxu0 %v1437
        %v1714 = vpop.f32.mrb[0].mxu0
        %v1715 = vadd.f32 %v1485, %v1714
        %v1716 = vpop.f32.mrb[0].mxu0
        %v1717 = vpop.f32.mrb[0].mxu0
        %v1718 = vadd.f32 %v1485, %v1717
        %v1719 = vpop.f32.mrb[0].mxu0
        %1720 = vmatprep.mubr.bf16.mxu0 0
        %1721 = vmatmul.mubr.bf16.gmra.mrb[0].mxu0 %v1438
        %v1722 = vpop.f32.mrb[0].mxu0
        %v1723 = vadd.f32 %v1485, %v1722
        %v1724 = vpop.f32.mrb[0].mxu0
        %v1725 = vpop.f32.mrb[0].mxu0
        %v1726 = vadd.f32 %v1485, %v1725
        %v1727 = vpop.f32.mrb[0].mxu0
        %1728 = vmatprep.mubr.bf16.mxu0 0
        %1729 = vmatmul.mubr.bf16.gmra.mrb[0].mxu0 %v1439
        %v1730 = vpop.f32.mrb[0].mxu0
        %v1731 = vadd.f32 %v1485, %v1730
        %v1732 = vpop.f32.mrb[0].mxu0
        %v1733 = vpop.f32.mrb[0].mxu0
        %v1734 = vadd.f32 %v1485, %v1733
        %v1735 = vpop.f32.mrb[0].mxu0
        %1736 = vdwg.mxu0
        %v1737 = vld [vmem:[%s988] sm:$0xf]
        %v1738 = vld [vmem:[%s988 + $0x4] sm:$0xf]
        %v1739 = vld [vmem:[%s988 + $0x8] sm:$0xf]
        %v1740 = vld [vmem:[%s988 + $0xc] sm:$0xf]
        %v1741 = vld [vmem:[%s988 + $0x10] sm:$0xf]
        %v1742 = vld [vmem:[%s988 + $0x14] sm:$0xf]
        %v1743 = vld [vmem:[%s988 + $0x18] sm:$0xf]
        %v1744 = vld [vmem:[%s988 + $0x1c] sm:$0xf]
        %v1745 = vld [vmem:[%s988 + $0x20] sm:$0xf]
        %v1746 = vld [vmem:[%s988 + $0x24] sm:$0xf]
        %v1747 = vld [vmem:[%s988 + $0x28] sm:$0xf]
        %v1748 = vld [vmem:[%s988 + $0x2c] sm:$0xf]
        %v1749 = vld [vmem:[%s988 + $0x30] sm:$0xf]
        %v1750 = vld [vmem:[%s988 + $0x34] sm:$0xf]
        %v1751 = vld [vmem:[%s988 + $0x38] sm:$0xf]
        %v1752 = vld [vmem:[%s988 + $0x3c] sm:$0xf]
        %v1753 = vpack.c.bf16 %v1656, %v1652
        %v1754 = vpack.c.bf16 %v1662, %v1662
        %v1755 = vpack.c.bf16 %v1672, %v1666
        %v1756 = vpack.c.bf16 %v1676, %v1676
        %v1757 = vpack.c.bf16 %v1658, %v1654
        %v1758 = vpack.c.bf16 %v1664, %v1664
        %v1759 = vpack.c.bf16 %v1674, %v1668
        %v1760 = vpack.c.bf16 %v1678, %v1678
        %vm1761 = vcmask 261120
        %v1763 = vsel %vm1761, %v1753, 0
        %v1766 = vsel %vm1761, %v1754, 0
        %v1769 = vsel %vm1761, %v1757, 0
        %v1772 = vsel %vm1761, %v1758, 0
        %1774 = vmatprep.subr.bf16.mxu0 0
        %1775 = vmatpush1.bf16.xpose.msra.mxu0 %v1769
        %1776 = vmatprep.subr.bf16.mxu0 0
        %1777 = vmatpush1.bf16.xpose.msra.mxu0 %v1772
        %1778 = vmatprep.subr.bf16.mxu0 0
        %1779 = vmatpush1.bf16.xpose.msra.mxu0 0
        %1780 = vmatprep.subr.bf16.mxu0 0
        %1781 = vmatpush1.bf16.xpose.msra.mxu0 0
        %1782 = vmatprep.subr.bf16.mxu0 0
        %1783 = vmatpush1.bf16.xpose.msra.mxu0 0
        %1784 = vmatprep.subr.bf16.mxu0 0
        %1785 = vmatpush1.bf16.xpose.msra.mxu0 0
        %1786 = vmatprep.subr.bf16.mxu0 0
        %1787 = vmatpush1.bf16.xpose.msra.mxu0 0
        %1788 = vmatprep.subr.bf16.mxu0 0
        %1789 = vmatpush1.bf16.xpose.msra.mxu0 0
        %1790 = vmatprep.subr.bf16.mxu0 0
        %1791 = vmatpush1.bf16.xpose.msra.mxu0 0
        %1792 = vmatprep.subr.bf16.mxu0 0
        %1793 = vmatpush1.bf16.xpose.msra.mxu0 0
        %1794 = vmatprep.subr.bf16.mxu0 0
        %1795 = vmatpush1.bf16.xpose.msra.mxu0 0
        %1796 = vmatprep.subr.bf16.mxu0 0
        %1797 = vmatpush1.bf16.xpose.msra.mxu0 0
        %1798 = vmatprep.subr.bf16.mxu0 0
        %1799 = vmatpush1.bf16.xpose.msra.mxu0 0
        %1800 = vmatprep.subr.bf16.mxu0 0
        %1801 = vmatpush1.bf16.xpose.msra.mxu0 0
        %1802 = vmatprep.subr.bf16.mxu0 0
        %1803 = vmatpush1.bf16.xpose.msra.mxu0 0
        %1804 = vmatprep.subr.bf16.mxu0 0
        %1805 = vmatpush1.bf16.xpose.msra.mxu0 0
        %1806 = vmatprep.mubr.bf16.mxu0 0
        %1807 = vmatmul.mubr.bf16.gmra.mrb[0].mxu0 %v1763
        %v1808 = vpop.f32.mrb[0].mxu0
        %v1809 = vadd.f32 0.0, %v1808
        %v1810 = vpop.f32.mrb[0].mxu0
        %v1811 = vpop.f32.mrb[0].mxu0
        %v1812 = vadd.f32 0.0, %v1811
        %v1813 = vpop.f32.mrb[0].mxu0
        %1814 = vmatprep.mubr.bf16.mxu0 0
        %1815 = vmatmul.mubr.bf16.gmra.mrb[0].mxu0 %v1766
        %v1816 = vpop.f32.mrb[0].mxu0
        %v1817 = vadd.f32 0.0, %v1816
        %v1818 = vpop.f32.mrb[0].mxu0
        %v1819 = vpop.f32.mrb[0].mxu0
        %v1820 = vpop.f32.mrb[0].mxu0
        %1821 = vdwg.mxu0
        %v1823 = vsel %vm1761, %v1755, 0
        %v1826 = vsel %vm1761, %v1756, 0
        %v1829 = vsel %vm1761, %v1759, 0
        %v1832 = vsel %vm1761, %v1760, 0
        %1834 = vmatprep.subr.bf16.mxu0 0
        %1835 = vmatpush1.bf16.xpose.msra.mxu0 %v1829
        %1836 = vmatprep.subr.bf16.mxu0 0
        %1837 = vmatpush1.bf16.xpose.msra.mxu0 %v1832
        %1838 = vmatprep.subr.bf16.mxu0 0
        %1839 = vmatpush1.bf16.xpose.msra.mxu0 0
        %1840 = vmatprep.subr.bf16.mxu0 0
        %1841 = vmatpush1.bf16.xpose.msra.mxu0 0
        %1842 = vmatprep.subr.bf16.mxu0 0
        %1843 = vmatpush1.bf16.xpose.msra.mxu0 0
        %1844 = vmatprep.subr.bf16.mxu0 0
        %1845 = vmatpush1.bf16.xpose.msra.mxu0 0
        %1846 = vmatprep.subr.bf16.mxu0 0
        %1847 = vmatpush1.bf16.xpose.msra.mxu0 0
        %1848 = vmatprep.subr.bf16.mxu0 0
        %1849 = vmatpush1.bf16.xpose.msra.mxu0 0
        %1850 = vmatprep.subr.bf16.mxu0 0
        %1851 = vmatpush1.bf16.xpose.msra.mxu0 0
        %1852 = vmatprep.subr.bf16.mxu0 0
        %1853 = vmatpush1.bf16.xpose.msra.mxu0 0
        %1854 = vmatprep.subr.bf16.mxu0 0
        %1855 = vmatpush1.bf16.xpose.msra.mxu0 0
        %1856 = vmatprep.subr.bf16.mxu0 0
        %1857 = vmatpush1.bf16.xpose.msra.mxu0 0
        %1858 = vmatprep.subr.bf16.mxu0 0
        %1859 = vmatpush1.bf16.xpose.msra.mxu0 0
        %1860 = vmatprep.subr.bf16.mxu0 0
        %1861 = vmatpush1.bf16.xpose.msra.mxu0 0
        %1862 = vmatprep.subr.bf16.mxu0 0
        %1863 = vmatpush1.bf16.xpose.msra.mxu0 0
        %1864 = vmatprep.subr.bf16.mxu0 0
        %1865 = vmatpush1.bf16.xpose.msra.mxu0 0
        %1866 = vmatprep.mubr.bf16.mxu0 0
        %1867 = vmatmul.mubr.bf16.gmra.mrb[0].mxu0 %v1823
        %v1868 = vpop.f32.mrb[0].mxu0
        %v1869 = vadd.f32 0.0, %v1868
        %v1870 = vpop.f32.mrb[0].mxu0
        %v1871 = vpop.f32.mrb[0].mxu0
        %v1872 = vadd.f32 0.0, %v1871
        %v1873 = vpop.f32.mrb[0].mxu0
        %1874 = vmatprep.mubr.bf16.mxu0 0
        %1875 = vmatmul.mubr.bf16.gmra.mrb[0].mxu0 %v1826
        %v1876 = vpop.f32.mrb[0].mxu0
        %v1877 = vadd.f32 0.0, %v1876
        %v1878 = vpop.f32.mrb[0].mxu0
        %v1879 = vpop.f32.mrb[0].mxu0
        %v1880 = vpop.f32.mrb[0].mxu0
        %1881 = vdwg.mxu0
        %v1882 = vmul.f32 %v1809, 0.17677669
        %v1883 = vmul.f32 %v1812, 0.17677669
        %v1884 = vmul.f32 %v1817, 0.17677669
        %v1885 = vmul.f32 %v1869, 0.17677669
        %v1886 = vmul.f32 %v1872, 0.17677669
        %v1887 = vmul.f32 %v1877, 0.17677669
        %v1888 = vadd.f32 %v1882, %v1342
        %v1889 = vadd.f32 %v1883, %v1342
        %v1890 = vadd.f32 %v1884, %v1342
        %v1891 = vadd.f32 %v1885, %v1342
        %v1892 = vadd.f32 %v1886, %v1342
        %v1893 = vadd.f32 %v1887, %v1342
        %vm1894 = vcmask 195584
        %v1895 = vsel %vm1894, %v1888, -inf
        %1896 = vmax.xlane.f32.xlu0 %v1895
        %v1897 = vpop.xlane.xlu0 %1896
        %v1898 = vsel %vm1894, %v1889, -inf
        %1899 = vmax.xlane.f32.xlu0 %v1898
        %v1900 = vpop.xlane.xlu0 %1899
        %v1901 = vsel %vm1894, %v1890, -inf
        %1902 = vmax.xlane.f32.xlu0 %v1901
        %v1903 = vpop.xlane.xlu0 %1902
        %v1904 = vsel %vm1894, %v1891, -inf
        %1905 = vmax.xlane.f32.xlu0 %v1904
        %v1906 = vpop.xlane.xlu0 %1905
        %v1907 = vsel %vm1894, %v1892, -inf
        %1908 = vmax.xlane.f32.xlu0 %v1907
        %v1909 = vpop.xlane.xlu0 %1908
        %v1910 = vsel %vm1894, %v1893, -inf
        %1911 = vmax.xlane.f32.xlu0 %v1910
        %v1912 = vpop.xlane.xlu0 %1911
        %v1913 = vsub.f32 %v1888, %v1897
        %v1914 = vsub.f32 %v1889, %v1900
        %v1915 = vsub.f32 %v1890, %v1903
        %v1916 = vsub.f32 %v1891, %v1906
        %v1917 = vsub.f32 %v1892, %v1909
        %v1918 = vsub.f32 %v1893, %v1912
        %v1919 = vmul.f32 %v1913, 1.442695
        %v1920 = vpow.pop %v1919
        %v1921 = vmul.f32 %v1914, 1.442695
        %v1922 = vpow.pop %v1921
        %v1923 = vmul.f32 %v1915, 1.442695
        %v1924 = vpow.pop %v1923
        %v1925 = vmul.f32 %v1916, 1.442695
        %v1926 = vpow.pop %v1925
        %v1927 = vmul.f32 %v1917, 1.442695
        %v1928 = vpow.pop %v1927
        %v1929 = vmul.f32 %v1918, 1.442695
        %v1930 = vpow.pop %v1929
        %v1931 = vsel %vm1894, %v1920, 0.0
        %1932 = vadd.xlane.f32.xlu0 %v1931
        %v1933 = vpop.xlane.xlu0 %1932
        %v1934 = vsel %vm1894, %v1922, 0.0
        %1935 = vadd.xlane.f32.xlu0 %v1934
        %v1936 = vpop.xlane.xlu0 %1935
        %v1937 = vsel %vm1894, %v1924, 0.0
        %1938 = vadd.xlane.f32.xlu0 %v1937
        %v1939 = vpop.xlane.xlu0 %1938
        %v1940 = vsel %vm1894, %v1926, 0.0
        %1941 = vadd.xlane.f32.xlu0 %v1940
        %v1942 = vpop.xlane.xlu0 %1941
        %v1943 = vsel %vm1894, %v1928, 0.0
        %1944 = vadd.xlane.f32.xlu0 %v1943
        %v1945 = vpop.xlane.xlu0 %1944
        %v1946 = vsel %vm1894, %v1930, 0.0
        %1947 = vadd.xlane.f32.xlu0 %v1946
        %v1948 = vpop.xlane.xlu0 %1947
        %v1949 = vrcp.pop %v1933
        %v1950 = vrcp.pop %v1936
        %v1951 = vrcp.pop %v1939
        %v1952 = vrcp.pop %v1942
        %v1953 = vrcp.pop %v1945
        %v1954 = vrcp.pop %v1948
        %v1955 = vmul.f32 %v1920, %v1949
        %v1956 = vmul.f32 %v1922, %v1950
        %v1957 = vmul.f32 %v1924, %v1951
        %v1958 = vmul.f32 %v1926, %v1952
        %v1959 = vmul.f32 %v1928, %v1953
        %v1960 = vmul.f32 %v1930, %v1954
        %v1961 = vpack.c.bf16 %v1956, %v1955
        %v1962 = vpack.c.bf16 %v1957, %v1957
        %v1963 = vpack.c.bf16 %v1959, %v1958
        %v1964 = vpack.c.bf16 %v1960, %v1960
        %v1965 = vpack.c.bf16 %v1718, %v1715
        %v1966 = vpack.c.bf16 %v1723, %v1723
        %v1967 = vpack.c.bf16 %v1731, %v1726
        %v1968 = vpack.c.bf16 %v1734, %v1734
        %v1970 = vsel %vm1894, %v1961, 0
        %v1973 = vsel %vm1894, %v1962, 0
        %vm1975 = vcmask 1043456
        %v1977 = vsel %vm1975, %v1966, 0
        %1979 = vmatprep.subr.bf16.mxu0 0
        %1980 = vmatpush1.bf16.msra.mxu0 %v1965
        %1981 = vmatprep.subr.bf16.mxu0 0
        %1982 = vmatpush1.bf16.msra.mxu0 %v1977
        %1983 = vmatprep.subr.bf16.mxu0 0
        %1984 = vmatpush1.bf16.msra.mxu0 0
        %1985 = vmatprep.subr.bf16.mxu0 0
        %1986 = vmatpush1.bf16.msra.mxu0 0
        %1987 = vmatprep.subr.bf16.mxu0 0
        %1988 = vmatpush1.bf16.msra.mxu0 0
        %1989 = vmatprep.subr.bf16.mxu0 0
        %1990 = vmatpush1.bf16.msra.mxu0 0
        %1991 = vmatprep.subr.bf16.mxu0 0
        %1992 = vmatpush1.bf16.msra.mxu0 0
        %1993 = vmatprep.subr.bf16.mxu0 0
        %1994 = vmatpush1.bf16.msra.mxu0 0
        %1995 = vmatprep.subr.bf16.mxu0 0
        %1996 = vmatpush1.bf16.msra.mxu0 0
        %1997 = vmatprep.subr.bf16.mxu0 0
        %1998 = vmatpush1.bf16.msra.mxu0 0
        %1999 = vmatprep.subr.bf16.mxu0 0
        %2000 = vmatpush1.bf16.msra.mxu0 0
        %2001 = vmatprep.subr.bf16.mxu0 0
        %2002 = vmatpush1.bf16.msra.mxu0 0
        %2003 = vmatprep.subr.bf16.mxu0 0
        %2004 = vmatpush1.bf16.msra.mxu0 0
        %2005 = vmatprep.subr.bf16.mxu0 0
        %2006 = vmatpush1.bf16.msra.mxu0 0
        %2007 = vmatprep.subr.bf16.mxu0 0
        %2008 = vmatpush1.bf16.msra.mxu0 0
        %2009 = vmatprep.subr.bf16.mxu0 0
        %2010 = vmatpush1.bf16.msra.mxu0 0
        %2011 = vmatprep.mubr.bf16.mxu0 0
        %2012 = vmatmul.mubr.bf16.gmra.mrb[0].mxu0 %v1970
        %v2013 = vpop.f32.mrb[0].mxu0
        %v2014 = vadd.f32 0.0, %v2013
        %v2015 = vpop.f32.mrb[0].mxu0
        %v2016 = vpop.f32.mrb[0].mxu0
        %v2017 = vadd.f32 0.0, %v2016
        %v2018 = vpop.f32.mrb[0].mxu0
        %2019 = vmatprep.mubr.bf16.mxu0 0
        %2020 = vmatmul.mubr.bf16.gmra.mrb[0].mxu0 %v1973
        %v2021 = vpop.f32.mrb[0].mxu0
        %v2022 = vadd.f32 0.0, %v2021
        %v2023 = vpop.f32.mrb[0].mxu0
        %v2024 = vpop.f32.mrb[0].mxu0
        %v2025 = vpop.f32.mrb[0].mxu0
        %2026 = vdwg.mxu0
        %v2028 = vsel %vm1894, %v1963, 0
        %v2031 = vsel %vm1894, %v1964, 0
        %v2034 = vsel %vm1975, %v1968, 0
        %2036 = vmatprep.subr.bf16.mxu0 0
        %2037 = vmatpush1.bf16.msra.mxu0 %v1967
        %2038 = vmatprep.subr.bf16.mxu0 0
        %2039 = vmatpush1.bf16.msra.mxu0 %v2034
        %2040 = vmatprep.subr.bf16.mxu0 0
        %2041 = vmatpush1.bf16.msra.mxu0 0
        %2042 = vmatprep.subr.bf16.mxu0 0
        %2043 = vmatpush1.bf16.msra.mxu0 0
        %2044 = vmatprep.subr.bf16.mxu0 0
        %2045 = vmatpush1.bf16.msra.mxu0 0
        %2046 = vmatprep.subr.bf16.mxu0 0
        %2047 = vmatpush1.bf16.msra.mxu0 0
        %2048 = vmatprep.subr.bf16.mxu0 0
        %2049 = vmatpush1.bf16.msra.mxu0 0
        %2050 = vmatprep.subr.bf16.mxu0 0
        %2051 = vmatpush1.bf16.msra.mxu0 0
        %2052 = vmatprep.subr.bf16.mxu0 0
        %2053 = vmatpush1.bf16.msra.mxu0 0
        %2054 = vmatprep.subr.bf16.mxu0 0
        %2055 = vmatpush1.bf16.msra.mxu0 0
        %2056 = vmatprep.subr.bf16.mxu0 0
        %2057 = vmatpush1.bf16.msra.mxu0 0
        %2058 = vmatprep.subr.bf16.mxu0 0
        %2059 = vmatpush1.bf16.msra.mxu0 0
        %2060 = vmatprep.subr.bf16.mxu0 0
        %2061 = vmatpush1.bf16.msra.mxu0 0
        %2062 = vmatprep.subr.bf16.mxu0 0
        %2063 = vmatpush1.bf16.msra.mxu0 0
        %2064 = vmatprep.subr.bf16.mxu0 0
        %2065 = vmatpush1.bf16.msra.mxu0 0
        %2066 = vmatprep.subr.bf16.mxu0 0
        %2067 = vmatpush1.bf16.msra.mxu0 0
        %2068 = vmatprep.mubr.bf16.mxu0 0
        %2069 = vmatmul.mubr.bf16.gmra.mrb[0].mxu0 %v2028
        %v2070 = vpop.f32.mrb[0].mxu0
        %v2071 = vadd.f32 0.0, %v2070
        %v2072 = vpop.f32.mrb[0].mxu0
        %v2073 = vpop.f32.mrb[0].mxu0
        %v2074 = vadd.f32 0.0, %v2073
        %v2075 = vpop.f32.mrb[0].mxu0
        %2076 = vmatprep.mubr.bf16.mxu0 0
        %2077 = vmatmul.mubr.bf16.gmra.mrb[0].mxu0 %v2031
        %v2078 = vpop.f32.mrb[0].mxu0
        %v2079 = vadd.f32 0.0, %v2078
        %v2080 = vpop.f32.mrb[0].mxu0
        %v2081 = vpop.f32.mrb[0].mxu0
        %v2082 = vpop.f32.mrb[0].mxu0
        %2083 = vdwg.mxu0
        %v2084 = vpack.c.bf16 %v2017, %v2014
        %v2085 = vpack.c.bf16 %v2071, %v2022
        %v2086 = vpack.c.bf16 %v2079, %v2074
        %2089 = vrot.lane.b32.xlu0 %v1753, 96
        %v2090 = vpop.permute.xlu0 %2089
        %2091 = vrot.lane.b32.xlu0 %v1754, 96
        %v2092 = vpop.permute.xlu0 %2091
        %2095 = vrot.lane.b32.xlu0 %v1757, 96
        %v2096 = vpop.permute.xlu0 %2095
        %2097 = vrot.lane.b32.xlu0 %v1758, 96
        %v2098 = vpop.permute.xlu0 %2097
        %v2100 = vsel %vm1761, %v2090, 0
        %v2103 = vsel %vm1761, %v2092, 0
        %v2106 = vsel %vm1761, %v2096, 0
        %v2109 = vsel %vm1761, %v2098, 0
        %2111 = vmatprep.subr.bf16.mxu0 0
        %2112 = vmatpush1.bf16.xpose.msra.mxu0 %v2106
        %2113 = vmatprep.subr.bf16.mxu0 0
        %2114 = vmatpush1.bf16.xpose.msra.mxu0 %v2109
        %2115 = vmatprep.subr.bf16.mxu0 0
        %2116 = vmatpush1.bf16.xpose.msra.mxu0 0
        %2117 = vmatprep.subr.bf16.mxu0 0
        %2118 = vmatpush1.bf16.xpose.msra.mxu0 0
        %2119 = vmatprep.subr.bf16.mxu0 0
        %2120 = vmatpush1.bf16.xpose.msra.mxu0 0
        %2121 = vmatprep.subr.bf16.mxu0 0
        %2122 = vmatpush1.bf16.xpose.msra.mxu0 0
        %2123 = vmatprep.subr.bf16.mxu0 0
        %2124 = vmatpush1.bf16.xpose.msra.mxu0 0
        %2125 = vmatprep.subr.bf16.mxu0 0
        %2126 = vmatpush1.bf16.xpose.msra.mxu0 0
        %2127 = vmatprep.subr.bf16.mxu0 0
        %2128 = vmatpush1.bf16.xpose.msra.mxu0 0
        %2129 = vmatprep.subr.bf16.mxu0 0
        %2130 = vmatpush1.bf16.xpose.msra.mxu0 0
        %2131 = vmatprep.subr.bf16.mxu0 0
        %2132 = vmatpush1.bf16.xpose.msra.mxu0 0
        %2133 = vmatprep.subr.bf16.mxu0 0
        %2134 = vmatpush1.bf16.xpose.msra.mxu0 0
        %2135 = vmatprep.subr.bf16.mxu0 0
        %2136 = vmatpush1.bf16.xpose.msra.mxu0 0
        %2137 = vmatprep.subr.bf16.mxu0 0
        %2138 = vmatpush1.bf16.xpose.msra.mxu0 0
        %2139 = vmatprep.subr.bf16.mxu0 0
        %2140 = vmatpush1.bf16.xpose.msra.mxu0 0
        %2141 = vmatprep.subr.bf16.mxu0 0
        %2142 = vmatpush1.bf16.xpose.msra.mxu0 0
        %2143 = vmatprep.mubr.bf16.mxu0 0
        %2144 = vmatmul.mubr.bf16.gmra.mrb[0].mxu0 %v2100
        %v2145 = vpop.f32.mrb[0].mxu0
        %v2146 = vadd.f32 0.0, %v2145
        %v2147 = vpop.f32.mrb[0].mxu0
        %v2148 = vpop.f32.mrb[0].mxu0
        %v2149 = vadd.f32 0.0, %v2148
        %v2150 = vpop.f32.mrb[0].mxu0
        %2151 = vmatprep.mubr.bf16.mxu0 0
        %2152 = vmatmul.mubr.bf16.gmra.mrb[0].mxu0 %v2103
        %v2153 = vpop.f32.mrb[0].mxu0
        %v2154 = vadd.f32 0.0, %v2153
        %v2155 = vpop.f32.mrb[0].mxu0
        %v2156 = vpop.f32.mrb[0].mxu0
        %v2157 = vpop.f32.mrb[0].mxu0
        %2158 = vdwg.mxu0
        %2161 = vrot.lane.b32.xlu0 %v1755, 96
        %v2162 = vpop.permute.xlu0 %2161
        %2163 = vrot.lane.b32.xlu0 %v1756, 96
        %v2164 = vpop.permute.xlu0 %2163
        %2167 = vrot.lane.b32.xlu0 %v1759, 96
        %v2168 = vpop.permute.xlu0 %2167
        %2169 = vrot.lane.b32.xlu0 %v1760, 96
        %v2170 = vpop.permute.xlu0 %2169
        %v2172 = vsel %vm1761, %v2162, 0
        %v2175 = vsel %vm1761, %v2164, 0
        %v2178 = vsel %vm1761, %v2168, 0
        %v2181 = vsel %vm1761, %v2170, 0
        %2183 = vmatprep.subr.bf16.mxu0 0
        %2184 = vmatpush1.bf16.xpose.msra.mxu0 %v2178
        %2185 = vmatprep.subr.bf16.mxu0 0
        %2186 = vmatpush1.bf16.xpose.msra.mxu0 %v2181
        %2187 = vmatprep.subr.bf16.mxu0 0
        %2188 = vmatpush1.bf16.xpose.msra.mxu0 0
        %2189 = vmatprep.subr.bf16.mxu0 0
        %2190 = vmatpush1.bf16.xpose.msra.mxu0 0
        %2191 = vmatprep.subr.bf16.mxu0 0
        %2192 = vmatpush1.bf16.xpose.msra.mxu0 0
        %2193 = vmatprep.subr.bf16.mxu0 0
        %2194 = vmatpush1.bf16.xpose.msra.mxu0 0
        %2195 = vmatprep.subr.bf16.mxu0 0
        %2196 = vmatpush1.bf16.xpose.msra.mxu0 0
        %2197 = vmatprep.subr.bf16.mxu0 0
        %2198 = vmatpush1.bf16.xpose.msra.mxu0 0
        %2199 = vmatprep.subr.bf16.mxu0 0
        %2200 = vmatpush1.bf16.xpose.msra.mxu0 0
        %2201 = vmatprep.subr.bf16.mxu0 0
        %2202 = vmatpush1.bf16.xpose.msra.mxu0 0
        %2203 = vmatprep.subr.bf16.mxu0 0
        %2204 = vmatpush1.bf16.xpose.msra.mxu0 0
        %2205 = vmatprep.subr.bf16.mxu0 0
        %2206 = vmatpush1.bf16.xpose.msra.mxu0 0
        %2207 = vmatprep.subr.bf16.mxu0 0
        %2208 = vmatpush1.bf16.xpose.msra.mxu0 0
        %2209 = vmatprep.subr.bf16.mxu0 0
        %2210 = vmatpush1.bf16.xpose.msra.mxu0 0
        %2211 = vmatprep.subr.bf16.mxu0 0
        %2212 = vmatpush1.bf16.xpose.msra.mxu0 0
        %2213 = vmatprep.subr.bf16.mxu0 0
        %2214 = vmatpush1.bf16.xpose.msra.mxu0 0
        %2215 = vmatprep.mubr.bf16.mxu0 0
        %2216 = vmatmul.mubr.bf16.gmra.mrb[0].mxu0 %v2172
        %v2217 = vpop.f32.mrb[0].mxu0
        %v2218 = vadd.f32 0.0, %v2217
        %v2219 = vpop.f32.mrb[0].mxu0
        %v2220 = vpop.f32.mrb[0].mxu0
        %v2221 = vadd.f32 0.0, %v2220
        %v2222 = vpop.f32.mrb[0].mxu0
        %2223 = vmatprep.mubr.bf16.mxu0 0
        %2224 = vmatmul.mubr.bf16.gmra.mrb[0].mxu0 %v2175
        %v2225 = vpop.f32.mrb[0].mxu0
        %v2226 = vadd.f32 0.0, %v2225
        %v2227 = vpop.f32.mrb[0].mxu0
        %v2228 = vpop.f32.mrb[0].mxu0
        %v2229 = vpop.f32.mrb[0].mxu0
        %2230 = vdwg.mxu0
        %v2231 = vmul.f32 %v2146, 0.17677669
        %v2232 = vmul.f32 %v2149, 0.17677669
        %v2233 = vmul.f32 %v2154, 0.17677669
        %v2234 = vmul.f32 %v2218, 0.17677669
        %v2235 = vmul.f32 %v2221, 0.17677669
        %v2236 = vmul.f32 %v2226, 0.17677669
        %v2237 = vadd.f32 %v2231, %v1342
        %v2238 = vadd.f32 %v2232, %v1342
        %v2239 = vadd.f32 %v2233, %v1342
        %v2240 = vadd.f32 %v2234, %v1342
        %v2241 = vadd.f32 %v2235, %v1342
        %v2242 = vadd.f32 %v2236, %v1342
        %v2243 = vsel %vm1894, %v2237, -inf
        %2244 = vmax.xlane.f32.xlu0 %v2243
        %v2245 = vpop.xlane.xlu0 %2244
        %v2246 = vsel %vm1894, %v2238, -inf
        %2247 = vmax.xlane.f32.xlu0 %v2246
        %v2248 = vpop.xlane.xlu0 %2247
        %v2249 = vsel %vm1894, %v2239, -inf
        %2250 = vmax.xlane.f32.xlu0 %v2249
        %v2251 = vpop.xlane.xlu0 %2250
        %v2252 = vsel %vm1894, %v2240, -inf
        %2253 = vmax.xlane.f32.xlu0 %v2252
        %v2254 = vpop.xlane.xlu0 %2253
        %v2255 = vsel %vm1894, %v2241, -inf
        %2256 = vmax.xlane.f32.xlu0 %v2255
        %v2257 = vpop.xlane.xlu0 %2256
        %v2258 = vsel %vm1894, %v2242, -inf
        %2259 = vmax.xlane.f32.xlu0 %v2258
        %v2260 = vpop.xlane.xlu0 %2259
        %v2261 = vsub.f32 %v2237, %v2245
        %v2262 = vsub.f32 %v2238, %v2248
        %v2263 = vsub.f32 %v2239, %v2251
        %v2264 = vsub.f32 %v2240, %v2254
        %v2265 = vsub.f32 %v2241, %v2257
        %v2266 = vsub.f32 %v2242, %v2260
        %v2267 = vmul.f32 %v2261, 1.442695
        %v2268 = vpow.pop %v2267
        %v2269 = vmul.f32 %v2262, 1.442695
        %v2270 = vpow.pop %v2269
        %v2271 = vmul.f32 %v2263, 1.442695
        %v2272 = vpow.pop %v2271
        %v2273 = vmul.f32 %v2264, 1.442695
        %v2274 = vpow.pop %v2273
        %v2275 = vmul.f32 %v2265, 1.442695
        %v2276 = vpow.pop %v2275
        %v2277 = vmul.f32 %v2266, 1.442695
        %v2278 = vpow.pop %v2277
        %v2279 = vsel %vm1894, %v2268, 0.0
        %2280 = vadd.xlane.f32.xlu0 %v2279
        %v2281 = vpop.xlane.xlu0 %2280
        %v2282 = vsel %vm1894, %v2270, 0.0
        %2283 = vadd.xlane.f32.xlu0 %v2282
        %v2284 = vpop.xlane.xlu0 %2283
        %v2285 = vsel %vm1894, %v2272, 0.0
        %2286 = vadd.xlane.f32.xlu0 %v2285
        %v2287 = vpop.xlane.xlu0 %2286
        %v2288 = vsel %vm1894, %v2274, 0.0
        %2289 = vadd.xlane.f32.xlu0 %v2288
        %v2290 = vpop.xlane.xlu0 %2289
        %v2291 = vsel %vm1894, %v2276, 0.0
        %2292 = vadd.xlane.f32.xlu0 %v2291
        %v2293 = vpop.xlane.xlu0 %2292
        %v2294 = vsel %vm1894, %v2278, 0.0
        %2295 = vadd.xlane.f32.xlu0 %v2294
        %v2296 = vpop.xlane.xlu0 %2295
        %v2297 = vrcp.pop %v2281
        %v2298 = vrcp.pop %v2284
        %v2299 = vrcp.pop %v2287
        %v2300 = vrcp.pop %v2290
        %v2301 = vrcp.pop %v2293
        %v2302 = vrcp.pop %v2296
        %v2303 = vmul.f32 %v2268, %v2297
        %v2304 = vmul.f32 %v2270, %v2298
        %v2305 = vmul.f32 %v2272, %v2299
        %v2306 = vmul.f32 %v2274, %v2300
        %v2307 = vmul.f32 %v2276, %v2301
        %v2308 = vmul.f32 %v2278, %v2302
        %v2309 = vpack.c.bf16 %v2304, %v2303
        %v2310 = vpack.c.bf16 %v2305, %v2305
        %v2311 = vpack.c.bf16 %v2307, %v2306
        %v2312 = vpack.c.bf16 %v2308, %v2308
        %2315 = vrot.lane.b32.xlu0 %v1965, 96
        %v2316 = vpop.permute.xlu0 %2315
        %2317 = vrot.lane.b32.xlu0 %v1966, 96
        %v2318 = vpop.permute.xlu0 %2317
        %v2321 = vsel %vm1894, %v2309, 0
        %v2324 = vsel %vm1894, %v2310, 0
        %v2327 = vsel %vm1975, %v2318, 0
        %2329 = vmatprep.subr.bf16.mxu0 0
        %2330 = vmatpush1.bf16.msra.mxu0 %v2316
        %2331 = vmatprep.subr.bf16.mxu0 0
        %2332 = vmatpush1.bf16.msra.mxu0 %v2327
        %2333 = vmatprep.subr.bf16.mxu0 0
        %2334 = vmatpush1.bf16.msra.mxu0 0
        %2335 = vmatprep.subr.bf16.mxu0 0
        %2336 = vmatpush1.bf16.msra.mxu0 0
        %2337 = vmatprep.subr.bf16.mxu0 0
        %2338 = vmatpush1.bf16.msra.mxu0 0
        %2339 = vmatprep.subr.bf16.mxu0 0
        %2340 = vmatpush1.bf16.msra.mxu0 0
        %2341 = vmatprep.subr.bf16.mxu0 0
        %2342 = vmatpush1.bf16.msra.mxu0 0
        %2343 = vmatprep.subr.bf16.mxu0 0
        %2344 = vmatpush1.bf16.msra.mxu0 0
        %2345 = vmatprep.subr.bf16.mxu0 0
        %2346 = vmatpush1.bf16.msra.mxu0 0
        %2347 = vmatprep.subr.bf16.mxu0 0
        %2348 = vmatpush1.bf16.msra.mxu0 0
        %2349 = vmatprep.subr.bf16.mxu0 0
        %2350 = vmatpush1.bf16.msra.mxu0 0
        %2351 = vmatprep.subr.bf16.mxu0 0
        %2352 = vmatpush1.bf16.msra.mxu0 0
        %2353 = vmatprep.subr.bf16.mxu0 0
        %2354 = vmatpush1.bf16.msra.mxu0 0
        %2355 = vmatprep.subr.bf16.mxu0 0
        %2356 = vmatpush1.bf16.msra.mxu0 0
        %2357 = vmatprep.subr.bf16.mxu0 0
        %2358 = vmatpush1.bf16.msra.mxu0 0
        %2359 = vmatprep.subr.bf16.mxu0 0
        %2360 = vmatpush1.bf16.msra.mxu0 0
        %2361 = vmatprep.mubr.bf16.mxu0 0
        %2362 = vmatmul.mubr.bf16.gmra.mrb[0].mxu0 %v2321
        %v2363 = vpop.f32.mrb[0].mxu0
        %v2364 = vadd.f32 0.0, %v2363
        %v2365 = vpop.f32.mrb[0].mxu0
        %v2366 = vpop.f32.mrb[0].mxu0
        %v2367 = vadd.f32 0.0, %v2366
        %v2368 = vpop.f32.mrb[0].mxu0
        %2369 = vmatprep.mubr.bf16.mxu0 0
        %2370 = vmatmul.mubr.bf16.gmra.mrb[0].mxu0 %v2324
        %v2371 = vpop.f32.mrb[0].mxu0
        %v2372 = vadd.f32 0.0, %v2371
        %v2373 = vpop.f32.mrb[0].mxu0
        %v2374 = vpop.f32.mrb[0].mxu0
        %v2375 = vpop.f32.mrb[0].mxu0
        %2376 = vdwg.mxu0
        %2379 = vrot.lane.b32.xlu0 %v1967, 96
        %v2380 = vpop.permute.xlu0 %2379
        %2381 = vrot.lane.b32.xlu0 %v1968, 96
        %v2382 = vpop.permute.xlu0 %2381
        %v2385 = vsel %vm1894, %v2311, 0
        %v2388 = vsel %vm1894, %v2312, 0
        %v2391 = vsel %vm1975, %v2382, 0
        %2393 = vmatprep.subr.bf16.mxu0 0
        %2394 = vmatpush1.bf16.msra.mxu0 %v2380
        %2395 = vmatprep.subr.bf16.mxu0 0
        %2396 = vmatpush1.bf16.msra.mxu0 %v2391
        %2397 = vmatprep.subr.bf16.mxu0 0
        %2398 = vmatpush1.bf16.msra.mxu0 0
        %2399 = vmatprep.subr.bf16.mxu0 0
        %2400 = vmatpush1.bf16.msra.mxu0 0
        %2401 = vmatprep.subr.bf16.mxu0 0
        %2402 = vmatpush1.bf16.msra.mxu0 0
        %2403 = vmatprep.subr.bf16.mxu0 0
        %2404 = vmatpush1.bf16.msra.mxu0 0
        %2405 = vmatprep.subr.bf16.mxu0 0
        %2406 = vmatpush1.bf16.msra.mxu0 0
        %2407 = vmatprep.subr.bf16.mxu0 0
        %2408 = vmatpush1.bf16.msra.mxu0 0
        %2409 = vmatprep.subr.bf16.mxu0 0
        %2410 = vmatpush1.bf16.msra.mxu0 0
        %2411 = vmatprep.subr.bf16.mxu0 0
        %2412 = vmatpush1.bf16.msra.mxu0 0
        %2413 = vmatprep.subr.bf16.mxu0 0
        %2414 = vmatpush1.bf16.msra.mxu0 0
        %2415 = vmatprep.subr.bf16.mxu0 0
        %2416 = vmatpush1.bf16.msra.mxu0 0
        %2417 = vmatprep.subr.bf16.mxu0 0
        %2418 = vmatpush1.bf16.msra.mxu0 0
        %2419 = vmatprep.subr.bf16.mxu0 0
        %2420 = vmatpush1.bf16.msra.mxu0 0
        %2421 = vmatprep.subr.bf16.mxu0 0
        %2422 = vmatpush1.bf16.msra.mxu0 0
        %2423 = vmatprep.subr.bf16.mxu0 0
        %2424 = vmatpush1.bf16.msra.mxu0 0
        %2425 = vmatprep.mubr.bf16.mxu0 0
        %2426 = vmatmul.mubr.bf16.gmra.mrb[0].mxu0 %v2385
        %v2427 = vpop.f32.mrb[0].mxu0
        %v2428 = vadd.f32 0.0, %v2427
        %v2429 = vpop.f32.mrb[0].mxu0
        %v2430 = vpop.f32.mrb[0].mxu0
        %v2431 = vadd.f32 0.0, %v2430
        %v2432 = vpop.f32.mrb[0].mxu0
        %2433 = vmatprep.mubr.bf16.mxu0 0
        %2434 = vmatmul.mubr.bf16.gmra.mrb[0].mxu0 %v2388
        %v2435 = vpop.f32.mrb[0].mxu0
        %v2436 = vadd.f32 0.0, %v2435
        %v2437 = vpop.f32.mrb[0].mxu0
        %v2438 = vpop.f32.mrb[0].mxu0
        %v2439 = vpop.f32.mrb[0].mxu0
        %2440 = vdwg.mxu0
        %v2441 = vpack.c.bf16 %v2367, %v2364
        %v2442 = vpack.c.bf16 %v2428, %v2372
        %v2443 = vpack.c.bf16 %v2436, %v2431
        %v2448 = vunpack.c.l.b16 %v1741
        %v2449 = vunpack.c.l.b16 %v1742
        %v2450 = vunpack.c.l.b16 %v1743
        %v2451 = vunpack.c.l.b16 %v1744
        %v2452 = vpack.c.b16 %v2449, %v2448
        %v2453 = vpack.c.b16 %v2451, %v2450
        %v2457 = vsel %vm1761, %v2441, 0
        %v2460 = vsel %vm1761, %v2442, 0
        %v2463 = vsel %vm1761, %v2443, 0
        %2465 = vmatprep.subr.bf16.mxu0 0
        %2466 = vmatpush1.bf16.msra.mxu0 %v2452
        %2467 = vmatprep.subr.bf16.mxu0 0
        %2468 = vmatpush1.bf16.msra.mxu0 %v2453
        %2469 = vmatprep.subr.bf16.mxu0 0
        %2470 = vmatpush1.bf16.msra.mxu0 0
        %2471 = vmatprep.subr.bf16.mxu0 0
        %2472 = vmatpush1.bf16.msra.mxu0 0
        %2473 = vmatprep.subr.bf16.mxu0 0
        %2474 = vmatpush1.bf16.msra.mxu0 0
        %2475 = vmatprep.subr.bf16.mxu0 0
        %2476 = vmatpush1.bf16.msra.mxu0 0
        %2477 = vmatprep.subr.bf16.mxu0 0
        %2478 = vmatpush1.bf16.msra.mxu0 0
        %2479 = vmatprep.subr.bf16.mxu0 0
        %2480 = vmatpush1.bf16.msra.mxu0 0
        %2481 = vmatprep.subr.bf16.mxu0 0
        %2482 = vmatpush1.bf16.msra.mxu0 0
        %2483 = vmatprep.subr.bf16.mxu0 0
        %2484 = vmatpush1.bf16.msra.mxu0 0
        %2485 = vmatprep.subr.bf16.mxu0 0
        %2486 = vmatpush1.bf16.msra.mxu0 0
        %2487 = vmatprep.subr.bf16.mxu0 0
        %2488 = vmatpush1.bf16.msra.mxu0 0
        %2489 = vmatprep.subr.bf16.mxu0 0
        %2490 = vmatpush1.bf16.msra.mxu0 0
        %2491 = vmatprep.subr.bf16.mxu0 0
        %2492 = vmatpush1.bf16.msra.mxu0 0
        %2493 = vmatprep.subr.bf16.mxu0 0
        %2494 = vmatpush1.bf16.msra.mxu0 0
        %2495 = vmatprep.subr.bf16.mxu0 0
        %2496 = vmatpush1.bf16.msra.mxu0 0
        %2497 = vmatprep.mubr.bf16.mxu0 0
        %2498 = vmatmul.mubr.bf16.gmra.mrb[0].mxu0 %v2457
        %v2499 = vpop.f32.mrb[0].mxu0
        %v2500 = vadd.f32 0.0, %v2499
        %v2501 = vpop.f32.mrb[0].mxu0
        %v2502 = vpop.f32.mrb[0].mxu0
        %v2503 = vadd.f32 0.0, %v2502
        %v2504 = vpop.f32.mrb[0].mxu0
        %2505 = vmatprep.mubr.bf16.mxu0 0
        %2506 = vmatmul.mubr.bf16.gmra.mrb[0].mxu0 %v2460
        %v2507 = vpop.f32.mrb[0].mxu0
        %v2508 = vadd.f32 0.0, %v2507
        %v2509 = vpop.f32.mrb[0].mxu0
        %v2510 = vpop.f32.mrb[0].mxu0
        %v2511 = vadd.f32 0.0, %v2510
        %v2512 = vpop.f32.mrb[0].mxu0
        %2513 = vmatprep.mubr.bf16.mxu0 0
        %2514 = vmatmul.mubr.bf16.gmra.mrb[0].mxu0 %v2463
        %v2515 = vpop.f32.mrb[0].mxu0
        %v2516 = vadd.f32 0.0, %v2515
        %v2517 = vpop.f32.mrb[0].mxu0
        %v2518 = vpop.f32.mrb[0].mxu0
        %v2519 = vadd.f32 0.0, %v2518
        %v2520 = vpop.f32.mrb[0].mxu0
        %2521 = vdwg.mxu0
        %v2526 = vunpack.c.l.b16 %v1737
        %v2527 = vunpack.c.l.b16 %v1738
        %v2528 = vunpack.c.l.b16 %v1739
        %v2529 = vunpack.c.l.b16 %v1740
        %v2530 = vpack.c.b16 %v2527, %v2526
        %v2531 = vpack.c.b16 %v2529, %v2528
        %v2535 = vsel %vm1761, %v2084, 0
        %v2538 = vsel %vm1761, %v2085, 0
        %v2541 = vsel %vm1761, %v2086, 0
        %2543 = vmatprep.subr.bf16.mxu0 0
        %2544 = vmatpush1.bf16.msra.mxu0 %v2530
        %2545 = vmatprep.subr.bf16.mxu0 0
        %2546 = vmatpush1.bf16.msra.mxu0 %v2531
        %2547 = vmatprep.subr.bf16.mxu0 0
        %2548 = vmatpush1.bf16.msra.mxu0 0
        %2549 = vmatprep.subr.bf16.mxu0 0
        %2550 = vmatpush1.bf16.msra.mxu0 0
        %2551 = vmatprep.subr.bf16.mxu0 0
        %2552 = vmatpush1.bf16.msra.mxu0 0
        %2553 = vmatprep.subr.bf16.mxu0 0
        %2554 = vmatpush1.bf16.msra.mxu0 0
        %2555 = vmatprep.subr.bf16.mxu0 0
        %2556 = vmatpush1.bf16.msra.mxu0 0
        %2557 = vmatprep.subr.bf16.mxu0 0
        %2558 = vmatpush1.bf16.msra.mxu0 0
        %2559 = vmatprep.subr.bf16.mxu0 0
        %2560 = vmatpush1.bf16.msra.mxu0 0
        %2561 = vmatprep.subr.bf16.mxu0 0
        %2562 = vmatpush1.bf16.msra.mxu0 0
        %2563 = vmatprep.subr.bf16.mxu0 0
        %2564 = vmatpush1.bf16.msra.mxu0 0
        %2565 = vmatprep.subr.bf16.mxu0 0
        %2566 = vmatpush1.bf16.msra.mxu0 0
        %2567 = vmatprep.subr.bf16.mxu0 0
        %2568 = vmatpush1.bf16.msra.mxu0 0
        %2569 = vmatprep.subr.bf16.mxu0 0
        %2570 = vmatpush1.bf16.msra.mxu0 0
        %2571 = vmatprep.subr.bf16.mxu0 0
        %2572 = vmatpush1.bf16.msra.mxu0 0
        %2573 = vmatprep.subr.bf16.mxu0 0
        %2574 = vmatpush1.bf16.msra.mxu0 0
        %2575 = vmatprep.mubr.bf16.mxu0 0
        %2576 = vmatmul.mubr.bf16.gmra.mrb[0].mxu0 %v2535
        %v2577 = vpop.f32.mrb[0].mxu0
        %v2578 = vadd.f32 %v2500, %v2577
        %v2579 = vpop.f32.mrb[0].mxu0
        %v2580 = vpop.f32.mrb[0].mxu0
        %v2581 = vadd.f32 %v2503, %v2580
        %v2582 = vpop.f32.mrb[0].mxu0
        %2583 = vmatprep.mubr.bf16.mxu0 0
        %2584 = vmatmul.mubr.bf16.gmra.mrb[0].mxu0 %v2538
        %v2585 = vpop.f32.mrb[0].mxu0
        %v2586 = vadd.f32 %v2508, %v2585
        %v2587 = vpop.f32.mrb[0].mxu0
        %v2588 = vpop.f32.mrb[0].mxu0
        %v2589 = vadd.f32 %v2511, %v2588
        %v2590 = vpop.f32.mrb[0].mxu0
        %2591 = vmatprep.mubr.bf16.mxu0 0
        %2592 = vmatmul.mubr.bf16.gmra.mrb[0].mxu0 %v2541
        %v2593 = vpop.f32.mrb[0].mxu0
        %v2594 = vadd.f32 %v2516, %v2593
        %v2595 = vpop.f32.mrb[0].mxu0
        %v2596 = vpop.f32.mrb[0].mxu0
        %v2597 = vadd.f32 %v2519, %v2596
        %v2598 = vpop.f32.mrb[0].mxu0
        %2599 = vdwg.mxu0
        %2600 = vrot.lane.b32.xlu0 %v1753, 64
        %v2601 = vpop.permute.xlu0 %2600
        %2602 = vrot.lane.b32.xlu0 %v1754, 64
        %v2603 = vpop.permute.xlu0 %2602
        %2604 = vrot.lane.b32.xlu0 %v1757, 64
        %v2605 = vpop.permute.xlu0 %2604
        %2606 = vrot.lane.b32.xlu0 %v1758, 64
        %v2607 = vpop.permute.xlu0 %2606
        %v2609 = vsel %vm1761, %v2601, 0
        %v2612 = vsel %vm1761, %v2603, 0
        %v2615 = vsel %vm1761, %v2605, 0
        %v2618 = vsel %vm1761, %v2607, 0
        %2620 = vmatprep.subr.bf16.mxu0 0
        %2621 = vmatpush1.bf16.xpose.msra.mxu0 %v2615
        %2622 = vmatprep.subr.bf16.mxu0 0
        %2623 = vmatpush1.bf16.xpose.msra.mxu0 %v2618
        %2624 = vmatprep.subr.bf16.mxu0 0
        %2625 = vmatpush1.bf16.xpose.msra.mxu0 0
        %2626 = vmatprep.subr.bf16.mxu0 0
        %2627 = vmatpush1.bf16.xpose.msra.mxu0 0
        %2628 = vmatprep.subr.bf16.mxu0 0
        %2629 = vmatpush1.bf16.xpose.msra.mxu0 0
        %2630 = vmatprep.subr.bf16.mxu0 0
        %2631 = vmatpush1.bf16.xpose.msra.mxu0 0
        %2632 = vmatprep.subr.bf16.mxu0 0
        %2633 = vmatpush1.bf16.xpose.msra.mxu0 0
        %2634 = vmatprep.subr.bf16.mxu0 0
        %2635 = vmatpush1.bf16.xpose.msra.mxu0 0
        %2636 = vmatprep.subr.bf16.mxu0 0
        %2637 = vmatpush1.bf16.xpose.msra.mxu0 0
        %2638 = vmatprep.subr.bf16.mxu0 0
        %2639 = vmatpush1.bf16.xpose.msra.mxu0 0
        %2640 = vmatprep.subr.bf16.mxu0 0
        %2641 = vmatpush1.bf16.xpose.msra.mxu0 0
        %2642 = vmatprep.subr.bf16.mxu0 0
        %2643 = vmatpush1.bf16.xpose.msra.mxu0 0
        %2644 = vmatprep.subr.bf16.mxu0 0
        %2645 = vmatpush1.bf16.xpose.msra.mxu0 0
        %2646 = vmatprep.subr.bf16.mxu0 0
        %2647 = vmatpush1.bf16.xpose.msra.mxu0 0
        %2648 = vmatprep.subr.bf16.mxu0 0
        %2649 = vmatpush1.bf16.xpose.msra.mxu0 0
        %2650 = vmatprep.subr.bf16.mxu0 0
        %2651 = vmatpush1.bf16.xpose.msra.mxu0 0
        %2652 = vmatprep.mubr.bf16.mxu0 0
        %2653 = vmatmul.mubr.bf16.gmra.mrb[0].mxu0 %v2609
        %v2654 = vpop.f32.mrb[0].mxu0
        %v2655 = vadd.f32 0.0, %v2654
        %v2656 = vpop.f32.mrb[0].mxu0
        %v2657 = vpop.f32.mrb[0].mxu0
        %v2658 = vadd.f32 0.0, %v2657
        %v2659 = vpop.f32.mrb[0].mxu0
        %2660 = vmatprep.mubr.bf16.mxu0 0
        %2661 = vmatmul.mubr.bf16.gmra.mrb[0].mxu0 %v2612
        %v2662 = vpop.f32.mrb[0].mxu0
        %v2663 = vadd.f32 0.0, %v2662
        %v2664 = vpop.f32.mrb[0].mxu0
        %v2665 = vpop.f32.mrb[0].mxu0
        %v2666 = vpop.f32.mrb[0].mxu0
        %2667 = vdwg.mxu0
        %2668 = vrot.lane.b32.xlu0 %v1755, 64
        %v2669 = vpop.permute.xlu0 %2668
        %2670 = vrot.lane.b32.xlu0 %v1756, 64
        %v2671 = vpop.permute.xlu0 %2670
        %2672 = vrot.lane.b32.xlu0 %v1759, 64
        %v2673 = vpop.permute.xlu0 %2672
        %2674 = vrot.lane.b32.xlu0 %v1760, 64
        %v2675 = vpop.permute.xlu0 %2674
        %v2677 = vsel %vm1761, %v2669, 0
        %v2680 = vsel %vm1761, %v2671, 0
        %v2683 = vsel %vm1761, %v2673, 0
        %v2686 = vsel %vm1761, %v2675, 0
        %2688 = vmatprep.subr.bf16.mxu0 0
        %2689 = vmatpush1.bf16.xpose.msra.mxu0 %v2683
        %2690 = vmatprep.subr.bf16.mxu0 0
        %2691 = vmatpush1.bf16.xpose.msra.mxu0 %v2686
        %2692 = vmatprep.subr.bf16.mxu0 0
        %2693 = vmatpush1.bf16.xpose.msra.mxu0 0
        %2694 = vmatprep.subr.bf16.mxu0 0
        %2695 = vmatpush1.bf16.xpose.msra.mxu0 0
        %2696 = vmatprep.subr.bf16.mxu0 0
        %2697 = vmatpush1.bf16.xpose.msra.mxu0 0
        %2698 = vmatprep.subr.bf16.mxu0 0
        %2699 = vmatpush1.bf16.xpose.msra.mxu0 0
        %2700 = vmatprep.subr.bf16.mxu0 0
        %2701 = vmatpush1.bf16.xpose.msra.mxu0 0
        %2702 = vmatprep.subr.bf16.mxu0 0
        %2703 = vmatpush1.bf16.xpose.msra.mxu0 0
        %2704 = vmatprep.subr.bf16.mxu0 0
        %2705 = vmatpush1.bf16.xpose.msra.mxu0 0
        %2706 = vmatprep.subr.bf16.mxu0 0
        %2707 = vmatpush1.bf16.xpose.msra.mxu0 0
        %2708 = vmatprep.subr.bf16.mxu0 0
        %2709 = vmatpush1.bf16.xpose.msra.mxu0 0
        %2710 = vmatprep.subr.bf16.mxu0 0
        %2711 = vmatpush1.bf16.xpose.msra.mxu0 0
        %2712 = vmatprep.subr.bf16.mxu0 0
        %2713 = vmatpush1.bf16.xpose.msra.mxu0 0
        %2714 = vmatprep.subr.bf16.mxu0 0
        %2715 = vmatpush1.bf16.xpose.msra.mxu0 0
        %2716 = vmatprep.subr.bf16.mxu0 0
        %2717 = vmatpush1.bf16.xpose.msra.mxu0 0
        %2718 = vmatprep.subr.bf16.mxu0 0
        %2719 = vmatpush1.bf16.xpose.msra.mxu0 0
        %2720 = vmatprep.mubr.bf16.mxu0 0
        %2721 = vmatmul.mubr.bf16.gmra.mrb[0].mxu0 %v2677
        %v2722 = vpop.f32.mrb[0].mxu0
        %v2723 = vadd.f32 0.0, %v2722
        %v2724 = vpop.f32.mrb[0].mxu0
        %v2725 = vpop.f32.mrb[0].mxu0
        %v2726 = vadd.f32 0.0, %v2725
        %v2727 = vpop.f32.mrb[0].mxu0
        %2728 = vmatprep.mubr.bf16.mxu0 0
        %2729 = vmatmul.mubr.bf16.gmra.mrb[0].mxu0 %v2680
        %v2730 = vpop.f32.mrb[0].mxu0
        %v2731 = vadd.f32 0.0, %v2730
        %v2732 = vpop.f32.mrb[0].mxu0
        %v2733 = vpop.f32.mrb[0].mxu0
        %v2734 = vpop.f32.mrb[0].mxu0
        %2735 = vdwg.mxu0
        %v2736 = vmul.f32 %v2655, 0.17677669
        %v2737 = vmul.f32 %v2658, 0.17677669
        %v2738 = vmul.f32 %v2663, 0.17677669
        %v2739 = vmul.f32 %v2723, 0.17677669
        %v2740 = vmul.f32 %v2726, 0.17677669
        %v2741 = vmul.f32 %v2731, 0.17677669
        %v2742 = vadd.f32 %v2736, %v1342
        %v2743 = vadd.f32 %v2737, %v1342
        %v2744 = vadd.f32 %v2738, %v1342
        %v2745 = vadd.f32 %v2739, %v1342
        %v2746 = vadd.f32 %v2740, %v1342
        %v2747 = vadd.f32 %v2741, %v1342
        %v2748 = vsel %vm1894, %v2742, -inf
        %2749 = vmax.xlane.f32.xlu0 %v2748
        %v2750 = vpop.xlane.xlu0 %2749
        %v2751 = vsel %vm1894, %v2743, -inf
        %2752 = vmax.xlane.f32.xlu0 %v2751
        %v2753 = vpop.xlane.xlu0 %2752
        %v2754 = vsel %vm1894, %v2744, -inf
        %2755 = vmax.xlane.f32.xlu0 %v2754
        %v2756 = vpop.xlane.xlu0 %2755
        %v2757 = vsel %vm1894, %v2745, -inf
        %2758 = vmax.xlane.f32.xlu0 %v2757
        %v2759 = vpop.xlane.xlu0 %2758
        %v2760 = vsel %vm1894, %v2746, -inf
        %2761 = vmax.xlane.f32.xlu0 %v2760
        %v2762 = vpop.xlane.xlu0 %2761
        %v2763 = vsel %vm1894, %v2747, -inf
        %2764 = vmax.xlane.f32.xlu0 %v2763
        %v2765 = vpop.xlane.xlu0 %2764
        %v2766 = vsub.f32 %v2742, %v2750
        %v2767 = vsub.f32 %v2743, %v2753
        %v2768 = vsub.f32 %v2744, %v2756
        %v2769 = vsub.f32 %v2745, %v2759
        %v2770 = vsub.f32 %v2746, %v2762
        %v2771 = vsub.f32 %v2747, %v2765
        %v2772 = vmul.f32 %v2766, 1.442695
        %v2773 = vpow.pop %v2772
        %v2774 = vmul.f32 %v2767, 1.442695
        %v2775 = vpow.pop %v2774
        %v2776 = vmul.f32 %v2768, 1.442695
        %v2777 = vpow.pop %v2776
        %v2778 = vmul.f32 %v2769, 1.442695
        %v2779 = vpow.pop %v2778
        %v2780 = vmul.f32 %v2770, 1.442695
        %v2781 = vpow.pop %v2780
        %v2782 = vmul.f32 %v2771, 1.442695
        %v2783 = vpow.pop %v2782
        %v2784 = vsel %vm1894, %v2773, 0.0
        %2785 = vadd.xlane.f32.xlu0 %v2784
        %v2786 = vpop.xlane.xlu0 %2785
        %v2787 = vsel %vm1894, %v2775, 0.0
        %2788 = vadd.xlane.f32.xlu0 %v2787
        %v2789 = vpop.xlane.xlu0 %2788
        %v2790 = vsel %vm1894, %v2777, 0.0
        %2791 = vadd.xlane.f32.xlu0 %v2790
        %v2792 = vpop.xlane.xlu0 %2791
        %v2793 = vsel %vm1894, %v2779, 0.0
        %2794 = vadd.xlane.f32.xlu0 %v2793
        %v2795 = vpop.xlane.xlu0 %2794
        %v2796 = vsel %vm1894, %v2781, 0.0
        %2797 = vadd.xlane.f32.xlu0 %v2796
        %v2798 = vpop.xlane.xlu0 %2797
        %v2799 = vsel %vm1894, %v2783, 0.0
        %2800 = vadd.xlane.f32.xlu0 %v2799
        %v2801 = vpop.xlane.xlu0 %2800
        %v2802 = vrcp.pop %v2786
        %v2803 = vrcp.pop %v2789
        %v2804 = vrcp.pop %v2792
        %v2805 = vrcp.pop %v2795
        %v2806 = vrcp.pop %v2798
        %v2807 = vrcp.pop %v2801
        %v2808 = vmul.f32 %v2773, %v2802
        %v2809 = vmul.f32 %v2775, %v2803
        %v2810 = vmul.f32 %v2777, %v2804
        %v2811 = vmul.f32 %v2779, %v2805
        %v2812 = vmul.f32 %v2781, %v2806
        %v2813 = vmul.f32 %v2783, %v2807
        %v2814 = vpack.c.bf16 %v2809, %v2808
        %v2815 = vpack.c.bf16 %v2810, %v2810
        %v2816 = vpack.c.bf16 %v2812, %v2811
        %v2817 = vpack.c.bf16 %v2813, %v2813
        %2818 = vrot.lane.b32.xlu0 %v1965, 64
        %v2819 = vpop.permute.xlu0 %2818
        %2820 = vrot.lane.b32.xlu0 %v1966, 64
        %v2821 = vpop.permute.xlu0 %2820
        %v2824 = vsel %vm1894, %v2814, 0
        %v2827 = vsel %vm1894, %v2815, 0
        %v2830 = vsel %vm1975, %v2821, 0
        %2832 = vmatprep.subr.bf16.mxu0 0
        %2833 = vmatpush1.bf16.msra.mxu0 %v2819
        %2834 = vmatprep.subr.bf16.mxu0 0
        %2835 = vmatpush1.bf16.msra.mxu0 %v2830
        %2836 = vmatprep.subr.bf16.mxu0 0
        %2837 = vmatpush1.bf16.msra.mxu0 0
        %2838 = vmatprep.subr.bf16.mxu0 0
        %2839 = vmatpush1.bf16.msra.mxu0 0
        %2840 = vmatprep.subr.bf16.mxu0 0
        %2841 = vmatpush1.bf16.msra.mxu0 0
        %2842 = vmatprep.subr.bf16.mxu0 0
        %2843 = vmatpush1.bf16.msra.mxu0 0
        %2844 = vmatprep.subr.bf16.mxu0 0
        %2845 = vmatpush1.bf16.msra.mxu0 0
        %2846 = vmatprep.subr.bf16.mxu0 0
        %2847 = vmatpush1.bf16.msra.mxu0 0
        %2848 = vmatprep.subr.bf16.mxu0 0
        %2849 = vmatpush1.bf16.msra.mxu0 0
        %2850 = vmatprep.subr.bf16.mxu0 0
        %2851 = vmatpush1.bf16.msra.mxu0 0
        %2852 = vmatprep.subr.bf16.mxu0 0
        %2853 = vmatpush1.bf16.msra.mxu0 0
        %2854 = vmatprep.subr.bf16.mxu0 0
        %2855 = vmatpush1.bf16.msra.mxu0 0
        %2856 = vmatprep.subr.bf16.mxu0 0
        %2857 = vmatpush1.bf16.msra.mxu0 0
        %2858 = vmatprep.subr.bf16.mxu0 0
        %2859 = vmatpush1.bf16.msra.mxu0 0
        %2860 = vmatprep.subr.bf16.mxu0 0
        %2861 = vmatpush1.bf16.msra.mxu0 0
        %2862 = vmatprep.subr.bf16.mxu0 0
        %2863 = vmatpush1.bf16.msra.mxu0 0
        %2864 = vmatprep.mubr.bf16.mxu0 0
        %2865 = vmatmul.mubr.bf16.gmra.mrb[0].mxu0 %v2824
        %v2866 = vpop.f32.mrb[0].mxu0
        %v2867 = vadd.f32 0.0, %v2866
        %v2868 = vpop.f32.mrb[0].mxu0
        %v2869 = vpop.f32.mrb[0].mxu0
        %v2870 = vadd.f32 0.0, %v2869
        %v2871 = vpop.f32.mrb[0].mxu0
        %2872 = vmatprep.mubr.bf16.mxu0 0
        %2873 = vmatmul.mubr.bf16.gmra.mrb[0].mxu0 %v2827
        %v2874 = vpop.f32.mrb[0].mxu0
        %v2875 = vadd.f32 0.0, %v2874
        %v2876 = vpop.f32.mrb[0].mxu0
        %v2877 = vpop.f32.mrb[0].mxu0
        %v2878 = vpop.f32.mrb[0].mxu0
        %2879 = vdwg.mxu0
        %2880 = vrot.lane.b32.xlu0 %v1967, 64
        %v2881 = vpop.permute.xlu0 %2880
        %2882 = vrot.lane.b32.xlu0 %v1968, 64
        %v2883 = vpop.permute.xlu0 %2882
        %v2886 = vsel %vm1894, %v2816, 0
        %v2889 = vsel %vm1894, %v2817, 0
        %v2892 = vsel %vm1975, %v2883, 0
        %2894 = vmatprep.subr.bf16.mxu0 0
        %2895 = vmatpush1.bf16.msra.mxu0 %v2881
        %2896 = vmatprep.subr.bf16.mxu0 0
        %2897 = vmatpush1.bf16.msra.mxu0 %v2892
        %2898 = vmatprep.subr.bf16.mxu0 0
        %2899 = vmatpush1.bf16.msra.mxu0 0
        %2900 = vmatprep.subr.bf16.mxu0 0
        %2901 = vmatpush1.bf16.msra.mxu0 0
        %2902 = vmatprep.subr.bf16.mxu0 0
        %2903 = vmatpush1.bf16.msra.mxu0 0
        %2904 = vmatprep.subr.bf16.mxu0 0
        %2905 = vmatpush1.bf16.msra.mxu0 0
        %2906 = vmatprep.subr.bf16.mxu0 0
        %2907 = vmatpush1.bf16.msra.mxu0 0
        %2908 = vmatprep.subr.bf16.mxu0 0
        %2909 = vmatpush1.bf16.msra.mxu0 0
        %2910 = vmatprep.subr.bf16.mxu0 0
        %2911 = vmatpush1.bf16.msra.mxu0 0
        %2912 = vmatprep.subr.bf16.mxu0 0
        %2913 = vmatpush1.bf16.msra.mxu0 0
        %2914 = vmatprep.subr.bf16.mxu0 0
        %2915 = vmatpush1.bf16.msra.mxu0 0
        %2916 = vmatprep.subr.bf16.mxu0 0
        %2917 = vmatpush1.bf16.msra.mxu0 0
        %2918 = vmatprep.subr.bf16.mxu0 0
        %2919 = vmatpush1.bf16.msra.mxu0 0
        %2920 = vmatprep.subr.bf16.mxu0 0
        %2921 = vmatpush1.bf16.msra.mxu0 0
        %2922 = vmatprep.subr.bf16.mxu0 0
        %2923 = vmatpush1.bf16.msra.mxu0 0
        %2924 = vmatprep.subr.bf16.mxu0 0
        %2925 = vmatpush1.bf16.msra.mxu0 0
        %2926 = vmatprep.mubr.bf16.mxu0 0
        %2927 = vmatmul.mubr.bf16.gmra.mrb[0].mxu0 %v2886
        %v2928 = vpop.f32.mrb[0].mxu0
        %v2929 = vadd.f32 0.0, %v2928
        %v2930 = vpop.f32.mrb[0].mxu0
        %v2931 = vpop.f32.mrb[0].mxu0
        %v2932 = vadd.f32 0.0, %v2931
        %v2933 = vpop.f32.mrb[0].mxu0
        %2934 = vmatprep.mubr.bf16.mxu0 0
        %2935 = vmatmul.mubr.bf16.gmra.mrb[0].mxu0 %v2889
        %v2936 = vpop.f32.mrb[0].mxu0
        %v2937 = vadd.f32 0.0, %v2936
        %v2938 = vpop.f32.mrb[0].mxu0
        %v2939 = vpop.f32.mrb[0].mxu0
        %v2940 = vpop.f32.mrb[0].mxu0
        %2941 = vdwg.mxu0
        %v2942 = vpack.c.bf16 %v2870, %v2867
        %v2943 = vpack.c.bf16 %v2929, %v2875
        %v2944 = vpack.c.bf16 %v2937, %v2932
        %v2949 = vunpack.c.l.b16 %v1745
        %v2950 = vunpack.c.l.b16 %v1746
        %v2951 = vunpack.c.l.b16 %v1747
        %v2952 = vunpack.c.l.b16 %v1748
        %v2953 = vpack.c.b16 %v2950, %v2949
        %v2954 = vpack.c.b16 %v2952, %v2951
        %v2958 = vsel %vm1761, %v2942, 0
        %v2961 = vsel %vm1761, %v2943, 0
        %v2964 = vsel %vm1761, %v2944, 0
        %2966 = vmatprep.subr.bf16.mxu0 0
        %2967 = vmatpush1.bf16.msra.mxu0 %v2953
        %2968 = vmatprep.subr.bf16.mxu0 0
        %2969 = vmatpush1.bf16.msra.mxu0 %v2954
        %2970 = vmatprep.subr.bf16.mxu0 0
        %2971 = vmatpush1.bf16.msra.mxu0 0
        %2972 = vmatprep.subr.bf16.mxu0 0
        %2973 = vmatpush1.bf16.msra.mxu0 0
        %2974 = vmatprep.subr.bf16.mxu0 0
        %2975 = vmatpush1.bf16.msra.mxu0 0
        %2976 = vmatprep.subr.bf16.mxu0 0
        %2977 = vmatpush1.bf16.msra.mxu0 0
        %2978 = vmatprep.subr.bf16.mxu0 0
        %2979 = vmatpush1.bf16.msra.mxu0 0
        %2980 = vmatprep.subr.bf16.mxu0 0
        %2981 = vmatpush1.bf16.msra.mxu0 0
        %2982 = vmatprep.subr.bf16.mxu0 0
        %2983 = vmatpush1.bf16.msra.mxu0 0
        %2984 = vmatprep.subr.bf16.mxu0 0
        %2985 = vmatpush1.bf16.msra.mxu0 0
        %2986 = vmatprep.subr.bf16.mxu0 0
        %2987 = vmatpush1.bf16.msra.mxu0 0
        %2988 = vmatprep.subr.bf16.mxu0 0
        %2989 = vmatpush1.bf16.msra.mxu0 0
        %2990 = vmatprep.subr.bf16.mxu0 0
        %2991 = vmatpush1.bf16.msra.mxu0 0
        %2992 = vmatprep.subr.bf16.mxu0 0
        %2993 = vmatpush1.bf16.msra.mxu0 0
        %2994 = vmatprep.subr.bf16.mxu0 0
        %2995 = vmatpush1.bf16.msra.mxu0 0
        %2996 = vmatprep.subr.bf16.mxu0 0
        %2997 = vmatpush1.bf16.msra.mxu0 0
        %2998 = vmatprep.mubr.bf16.mxu0 0
        %2999 = vmatmul.mubr.bf16.gmra.mrb[0].mxu0 %v2958
        %v3000 = vpop.f32.mrb[0].mxu0
        %v3001 = vadd.f32 0.0, %v3000
        %v3002 = vpop.f32.mrb[0].mxu0
        %v3003 = vpop.f32.mrb[0].mxu0
        %v3004 = vadd.f32 0.0, %v3003
        %v3005 = vpop.f32.mrb[0].mxu0
        %3006 = vmatprep.mubr.bf16.mxu0 0
        %3007 = vmatmul.mubr.bf16.gmra.mrb[0].mxu0 %v2961
        %v3008 = vpop.f32.mrb[0].mxu0
        %v3009 = vadd.f32 0.0, %v3008
        %v3010 = vpop.f32.mrb[0].mxu0
        %v3011 = vpop.f32.mrb[0].mxu0
        %v3012 = vadd.f32 0.0, %v3011
        %v3013 = vpop.f32.mrb[0].mxu0
        %3014 = vmatprep.mubr.bf16.mxu0 0
        %3015 = vmatmul.mubr.bf16.gmra.mrb[0].mxu0 %v2964
        %v3016 = vpop.f32.mrb[0].mxu0
        %v3017 = vadd.f32 0.0, %v3016
        %v3018 = vpop.f32.mrb[0].mxu0
        %v3019 = vpop.f32.mrb[0].mxu0
        %v3020 = vadd.f32 0.0, %v3019
        %v3021 = vpop.f32.mrb[0].mxu0
        %3022 = vdwg.mxu0
        %v3023 = vadd.f32 %v2578, %v3001
        %v3024 = vadd.f32 %v2581, %v3004
        %v3025 = vadd.f32 %v2586, %v3009
        %v3026 = vadd.f32 %v2589, %v3012
        %v3027 = vadd.f32 %v2594, %v3017
        %v3028 = vadd.f32 %v2597, %v3020
        %3029 = vrot.lane.b32.xlu0 %v1753, 32
        %v3030 = vpop.permute.xlu0 %3029
        %3031 = vrot.lane.b32.xlu0 %v1754, 32
        %v3032 = vpop.permute.xlu0 %3031
        %3033 = vrot.lane.b32.xlu0 %v1757, 32
        %v3034 = vpop.permute.xlu0 %3033
        %3035 = vrot.lane.b32.xlu0 %v1758, 32
        %v3036 = vpop.permute.xlu0 %3035
        %v3038 = vsel %vm1761, %v3030, 0
        %v3041 = vsel %vm1761, %v3032, 0
        %v3044 = vsel %vm1761, %v3034, 0
        %v3047 = vsel %vm1761, %v3036, 0
        %3049 = vmatprep.subr.bf16.mxu0 0
        %3050 = vmatpush1.bf16.xpose.msra.mxu0 %v3044
        %3051 = vmatprep.subr.bf16.mxu0 0
        %3052 = vmatpush1.bf16.xpose.msra.mxu0 %v3047
        %3053 = vmatprep.subr.bf16.mxu0 0
        %3054 = vmatpush1.bf16.xpose.msra.mxu0 0
        %3055 = vmatprep.subr.bf16.mxu0 0
        %3056 = vmatpush1.bf16.xpose.msra.mxu0 0
        %3057 = vmatprep.subr.bf16.mxu0 0
        %3058 = vmatpush1.bf16.xpose.msra.mxu0 0
        %3059 = vmatprep.subr.bf16.mxu0 0
        %3060 = vmatpush1.bf16.xpose.msra.mxu0 0
        %3061 = vmatprep.subr.bf16.mxu0 0
        %3062 = vmatpush1.bf16.xpose.msra.mxu0 0
        %3063 = vmatprep.subr.bf16.mxu0 0
        %3064 = vmatpush1.bf16.xpose.msra.mxu0 0
        %3065 = vmatprep.subr.bf16.mxu0 0
        %3066 = vmatpush1.bf16.xpose.msra.mxu0 0
        %3067 = vmatprep.subr.bf16.mxu0 0
        %3068 = vmatpush1.bf16.xpose.msra.mxu0 0
        %3069 = vmatprep.subr.bf16.mxu0 0
        %3070 = vmatpush1.bf16.xpose.msra.mxu0 0
        %3071 = vmatprep.subr.bf16.mxu0 0
        %3072 = vmatpush1.bf16.xpose.msra.mxu0 0
        %3073 = vmatprep.subr.bf16.mxu0 0
        %3074 = vmatpush1.bf16.xpose.msra.mxu0 0
        %3075 = vmatprep.subr.bf16.mxu0 0
        %3076 = vmatpush1.bf16.xpose.msra.mxu0 0
        %3077 = vmatprep.subr.bf16.mxu0 0
        %3078 = vmatpush1.bf16.xpose.msra.mxu0 0
        %3079 = vmatprep.subr.bf16.mxu0 0
        %3080 = vmatpush1.bf16.xpose.msra.mxu0 0
        %3081 = vmatprep.mubr.bf16.mxu0 0
        %3082 = vmatmul.mubr.bf16.gmra.mrb[0].mxu0 %v3038
        %v3083 = vpop.f32.mrb[0].mxu0
        %v3084 = vadd.f32 0.0, %v3083
        %v3085 = vpop.f32.mrb[0].mxu0
        %v3086 = vpop.f32.mrb[0].mxu0
        %v3087 = vadd.f32 0.0, %v3086
        %v3088 = vpop.f32.mrb[0].mxu0
        %3089 = vmatprep.mubr.bf16.mxu0 0
        %3090 = vmatmul.mubr.bf16.gmra.mrb[0].mxu0 %v3041
        %v3091 = vpop.f32.mrb[0].mxu0
        %v3092 = vadd.f32 0.0, %v3091
        %v3093 = vpop.f32.mrb[0].mxu0
        %v3094 = vpop.f32.mrb[0].mxu0
        %v3095 = vpop.f32.mrb[0].mxu0
        %3096 = vdwg.mxu0
        %3097 = vrot.lane.b32.xlu0 %v1755, 32
        %v3098 = vpop.permute.xlu0 %3097
        %3099 = vrot.lane.b32.xlu0 %v1756, 32
        %v3100 = vpop.permute.xlu0 %3099
        %3101 = vrot.lane.b32.xlu0 %v1759, 32
        %v3102 = vpop.permute.xlu0 %3101
        %3103 = vrot.lane.b32.xlu0 %v1760, 32
        %v3104 = vpop.permute.xlu0 %3103
        %v3106 = vsel %vm1761, %v3098, 0
        %v3109 = vsel %vm1761, %v3100, 0
        %v3112 = vsel %vm1761, %v3102, 0
        %v3115 = vsel %vm1761, %v3104, 0
        %3117 = vmatprep.subr.bf16.mxu0 0
        %3118 = vmatpush1.bf16.xpose.msra.mxu0 %v3112
        %3119 = vmatprep.subr.bf16.mxu0 0
        %3120 = vmatpush1.bf16.xpose.msra.mxu0 %v3115
        %3121 = vmatprep.subr.bf16.mxu0 0
        %3122 = vmatpush1.bf16.xpose.msra.mxu0 0
        %3123 = vmatprep.subr.bf16.mxu0 0
        %3124 = vmatpush1.bf16.xpose.msra.mxu0 0
        %3125 = vmatprep.subr.bf16.mxu0 0
        %3126 = vmatpush1.bf16.xpose.msra.mxu0 0
        %3127 = vmatprep.subr.bf16.mxu0 0
        %3128 = vmatpush1.bf16.xpose.msra.mxu0 0
        %3129 = vmatprep.subr.bf16.mxu0 0
        %3130 = vmatpush1.bf16.xpose.msra.mxu0 0
        %3131 = vmatprep.subr.bf16.mxu0 0
        %3132 = vmatpush1.bf16.xpose.msra.mxu0 0
        %3133 = vmatprep.subr.bf16.mxu0 0
        %3134 = vmatpush1.bf16.xpose.msra.mxu0 0
        %3135 = vmatprep.subr.bf16.mxu0 0
        %3136 = vmatpush1.bf16.xpose.msra.mxu0 0
        %3137 = vmatprep.subr.bf16.mxu0 0
        %3138 = vmatpush1.bf16.xpose.msra.mxu0 0
        %3139 = vmatprep.subr.bf16.mxu0 0
        %3140 = vmatpush1.bf16.xpose.msra.mxu0 0
        %3141 = vmatprep.subr.bf16.mxu0 0
        %3142 = vmatpush1.bf16.xpose.msra.mxu0 0
        %3143 = vmatprep.subr.bf16.mxu0 0
        %3144 = vmatpush1.bf16.xpose.msra.mxu0 0
        %3145 = vmatprep.subr.bf16.mxu0 0
        %3146 = vmatpush1.bf16.xpose.msra.mxu0 0
        %3147 = vmatprep.subr.bf16.mxu0 0
        %3148 = vmatpush1.bf16.xpose.msra.mxu0 0
        %3149 = vmatprep.mubr.bf16.mxu0 0
        %3150 = vmatmul.mubr.bf16.gmra.mrb[0].mxu0 %v3106
        %v3151 = vpop.f32.mrb[0].mxu0
        %v3152 = vadd.f32 0.0, %v3151
        %v3153 = vpop.f32.mrb[0].mxu0
        %v3154 = vpop.f32.mrb[0].mxu0
        %v3155 = vadd.f32 0.0, %v3154
        %v3156 = vpop.f32.mrb[0].mxu0
        %3157 = vmatprep.mubr.bf16.mxu0 0
        %3158 = vmatmul.mubr.bf16.gmra.mrb[0].mxu0 %v3109
        %v3159 = vpop.f32.mrb[0].mxu0
        %v3160 = vadd.f32 0.0, %v3159
        %v3161 = vpop.f32.mrb[0].mxu0
        %v3162 = vpop.f32.mrb[0].mxu0
        %v3163 = vpop.f32.mrb[0].mxu0
        %3164 = vdwg.mxu0
        %v3165 = vmul.f32 %v3084, 0.17677669
        %v3166 = vmul.f32 %v3087, 0.17677669
        %v3167 = vmul.f32 %v3092, 0.17677669
        %v3168 = vmul.f32 %v3152, 0.17677669
        %v3169 = vmul.f32 %v3155, 0.17677669
        %v3170 = vmul.f32 %v3160, 0.17677669
        %v3171 = vadd.f32 %v3165, %v1342
        %v3172 = vadd.f32 %v3166, %v1342
        %v3173 = vadd.f32 %v3167, %v1342
        %v3174 = vadd.f32 %v3168, %v1342
        %v3175 = vadd.f32 %v3169, %v1342
        %v3176 = vadd.f32 %v3170, %v1342
        %v3177 = vsel %vm1894, %v3171, -inf
        %3178 = vmax.xlane.f32.xlu0 %v3177
        %v3179 = vpop.xlane.xlu0 %3178
        %v3180 = vsel %vm1894, %v3172, -inf
        %3181 = vmax.xlane.f32.xlu0 %v3180
        %v3182 = vpop.xlane.xlu0 %3181
        %v3183 = vsel %vm1894, %v3173, -inf
        %3184 = vmax.xlane.f32.xlu0 %v3183
        %v3185 = vpop.xlane.xlu0 %3184
        %v3186 = vsel %vm1894, %v3174, -inf
        %3187 = vmax.xlane.f32.xlu0 %v3186
        %v3188 = vpop.xlane.xlu0 %3187
        %v3189 = vsel %vm1894, %v3175, -inf
        %3190 = vmax.xlane.f32.xlu0 %v3189
        %v3191 = vpop.xlane.xlu0 %3190
        %v3192 = vsel %vm1894, %v3176, -inf
        %3193 = vmax.xlane.f32.xlu0 %v3192
        %v3194 = vpop.xlane.xlu0 %3193
        %v3195 = vsub.f32 %v3171, %v3179
        %v3196 = vsub.f32 %v3172, %v3182
        %v3197 = vsub.f32 %v3173, %v3185
        %v3198 = vsub.f32 %v3174, %v3188
        %v3199 = vsub.f32 %v3175, %v3191
        %v3200 = vsub.f32 %v3176, %v3194
        %v3201 = vmul.f32 %v3195, 1.442695
        %v3202 = vpow.pop %v3201
        %v3203 = vmul.f32 %v3196, 1.442695
        %v3204 = vpow.pop %v3203
        %v3205 = vmul.f32 %v3197, 1.442695
        %v3206 = vpow.pop %v3205
        %v3207 = vmul.f32 %v3198, 1.442695
        %v3208 = vpow.pop %v3207
        %v3209 = vmul.f32 %v3199, 1.442695
        %v3210 = vpow.pop %v3209
        %v3211 = vmul.f32 %v3200, 1.442695
        %v3212 = vpow.pop %v3211
        %v3213 = vsel %vm1894, %v3202, 0.0
        %3214 = vadd.xlane.f32.xlu0 %v3213
        %v3215 = vpop.xlane.xlu0 %3214
        %v3216 = vsel %vm1894, %v3204, 0.0
        %3217 = vadd.xlane.f32.xlu0 %v3216
        %v3218 = vpop.xlane.xlu0 %3217
        %v3219 = vsel %vm1894, %v3206, 0.0
        %3220 = vadd.xlane.f32.xlu0 %v3219
        %v3221 = vpop.xlane.xlu0 %3220
        %v3222 = vsel %vm1894, %v3208, 0.0
        %3223 = vadd.xlane.f32.xlu0 %v3222
        %v3224 = vpop.xlane.xlu0 %3223
        %v3225 = vsel %vm1894, %v3210, 0.0
        %3226 = vadd.xlane.f32.xlu0 %v3225
        %v3227 = vpop.xlane.xlu0 %3226
        %v3228 = vsel %vm1894, %v3212, 0.0
        %3229 = vadd.xlane.f32.xlu0 %v3228
        %v3230 = vpop.xlane.xlu0 %3229
        %v3231 = vrcp.pop %v3215
        %v3232 = vrcp.pop %v3218
        %v3233 = vrcp.pop %v3221
        %v3234 = vrcp.pop %v3224
        %v3235 = vrcp.pop %v3227
        %v3236 = vrcp.pop %v3230
        %v3237 = vmul.f32 %v3202, %v3231
        %v3238 = vmul.f32 %v3204, %v3232
        %v3239 = vmul.f32 %v3206, %v3233
        %v3240 = vmul.f32 %v3208, %v3234
        %v3241 = vmul.f32 %v3210, %v3235
        %v3242 = vmul.f32 %v3212, %v3236
        %v3243 = vpack.c.bf16 %v3238, %v3237
        %v3244 = vpack.c.bf16 %v3239, %v3239
        %v3245 = vpack.c.bf16 %v3241, %v3240
        %v3246 = vpack.c.bf16 %v3242, %v3242
        %3247 = vrot.lane.b32.xlu0 %v1965, 32
        %v3248 = vpop.permute.xlu0 %3247
        %3249 = vrot.lane.b32.xlu0 %v1966, 32
        %v3250 = vpop.permute.xlu0 %3249
        %v3253 = vsel %vm1894, %v3243, 0
        %v3256 = vsel %vm1894, %v3244, 0
        %v3259 = vsel %vm1975, %v3250, 0
        %3261 = vmatprep.subr.bf16.mxu0 0
        %3262 = vmatpush1.bf16.msra.mxu0 %v3248
        %3263 = vmatprep.subr.bf16.mxu0 0
        %3264 = vmatpush1.bf16.msra.mxu0 %v3259
        %3265 = vmatprep.subr.bf16.mxu0 0
        %3266 = vmatpush1.bf16.msra.mxu0 0
        %3267 = vmatprep.subr.bf16.mxu0 0
        %3268 = vmatpush1.bf16.msra.mxu0 0
        %3269 = vmatprep.subr.bf16.mxu0 0
        %3270 = vmatpush1.bf16.msra.mxu0 0
        %3271 = vmatprep.subr.bf16.mxu0 0
        %3272 = vmatpush1.bf16.msra.mxu0 0
        %3273 = vmatprep.subr.bf16.mxu0 0
        %3274 = vmatpush1.bf16.msra.mxu0 0
        %3275 = vmatprep.subr.bf16.mxu0 0
        %3276 = vmatpush1.bf16.msra.mxu0 0
        %3277 = vmatprep.subr.bf16.mxu0 0
        %3278 = vmatpush1.bf16.msra.mxu0 0
        %3279 = vmatprep.subr.bf16.mxu0 0
        %3280 = vmatpush1.bf16.msra.mxu0 0
        %3281 = vmatprep.subr.bf16.mxu0 0
        %3282 = vmatpush1.bf16.msra.mxu0 0
        %3283 = vmatprep.subr.bf16.mxu0 0
        %3284 = vmatpush1.bf16.msra.mxu0 0
        %3285 = vmatprep.subr.bf16.mxu0 0
        %3286 = vmatpush1.bf16.msra.mxu0 0
        %3287 = vmatprep.subr.bf16.mxu0 0
        %3288 = vmatpush1.bf16.msra.mxu0 0
        %3289 = vmatprep.subr.bf16.mxu0 0
        %3290 = vmatpush1.bf16.msra.mxu0 0
        %3291 = vmatprep.subr.bf16.mxu0 0
        %3292 = vmatpush1.bf16.msra.mxu0 0
        %3293 = vmatprep.mubr.bf16.mxu0 0
        %3294 = vmatmul.mubr.bf16.gmra.mrb[0].mxu0 %v3253
        %v3295 = vpop.f32.mrb[0].mxu0
        %v3296 = vadd.f32 0.0, %v3295
        %v3297 = vpop.f32.mrb[0].mxu0
        %v3298 = vpop.f32.mrb[0].mxu0
        %v3299 = vadd.f32 0.0, %v3298
        %v3300 = vpop.f32.mrb[0].mxu0
        %3301 = vmatprep.mubr.bf16.mxu0 0
        %3302 = vmatmul.mubr.bf16.gmra.mrb[0].mxu0 %v3256
        %v3303 = vpop.f32.mrb[0].mxu0
        %v3304 = vadd.f32 0.0, %v3303
        %v3305 = vpop.f32.mrb[0].mxu0
        %v3306 = vpop.f32.mrb[0].mxu0
        %v3307 = vpop.f32.mrb[0].mxu0
        %3308 = vdwg.mxu0
        %3309 = vrot.lane.b32.xlu0 %v1967, 32
        %v3310 = vpop.permute.xlu0 %3309
        %3311 = vrot.lane.b32.xlu0 %v1968, 32
        %v3312 = vpop.permute.xlu0 %3311
        %v3315 = vsel %vm1894, %v3245, 0
        %v3318 = vsel %vm1894, %v3246, 0
        %v3321 = vsel %vm1975, %v3312, 0
        %3323 = vmatprep.subr.bf16.mxu0 0
        %3324 = vmatpush1.bf16.msra.mxu0 %v3310
        %3325 = vmatprep.subr.bf16.mxu0 0
        %3326 = vmatpush1.bf16.msra.mxu0 %v3321
        %3327 = vmatprep.subr.bf16.mxu0 0
        %3328 = vmatpush1.bf16.msra.mxu0 0
        %3329 = vmatprep.subr.bf16.mxu0 0
        %3330 = vmatpush1.bf16.msra.mxu0 0
        %3331 = vmatprep.subr.bf16.mxu0 0
        %3332 = vmatpush1.bf16.msra.mxu0 0
        %3333 = vmatprep.subr.bf16.mxu0 0
        %3334 = vmatpush1.bf16.msra.mxu0 0
        %3335 = vmatprep.subr.bf16.mxu0 0
        %3336 = vmatpush1.bf16.msra.mxu0 0
        %3337 = vmatprep.subr.bf16.mxu0 0
        %3338 = vmatpush1.bf16.msra.mxu0 0
        %3339 = vmatprep.subr.bf16.mxu0 0
        %3340 = vmatpush1.bf16.msra.mxu0 0
        %3341 = vmatprep.subr.bf16.mxu0 0
        %3342 = vmatpush1.bf16.msra.mxu0 0
        %3343 = vmatprep.subr.bf16.mxu0 0
        %3344 = vmatpush1.bf16.msra.mxu0 0
        %3345 = vmatprep.subr.bf16.mxu0 0
        %3346 = vmatpush1.bf16.msra.mxu0 0
        %3347 = vmatprep.subr.bf16.mxu0 0
        %3348 = vmatpush1.bf16.msra.mxu0 0
        %3349 = vmatprep.subr.bf16.mxu0 0
        %3350 = vmatpush1.bf16.msra.mxu0 0
        %3351 = vmatprep.subr.bf16.mxu0 0
        %3352 = vmatpush1.bf16.msra.mxu0 0
        %3353 = vmatprep.subr.bf16.mxu0 0
        %3354 = vmatpush1.bf16.msra.mxu0 0
        %3355 = vmatprep.mubr.bf16.mxu0 0
        %3356 = vmatmul.mubr.bf16.gmra.mrb[0].mxu0 %v3315
        %v3357 = vpop.f32.mrb[0].mxu0
        %v3358 = vadd.f32 0.0, %v3357
        %v3359 = vpop.f32.mrb[0].mxu0
        %v3360 = vpop.f32.mrb[0].mxu0
        %v3361 = vadd.f32 0.0, %v3360
        %v3362 = vpop.f32.mrb[0].mxu0
        %3363 = vmatprep.mubr.bf16.mxu0 0
        %3364 = vmatmul.mubr.bf16.gmra.mrb[0].mxu0 %v3318
        %v3365 = vpop.f32.mrb[0].mxu0
        %v3366 = vadd.f32 0.0, %v3365
        %v3367 = vpop.f32.mrb[0].mxu0
        %v3368 = vpop.f32.mrb[0].mxu0
        %v3369 = vpop.f32.mrb[0].mxu0
        %3370 = vdwg.mxu0
        %v3371 = vpack.c.bf16 %v3299, %v3296
        %v3372 = vpack.c.bf16 %v3358, %v3304
        %v3373 = vpack.c.bf16 %v3366, %v3361
        %v3378 = vunpack.c.l.b16 %v1749
        %v3379 = vunpack.c.l.b16 %v1750
        %v3380 = vunpack.c.l.b16 %v1751
        %v3381 = vunpack.c.l.b16 %v1752
        %v3382 = vpack.c.b16 %v3379, %v3378
        %v3383 = vpack.c.b16 %v3381, %v3380
        %v3387 = vsel %vm1761, %v3371, 0
        %v3390 = vsel %vm1761, %v3372, 0
        %v3393 = vsel %vm1761, %v3373, 0
        %3395 = vmatprep.subr.bf16.mxu0 0
        %3396 = vmatpush1.bf16.msra.mxu0 %v3382
        %3397 = vmatprep.subr.bf16.mxu0 0
        %3398 = vmatpush1.bf16.msra.mxu0 %v3383
        %3399 = vmatprep.subr.bf16.mxu0 0
        %3400 = vmatpush1.bf16.msra.mxu0 0
        %3401 = vmatprep.subr.bf16.mxu0 0
        %3402 = vmatpush1.bf16.msra.mxu0 0
        %3403 = vmatprep.subr.bf16.mxu0 0
        %3404 = vmatpush1.bf16.msra.mxu0 0
        %3405 = vmatprep.subr.bf16.mxu0 0
        %3406 = vmatpush1.bf16.msra.mxu0 0
        %3407 = vmatprep.subr.bf16.mxu0 0
        %3408 = vmatpush1.bf16.msra.mxu0 0
        %3409 = vmatprep.subr.bf16.mxu0 0
        %3410 = vmatpush1.bf16.msra.mxu0 0
        %3411 = vmatprep.subr.bf16.mxu0 0
        %3412 = vmatpush1.bf16.msra.mxu0 0
        %3413 = vmatprep.subr.bf16.mxu0 0
        %3414 = vmatpush1.bf16.msra.mxu0 0
        %3415 = vmatprep.subr.bf16.mxu0 0
        %3416 = vmatpush1.bf16.msra.mxu0 0
        %3417 = vmatprep.subr.bf16.mxu0 0
        %3418 = vmatpush1.bf16.msra.mxu0 0
        %3419 = vmatprep.subr.bf16.mxu0 0
        %3420 = vmatpush1.bf16.msra.mxu0 0
        %3421 = vmatprep.subr.bf16.mxu0 0
        %3422 = vmatpush1.bf16.msra.mxu0 0
        %3423 = vmatprep.subr.bf16.mxu0 0
        %3424 = vmatpush1.bf16.msra.mxu0 0
        %3425 = vmatprep.subr.bf16.mxu0 0
        %3426 = vmatpush1.bf16.msra.mxu0 0
        %3427 = vmatprep.mubr.bf16.mxu0 0
        %3428 = vmatmul.mubr.bf16.gmra.mrb[0].mxu0 %v3387
        %v3429 = vpop.f32.mrb[0].mxu0
        %v3430 = vadd.f32 0.0, %v3429
        %v3431 = vpop.f32.mrb[0].mxu0
        %v3432 = vpop.f32.mrb[0].mxu0
        %v3433 = vadd.f32 0.0, %v3432
        %v3434 = vpop.f32.mrb[0].mxu0
        %3435 = vmatprep.mubr.bf16.mxu0 0
        %3436 = vmatmul.mubr.bf16.gmra.mrb[0].mxu0 %v3390
        %v3437 = vpop.f32.mrb[0].mxu0
        %v3438 = vadd.f32 0.0, %v3437
        %v3439 = vpop.f32.mrb[0].mxu0
        %v3440 = vpop.f32.mrb[0].mxu0
        %v3441 = vadd.f32 0.0, %v3440
        %v3442 = vpop.f32.mrb[0].mxu0
        %3443 = vmatprep.mubr.bf16.mxu0 0
        %3444 = vmatmul.mubr.bf16.gmra.mrb[0].mxu0 %v3393
        %v3445 = vpop.f32.mrb[0].mxu0
        %v3446 = vadd.f32 0.0, %v3445
        %v3447 = vpop.f32.mrb[0].mxu0
        %v3448 = vpop.f32.mrb[0].mxu0
        %v3449 = vadd.f32 0.0, %v3448
        %v3450 = vpop.f32.mrb[0].mxu0
        %3451 = vdwg.mxu0
        %v3452 = vadd.f32 %v3023, %v3430
        %v3453 = vadd.f32 %v3024, %v3433
        %v3454 = vadd.f32 %v3025, %v3438
        %v3455 = vadd.f32 %v3026, %v3441
        %v3456 = vadd.f32 %v3027, %v3446
        %v3457 = vadd.f32 %v3028, %v3449
        %v3458 = vadd.f32 %v1333, %v3452
        %v3459 = vadd.f32 %v1334, %v3453
        %v3460 = vadd.f32 %v1335, %v3454
        %v3461 = vadd.f32 %v1336, %v3455
        %v3462 = vadd.f32 %v1337, %v3456
        %v3463 = vadd.f32 %v1338, %v3457
        %v3464 = vld [vmem:[%s997] sm:$0x1]
        %v3466 = vlaneseq
        %v3467 = vshrl.u32 %v3466, 7
        %v3468 = vsub.s32 0, %v3467
        %v3469 = vrot.slane %v3464, %v3468
        %v3471 = vadd.f32 %v3458, %v3469
        %v3472 = vadd.f32 %v3459, %v3469
        %v3473 = vadd.f32 %v3460, %v3469
        %v3474 = vadd.f32 %v3461, %v3469
        %v3475 = vadd.f32 %v3462, %v3469
        %v3476 = vadd.f32 %v3463, %v3469
        %v3477 = vld [vmem:[%s1006] sm:$0x1]
        %v3478 = vld [vmem:[%s1015] sm:$0x1]
        %3479 = vadd.xlane.f32.xlu0 %v3471
        %v3480 = vpop.xlane.xlu0 %3479
        %3481 = vadd.xlane.f32.xlu0 %v3472
        %v3482 = vpop.xlane.xlu0 %3481
        %3483 = vadd.xlane.f32.xlu0 %v3473
        %v3484 = vpop.xlane.xlu0 %3483
        %3485 = vadd.xlane.f32.xlu0 %v3474
        %v3486 = vpop.xlane.xlu0 %3485
        %3487 = vadd.xlane.f32.xlu0 %v3475
        %v3488 = vpop.xlane.xlu0 %3487
        %3489 = vadd.xlane.f32.xlu0 %v3476
        %v3490 = vpop.xlane.xlu0 %3489
        %v3491 = vmul.f32 %v3480, %v1358
        %v3492 = vmul.f32 %v3482, %v1358
        %v3493 = vmul.f32 %v3484, %v1358
        %v3494 = vmul.f32 %v3486, %v1358
        %v3495 = vmul.f32 %v3488, %v1358
        %v3496 = vmul.f32 %v3490, %v1358
        %v3497 = vsub.f32 %v3471, %v3491
        %v3498 = vsub.f32 %v3472, %v3492
        %v3499 = vsub.f32 %v3473, %v3493
        %v3500 = vsub.f32 %v3474, %v3494
        %v3501 = vsub.f32 %v3475, %v3495
        %v3502 = vsub.f32 %v3476, %v3496
        %v3503 = vmul.f32 %v3497, %v3497
        %v3504 = vmul.f32 %v3498, %v3498
        %v3505 = vmul.f32 %v3499, %v3499
        %v3506 = vmul.f32 %v3500, %v3500
        %v3507 = vmul.f32 %v3501, %v3501
        %v3508 = vmul.f32 %v3502, %v3502
        %3509 = vadd.xlane.f32.xlu0 %v3503
        %v3510 = vpop.xlane.xlu0 %3509
        %3511 = vadd.xlane.f32.xlu0 %v3504
        %v3512 = vpop.xlane.xlu0 %3511
        %3513 = vadd.xlane.f32.xlu0 %v3505
        %v3514 = vpop.xlane.xlu0 %3513
        %3515 = vadd.xlane.f32.xlu0 %v3506
        %v3516 = vpop.xlane.xlu0 %3515
        %3517 = vadd.xlane.f32.xlu0 %v3507
        %v3518 = vpop.xlane.xlu0 %3517
        %3519 = vadd.xlane.f32.xlu0 %v3508
        %v3520 = vpop.xlane.xlu0 %3519
        %v3521 = vmul.f32 %v3510, %v1358
        %v3522 = vmul.f32 %v3512, %v1358
        %v3523 = vmul.f32 %v3514, %v1358
        %v3524 = vmul.f32 %v3516, %v1358
        %v3525 = vmul.f32 %v3518, %v1358
        %v3526 = vmul.f32 %v3520, %v1358
        %v3527 = vadd.f32 %v3521, 1e-06
        %v3528 = vadd.f32 %v3522, 1e-06
        %v3529 = vadd.f32 %v3523, 1e-06
        %v3530 = vadd.f32 %v3524, 1e-06
        %v3531 = vadd.f32 %v3525, 1e-06
        %v3532 = vadd.f32 %v3526, 1e-06
        %v3533 = vrsqrt.pop %v3527
        %v3534 = vrsqrt.pop %v3528
        %v3535 = vrsqrt.pop %v3529
        %v3536 = vrsqrt.pop %v3530
        %v3537 = vrsqrt.pop %v3531
        %v3538 = vrsqrt.pop %v3532
        %v3539 = vmul.f32 %v3497, %v3533
        %v3540 = vmul.f32 %v3498, %v3534
        %v3541 = vmul.f32 %v3499, %v3535
        %v3542 = vmul.f32 %v3500, %v3536
        %v3543 = vmul.f32 %v3501, %v3537
        %v3544 = vmul.f32 %v3502, %v3538
        %v3546 = vlaneseq
        %v3547 = vshrl.u32 %v3546, 7
        %v3548 = vsub.s32 0, %v3547
        %v3549 = vrot.slane %v3477, %v3548
        %v3551 = vmul.f32 %v3539, %v3549
        %v3552 = vmul.f32 %v3540, %v3549
        %v3553 = vmul.f32 %v3541, %v3549
        %v3554 = vmul.f32 %v3542, %v3549
        %v3555 = vmul.f32 %v3543, %v3549
        %v3556 = vmul.f32 %v3544, %v3549
        %v3558 = vlaneseq
        %v3559 = vshrl.u32 %v3558, 7
        %v3560 = vsub.s32 0, %v3559
        %v3561 = vrot.slane %v3478, %v3560
        %v3563 = vadd.f32 %v3551, %v3561
        %v3564 = vadd.f32 %v3552, %v3561
        %v3565 = vadd.f32 %v3553, %v3561
        %v3566 = vadd.f32 %v3554, %v3561
        %v3567 = vadd.f32 %v3555, %v3561
        %v3568 = vadd.f32 %v3556, %v3561
        %v3569 = vpack.c.bf16 %v3564, %v3563
        %v3570 = vpack.c.bf16 %v3566, %v3565
        %v3571 = vpack.c.bf16 %v3568, %v3567
        %v3572 = vld [vmem:[%s1024] sm:$0xff]
        %v3573 = vld [vmem:[%s1024 + $0x8] sm:$0xff]
        %v3574 = vld [vmem:[%s1024 + $0x10] sm:$0xff]
        %v3575 = vld [vmem:[%s1024 + $0x18] sm:$0xff]
        %v3576 = vld [vmem:[%s1024 + $0x20] sm:$0xff]
        %v3577 = vld [vmem:[%s1024 + $0x28] sm:$0xff]
        %v3578 = vld [vmem:[%s1024 + $0x30] sm:$0xff]
        %v3579 = vld [vmem:[%s1024 + $0x38] sm:$0xff]
        %v3580 = vld [vmem:[%s1024 + $0x40] sm:$0xff]
        %v3581 = vld [vmem:[%s1024 + $0x48] sm:$0xff]
        %v3582 = vld [vmem:[%s1024 + $0x50] sm:$0xff]
        %v3583 = vld [vmem:[%s1024 + $0x58] sm:$0xff]
        %v3584 = vld [vmem:[%s1024 + $0x60] sm:$0xff]
        %v3585 = vld [vmem:[%s1024 + $0x68] sm:$0xff]
        %v3586 = vld [vmem:[%s1024 + $0x70] sm:$0xff]
        %v3587 = vld [vmem:[%s1024 + $0x78] sm:$0xff]
        %v3588 = vld [vmem:[%s1024 + $0x80] sm:$0xff]
        %v3589 = vld [vmem:[%s1024 + $0x88] sm:$0xff]
        %v3590 = vld [vmem:[%s1024 + $0x90] sm:$0xff]
        %v3591 = vld [vmem:[%s1024 + $0x98] sm:$0xff]
        %v3592 = vld [vmem:[%s1024 + $0xa0] sm:$0xff]
        %v3593 = vld [vmem:[%s1024 + $0xa8] sm:$0xff]
        %v3594 = vld [vmem:[%s1024 + $0xb0] sm:$0xff]
        %v3595 = vld [vmem:[%s1024 + $0xb8] sm:$0xff]
        %v3596 = vld [vmem:[%s1024 + $0xc0] sm:$0xff]
        %v3597 = vld [vmem:[%s1024 + $0xc8] sm:$0xff]
        %v3598 = vld [vmem:[%s1024 + $0xd0] sm:$0xff]
        %v3599 = vld [vmem:[%s1024 + $0xd8] sm:$0xff]
        %v3600 = vld [vmem:[%s1024 + $0xe0] sm:$0xff]
        %v3601 = vld [vmem:[%s1024 + $0xe8] sm:$0xff]
        %v3602 = vld [vmem:[%s1024 + $0xf0] sm:$0xff]
        %v3603 = vld [vmem:[%s1024 + $0xf8] sm:$0xff]
        %v3604 = vld [vmem:[%s1033] sm:$0xf]
        %v3606 = vlaneseq
        %v3607 = vshrl.u32 %v3606, 7
        %v3608 = vsub.s32 0, %v3607
        %v3609 = vrot.slane %v3604, %v3608
        %v3610 = vlaneseq
        %v3611 = vshrl.u32 %v3610, 7
        %v3612 = vsub.s32 1, %v3611
        %v3613 = vrot.slane %v3604, %v3612
        %v3614 = vlaneseq
        %v3615 = vshrl.u32 %v3614, 7
        %v3616 = vsub.s32 2, %v3615
        %v3617 = vrot.slane %v3604, %v3616
        %v3618 = vlaneseq
        %v3619 = vshrl.u32 %v3618, 7
        %v3620 = vsub.s32 3, %v3619
        %v3621 = vrot.slane %v3604, %v3620
        %v3658 = vunpack.c.l.b16 %v3572
        %v3659 = vunpack.c.h.b16 %v3572
        %v3660 = vunpack.c.l.b16 %v3573
        %v3661 = vunpack.c.h.b16 %v3573
        %v3662 = vunpack.c.l.b16 %v3574
        %v3663 = vunpack.c.h.b16 %v3574
        %v3664 = vunpack.c.l.b16 %v3575
        %v3665 = vunpack.c.h.b16 %v3575
        %v3666 = vunpack.c.l.b16 %v3576
        %v3667 = vunpack.c.h.b16 %v3576
        %v3668 = vunpack.c.l.b16 %v3577
        %v3669 = vunpack.c.h.b16 %v3577
        %v3670 = vunpack.c.l.b16 %v3578
        %v3671 = vunpack.c.h.b16 %v3578
        %v3672 = vunpack.c.l.b16 %v3579
        %v3673 = vunpack.c.h.b16 %v3579
        %v3674 = vunpack.c.l.b16 %v3580
        %v3675 = vunpack.c.h.b16 %v3580
        %v3676 = vunpack.c.l.b16 %v3581
        %v3677 = vunpack.c.h.b16 %v3581
        %v3678 = vunpack.c.l.b16 %v3582
        %v3679 = vunpack.c.h.b16 %v3582
        %v3680 = vunpack.c.l.b16 %v3583
        %v3681 = vunpack.c.h.b16 %v3583
        %v3682 = vunpack.c.l.b16 %v3584
        %v3683 = vunpack.c.h.b16 %v3584
        %v3684 = vunpack.c.l.b16 %v3585
        %v3685 = vunpack.c.h.b16 %v3585
        %v3686 = vunpack.c.l.b16 %v3586
        %v3687 = vunpack.c.h.b16 %v3586
        %v3688 = vunpack.c.l.b16 %v3587
        %v3689 = vunpack.c.h.b16 %v3587
        %v3690 = vunpack.c.l.b16 %v3588
        %v3691 = vunpack.c.h.b16 %v3588
        %v3692 = vunpack.c.l.b16 %v3589
        %v3693 = vunpack.c.h.b16 %v3589
        %v3694 = vunpack.c.l.b16 %v3590
        %v3695 = vunpack.c.h.b16 %v3590
        %v3696 = vunpack.c.l.b16 %v3591
        %v3697 = vunpack.c.h.b16 %v3591
        %v3698 = vunpack.c.l.b16 %v3592
        %v3699 = vunpack.c.h.b16 %v3592
        %v3700 = vunpack.c.l.b16 %v3593
        %v3701 = vunpack.c.h.b16 %v3593
        %v3702 = vunpack.c.l.b16 %v3594
        %v3703 = vunpack.c.h.b16 %v3594
        %v3704 = vunpack.c.l.b16 %v3595
        %v3705 = vunpack.c.h.b16 %v3595
        %v3706 = vunpack.c.l.b16 %v3596
        %v3707 = vunpack.c.h.b16 %v3596
        %v3708 = vunpack.c.l.b16 %v3597
        %v3709 = vunpack.c.h.b16 %v3597
        %v3710 = vunpack.c.l.b16 %v3598
        %v3711 = vunpack.c.h.b16 %v3598
        %v3712 = vunpack.c.l.b16 %v3599
        %v3713 = vunpack.c.h.b16 %v3599
        %v3714 = vunpack.c.l.b16 %v3600
        %v3715 = vunpack.c.h.b16 %v3600
        %v3716 = vunpack.c.l.b16 %v3601
        %v3717 = vunpack.c.h.b16 %v3601
        %v3718 = vunpack.c.l.b16 %v3602
        %v3719 = vunpack.c.h.b16 %v3602
        %v3720 = vunpack.c.l.b16 %v3603
        %v3721 = vunpack.c.h.b16 %v3603
        %v3722 = vpack.c.b16 %v3662, %v3658
        %v3723 = vpack.c.b16 %v3663, %v3659
        %v3724 = vpack.c.b16 %v3664, %v3660
        %v3725 = vpack.c.b16 %v3665, %v3661
        %v3726 = vpack.c.b16 %v3670, %v3666
        %v3727 = vpack.c.b16 %v3671, %v3667
        %v3728 = vpack.c.b16 %v3672, %v3668
        %v3729 = vpack.c.b16 %v3673, %v3669
        %v3730 = vpack.c.b16 %v3678, %v3674
        %v3731 = vpack.c.b16 %v3679, %v3675
        %v3732 = vpack.c.b16 %v3680, %v3676
        %v3733 = vpack.c.b16 %v3681, %v3677
        %v3734 = vpack.c.b16 %v3686, %v3682
        %v3735 = vpack.c.b16 %v3687, %v3683
        %v3736 = vpack.c.b16 %v3688, %v3684
        %v3737 = vpack.c.b16 %v3689, %v3685
        %v3738 = vpack.c.b16 %v3694, %v3690
        %v3739 = vpack.c.b16 %v3695, %v3691
        %v3740 = vpack.c.b16 %v3696, %v3692
        %v3741 = vpack.c.b16 %v3697, %v3693
        %v3742 = vpack.c.b16 %v3702, %v3698
        %v3743 = vpack.c.b16 %v3703, %v3699
        %v3744 = vpack.c.b16 %v3704, %v3700
        %v3745 = vpack.c.b16 %v3705, %v3701
        %v3746 = vpack.c.b16 %v3710, %v3706
        %v3747 = vpack.c.b16 %v3711, %v3707
        %v3748 = vpack.c.b16 %v3712, %v3708
        %v3749 = vpack.c.b16 %v3713, %v3709
        %v3750 = vpack.c.b16 %v3718, %v3714
        %v3751 = vpack.c.b16 %v3719, %v3715
        %v3752 = vpack.c.b16 %v3720, %v3716
        %v3753 = vpack.c.b16 %v3721, %v3717
        %3786 = vmatprep.subr.bf16.mxu0 %v3723
        %3787 = vmatpush1.bf16.msra.mxu0 %v3722
        %3788 = vmatprep.subr.bf16.mxu0 %v3727
        %3789 = vmatpush1.bf16.msra.mxu0 %v3726
        %3790 = vmatprep.subr.bf16.mxu0 %v3731
        %3791 = vmatpush1.bf16.msra.mxu0 %v3730
        %3792 = vmatprep.subr.bf16.mxu0 %v3735
        %3793 = vmatpush1.bf16.msra.mxu0 %v3734
        %3794 = vmatprep.subr.bf16.mxu0 %v3739
        %3795 = vmatpush1.bf16.msra.mxu0 %v3738
        %3796 = vmatprep.subr.bf16.mxu0 %v3743
        %3797 = vmatpush1.bf16.msra.mxu0 %v3742
        %3798 = vmatprep.subr.bf16.mxu0 %v3747
        %3799 = vmatpush1.bf16.msra.mxu0 %v3746
        %3800 = vmatprep.subr.bf16.mxu0 %v3751
        %3801 = vmatpush1.bf16.msra.mxu0 %v3750
        %3802 = vmatprep.subr.bf16.mxu0 0
        %3803 = vmatpush1.bf16.msra.mxu0 0
        %3804 = vmatprep.subr.bf16.mxu0 0
        %3805 = vmatpush1.bf16.msra.mxu0 0
        %3806 = vmatprep.subr.bf16.mxu0 0
        %3807 = vmatpush1.bf16.msra.mxu0 0
        %3808 = vmatprep.subr.bf16.mxu0 0
        %3809 = vmatpush1.bf16.msra.mxu0 0
        %3810 = vmatprep.subr.bf16.mxu0 0
        %3811 = vmatpush1.bf16.msra.mxu0 0
        %3812 = vmatprep.subr.bf16.mxu0 0
        %3813 = vmatpush1.bf16.msra.mxu0 0
        %3814 = vmatprep.subr.bf16.mxu0 0
        %3815 = vmatpush1.bf16.msra.mxu0 0
        %3816 = vmatprep.subr.bf16.mxu0 0
        %3817 = vmatpush1.bf16.msra.mxu0 0
        %3818 = vmatprep.mubr.bf16.mxu0 0
        %3819 = vmatmul.mubr.bf16.gmra.mrb[0].mxu0 %v3569
        %v3820 = vpop.f32.mrb[0].mxu0
        %v3821 = vadd.f32 %v3609, %v3820
        %v3822 = vpop.f32.mrb[0].mxu0
        %v3823 = vadd.f32 %v3613, %v3822
        %v3824 = vpop.f32.mrb[0].mxu0
        %v3825 = vadd.f32 %v3609, %v3824
        %v3826 = vpop.f32.mrb[0].mxu0
        %v3827 = vadd.f32 %v3613, %v3826
        %3828 = vmatprep.mubr.bf16.mxu0 0
        %3829 = vmatmul.mubr.bf16.gmra.mrb[0].mxu0 %v3570
        %v3830 = vpop.f32.mrb[0].mxu0
        %v3831 = vadd.f32 %v3609, %v3830
        %v3832 = vpop.f32.mrb[0].mxu0
        %v3833 = vadd.f32 %v3613, %v3832
        %v3834 = vpop.f32.mrb[0].mxu0
        %v3835 = vadd.f32 %v3609, %v3834
        %v3836 = vpop.f32.mrb[0].mxu0
        %v3837 = vadd.f32 %v3613, %v3836
        %3838 = vmatprep.mubr.bf16.mxu0 0
        %3839 = vmatmul.mubr.bf16.gmra.mrb[0].mxu0 %v3571
        %v3840 = vpop.f32.mrb[0].mxu0
        %v3841 = vadd.f32 %v3609, %v3840
        %v3842 = vpop.f32.mrb[0].mxu0
        %v3843 = vadd.f32 %v3613, %v3842
        %v3844 = vpop.f32.mrb[0].mxu0
        %v3845 = vadd.f32 %v3609, %v3844
        %v3846 = vpop.f32.mrb[0].mxu0
        %v3847 = vadd.f32 %v3613, %v3846
        %3848 = vdwg.mxu0
        %3849 = vmatprep.subr.bf16.mxu0 %v3725
        %3850 = vmatpush1.bf16.msra.mxu0 %v3724
        %3851 = vmatprep.subr.bf16.mxu0 %v3729
        %3852 = vmatpush1.bf16.msra.mxu0 %v3728
        %3853 = vmatprep.subr.bf16.mxu0 %v3733
        %3854 = vmatpush1.bf16.msra.mxu0 %v3732
        %3855 = vmatprep.subr.bf16.mxu0 %v3737
        %3856 = vmatpush1.bf16.msra.mxu0 %v3736
        %3857 = vmatprep.subr.bf16.mxu0 %v3741
        %3858 = vmatpush1.bf16.msra.mxu0 %v3740
        %3859 = vmatprep.subr.bf16.mxu0 %v3745
        %3860 = vmatpush1.bf16.msra.mxu0 %v3744
        %3861 = vmatprep.subr.bf16.mxu0 %v3749
        %3862 = vmatpush1.bf16.msra.mxu0 %v3748
        %3863 = vmatprep.subr.bf16.mxu0 %v3753
        %3864 = vmatpush1.bf16.msra.mxu0 %v3752
        %3865 = vmatprep.subr.bf16.mxu0 0
        %3866 = vmatpush1.bf16.msra.mxu0 0
        %3867 = vmatprep.subr.bf16.mxu0 0
        %3868 = vmatpush1.bf16.msra.mxu0 0
        %3869 = vmatprep.subr.bf16.mxu0 0
        %3870 = vmatpush1.bf16.msra.mxu0 0
        %3871 = vmatprep.subr.bf16.mxu0 0
        %3872 = vmatpush1.bf16.msra.mxu0 0
        %3873 = vmatprep.subr.bf16.mxu0 0
        %3874 = vmatpush1.bf16.msra.mxu0 0
        %3875 = vmatprep.subr.bf16.mxu0 0
        %3876 = vmatpush1.bf16.msra.mxu0 0
        %3877 = vmatprep.subr.bf16.mxu0 0
        %3878 = vmatpush1.bf16.msra.mxu0 0
        %3879 = vmatprep.subr.bf16.mxu0 0
        %3880 = vmatpush1.bf16.msra.mxu0 0
        %3881 = vmatprep.mubr.bf16.mxu0 0
        %3882 = vmatmul.mubr.bf16.gmra.mrb[0].mxu0 %v3569
        %v3883 = vpop.f32.mrb[0].mxu0
        %v3884 = vadd.f32 %v3617, %v3883
        %v3885 = vpop.f32.mrb[0].mxu0
        %v3886 = vadd.f32 %v3621, %v3885
        %v3887 = vpop.f32.mrb[0].mxu0
        %v3888 = vadd.f32 %v3617, %v3887
        %v3889 = vpop.f32.mrb[0].mxu0
        %v3890 = vadd.f32 %v3621, %v3889
        %3891 = vmatprep.mubr.bf16.mxu0 0
        %3892 = vmatmul.mubr.bf16.gmra.mrb[0].mxu0 %v3570
        %v3893 = vpop.f32.mrb[0].mxu0
        %v3894 = vadd.f32 %v3617, %v3893
        %v3895 = vpop.f32.mrb[0].mxu0
        %v3896 = vadd.f32 %v3621, %v3895
        %v3897 = vpop.f32.mrb[0].mxu0
        %v3898 = vadd.f32 %v3617, %v3897
        %v3899 = vpop.f32.mrb[0].mxu0
        %v3900 = vadd.f32 %v3621, %v3899
        %3901 = vmatprep.mubr.bf16.mxu0 0
        %3902 = vmatmul.mubr.bf16.gmra.mrb[0].mxu0 %v3571
        %v3903 = vpop.f32.mrb[0].mxu0
        %v3904 = vadd.f32 %v3617, %v3903
        %v3905 = vpop.f32.mrb[0].mxu0
        %v3906 = vadd.f32 %v3621, %v3905
        %v3907 = vpop.f32.mrb[0].mxu0
        %v3908 = vadd.f32 %v3617, %v3907
        %v3909 = vpop.f32.mrb[0].mxu0
        %v3910 = vadd.f32 %v3621, %v3909
        %3911 = vdwg.mxu0
        %v3912 = vmul.f32 %v3821, %v3821
        %v3913 = vmul.f32 %v3823, %v3823
        %v3914 = vmul.f32 %v3884, %v3884
        %v3915 = vmul.f32 %v3886, %v3886
        %v3916 = vmul.f32 %v3825, %v3825
        %v3917 = vmul.f32 %v3827, %v3827
        %v3918 = vmul.f32 %v3888, %v3888
        %v3919 = vmul.f32 %v3890, %v3890
        %v3920 = vmul.f32 %v3831, %v3831
        %v3921 = vmul.f32 %v3833, %v3833
        %v3922 = vmul.f32 %v3894, %v3894
        %v3923 = vmul.f32 %v3896, %v3896
        %v3924 = vmul.f32 %v3835, %v3835
        %v3925 = vmul.f32 %v3837, %v3837
        %v3926 = vmul.f32 %v3898, %v3898
        %v3927 = vmul.f32 %v3900, %v3900
        %v3928 = vmul.f32 %v3841, %v3841
        %v3929 = vmul.f32 %v3843, %v3843
        %v3930 = vmul.f32 %v3904, %v3904
        %v3931 = vmul.f32 %v3906, %v3906
        %v3932 = vmul.f32 %v3845, %v3845
        %v3933 = vmul.f32 %v3847, %v3847
        %v3934 = vmul.f32 %v3908, %v3908
        %v3935 = vmul.f32 %v3910, %v3910
        %v3936 = vmul.f32 %v3821, %v3912
        %v3937 = vmul.f32 %v3823, %v3913
        %v3938 = vmul.f32 %v3884, %v3914
        %v3939 = vmul.f32 %v3886, %v3915
        %v3940 = vmul.f32 %v3825, %v3916
        %v3941 = vmul.f32 %v3827, %v3917
        %v3942 = vmul.f32 %v3888, %v3918
        %v3943 = vmul.f32 %v3890, %v3919
        %v3944 = vmul.f32 %v3831, %v3920
        %v3945 = vmul.f32 %v3833, %v3921
        %v3946 = vmul.f32 %v3894, %v3922
        %v3947 = vmul.f32 %v3896, %v3923
        %v3948 = vmul.f32 %v3835, %v3924
        %v3949 = vmul.f32 %v3837, %v3925
        %v3950 = vmul.f32 %v3898, %v3926
        %v3951 = vmul.f32 %v3900, %v3927
        %v3952 = vmul.f32 %v3841, %v3928
        %v3953 = vmul.f32 %v3843, %v3929
        %v3954 = vmul.f32 %v3904, %v3930
        %v3955 = vmul.f32 %v3906, %v3931
        %v3956 = vmul.f32 %v3845, %v3932
        %v3957 = vmul.f32 %v3847, %v3933
        %v3958 = vmul.f32 %v3908, %v3934
        %v3959 = vmul.f32 %v3910, %v3935
        %v3960 = vmul.f32 %v3936, 0.044715
        %v3961 = vmul.f32 %v3937, 0.044715
        %v3962 = vmul.f32 %v3938, 0.044715
        %v3963 = vmul.f32 %v3939, 0.044715
        %v3964 = vmul.f32 %v3940, 0.044715
        %v3965 = vmul.f32 %v3941, 0.044715
        %v3966 = vmul.f32 %v3942, 0.044715
        %v3967 = vmul.f32 %v3943, 0.044715
        %v3968 = vmul.f32 %v3944, 0.044715
        %v3969 = vmul.f32 %v3945, 0.044715
        %v3970 = vmul.f32 %v3946, 0.044715
        %v3971 = vmul.f32 %v3947, 0.044715
        %v3972 = vmul.f32 %v3948, 0.044715
        %v3973 = vmul.f32 %v3949, 0.044715
        %v3974 = vmul.f32 %v3950, 0.044715
        %v3975 = vmul.f32 %v3951, 0.044715
        %v3976 = vmul.f32 %v3952, 0.044715
        %v3977 = vmul.f32 %v3953, 0.044715
        %v3978 = vmul.f32 %v3954, 0.044715
        %v3979 = vmul.f32 %v3955, 0.044715
        %v3980 = vmul.f32 %v3956, 0.044715
        %v3981 = vmul.f32 %v3957, 0.044715
        %v3982 = vmul.f32 %v3958, 0.044715
        %v3983 = vmul.f32 %v3959, 0.044715
        %v3984 = vadd.f32 %v3821, %v3960
        %v3985 = vadd.f32 %v3823, %v3961
        %v3986 = vadd.f32 %v3884, %v3962
        %v3987 = vadd.f32 %v3886, %v3963
        %v3988 = vadd.f32 %v3825, %v3964
        %v3989 = vadd.f32 %v3827, %v3965
        %v3990 = vadd.f32 %v3888, %v3966
        %v3991 = vadd.f32 %v3890, %v3967
        %v3992 = vadd.f32 %v3831, %v3968
        %v3993 = vadd.f32 %v3833, %v3969
        %v3994 = vadd.f32 %v3894, %v3970
        %v3995 = vadd.f32 %v3896, %v3971
        %v3996 = vadd.f32 %v3835, %v3972
        %v3997 = vadd.f32 %v3837, %v3973
        %v3998 = vadd.f32 %v3898, %v3974
        %v3999 = vadd.f32 %v3900, %v3975
        %v4000 = vadd.f32 %v3841, %v3976
        %v4001 = vadd.f32 %v3843, %v3977
        %v4002 = vadd.f32 %v3904, %v3978
        %v4003 = vadd.f32 %v3906, %v3979
        %v4004 = vadd.f32 %v3845, %v3980
        %v4005 = vadd.f32 %v3847, %v3981
        %v4006 = vadd.f32 %v3908, %v3982
        %v4007 = vadd.f32 %v3910, %v3983
        %v4008 = vmul.f32 %v3984, 0.7978846
        %v4009 = vmul.f32 %v3985, 0.7978846
        %v4010 = vmul.f32 %v3986, 0.7978846
        %v4011 = vmul.f32 %v3987, 0.7978846
        %v4012 = vmul.f32 %v3988, 0.7978846
        %v4013 = vmul.f32 %v3989, 0.7978846
        %v4014 = vmul.f32 %v3990, 0.7978846
        %v4015 = vmul.f32 %v3991, 0.7978846
        %v4016 = vmul.f32 %v3992, 0.7978846
        %v4017 = vmul.f32 %v3993, 0.7978846
        %v4018 = vmul.f32 %v3994, 0.7978846
        %v4019 = vmul.f32 %v3995, 0.7978846
        %v4020 = vmul.f32 %v3996, 0.7978846
        %v4021 = vmul.f32 %v3997, 0.7978846
        %v4022 = vmul.f32 %v3998, 0.7978846
        %v4023 = vmul.f32 %v3999, 0.7978846
        %v4024 = vmul.f32 %v4000, 0.7978846
        %v4025 = vmul.f32 %v4001, 0.7978846
        %v4026 = vmul.f32 %v4002, 0.7978846
        %v4027 = vmul.f32 %v4003, 0.7978846
        %v4028 = vmul.f32 %v4004, 0.7978846
        %v4029 = vmul.f32 %v4005, 0.7978846
        %v4030 = vmul.f32 %v4006, 0.7978846
        %v4031 = vmul.f32 %v4007, 0.7978846
        %v4032 = vtanh.pop %v4008
        %v4033 = vtanh.pop %v4009
        %v4034 = vtanh.pop %v4010
        %v4035 = vtanh.pop %v4011
        %v4036 = vtanh.pop %v4012
        %v4037 = vtanh.pop %v4013
        %v4038 = vtanh.pop %v4014
        %v4039 = vtanh.pop %v4015
        %v4040 = vtanh.pop %v4016
        %v4041 = vtanh.pop %v4017
        %v4042 = vtanh.pop %v4018
        %v4043 = vtanh.pop %v4019
        %v4044 = vtanh.pop %v4020
        %v4045 = vtanh.pop %v4021
        %v4046 = vtanh.pop %v4022
        %v4047 = vtanh.pop %v4023
        %v4048 = vtanh.pop %v4024
        %v4049 = vtanh.pop %v4025
        %v4050 = vtanh.pop %v4026
        %v4051 = vtanh.pop %v4027
        %v4052 = vtanh.pop %v4028
        %v4053 = vtanh.pop %v4029
        %v4054 = vtanh.pop %v4030
        %v4055 = vtanh.pop %v4031
        %v4056 = vadd.f32 %v4032, 1.0
        %v4057 = vadd.f32 %v4033, 1.0
        %v4058 = vadd.f32 %v4034, 1.0
        %v4059 = vadd.f32 %v4035, 1.0
        %v4060 = vadd.f32 %v4036, 1.0
        %v4061 = vadd.f32 %v4037, 1.0
        %v4062 = vadd.f32 %v4038, 1.0
        %v4063 = vadd.f32 %v4039, 1.0
        %v4064 = vadd.f32 %v4040, 1.0
        %v4065 = vadd.f32 %v4041, 1.0
        %v4066 = vadd.f32 %v4042, 1.0
        %v4067 = vadd.f32 %v4043, 1.0
        %v4068 = vadd.f32 %v4044, 1.0
        %v4069 = vadd.f32 %v4045, 1.0
        %v4070 = vadd.f32 %v4046, 1.0
        %v4071 = vadd.f32 %v4047, 1.0
        %v4072 = vadd.f32 %v4048, 1.0
        %v4073 = vadd.f32 %v4049, 1.0
        %v4074 = vadd.f32 %v4050, 1.0
        %v4075 = vadd.f32 %v4051, 1.0
        %v4076 = vadd.f32 %v4052, 1.0
        %v4077 = vadd.f32 %v4053, 1.0
        %v4078 = vadd.f32 %v4054, 1.0
        %v4079 = vadd.f32 %v4055, 1.0
        %v4080 = vmul.f32 %v4056, 0.5
        %v4081 = vmul.f32 %v4057, 0.5
        %v4082 = vmul.f32 %v4058, 0.5
        %v4083 = vmul.f32 %v4059, 0.5
        %v4084 = vmul.f32 %v4060, 0.5
        %v4085 = vmul.f32 %v4061, 0.5
        %v4086 = vmul.f32 %v4062, 0.5
        %v4087 = vmul.f32 %v4063, 0.5
        %v4088 = vmul.f32 %v4064, 0.5
        %v4089 = vmul.f32 %v4065, 0.5
        %v4090 = vmul.f32 %v4066, 0.5
        %v4091 = vmul.f32 %v4067, 0.5
        %v4092 = vmul.f32 %v4068, 0.5
        %v4093 = vmul.f32 %v4069, 0.5
        %v4094 = vmul.f32 %v4070, 0.5
        %v4095 = vmul.f32 %v4071, 0.5
        %v4096 = vmul.f32 %v4072, 0.5
        %v4097 = vmul.f32 %v4073, 0.5
        %v4098 = vmul.f32 %v4074, 0.5
        %v4099 = vmul.f32 %v4075, 0.5
        %v4100 = vmul.f32 %v4076, 0.5
        %v4101 = vmul.f32 %v4077, 0.5
        %v4102 = vmul.f32 %v4078, 0.5
        %v4103 = vmul.f32 %v4079, 0.5
        %v4104 = vmul.f32 %v3821, %v4080
        %v4105 = vmul.f32 %v3823, %v4081
        %v4106 = vmul.f32 %v3884, %v4082
        %v4107 = vmul.f32 %v3886, %v4083
        %v4108 = vmul.f32 %v3825, %v4084
        %v4109 = vmul.f32 %v3827, %v4085
        %v4110 = vmul.f32 %v3888, %v4086
        %v4111 = vmul.f32 %v3890, %v4087
        %v4112 = vmul.f32 %v3831, %v4088
        %v4113 = vmul.f32 %v3833, %v4089
        %v4114 = vmul.f32 %v3894, %v4090
        %v4115 = vmul.f32 %v3896, %v4091
        %v4116 = vmul.f32 %v3835, %v4092
        %v4117 = vmul.f32 %v3837, %v4093
        %v4118 = vmul.f32 %v3898, %v4094
        %v4119 = vmul.f32 %v3900, %v4095
        %v4120 = vmul.f32 %v3841, %v4096
        %v4121 = vmul.f32 %v3843, %v4097
        %v4122 = vmul.f32 %v3904, %v4098
        %v4123 = vmul.f32 %v3906, %v4099
        %v4124 = vmul.f32 %v3845, %v4100
        %v4125 = vmul.f32 %v3847, %v4101
        %v4126 = vmul.f32 %v3908, %v4102
        %v4127 = vmul.f32 %v3910, %v4103
        %v4128 = vpack.c.bf16 %v4108, %v4104
        %v4129 = vpack.c.bf16 %v4109, %v4105
        %v4130 = vpack.c.bf16 %v4110, %v4106
        %v4131 = vpack.c.bf16 %v4111, %v4107
        %v4132 = vpack.c.bf16 %v4116, %v4112
        %v4133 = vpack.c.bf16 %v4117, %v4113
        %v4134 = vpack.c.bf16 %v4118, %v4114
        %v4135 = vpack.c.bf16 %v4119, %v4115
        %v4136 = vpack.c.bf16 %v4124, %v4120
        %v4137 = vpack.c.bf16 %v4125, %v4121
        %v4138 = vpack.c.bf16 %v4126, %v4122
        %v4139 = vpack.c.bf16 %v4127, %v4123
        %v4140 = vld [vmem:[%s1042] sm:$0xf]
        %v4141 = vld [vmem:[%s1042 + $0x4] sm:$0xf]
        %v4142 = vld [vmem:[%s1042 + $0x8] sm:$0xf]
        %v4143 = vld [vmem:[%s1042 + $0xc] sm:$0xf]
        %v4144 = vld [vmem:[%s1042 + $0x10] sm:$0xf]
        %v4145 = vld [vmem:[%s1042 + $0x14] sm:$0xf]
        %v4146 = vld [vmem:[%s1042 + $0x18] sm:$0xf]
        %v4147 = vld [vmem:[%s1042 + $0x1c] sm:$0xf]
        %v4148 = vld [vmem:[%s1042 + $0x20] sm:$0xf]
        %v4149 = vld [vmem:[%s1042 + $0x24] sm:$0xf]
        %v4150 = vld [vmem:[%s1042 + $0x28] sm:$0xf]
        %v4151 = vld [vmem:[%s1042 + $0x2c] sm:$0xf]
        %v4152 = vld [vmem:[%s1042 + $0x30] sm:$0xf]
        %v4153 = vld [vmem:[%s1042 + $0x34] sm:$0xf]
        %v4154 = vld [vmem:[%s1042 + $0x38] sm:$0xf]
        %v4155 = vld [vmem:[%s1042 + $0x3c] sm:$0xf]
        %v4156 = vld [vmem:[%s1042 + $0x40] sm:$0xf]
        %v4157 = vld [vmem:[%s1042 + $0x44] sm:$0xf]
        %v4158 = vld [vmem:[%s1042 + $0x48] sm:$0xf]
        %v4159 = vld [vmem:[%s1042 + $0x4c] sm:$0xf]
        %v4160 = vld [vmem:[%s1042 + $0x50] sm:$0xf]
        %v4161 = vld [vmem:[%s1042 + $0x54] sm:$0xf]
        %v4162 = vld [vmem:[%s1042 + $0x58] sm:$0xf]
        %v4163 = vld [vmem:[%s1042 + $0x5c] sm:$0xf]
        %v4164 = vld [vmem:[%s1042 + $0x60] sm:$0xf]
        %v4165 = vld [vmem:[%s1042 + $0x64] sm:$0xf]
        %v4166 = vld [vmem:[%s1042 + $0x68] sm:$0xf]
        %v4167 = vld [vmem:[%s1042 + $0x6c] sm:$0xf]
        %v4168 = vld [vmem:[%s1042 + $0x70] sm:$0xf]
        %v4169 = vld [vmem:[%s1042 + $0x74] sm:$0xf]
        %v4170 = vld [vmem:[%s1042 + $0x78] sm:$0xf]
        %v4171 = vld [vmem:[%s1042 + $0x7c] sm:$0xf]
        %v4172 = vld [vmem:[%s1042 + $0x80] sm:$0xf]
        %v4173 = vld [vmem:[%s1042 + $0x84] sm:$0xf]
        %v4174 = vld [vmem:[%s1042 + $0x88] sm:$0xf]
        %v4175 = vld [vmem:[%s1042 + $0x8c] sm:$0xf]
        %v4176 = vld [vmem:[%s1042 + $0x90] sm:$0xf]
        %v4177 = vld [vmem:[%s1042 + $0x94] sm:$0xf]
        %v4178 = vld [vmem:[%s1042 + $0x98] sm:$0xf]
        %v4179 = vld [vmem:[%s1042 + $0x9c] sm:$0xf]
        %v4180 = vld [vmem:[%s1042 + $0xa0] sm:$0xf]
        %v4181 = vld [vmem:[%s1042 + $0xa4] sm:$0xf]
        %v4182 = vld [vmem:[%s1042 + $0xa8] sm:$0xf]
        %v4183 = vld [vmem:[%s1042 + $0xac] sm:$0xf]
        %v4184 = vld [vmem:[%s1042 + $0xb0] sm:$0xf]
        %v4185 = vld [vmem:[%s1042 + $0xb4] sm:$0xf]
        %v4186 = vld [vmem:[%s1042 + $0xb8] sm:$0xf]
        %v4187 = vld [vmem:[%s1042 + $0xbc] sm:$0xf]
        %v4188 = vld [vmem:[%s1042 + $0xc0] sm:$0xf]
        %v4189 = vld [vmem:[%s1042 + $0xc4] sm:$0xf]
        %v4190 = vld [vmem:[%s1042 + $0xc8] sm:$0xf]
        %v4191 = vld [vmem:[%s1042 + $0xcc] sm:$0xf]
        %v4192 = vld [vmem:[%s1042 + $0xd0] sm:$0xf]
        %v4193 = vld [vmem:[%s1042 + $0xd4] sm:$0xf]
        %v4194 = vld [vmem:[%s1042 + $0xd8] sm:$0xf]
        %v4195 = vld [vmem:[%s1042 + $0xdc] sm:$0xf]
        %v4196 = vld [vmem:[%s1042 + $0xe0] sm:$0xf]
        %v4197 = vld [vmem:[%s1042 + $0xe4] sm:$0xf]
        %v4198 = vld [vmem:[%s1042 + $0xe8] sm:$0xf]
        %v4199 = vld [vmem:[%s1042 + $0xec] sm:$0xf]
        %v4200 = vld [vmem:[%s1042 + $0xf0] sm:$0xf]
        %v4201 = vld [vmem:[%s1042 + $0xf4] sm:$0xf]
        %v4202 = vld [vmem:[%s1042 + $0xf8] sm:$0xf]
        %v4203 = vld [vmem:[%s1042 + $0xfc] sm:$0xf]
        %v4204 = vld [vmem:[%s1051] sm:$0x1]
        %v4206 = vlaneseq
        %v4207 = vshrl.u32 %v4206, 7
        %v4208 = vsub.s32 0, %v4207
        %v4209 = vrot.slane %v4204, %v4208
        %v4275 = vunpack.c.l.b16 %v4140
        %v4276 = vunpack.c.l.b16 %v4141
        %v4277 = vunpack.c.l.b16 %v4142
        %v4278 = vunpack.c.l.b16 %v4143
        %v4279 = vunpack.c.l.b16 %v4144
        %v4280 = vunpack.c.l.b16 %v4145
        %v4281 = vunpack.c.l.b16 %v4146
        %v4282 = vunpack.c.l.b16 %v4147
        %v4283 = vunpack.c.l.b16 %v4148
        %v4284 = vunpack.c.l.b16 %v4149
        %v4285 = vunpack.c.l.b16 %v4150
        %v4286 = vunpack.c.l.b16 %v4151
        %v4287 = vunpack.c.l.b16 %v4152
        %v4288 = vunpack.c.l.b16 %v4153
        %v4289 = vunpack.c.l.b16 %v4154
        %v4290 = vunpack.c.l.b16 %v4155
        %v4291 = vunpack.c.l.b16 %v4156
        %v4292 = vunpack.c.l.b16 %v4157
        %v4293 = vunpack.c.l.b16 %v4158
        %v4294 = vunpack.c.l.b16 %v4159
        %v4295 = vunpack.c.l.b16 %v4160
        %v4296 = vunpack.c.l.b16 %v4161
        %v4297 = vunpack.c.l.b16 %v4162
        %v4298 = vunpack.c.l.b16 %v4163
        %v4299 = vunpack.c.l.b16 %v4164
        %v4300 = vunpack.c.l.b16 %v4165
        %v4301 = vunpack.c.l.b16 %v4166
        %v4302 = vunpack.c.l.b16 %v4167
        %v4303 = vunpack.c.l.b16 %v4168
        %v4304 = vunpack.c.l.b16 %v4169
        %v4305 = vunpack.c.l.b16 %v4170
        %v4306 = vunpack.c.l.b16 %v4171
        %v4307 = vunpack.c.l.b16 %v4172
        %v4308 = vunpack.c.l.b16 %v4173
        %v4309 = vunpack.c.l.b16 %v4174
        %v4310 = vunpack.c.l.b16 %v4175
        %v4311 = vunpack.c.l.b16 %v4176
        %v4312 = vunpack.c.l.b16 %v4177
        %v4313 = vunpack.c.l.b16 %v4178
        %v4314 = vunpack.c.l.b16 %v4179
        %v4315 = vunpack.c.l.b16 %v4180
        %v4316 = vunpack.c.l.b16 %v4181
        %v4317 = vunpack.c.l.b16 %v4182
        %v4318 = vunpack.c.l.b16 %v4183
        %v4319 = vunpack.c.l.b16 %v4184
        %v4320 = vunpack.c.l.b16 %v4185
        %v4321 = vunpack.c.l.b16 %v4186
        %v4322 = vunpack.c.l.b16 %v4187
        %v4323 = vunpack.c.l.b16 %v4188
        %v4324 = vunpack.c.l.b16 %v4189
        %v4325 = vunpack.c.l.b16 %v4190
        %v4326 = vunpack.c.l.b16 %v4191
        %v4327 = vunpack.c.l.b16 %v4192
        %v4328 = vunpack.c.l.b16 %v4193
        %v4329 = vunpack.c.l.b16 %v4194
        %v4330 = vunpack.c.l.b16 %v4195
        %v4331 = vunpack.c.l.b16 %v4196
        %v4332 = vunpack.c.l.b16 %v4197
        %v4333 = vunpack.c.l.b16 %v4198
        %v4334 = vunpack.c.l.b16 %v4199
        %v4335 = vunpack.c.l.b16 %v4200
        %v4336 = vunpack.c.l.b16 %v4201
        %v4337 = vunpack.c.l.b16 %v4202
        %v4338 = vunpack.c.l.b16 %v4203
        %v4339 = vpack.c.b16 %v4276, %v4275
        %v4340 = vpack.c.b16 %v4278, %v4277
        %v4341 = vpack.c.b16 %v4280, %v4279
        %v4342 = vpack.c.b16 %v4282, %v4281
        %v4343 = vpack.c.b16 %v4284, %v4283
        %v4344 = vpack.c.b16 %v4286, %v4285
        %v4345 = vpack.c.b16 %v4288, %v4287
        %v4346 = vpack.c.b16 %v4290, %v4289
        %v4347 = vpack.c.b16 %v4292, %v4291
        %v4348 = vpack.c.b16 %v4294, %v4293
        %v4349 = vpack.c.b16 %v4296, %v4295
        %v4350 = vpack.c.b16 %v4298, %v4297
        %v4351 = vpack.c.b16 %v4300, %v4299
        %v4352 = vpack.c.b16 %v4302, %v4301
        %v4353 = vpack.c.b16 %v4304, %v4303
        %v4354 = vpack.c.b16 %v4306, %v4305
        %v4355 = vpack.c.b16 %v4308, %v4307
        %v4356 = vpack.c.b16 %v4310, %v4309
        %v4357 = vpack.c.b16 %v4312, %v4311
        %v4358 = vpack.c.b16 %v4314, %v4313
        %v4359 = vpack.c.b16 %v4316, %v4315
        %v4360 = vpack.c.b16 %v4318, %v4317
        %v4361 = vpack.c.b16 %v4320, %v4319
        %v4362 = vpack.c.b16 %v4322, %v4321
        %v4363 = vpack.c.b16 %v4324, %v4323
        %v4364 = vpack.c.b16 %v4326, %v4325
        %v4365 = vpack.c.b16 %v4328, %v4327
        %v4366 = vpack.c.b16 %v4330, %v4329
        %v4367 = vpack.c.b16 %v4332, %v4331
        %v4368 = vpack.c.b16 %v4334, %v4333
        %v4369 = vpack.c.b16 %v4336, %v4335
        %v4370 = vpack.c.b16 %v4338, %v4337
        %4403 = vmatprep.subr.bf16.mxu0 0
        %4404 = vmatpush1.bf16.msra.mxu0 %v4339
        %4405 = vmatprep.subr.bf16.mxu0 0
        %4406 = vmatpush1.bf16.msra.mxu0 %v4340
        %4407 = vmatprep.subr.bf16.mxu0 0
        %4408 = vmatpush1.bf16.msra.mxu0 %v4341
        %4409 = vmatprep.subr.bf16.mxu0 0
        %4410 = vmatpush1.bf16.msra.mxu0 %v4342
        %4411 = vmatprep.subr.bf16.mxu0 0
        %4412 = vmatpush1.bf16.msra.mxu0 %v4343
        %4413 = vmatprep.subr.bf16.mxu0 0
        %4414 = vmatpush1.bf16.msra.mxu0 %v4344
        %4415 = vmatprep.subr.bf16.mxu0 0
        %4416 = vmatpush1.bf16.msra.mxu0 %v4345
        %4417 = vmatprep.subr.bf16.mxu0 0
        %4418 = vmatpush1.bf16.msra.mxu0 %v4346
        %4419 = vmatprep.subr.bf16.mxu0 0
        %4420 = vmatpush1.bf16.msra.mxu0 %v4347
        %4421 = vmatprep.subr.bf16.mxu0 0
        %4422 = vmatpush1.bf16.msra.mxu0 %v4348
        %4423 = vmatprep.subr.bf16.mxu0 0
        %4424 = vmatpush1.bf16.msra.mxu0 %v4349
        %4425 = vmatprep.subr.bf16.mxu0 0
        %4426 = vmatpush1.bf16.msra.mxu0 %v4350
        %4427 = vmatprep.subr.bf16.mxu0 0
        %4428 = vmatpush1.bf16.msra.mxu0 %v4351
        %4429 = vmatprep.subr.bf16.mxu0 0
        %4430 = vmatpush1.bf16.msra.mxu0 %v4352
        %4431 = vmatprep.subr.bf16.mxu0 0
        %4432 = vmatpush1.bf16.msra.mxu0 %v4353
        %4433 = vmatprep.subr.bf16.mxu0 0
        %4434 = vmatpush1.bf16.msra.mxu0 %v4354
        %4435 = vmatprep.mubr.bf16.mxu0 %v4129
        %4436 = vmatmul.mubr.bf16.gmra.mrb[0].mxu0 %v4128
        %v4437 = vpop.f32.mrb[0].mxu0
        %v4438 = vadd.f32 %v4209, %v4437
        %v4439 = vpop.f32.mrb[0].mxu0
        %v4440 = vpop.f32.mrb[0].mxu0
        %v4441 = vadd.f32 %v4209, %v4440
        %v4442 = vpop.f32.mrb[0].mxu0
        %4443 = vmatprep.mubr.bf16.mxu0 %v4133
        %4444 = vmatmul.mubr.bf16.gmra.mrb[0].mxu0 %v4132
        %v4445 = vpop.f32.mrb[0].mxu0
        %v4446 = vadd.f32 %v4209, %v4445
        %v4447 = vpop.f32.mrb[0].mxu0
        %v4448 = vpop.f32.mrb[0].mxu0
        %v4449 = vadd.f32 %v4209, %v4448
        %v4450 = vpop.f32.mrb[0].mxu0
        %4451 = vmatprep.mubr.bf16.mxu0 %v4137
        %4452 = vmatmul.mubr.bf16.gmra.mrb[0].mxu0 %v4136
        %v4453 = vpop.f32.mrb[0].mxu0
        %v4454 = vadd.f32 %v4209, %v4453
        %v4455 = vpop.f32.mrb[0].mxu0
        %v4456 = vpop.f32.mrb[0].mxu0
        %v4457 = vadd.f32 %v4209, %v4456
        %v4458 = vpop.f32.mrb[0].mxu0
        %4459 = vdwg.mxu0
        %4460 = vmatprep.subr.bf16.mxu0 0
        %4461 = vmatpush1.bf16.msra.mxu0 %v4355
        %4462 = vmatprep.subr.bf16.mxu0 0
        %4463 = vmatpush1.bf16.msra.mxu0 %v4356
        %4464 = vmatprep.subr.bf16.mxu0 0
        %4465 = vmatpush1.bf16.msra.mxu0 %v4357
        %4466 = vmatprep.subr.bf16.mxu0 0
        %4467 = vmatpush1.bf16.msra.mxu0 %v4358
        %4468 = vmatprep.subr.bf16.mxu0 0
        %4469 = vmatpush1.bf16.msra.mxu0 %v4359
        %4470 = vmatprep.subr.bf16.mxu0 0
        %4471 = vmatpush1.bf16.msra.mxu0 %v4360
        %4472 = vmatprep.subr.bf16.mxu0 0
        %4473 = vmatpush1.bf16.msra.mxu0 %v4361
        %4474 = vmatprep.subr.bf16.mxu0 0
        %4475 = vmatpush1.bf16.msra.mxu0 %v4362
        %4476 = vmatprep.subr.bf16.mxu0 0
        %4477 = vmatpush1.bf16.msra.mxu0 %v4363
        %4478 = vmatprep.subr.bf16.mxu0 0
        %4479 = vmatpush1.bf16.msra.mxu0 %v4364
        %4480 = vmatprep.subr.bf16.mxu0 0
        %4481 = vmatpush1.bf16.msra.mxu0 %v4365
        %4482 = vmatprep.subr.bf16.mxu0 0
        %4483 = vmatpush1.bf16.msra.mxu0 %v4366
        %4484 = vmatprep.subr.bf16.mxu0 0
        %4485 = vmatpush1.bf16.msra.mxu0 %v4367
        %4486 = vmatprep.subr.bf16.mxu0 0
        %4487 = vmatpush1.bf16.msra.mxu0 %v4368
        %4488 = vmatprep.subr.bf16.mxu0 0
        %4489 = vmatpush1.bf16.msra.mxu0 %v4369
        %4490 = vmatprep.subr.bf16.mxu0 0
        %4491 = vmatpush1.bf16.msra.mxu0 %v4370
        %4492 = vmatprep.mubr.bf16.mxu0 %v4131
        %4493 = vmatmul.mubr.bf16.gmra.mrb[0].mxu0 %v4130
        %v4494 = vpop.f32.mrb[0].mxu0
        %v4495 = vadd.f32 %v4438, %v4494
        %v4496 = vpop.f32.mrb[0].mxu0
        %v4497 = vpop.f32.mrb[0].mxu0
        %v4498 = vadd.f32 %v4441, %v4497
        %v4499 = vpop.f32.mrb[0].mxu0
        %4500 = vmatprep.mubr.bf16.mxu0 %v4135
        %4501 = vmatmul.mubr.bf16.gmra.mrb[0].mxu0 %v4134
        %v4502 = vpop.f32.mrb[0].mxu0
        %v4503 = vadd.f32 %v4446, %v4502
        %v4504 = vpop.f32.mrb[0].mxu0
        %v4505 = vpop.f32.mrb[0].mxu0
        %v4506 = vadd.f32 %v4449, %v4505
        %v4507 = vpop.f32.mrb[0].mxu0
        %4508 = vmatprep.mubr.bf16.mxu0 %v4139
        %4509 = vmatmul.mubr.bf16.gmra.mrb[0].mxu0 %v4138
        %v4510 = vpop.f32.mrb[0].mxu0
        %v4511 = vadd.f32 %v4454, %v4510
        %v4512 = vpop.f32.mrb[0].mxu0
        %v4513 = vpop.f32.mrb[0].mxu0
        %v4514 = vadd.f32 %v4457, %v4513
        %v4515 = vpop.f32.mrb[0].mxu0
        %4516 = vdwg.mxu0
        %v4517 = vadd.f32 %v3471, %v4495
        %v4518 = vadd.f32 %v3472, %v4498
        %v4519 = vadd.f32 %v3473, %v4503
        %v4520 = vadd.f32 %v3474, %v4506
        %v4521 = vadd.f32 %v3475, %v4511
        %v4522 = vadd.f32 %v3476, %v4514
        %p4523 = scmp.eq.s32.totalorder %s1343, 2
        // Predicated region
        $region181: #{vit_forward.1} parent=103 // pred_check
          %p4524 = pneg %p4523
        $region182: #{vit_forward.1} parent=103 // pred_check_branch
          %4526 = sbr.rel (%p4524) target = $region184
        $region183: #{vit_forward.1} parent=103 // pred_region
          %s4527 = scalar_lea.vmem [#allocation2], 48
          %4528 = vst [vmem:[%s4527] sm:$0xff] %v4517
          %4529 = vst [vmem:[%s4527 + $0x8] sm:$0xff] %v4518
          %4530 = vst [vmem:[%s4527 + $0x10] sm:$0xff] %v4519
          %4531 = vst [vmem:[%s4527 + $0x18] sm:$0xff] %v4520
          %4532 = vst [vmem:[%s4527 + $0x20] sm:$0xff] %v4521
          %4533 = vst [vmem:[%s4527 + $0x28] sm:$0xff] %v4522
        $region184: #{vit_forward.1} parent=103 // pred_fallthru
          _
        %p4534 = scmp.eq.s32.totalorder %s1343, 4
        // Predicated region
        $region185: #{vit_forward.1} parent=103 // pred_check
          %p4535 = pneg %p4534
        $region186: #{vit_forward.1} parent=103 // pred_check_branch
          %4537 = sbr.rel (%p4535) target = $region188
        $region187: #{vit_forward.1} parent=103 // pred_region
          %s4538 = scalar_lea.vmem [#allocation2], 96
          %4539 = vst [vmem:[%s4538] sm:$0xff] %v4517
          %4540 = vst [vmem:[%s4538 + $0x8] sm:$0xff] %v4518
          %4541 = vst [vmem:[%s4538 + $0x10] sm:$0xff] %v4519
          %4542 = vst [vmem:[%s4538 + $0x18] sm:$0xff] %v4520
          %4543 = vst [vmem:[%s4538 + $0x20] sm:$0xff] %v4521
          %4544 = vst [vmem:[%s4538 + $0x28] sm:$0xff] %v4522
        $region188: #{vit_forward.1} parent=103 // pred_fallthru
          _
        %s4545 = sadd.s32 %s1343, 1
        %s4546 = scalar_lea.vmem %s961, 1 [#allocation10]
        %v4547 = vld [vmem:[%s4546] sm:$0x1]
        %s4548 = scalar_lea.vmem %s970, 1 [#allocation11]
        %v4549 = vld [vmem:[%s4548] sm:$0x1]
        %4550 = vadd.xlane.f32.xlu0 %v4517
        %v4551 = vpop.xlane.xlu0 %4550
        %4552 = vadd.xlane.f32.xlu0 %v4518
        %v4553 = vpop.xlane.xlu0 %4552
        %4554 = vadd.xlane.f32.xlu0 %v4519
        %v4555 = vpop.xlane.xlu0 %4554
        %4556 = vadd.xlane.f32.xlu0 %v4520
        %v4557 = vpop.xlane.xlu0 %4556
        %4558 = vadd.xlane.f32.xlu0 %v4521
        %v4559 = vpop.xlane.xlu0 %4558
        %4560 = vadd.xlane.f32.xlu0 %v4522
        %v4561 = vpop.xlane.xlu0 %4560
        %v4562 = vmul.f32 %v4551, %v1358
        %v4563 = vmul.f32 %v4553, %v1358
        %v4564 = vmul.f32 %v4555, %v1358
        %v4565 = vmul.f32 %v4557, %v1358
        %v4566 = vmul.f32 %v4559, %v1358
        %v4567 = vmul.f32 %v4561, %v1358
        %v4568 = vsub.f32 %v4517, %v4562
        %v4569 = vsub.f32 %v4518, %v4563
        %v4570 = vsub.f32 %v4519, %v4564
        %v4571 = vsub.f32 %v4520, %v4565
        %v4572 = vsub.f32 %v4521, %v4566
        %v4573 = vsub.f32 %v4522, %v4567
        %v4574 = vmul.f32 %v4568, %v4568
        %v4575 = vmul.f32 %v4569, %v4569
        %v4576 = vmul.f32 %v4570, %v4570
        %v4577 = vmul.f32 %v4571, %v4571
        %v4578 = vmul.f32 %v4572, %v4572
        %v4579 = vmul.f32 %v4573, %v4573
        %4580 = vadd.xlane.f32.xlu0 %v4574
        %v4581 = vpop.xlane.xlu0 %4580
        %4582 = vadd.xlane.f32.xlu0 %v4575
        %v4583 = vpop.xlane.xlu0 %4582
        %4584 = vadd.xlane.f32.xlu0 %v4576
        %v4585 = vpop.xlane.xlu0 %4584
        %4586 = vadd.xlane.f32.xlu0 %v4577
        %v4587 = vpop.xlane.xlu0 %4586
        %4588 = vadd.xlane.f32.xlu0 %v4578
        %v4589 = vpop.xlane.xlu0 %4588
        %4590 = vadd.xlane.f32.xlu0 %v4579
        %v4591 = vpop.xlane.xlu0 %4590
        %v4592 = vmul.f32 %v4581, %v1358
        %v4593 = vmul.f32 %v4583, %v1358
        %v4594 = vmul.f32 %v4585, %v1358
        %v4595 = vmul.f32 %v4587, %v1358
        %v4596 = vmul.f32 %v4589, %v1358
        %v4597 = vmul.f32 %v4591, %v1358
        %v4598 = vadd.f32 %v4592, 1e-06
        %v4599 = vadd.f32 %v4593, 1e-06
        %v4600 = vadd.f32 %v4594, 1e-06
        %v4601 = vadd.f32 %v4595, 1e-06
        %v4602 = vadd.f32 %v4596, 1e-06
        %v4603 = vadd.f32 %v4597, 1e-06
        %v4604 = vrsqrt.pop %v4598
        %v4605 = vrsqrt.pop %v4599
        %v4606 = vrsqrt.pop %v4600
        %v4607 = vrsqrt.pop %v4601
        %v4608 = vrsqrt.pop %v4602
        %v4609 = vrsqrt.pop %v4603
        %v4610 = vmul.f32 %v4568, %v4604
        %v4611 = vmul.f32 %v4569, %v4605
        %v4612 = vmul.f32 %v4570, %v4606
        %v4613 = vmul.f32 %v4571, %v4607
        %v4614 = vmul.f32 %v4572, %v4608
        %v4615 = vmul.f32 %v4573, %v4609
        %v4617 = vlaneseq
        %v4618 = vshrl.u32 %v4617, 7
        %v4619 = vsub.s32 0, %v4618
        %v4620 = vrot.slane %v4547, %v4619
        %v4622 = vmul.f32 %v4610, %v4620
        %v4623 = vmul.f32 %v4611, %v4620
        %v4624 = vmul.f32 %v4612, %v4620
        %v4625 = vmul.f32 %v4613, %v4620
        %v4626 = vmul.f32 %v4614, %v4620
        %v4627 = vmul.f32 %v4615, %v4620
        %v4629 = vlaneseq
        %v4630 = vshrl.u32 %v4629, 7
        %v4631 = vsub.s32 0, %v4630
        %v4632 = vrot.slane %v4549, %v4631
        %v4634 = vadd.f32 %v4622, %v4632
        %v4635 = vadd.f32 %v4623, %v4632
        %v4636 = vadd.f32 %v4624, %v4632
        %v4637 = vadd.f32 %v4625, %v4632
        %v4638 = vadd.f32 %v4626, %v4632
        %v4639 = vadd.f32 %v4627, %v4632
        %v4640 = vpack.c.bf16 %v4635, %v4634
        %v4641 = vpack.c.bf16 %v4637, %v4636
        %v4642 = vpack.c.bf16 %v4639, %v4638
        %s4643 = scalar_lea.vmem %s1182, 192
        %v4644 = vld [vmem:[%s4643] sm:$0xff]
        %v4645 = vld [vmem:[%s4643 + $0x8] sm:$0xf]
        %v4646 = vld [vmem:[%s4643 + $0xc] sm:$0xff]
        %v4647 = vld [vmem:[%s4643 + $0x14] sm:$0xf]
        %v4648 = vld [vmem:[%s4643 + $0x18] sm:$0xff]
        %v4649 = vld [vmem:[%s4643 + $0x20] sm:$0xf]
        %v4650 = vld [vmem:[%s4643 + $0x24] sm:$0xff]
        %v4651 = vld [vmem:[%s4643 + $0x2c] sm:$0xf]
        %v4652 = vld [vmem:[%s4643 + $0x30] sm:$0xff]
        %v4653 = vld [vmem:[%s4643 + $0x38] sm:$0xf]
        %v4654 = vld [vmem:[%s4643 + $0x3c] sm:$0xff]
        %v4655 = vld [vmem:[%s4643 + $0x44] sm:$0xf]
        %v4656 = vld [vmem:[%s4643 + $0x48] sm:$0xff]
        %v4657 = vld [vmem:[%s4643 + $0x50] sm:$0xf]
        %v4658 = vld [vmem:[%s4643 + $0x54] sm:$0xff]
        %v4659 = vld [vmem:[%s4643 + $0x5c] sm:$0xf]
        %v4660 = vld [vmem:[%s4643 + $0x60] sm:$0xff]
        %v4661 = vld [vmem:[%s4643 + $0x68] sm:$0xf]
        %v4662 = vld [vmem:[%s4643 + $0x6c] sm:$0xff]
        %v4663 = vld [vmem:[%s4643 + $0x74] sm:$0xf]
        %v4664 = vld [vmem:[%s4643 + $0x78] sm:$0xff]
        %v4665 = vld [vmem:[%s4643 + $0x80] sm:$0xf]
        %v4666 = vld [vmem:[%s4643 + $0x84] sm:$0xff]
        %v4667 = vld [vmem:[%s4643 + $0x8c] sm:$0xf]
        %v4668 = vld [vmem:[%s4643 + $0x90] sm:$0xff]
        %v4669 = vld [vmem:[%s4643 + $0x98] sm:$0xf]
        %v4670 = vld [vmem:[%s4643 + $0x9c] sm:$0xff]
        %v4671 = vld [vmem:[%s4643 + $0xa4] sm:$0xf]
        %v4672 = vld [vmem:[%s4643 + $0xa8] sm:$0xff]
        %v4673 = vld [vmem:[%s4643 + $0xb0] sm:$0xf]
        %v4674 = vld [vmem:[%s4643 + $0xb4] sm:$0xff]
        %v4675 = vld [vmem:[%s4643 + $0xbc] sm:$0xf]
        %s4676 = scalar_lea.vmem %s979, 3 [#allocation12]
        %v4677 = vld [vmem:[%s4676] sm:$0x7]
        %v4679 = vlaneseq
        %v4680 = vshrl.u32 %v4679, 7
        %v4681 = vsub.s32 0, %v4680
        %v4682 = vrot.slane %v4677, %v4681
        %v4683 = vlaneseq
        %v4684 = vshrl.u32 %v4683, 7
        %v4685 = vsub.s32 1, %v4684
        %v4686 = vrot.slane %v4677, %v4685
        %v4687 = vlaneseq
        %v4688 = vshrl.u32 %v4687, 7
        %v4689 = vsub.s32 2, %v4688
        %v4690 = vrot.slane %v4677, %v4689
        %v4726 = vunpack.c.l.b16 %v4644
        %v4727 = vunpack.c.h.b16 %v4644
        %v4728 = vunpack.c.l.b16 %v4645
        %v4729 = vunpack.c.l.b16 %v4646
        %v4730 = vunpack.c.h.b16 %v4646
        %v4731 = vunpack.c.l.b16 %v4647
        %v4732 = vunpack.c.l.b16 %v4648
        %v4733 = vunpack.c.h.b16 %v4648
        %v4734 = vunpack.c.l.b16 %v4649
        %v4735 = vunpack.c.l.b16 %v4650
        %v4736 = vunpack.c.h.b16 %v4650
        %v4737 = vunpack.c.l.b16 %v4651
        %v4738 = vunpack.c.l.b16 %v4652
        %v4739 = vunpack.c.h.b16 %v4652
        %v4740 = vunpack.c.l.b16 %v4653
        %v4741 = vunpack.c.l.b16 %v4654
        %v4742 = vunpack.c.h.b16 %v4654
        %v4743 = vunpack.c.l.b16 %v4655
        %v4744 = vunpack.c.l.b16 %v4656
        %v4745 = vunpack.c.h.b16 %v4656
        %v4746 = vunpack.c.l.b16 %v4657
        %v4747 = vunpack.c.l.b16 %v4658
        %v4748 = vunpack.c.h.b16 %v4658
        %v4749 = vunpack.c.l.b16 %v4659
        %v4750 = vunpack.c.l.b16 %v4660
        %v4751 = vunpack.c.h.b16 %v4660
        %v4752 = vunpack.c.l.b16 %v4661
        %v4753 = vunpack.c.l.b16 %v4662
        %v4754 = vunpack.c.h.b16 %v4662
        %v4755 = vunpack.c.l.b16 %v4663
        %v4756 = vunpack.c.l.b16 %v4664
        %v4757 = vunpack.c.h.b16 %v4664
        %v4758 = vunpack.c.l.b16 %v4665
        %v4759 = vunpack.c.l.b16 %v4666
        %v4760 = vunpack.c.h.b16 %v4666
        %v4761 = vunpack.c.l.b16 %v4667
        %v4762 = vunpack.c.l.b16 %v4668
        %v4763 = vunpack.c.h.b16 %v4668
        %v4764 = vunpack.c.l.b16 %v4669
        %v4765 = vunpack.c.l.b16 %v4670
        %v4766 = vunpack.c.h.b16 %v4670
        %v4767 = vunpack.c.l.b16 %v4671
        %v4768 = vunpack.c.l.b16 %v4672
        %v4769 = vunpack.c.h.b16 %v4672
        %v4770 = vunpack.c.l.b16 %v4673
        %v4771 = vunpack.c.l.b16 %v4674
        %v4772 = vunpack.c.h.b16 %v4674
        %v4773 = vunpack.c.l.b16 %v4675
        %v4774 = vpack.c.b16 %v4729, %v4726
        %v4775 = vpack.c.b16 %v4730, %v4727
        %v4776 = vpack.c.b16 %v4731, %v4728
        %v4777 = vpack.c.b16 %v4735, %v4732
        %v4778 = vpack.c.b16 %v4736, %v4733
        %v4779 = vpack.c.b16 %v4737, %v4734
        %v4780 = vpack.c.b16 %v4741, %v4738
        %v4781 = vpack.c.b16 %v4742, %v4739
        %v4782 = vpack.c.b16 %v4743, %v4740
        %v4783 = vpack.c.b16 %v4747, %v4744
        %v4784 = vpack.c.b16 %v4748, %v4745
        %v4785 = vpack.c.b16 %v4749, %v4746
        %v4786 = vpack.c.b16 %v4753, %v4750
        %v4787 = vpack.c.b16 %v4754, %v4751
        %v4788 = vpack.c.b16 %v4755, %v4752
        %v4789 = vpack.c.b16 %v4759, %v4756
        %v4790 = vpack.c.b16 %v4760, %v4757
        %v4791 = vpack.c.b16 %v4761, %v4758
        %v4792 = vpack.c.b16 %v4765, %v4762
        %v4793 = vpack.c.b16 %v4766, %v4763
        %v4794 = vpack.c.b16 %v4767, %v4764
        %v4795 = vpack.c.b16 %v4771, %v4768
        %v4796 = vpack.c.b16 %v4772, %v4769
        %v4797 = vpack.c.b16 %v4773, %v4770
        %4822 = vmatprep.subr.bf16.mxu0 %v4775
        %4823 = vmatpush1.bf16.msra.mxu0 %v4774
        %4824 = vmatprep.subr.bf16.mxu0 %v4778
        %4825 = vmatpush1.bf16.msra.mxu0 %v4777
        %4826 = vmatprep.subr.bf16.mxu0 %v4781
        %4827 = vmatpush1.bf16.msra.mxu0 %v4780
        %4828 = vmatprep.subr.bf16.mxu0 %v4784
        %4829 = vmatpush1.bf16.msra.mxu0 %v4783
        %4830 = vmatprep.subr.bf16.mxu0 %v4787
        %4831 = vmatpush1.bf16.msra.mxu0 %v4786
        %4832 = vmatprep.subr.bf16.mxu0 %v4790
        %4833 = vmatpush1.bf16.msra.mxu0 %v4789
        %4834 = vmatprep.subr.bf16.mxu0 %v4793
        %4835 = vmatpush1.bf16.msra.mxu0 %v4792
        %4836 = vmatprep.subr.bf16.mxu0 %v4796
        %4837 = vmatpush1.bf16.msra.mxu0 %v4795
        %4838 = vmatprep.subr.bf16.mxu0 0
        %4839 = vmatpush1.bf16.msra.mxu0 0
        %4840 = vmatprep.subr.bf16.mxu0 0
        %4841 = vmatpush1.bf16.msra.mxu0 0
        %4842 = vmatprep.subr.bf16.mxu0 0
        %4843 = vmatpush1.bf16.msra.mxu0 0
        %4844 = vmatprep.subr.bf16.mxu0 0
        %4845 = vmatpush1.bf16.msra.mxu0 0
        %4846 = vmatprep.subr.bf16.mxu0 0
        %4847 = vmatpush1.bf16.msra.mxu0 0
        %4848 = vmatprep.subr.bf16.mxu0 0
        %4849 = vmatpush1.bf16.msra.mxu0 0
        %4850 = vmatprep.subr.bf16.mxu0 0
        %4851 = vmatpush1.bf16.msra.mxu0 0
        %4852 = vmatprep.subr.bf16.mxu0 0
        %4853 = vmatpush1.bf16.msra.mxu0 0
        %4854 = vmatprep.mubr.bf16.mxu0 0
        %4855 = vmatmul.mubr.bf16.gmra.mrb[0].mxu0 %v4640
        %v4856 = vpop.f32.mrb[0].mxu0
        %v4857 = vadd.f32 %v4682, %v4856
        %v4858 = vpop.f32.mrb[0].mxu0
        %v4859 = vadd.f32 %v4686, %v4858
        %v4860 = vpop.f32.mrb[0].mxu0
        %v4861 = vadd.f32 %v4682, %v4860
        %v4862 = vpop.f32.mrb[0].mxu0
        %v4863 = vadd.f32 %v4686, %v4862
        %4864 = vmatprep.mubr.bf16.mxu0 0
        %4865 = vmatmul.mubr.bf16.gmra.mrb[0].mxu0 %v4641
        %v4866 = vpop.f32.mrb[0].mxu0
        %v4867 = vadd.f32 %v4682, %v4866
        %v4868 = vpop.f32.mrb[0].mxu0
        %v4869 = vadd.f32 %v4686, %v4868
        %v4870 = vpop.f32.mrb[0].mxu0
        %v4871 = vadd.f32 %v4682, %v4870
        %v4872 = vpop.f32.mrb[0].mxu0
        %v4873 = vadd.f32 %v4686, %v4872
        %4874 = vmatprep.mubr.bf16.mxu0 0
        %4875 = vmatmul.mubr.bf16.gmra.mrb[0].mxu0 %v4642
        %v4876 = vpop.f32.mrb[0].mxu0
        %v4877 = vadd.f32 %v4682, %v4876
        %v4878 = vpop.f32.mrb[0].mxu0
        %v4879 = vadd.f32 %v4686, %v4878
        %v4880 = vpop.f32.mrb[0].mxu0
        %v4881 = vadd.f32 %v4682, %v4880
        %v4882 = vpop.f32.mrb[0].mxu0
        %v4883 = vadd.f32 %v4686, %v4882
        %4884 = vdwg.mxu0
        %4885 = vmatprep.subr.bf16.mxu0 0
        %4886 = vmatpush1.bf16.msra.mxu0 %v4776
        %4887 = vmatprep.subr.bf16.mxu0 0
        %4888 = vmatpush1.bf16.msra.mxu0 %v4779
        %4889 = vmatprep.subr.bf16.mxu0 0
        %4890 = vmatpush1.bf16.msra.mxu0 %v4782
        %4891 = vmatprep.subr.bf16.mxu0 0
        %4892 = vmatpush1.bf16.msra.mxu0 %v4785
        %4893 = vmatprep.subr.bf16.mxu0 0
        %4894 = vmatpush1.bf16.msra.mxu0 %v4788
        %4895 = vmatprep.subr.bf16.mxu0 0
        %4896 = vmatpush1.bf16.msra.mxu0 %v4791
        %4897 = vmatprep.subr.bf16.mxu0 0
        %4898 = vmatpush1.bf16.msra.mxu0 %v4794
        %4899 = vmatprep.subr.bf16.mxu0 0
        %4900 = vmatpush1.bf16.msra.mxu0 %v4797
        %4901 = vmatprep.subr.bf16.mxu0 0
        %4902 = vmatpush1.bf16.msra.mxu0 0
        %4903 = vmatprep.subr.bf16.mxu0 0
        %4904 = vmatpush1.bf16.msra.mxu0 0
        %4905 = vmatprep.subr.bf16.mxu0 0
        %4906 = vmatpush1.bf16.msra.mxu0 0
        %4907 = vmatprep.subr.bf16.mxu0 0
        %4908 = vmatpush1.bf16.msra.mxu0 0
        %4909 = vmatprep.subr.bf16.mxu0 0
        %4910 = vmatpush1.bf16.msra.mxu0 0
        %4911 = vmatprep.subr.bf16.mxu0 0
        %4912 = vmatpush1.bf16.msra.mxu0 0
        %4913 = vmatprep.subr.bf16.mxu0 0
        %4914 = vmatpush1.bf16.msra.mxu0 0
        %4915 = vmatprep.subr.bf16.mxu0 0
        %4916 = vmatpush1.bf16.msra.mxu0 0
        %4917 = vmatprep.mubr.bf16.mxu0 0
        %4918 = vmatmul.mubr.bf16.gmra.mrb[0].mxu0 %v4640
        %v4919 = vpop.f32.mrb[0].mxu0
        %v4920 = vadd.f32 %v4690, %v4919
        %v4921 = vpop.f32.mrb[0].mxu0
        %v4922 = vpop.f32.mrb[0].mxu0
        %v4923 = vadd.f32 %v4690, %v4922
        %v4924 = vpop.f32.mrb[0].mxu0
        %4925 = vmatprep.mubr.bf16.mxu0 0
        %4926 = vmatmul.mubr.bf16.gmra.mrb[0].mxu0 %v4641
        %v4927 = vpop.f32.mrb[0].mxu0
        %v4928 = vadd.f32 %v4690, %v4927
        %v4929 = vpop.f32.mrb[0].mxu0
        %v4930 = vpop.f32.mrb[0].mxu0
        %v4931 = vadd.f32 %v4690, %v4930
        %v4932 = vpop.f32.mrb[0].mxu0
        %4933 = vmatprep.mubr.bf16.mxu0 0
        %4934 = vmatmul.mubr.bf16.gmra.mrb[0].mxu0 %v4642
        %v4935 = vpop.f32.mrb[0].mxu0
        %v4936 = vadd.f32 %v4690, %v4935
        %v4937 = vpop.f32.mrb[0].mxu0
        %v4938 = vpop.f32.mrb[0].mxu0
        %v4939 = vadd.f32 %v4690, %v4938
        %v4940 = vpop.f32.mrb[0].mxu0
        %4941 = vdwg.mxu0
        %s4942 = scalar_lea.vmem %s988, 64 [#allocation13]
        %v4943 = vld [vmem:[%s4942] sm:$0xf]
        %v4944 = vld [vmem:[%s4942 + $0x4] sm:$0xf]
        %v4945 = vld [vmem:[%s4942 + $0x8] sm:$0xf]
        %v4946 = vld [vmem:[%s4942 + $0xc] sm:$0xf]
        %v4947 = vld [vmem:[%s4942 + $0x10] sm:$0xf]
        %v4948 = vld [vmem:[%s4942 + $0x14] sm:$0xf]
        %v4949 = vld [vmem:[%s4942 + $0x18] sm:$0xf]
        %v4950 = vld [vmem:[%s4942 + $0x1c] sm:$0xf]
        %v4951 = vld [vmem:[%s4942 + $0x20] sm:$0xf]
        %v4952 = vld [vmem:[%s4942 + $0x24] sm:$0xf]
        %v4953 = vld [vmem:[%s4942 + $0x28] sm:$0xf]
        %v4954 = vld [vmem:[%s4942 + $0x2c] sm:$0xf]
        %v4955 = vld [vmem:[%s4942 + $0x30] sm:$0xf]
        %v4956 = vld [vmem:[%s4942 + $0x34] sm:$0xf]
        %v4957 = vld [vmem:[%s4942 + $0x38] sm:$0xf]
        %v4958 = vld [vmem:[%s4942 + $0x3c] sm:$0xf]
        %v4959 = vpack.c.bf16 %v4861, %v4857
        %v4960 = vpack.c.bf16 %v4867, %v4867
        %v4961 = vpack.c.bf16 %v4877, %v4871
        %v4962 = vpack.c.bf16 %v4881, %v4881
        %v4963 = vpack.c.bf16 %v4863, %v4859
        %v4964 = vpack.c.bf16 %v4869, %v4869
        %v4965 = vpack.c.bf16 %v4879, %v4873
        %v4966 = vpack.c.bf16 %v4883, %v4883
        %v4968 = vsel %vm1761, %v4959, 0
        %v4971 = vsel %vm1761, %v4960, 0
        %v4974 = vsel %vm1761, %v4963, 0
        %v4977 = vsel %vm1761, %v4964, 0
        %4979 = vmatprep.subr.bf16.mxu0 0
        %4980 = vmatpush1.bf16.xpose.msra.mxu0 %v4974
        %4981 = vmatprep.subr.bf16.mxu0 0
        %4982 = vmatpush1.bf16.xpose.msra.mxu0 %v4977
        %4983 = vmatprep.subr.bf16.mxu0 0
        %4984 = vmatpush1.bf16.xpose.msra.mxu0 0
        %4985 = vmatprep.subr.bf16.mxu0 0
        %4986 = vmatpush1.bf16.xpose.msra.mxu0 0
        %4987 = vmatprep.subr.bf16.mxu0 0
        %4988 = vmatpush1.bf16.xpose.msra.mxu0 0
        %4989 = vmatprep.subr.bf16.mxu0 0
        %4990 = vmatpush1.bf16.xpose.msra.mxu0 0
        %4991 = vmatprep.subr.bf16.mxu0 0
        %4992 = vmatpush1.bf16.xpose.msra.mxu0 0
        %4993 = vmatprep.subr.bf16.mxu0 0
        %4994 = vmatpush1.bf16.xpose.msra.mxu0 0
        %4995 = vmatprep.subr.bf16.mxu0 0
        %4996 = vmatpush1.bf16.xpose.msra.mxu0 0
        %4997 = vmatprep.subr.bf16.mxu0 0
        %4998 = vmatpush1.bf16.xpose.msra.mxu0 0
        %4999 = vmatprep.subr.bf16.mxu0 0
        %5000 = vmatpush1.bf16.xpose.msra.mxu0 0
        %5001 = vmatprep.subr.bf16.mxu0 0
        %5002 = vmatpush1.bf16.xpose.msra.mxu0 0
        %5003 = vmatprep.subr.bf16.mxu0 0
        %5004 = vmatpush1.bf16.xpose.msra.mxu0 0
        %5005 = vmatprep.subr.bf16.mxu0 0
        %5006 = vmatpush1.bf16.xpose.msra.mxu0 0
        %5007 = vmatprep.subr.bf16.mxu0 0
        %5008 = vmatpush1.bf16.xpose.msra.mxu0 0
        %5009 = vmatprep.subr.bf16.mxu0 0
        %5010 = vmatpush1.bf16.xpose.msra.mxu0 0
        %5011 = vmatprep.mubr.bf16.mxu0 0
        %5012 = vmatmul.mubr.bf16.gmra.mrb[0].mxu0 %v4968
        %v5013 = vpop.f32.mrb[0].mxu0
        %v5014 = vadd.f32 0.0, %v5013
        %v5015 = vpop.f32.mrb[0].mxu0
        %v5016 = vpop.f32.mrb[0].mxu0
        %v5017 = vadd.f32 0.0, %v5016
        %v5018 = vpop.f32.mrb[0].mxu0
        %5019 = vmatprep.mubr.bf16.mxu0 0
        %5020 = vmatmul.mubr.bf16.gmra.mrb[0].mxu0 %v4971
        %v5021 = vpop.f32.mrb[0].mxu0
        %v5022 = vadd.f32 0.0, %v5021
        %v5023 = vpop.f32.mrb[0].mxu0
        %v5024 = vpop.f32.mrb[0].mxu0
        %v5025 = vpop.f32.mrb[0].mxu0
        %5026 = vdwg.mxu0
        %v5028 = vsel %vm1761, %v4961, 0
        %v5031 = vsel %vm1761, %v4962, 0
        %v5034 = vsel %vm1761, %v4965, 0
        %v5037 = vsel %vm1761, %v4966, 0
        %5039 = vmatprep.subr.bf16.mxu0 0
        %5040 = vmatpush1.bf16.xpose.msra.mxu0 %v5034
        %5041 = vmatprep.subr.bf16.mxu0 0
        %5042 = vmatpush1.bf16.xpose.msra.mxu0 %v5037
        %5043 = vmatprep.subr.bf16.mxu0 0
        %5044 = vmatpush1.bf16.xpose.msra.mxu0 0
        %5045 = vmatprep.subr.bf16.mxu0 0
        %5046 = vmatpush1.bf16.xpose.msra.mxu0 0
        %5047 = vmatprep.subr.bf16.mxu0 0
        %5048 = vmatpush1.bf16.xpose.msra.mxu0 0
        %5049 = vmatprep.subr.bf16.mxu0 0
        %5050 = vmatpush1.bf16.xpose.msra.mxu0 0
        %5051 = vmatprep.subr.bf16.mxu0 0
        %5052 = vmatpush1.bf16.xpose.msra.mxu0 0
        %5053 = vmatprep.subr.bf16.mxu0 0
        %5054 = vmatpush1.bf16.xpose.msra.mxu0 0
        %5055 = vmatprep.subr.bf16.mxu0 0
        %5056 = vmatpush1.bf16.xpose.msra.mxu0 0
        %5057 = vmatprep.subr.bf16.mxu0 0
        %5058 = vmatpush1.bf16.xpose.msra.mxu0 0
        %5059 = vmatprep.subr.bf16.mxu0 0
        %5060 = vmatpush1.bf16.xpose.msra.mxu0 0
        %5061 = vmatprep.subr.bf16.mxu0 0
        %5062 = vmatpush1.bf16.xpose.msra.mxu0 0
        %5063 = vmatprep.subr.bf16.mxu0 0
        %5064 = vmatpush1.bf16.xpose.msra.mxu0 0
        %5065 = vmatprep.subr.bf16.mxu0 0
        %5066 = vmatpush1.bf16.xpose.msra.mxu0 0
        %5067 = vmatprep.subr.bf16.mxu0 0
        %5068 = vmatpush1.bf16.xpose.msra.mxu0 0
        %5069 = vmatprep.subr.bf16.mxu0 0
        %5070 = vmatpush1.bf16.xpose.msra.mxu0 0
        %5071 = vmatprep.mubr.bf16.mxu0 0
        %5072 = vmatmul.mubr.bf16.gmra.mrb[0].mxu0 %v5028
        %v5073 = vpop.f32.mrb[0].mxu0
        %v5074 = vadd.f32 0.0, %v5073
        %v5075 = vpop.f32.mrb[0].mxu0
        %v5076 = vpop.f32.mrb[0].mxu0
        %v5077 = vadd.f32 0.0, %v5076
        %v5078 = vpop.f32.mrb[0].mxu0
        %5079 = vmatprep.mubr.bf16.mxu0 0
        %5080 = vmatmul.mubr.bf16.gmra.mrb[0].mxu0 %v5031
        %v5081 = vpop.f32.mrb[0].mxu0
        %v5082 = vadd.f32 0.0, %v5081
        %v5083 = vpop.f32.mrb[0].mxu0
        %v5084 = vpop.f32.mrb[0].mxu0
        %v5085 = vpop.f32.mrb[0].mxu0
        %5086 = vdwg.mxu0
        %v5087 = vmul.f32 %v5014, 0.17677669
        %v5088 = vmul.f32 %v5017, 0.17677669
        %v5089 = vmul.f32 %v5022, 0.17677669
        %v5090 = vmul.f32 %v5074, 0.17677669
        %v5091 = vmul.f32 %v5077, 0.17677669
        %v5092 = vmul.f32 %v5082, 0.17677669
        %v5093 = vadd.f32 %v5087, %v1342
        %v5094 = vadd.f32 %v5088, %v1342
        %v5095 = vadd.f32 %v5089, %v1342
        %v5096 = vadd.f32 %v5090, %v1342
        %v5097 = vadd.f32 %v5091, %v1342
        %v5098 = vadd.f32 %v5092, %v1342
        %v5099 = vsel %vm1894, %v5093, -inf
        %5100 = vmax.xlane.f32.xlu0 %v5099
        %v5101 = vpop.xlane.xlu0 %5100
        %v5102 = vsel %vm1894, %v5094, -inf
        %5103 = vmax.xlane.f32.xlu0 %v5102
        %v5104 = vpop.xlane.xlu0 %5103
        %v5105 = vsel %vm1894, %v5095, -inf
        %5106 = vmax.xlane.f32.xlu0 %v5105
        %v5107 = vpop.xlane.xlu0 %5106
        %v5108 = vsel %vm1894, %v5096, -inf
        %5109 = vmax.xlane.f32.xlu0 %v5108
        %v5110 = vpop.xlane.xlu0 %5109
        %v5111 = vsel %vm1894, %v5097, -inf
        %5112 = vmax.xlane.f32.xlu0 %v5111
        %v5113 = vpop.xlane.xlu0 %5112
        %v5114 = vsel %vm1894, %v5098, -inf
        %5115 = vmax.xlane.f32.xlu0 %v5114
        %v5116 = vpop.xlane.xlu0 %5115
        %v5117 = vsub.f32 %v5093, %v5101
        %v5118 = vsub.f32 %v5094, %v5104
        %v5119 = vsub.f32 %v5095, %v5107
        %v5120 = vsub.f32 %v5096, %v5110
        %v5121 = vsub.f32 %v5097, %v5113
        %v5122 = vsub.f32 %v5098, %v5116
        %v5123 = vmul.f32 %v5117, 1.442695
        %v5124 = vpow.pop %v5123
        %v5125 = vmul.f32 %v5118, 1.442695
        %v5126 = vpow.pop %v5125
        %v5127 = vmul.f32 %v5119, 1.442695
        %v5128 = vpow.pop %v5127
        %v5129 = vmul.f32 %v5120, 1.442695
        %v5130 = vpow.pop %v5129
        %v5131 = vmul.f32 %v5121, 1.442695
        %v5132 = vpow.pop %v5131
        %v5133 = vmul.f32 %v5122, 1.442695
        %v5134 = vpow.pop %v5133
        %v5135 = vsel %vm1894, %v5124, 0.0
        %5136 = vadd.xlane.f32.xlu0 %v5135
        %v5137 = vpop.xlane.xlu0 %5136
        %v5138 = vsel %vm1894, %v5126, 0.0
        %5139 = vadd.xlane.f32.xlu0 %v5138
        %v5140 = vpop.xlane.xlu0 %5139
        %v5141 = vsel %vm1894, %v5128, 0.0
        %5142 = vadd.xlane.f32.xlu0 %v5141
        %v5143 = vpop.xlane.xlu0 %5142
        %v5144 = vsel %vm1894, %v5130, 0.0
        %5145 = vadd.xlane.f32.xlu0 %v5144
        %v5146 = vpop.xlane.xlu0 %5145
        %v5147 = vsel %vm1894, %v5132, 0.0
        %5148 = vadd.xlane.f32.xlu0 %v5147
        %v5149 = vpop.xlane.xlu0 %5148
        %v5150 = vsel %vm1894, %v5134, 0.0
        %5151 = vadd.xlane.f32.xlu0 %v5150
        %v5152 = vpop.xlane.xlu0 %5151
        %v5153 = vrcp.pop %v5137
        %v5154 = vrcp.pop %v5140
        %v5155 = vrcp.pop %v5143
        %v5156 = vrcp.pop %v5146
        %v5157 = vrcp.pop %v5149
        %v5158 = vrcp.pop %v5152
        %v5159 = vmul.f32 %v5124, %v5153
        %v5160 = vmul.f32 %v5126, %v5154
        %v5161 = vmul.f32 %v5128, %v5155
        %v5162 = vmul.f32 %v5130, %v5156
        %v5163 = vmul.f32 %v5132, %v5157
        %v5164 = vmul.f32 %v5134, %v5158
        %v5165 = vpack.c.bf16 %v5160, %v5159
        %v5166 = vpack.c.bf16 %v5161, %v5161
        %v5167 = vpack.c.bf16 %v5163, %v5162
        %v5168 = vpack.c.bf16 %v5164, %v5164
        %v5169 = vpack.c.bf16 %v4923, %v4920
        %v5170 = vpack.c.bf16 %v4928, %v4928
        %v5171 = vpack.c.bf16 %v4936, %v4931
        %v5172 = vpack.c.bf16 %v4939, %v4939
        %v5174 = vsel %vm1894, %v5165, 0
        %v5177 = vsel %vm1894, %v5166, 0
        %v5180 = vsel %vm1975, %v5170, 0
        %5182 = vmatprep.subr.bf16.mxu0 0
        %5183 = vmatpush1.bf16.msra.mxu0 %v5169
        %5184 = vmatprep.subr.bf16.mxu0 0
        %5185 = vmatpush1.bf16.msra.mxu0 %v5180
        %5186 = vmatprep.subr.bf16.mxu0 0
        %5187 = vmatpush1.bf16.msra.mxu0 0
        %5188 = vmatprep.subr.bf16.mxu0 0
        %5189 = vmatpush1.bf16.msra.mxu0 0
        %5190 = vmatprep.subr.bf16.mxu0 0
        %5191 = vmatpush1.bf16.msra.mxu0 0
        %5192 = vmatprep.subr.bf16.mxu0 0
        %5193 = vmatpush1.bf16.msra.mxu0 0
        %5194 = vmatprep.subr.bf16.mxu0 0
        %5195 = vmatpush1.bf16.msra.mxu0 0
        %5196 = vmatprep.subr.bf16.mxu0 0
        %5197 = vmatpush1.bf16.msra.mxu0 0
        %5198 = vmatprep.subr.bf16.mxu0 0
        %5199 = vmatpush1.bf16.msra.mxu0 0
        %5200 = vmatprep.subr.bf16.mxu0 0
        %5201 = vmatpush1.bf16.msra.mxu0 0
        %5202 = vmatprep.subr.bf16.mxu0 0
        %5203 = vmatpush1.bf16.msra.mxu0 0
        %5204 = vmatprep.subr.bf16.mxu0 0
        %5205 = vmatpush1.bf16.msra.mxu0 0
        %5206 = vmatprep.subr.bf16.mxu0 0
        %5207 = vmatpush1.bf16.msra.mxu0 0
        %5208 = vmatprep.subr.bf16.mxu0 0
        %5209 = vmatpush1.bf16.msra.mxu0 0
        %5210 = vmatprep.subr.bf16.mxu0 0
        %5211 = vmatpush1.bf16.msra.mxu0 0
        %5212 = vmatprep.subr.bf16.mxu0 0
        %5213 = vmatpush1.bf16.msra.mxu0 0
        %5214 = vmatprep.mubr.bf16.mxu0 0
        %5215 = vmatmul.mubr.bf16.gmra.mrb[0].mxu0 %v5174
        %v5216 = vpop.f32.mrb[0].mxu0
        %v5217 = vadd.f32 0.0, %v5216
        %v5218 = vpop.f32.mrb[0].mxu0
        %v5219 = vpop.f32.mrb[0].mxu0
        %v5220 = vadd.f32 0.0, %v5219
        %v5221 = vpop.f32.mrb[0].mxu0
        %5222 = vmatprep.mubr.bf16.mxu0 0
        %5223 = vmatmul.mubr.bf16.gmra.mrb[0].mxu0 %v5177
        %v5224 = vpop.f32.mrb[0].mxu0
        %v5225 = vadd.f32 0.0, %v5224
        %v5226 = vpop.f32.mrb[0].mxu0
        %v5227 = vpop.f32.mrb[0].mxu0
        %v5228 = vpop.f32.mrb[0].mxu0
        %5229 = vdwg.mxu0
        %v5231 = vsel %vm1894, %v5167, 0
        %v5234 = vsel %vm1894, %v5168, 0
        %v5237 = vsel %vm1975, %v5172, 0
        %5239 = vmatprep.subr.bf16.mxu0 0
        %5240 = vmatpush1.bf16.msra.mxu0 %v5171
        %5241 = vmatprep.subr.bf16.mxu0 0
        %5242 = vmatpush1.bf16.msra.mxu0 %v5237
        %5243 = vmatprep.subr.bf16.mxu0 0
        %5244 = vmatpush1.bf16.msra.mxu0 0
        %5245 = vmatprep.subr.bf16.mxu0 0
        %5246 = vmatpush1.bf16.msra.mxu0 0
        %5247 = vmatprep.subr.bf16.mxu0 0
        %5248 = vmatpush1.bf16.msra.mxu0 0
        %5249 = vmatprep.subr.bf16.mxu0 0
        %5250 = vmatpush1.bf16.msra.mxu0 0
        %5251 = vmatprep.subr.bf16.mxu0 0
        %5252 = vmatpush1.bf16.msra.mxu0 0
        %5253 = vmatprep.subr.bf16.mxu0 0
        %5254 = vmatpush1.bf16.msra.mxu0 0
        %5255 = vmatprep.subr.bf16.mxu0 0
        %5256 = vmatpush1.bf16.msra.mxu0 0
        %5257 = vmatprep.subr.bf16.mxu0 0
        %5258 = vmatpush1.bf16.msra.mxu0 0
        %5259 = vmatprep.subr.bf16.mxu0 0
        %5260 = vmatpush1.bf16.msra.mxu0 0
        %5261 = vmatprep.subr.bf16.mxu0 0
        %5262 = vmatpush1.bf16.msra.mxu0 0
        %5263 = vmatprep.subr.bf16.mxu0 0
        %5264 = vmatpush1.bf16.msra.mxu0 0
        %5265 = vmatprep.subr.bf16.mxu0 0
        %5266 = vmatpush1.bf16.msra.mxu0 0
        %5267 = vmatprep.subr.bf16.mxu0 0
        %5268 = vmatpush1.bf16.msra.mxu0 0
        %5269 = vmatprep.subr.bf16.mxu0 0
        %5270 = vmatpush1.bf16.msra.mxu0 0
        %5271 = vmatprep.mubr.bf16.mxu0 0
        %5272 = vmatmul.mubr.bf16.gmra.mrb[0].mxu0 %v5231
        %v5273 = vpop.f32.mrb[0].mxu0
        %v5274 = vadd.f32 0.0, %v5273
        %v5275 = vpop.f32.mrb[0].mxu0
        %v5276 = vpop.f32.mrb[0].mxu0
        %v5277 = vadd.f32 0.0, %v5276
        %v5278 = vpop.f32.mrb[0].mxu0
        %5279 = vmatprep.mubr.bf16.mxu0 0
        %5280 = vmatmul.mubr.bf16.gmra.mrb[0].mxu0 %v5234
        %v5281 = vpop.f32.mrb[0].mxu0
        %v5282 = vadd.f32 0.0, %v5281
        %v5283 = vpop.f32.mrb[0].mxu0
        %v5284 = vpop.f32.mrb[0].mxu0
        %v5285 = vpop.f32.mrb[0].mxu0
        %5286 = vdwg.mxu0
        %v5287 = vpack.c.bf16 %v5220, %v5217
        %v5288 = vpack.c.bf16 %v5274, %v5225
        %v5289 = vpack.c.bf16 %v5282, %v5277
        %5292 = vrot.lane.b32.xlu0 %v4959, 96
        %v5293 = vpop.permute.xlu0 %5292
        %5294 = vrot.lane.b32.xlu0 %v4960, 96
        %v5295 = vpop.permute.xlu0 %5294
        %5298 = vrot.lane.b32.xlu0 %v4963, 96
        %v5299 = vpop.permute.xlu0 %5298
        %5300 = vrot.lane.b32.xlu0 %v4964, 96
        %v5301 = vpop.permute.xlu0 %5300
        %v5303 = vsel %vm1761, %v5293, 0
        %v5306 = vsel %vm1761, %v5295, 0
        %v5309 = vsel %vm1761, %v5299, 0
        %v5312 = vsel %vm1761, %v5301, 0
        %5314 = vmatprep.subr.bf16.mxu0 0
        %5315 = vmatpush1.bf16.xpose.msra.mxu0 %v5309
        %5316 = vmatprep.subr.bf16.mxu0 0
        %5317 = vmatpush1.bf16.xpose.msra.mxu0 %v5312
        %5318 = vmatprep.subr.bf16.mxu0 0
        %5319 = vmatpush1.bf16.xpose.msra.mxu0 0
        %5320 = vmatprep.subr.bf16.mxu0 0
        %5321 = vmatpush1.bf16.xpose.msra.mxu0 0
        %5322 = vmatprep.subr.bf16.mxu0 0
        %5323 = vmatpush1.bf16.xpose.msra.mxu0 0
        %5324 = vmatprep.subr.bf16.mxu0 0
        %5325 = vmatpush1.bf16.xpose.msra.mxu0 0
        %5326 = vmatprep.subr.bf16.mxu0 0
        %5327 = vmatpush1.bf16.xpose.msra.mxu0 0
        %5328 = vmatprep.subr.bf16.mxu0 0
        %5329 = vmatpush1.bf16.xpose.msra.mxu0 0
        %5330 = vmatprep.subr.bf16.mxu0 0
        %5331 = vmatpush1.bf16.xpose.msra.mxu0 0
        %5332 = vmatprep.subr.bf16.mxu0 0
        %5333 = vmatpush1.bf16.xpose.msra.mxu0 0
        %5334 = vmatprep.subr.bf16.mxu0 0
        %5335 = vmatpush1.bf16.xpose.msra.mxu0 0
        %5336 = vmatprep.subr.bf16.mxu0 0
        %5337 = vmatpush1.bf16.xpose.msra.mxu0 0
        %5338 = vmatprep.subr.bf16.mxu0 0
        %5339 = vmatpush1.bf16.xpose.msra.mxu0 0
        %5340 = vmatprep.subr.bf16.mxu0 0
        %5341 = vmatpush1.bf16.xpose.msra.mxu0 0
        %5342 = vmatprep.subr.bf16.mxu0 0
        %5343 = vmatpush1.bf16.xpose.msra.mxu0 0
        %5344 = vmatprep.subr.bf16.mxu0 0
        %5345 = vmatpush1.bf16.xpose.msra.mxu0 0
        %5346 = vmatprep.mubr.bf16.mxu0 0
        %5347 = vmatmul.mubr.bf16.gmra.mrb[0].mxu0 %v5303
        %v5348 = vpop.f32.mrb[0].mxu0
        %v5349 = vadd.f32 0.0, %v5348
        %v5350 = vpop.f32.mrb[0].mxu0
        %v5351 = vpop.f32.mrb[0].mxu0
        %v5352 = vadd.f32 0.0, %v5351
        %v5353 = vpop.f32.mrb[0].mxu0
        %5354 = vmatprep.mubr.bf16.mxu0 0
        %5355 = vmatmul.mubr.bf16.gmra.mrb[0].mxu0 %v5306
        %v5356 = vpop.f32.mrb[0].mxu0
        %v5357 = vadd.f32 0.0, %v5356
        %v5358 = vpop.f32.mrb[0].mxu0
        %v5359 = vpop.f32.mrb[0].mxu0
        %v5360 = vpop.f32.mrb[0].mxu0
        %5361 = vdwg.mxu0
        %5364 = vrot.lane.b32.xlu0 %v4961, 96
        %v5365 = vpop.permute.xlu0 %5364
        %5366 = vrot.lane.b32.xlu0 %v4962, 96
        %v5367 = vpop.permute.xlu0 %5366
        %5370 = vrot.lane.b32.xlu0 %v4965, 96
        %v5371 = vpop.permute.xlu0 %5370
        %5372 = vrot.lane.b32.xlu0 %v4966, 96
        %v5373 = vpop.permute.xlu0 %5372
        %v5375 = vsel %vm1761, %v5365, 0
        %v5378 = vsel %vm1761, %v5367, 0
        %v5381 = vsel %vm1761, %v5371, 0
        %v5384 = vsel %vm1761, %v5373, 0
        %5386 = vmatprep.subr.bf16.mxu0 0
        %5387 = vmatpush1.bf16.xpose.msra.mxu0 %v5381
        %5388 = vmatprep.subr.bf16.mxu0 0
        %5389 = vmatpush1.bf16.xpose.msra.mxu0 %v5384
        %5390 = vmatprep.subr.bf16.mxu0 0
        %5391 = vmatpush1.bf16.xpose.msra.mxu0 0
        %5392 = vmatprep.subr.bf16.mxu0 0
        %5393 = vmatpush1.bf16.xpose.msra.mxu0 0
        %5394 = vmatprep.subr.bf16.mxu0 0
        %5395 = vmatpush1.bf16.xpose.msra.mxu0 0
        %5396 = vmatprep.subr.bf16.mxu0 0
        %5397 = vmatpush1.bf16.xpose.msra.mxu0 0
        %5398 = vmatprep.subr.bf16.mxu0 0
        %5399 = vmatpush1.bf16.xpose.msra.mxu0 0
        %5400 = vmatprep.subr.bf16.mxu0 0
        %5401 = vmatpush1.bf16.xpose.msra.mxu0 0
        %5402 = vmatprep.subr.bf16.mxu0 0
        %5403 = vmatpush1.bf16.xpose.msra.mxu0 0
        %5404 = vmatprep.subr.bf16.mxu0 0
        %5405 = vmatpush1.bf16.xpose.msra.mxu0 0
        %5406 = vmatprep.subr.bf16.mxu0 0
        %5407 = vmatpush1.bf16.xpose.msra.mxu0 0
        %5408 = vmatprep.subr.bf16.mxu0 0
        %5409 = vmatpush1.bf16.xpose.msra.mxu0 0
        %5410 = vmatprep.subr.bf16.mxu0 0
        %5411 = vmatpush1.bf16.xpose.msra.mxu0 0
        %5412 = vmatprep.subr.bf16.mxu0 0
        %5413 = vmatpush1.bf16.xpose.msra.mxu0 0
        %5414 = vmatprep.subr.bf16.mxu0 0
        %5415 = vmatpush1.bf16.xpose.msra.mxu0 0
        %5416 = vmatprep.subr.bf16.mxu0 0
        %5417 = vmatpush1.bf16.xpose.msra.mxu0 0
        %5418 = vmatprep.mubr.bf16.mxu0 0
        %5419 = vmatmul.mubr.bf16.gmra.mrb[0].mxu0 %v5375
        %v5420 = vpop.f32.mrb[0].mxu0
        %v5421 = vadd.f32 0.0, %v5420
        %v5422 = vpop.f32.mrb[0].mxu0
        %v5423 = vpop.f32.mrb[0].mxu0
        %v5424 = vadd.f32 0.0, %v5423
        %v5425 = vpop.f32.mrb[0].mxu0
        %5426 = vmatprep.mubr.bf16.mxu0 0
        %5427 = vmatmul.mubr.bf16.gmra.mrb[0].mxu0 %v5378
        %v5428 = vpop.f32.mrb[0].mxu0
        %v5429 = vadd.f32 0.0, %v5428
        %v5430 = vpop.f32.mrb[0].mxu0
        %v5431 = vpop.f32.mrb[0].mxu0
        %v5432 = vpop.f32.mrb[0].mxu0
        %5433 = vdwg.mxu0
        %v5434 = vmul.f32 %v5349, 0.17677669
        %v5435 = vmul.f32 %v5352, 0.17677669
        %v5436 = vmul.f32 %v5357, 0.17677669
        %v5437 = vmul.f32 %v5421, 0.17677669
        %v5438 = vmul.f32 %v5424, 0.17677669
        %v5439 = vmul.f32 %v5429, 0.17677669
        %v5440 = vadd.f32 %v5434, %v1342
        %v5441 = vadd.f32 %v5435, %v1342
        %v5442 = vadd.f32 %v5436, %v1342
        %v5443 = vadd.f32 %v5437, %v1342
        %v5444 = vadd.f32 %v5438, %v1342
        %v5445 = vadd.f32 %v5439, %v1342
        %v5446 = vsel %vm1894, %v5440, -inf
        %5447 = vmax.xlane.f32.xlu0 %v5446
        %v5448 = vpop.xlane.xlu0 %5447
        %v5449 = vsel %vm1894, %v5441, -inf
        %5450 = vmax.xlane.f32.xlu0 %v5449
        %v5451 = vpop.xlane.xlu0 %5450
        %v5452 = vsel %vm1894, %v5442, -inf
        %5453 = vmax.xlane.f32.xlu0 %v5452
        %v5454 = vpop.xlane.xlu0 %5453
        %v5455 = vsel %vm1894, %v5443, -inf
        %5456 = vmax.xlane.f32.xlu0 %v5455
        %v5457 = vpop.xlane.xlu0 %5456
        %v5458 = vsel %vm1894, %v5444, -inf
        %5459 = vmax.xlane.f32.xlu0 %v5458
        %v5460 = vpop.xlane.xlu0 %5459
        %v5461 = vsel %vm1894, %v5445, -inf
        %5462 = vmax.xlane.f32.xlu0 %v5461
        %v5463 = vpop.xlane.xlu0 %5462
        %v5464 = vsub.f32 %v5440, %v5448
        %v5465 = vsub.f32 %v5441, %v5451
        %v5466 = vsub.f32 %v5442, %v5454
        %v5467 = vsub.f32 %v5443, %v5457
        %v5468 = vsub.f32 %v5444, %v5460
        %v5469 = vsub.f32 %v5445, %v5463
        %v5470 = vmul.f32 %v5464, 1.442695
        %v5471 = vpow.pop %v5470
        %v5472 = vmul.f32 %v5465, 1.442695
        %v5473 = vpow.pop %v5472
        %v5474 = vmul.f32 %v5466, 1.442695
        %v5475 = vpow.pop %v5474
        %v5476 = vmul.f32 %v5467, 1.442695
        %v5477 = vpow.pop %v5476
        %v5478 = vmul.f32 %v5468, 1.442695
        %v5479 = vpow.pop %v5478
        %v5480 = vmul.f32 %v5469, 1.442695
        %v5481 = vpow.pop %v5480
        %v5482 = vsel %vm1894, %v5471, 0.0
        %5483 = vadd.xlane.f32.xlu0 %v5482
        %v5484 = vpop.xlane.xlu0 %5483
        %v5485 = vsel %vm1894, %v5473, 0.0
        %5486 = vadd.xlane.f32.xlu0 %v5485
        %v5487 = vpop.xlane.xlu0 %5486
        %v5488 = vsel %vm1894, %v5475, 0.0
        %5489 = vadd.xlane.f32.xlu0 %v5488
        %v5490 = vpop.xlane.xlu0 %5489
        %v5491 = vsel %vm1894, %v5477, 0.0
        %5492 = vadd.xlane.f32.xlu0 %v5491
        %v5493 = vpop.xlane.xlu0 %5492
        %v5494 = vsel %vm1894, %v5479, 0.0
        %5495 = vadd.xlane.f32.xlu0 %v5494
        %v5496 = vpop.xlane.xlu0 %5495
        %v5497 = vsel %vm1894, %v5481, 0.0
        %5498 = vadd.xlane.f32.xlu0 %v5497
        %v5499 = vpop.xlane.xlu0 %5498
        %v5500 = vrcp.pop %v5484
        %v5501 = vrcp.pop %v5487
        %v5502 = vrcp.pop %v5490
        %v5503 = vrcp.pop %v5493
        %v5504 = vrcp.pop %v5496
        %v5505 = vrcp.pop %v5499
        %v5506 = vmul.f32 %v5471, %v5500
        %v5507 = vmul.f32 %v5473, %v5501
        %v5508 = vmul.f32 %v5475, %v5502
        %v5509 = vmul.f32 %v5477, %v5503
        %v5510 = vmul.f32 %v5479, %v5504
        %v5511 = vmul.f32 %v5481, %v5505
        %v5512 = vpack.c.bf16 %v5507, %v5506
        %v5513 = vpack.c.bf16 %v5508, %v5508
        %v5514 = vpack.c.bf16 %v5510, %v5509
        %v5515 = vpack.c.bf16 %v5511, %v5511
        %5518 = vrot.lane.b32.xlu0 %v5169, 96
        %v5519 = vpop.permute.xlu0 %5518
        %5520 = vrot.lane.b32.xlu0 %v5170, 96
        %v5521 = vpop.permute.xlu0 %5520
        %v5524 = vsel %vm1894, %v5512, 0
        %v5527 = vsel %vm1894, %v5513, 0
        %v5530 = vsel %vm1975, %v5521, 0
        %5532 = vmatprep.subr.bf16.mxu0 0
        %5533 = vmatpush1.bf16.msra.mxu0 %v5519
        %5534 = vmatprep.subr.bf16.mxu0 0
        %5535 = vmatpush1.bf16.msra.mxu0 %v5530
        %5536 = vmatprep.subr.bf16.mxu0 0
        %5537 = vmatpush1.bf16.msra.mxu0 0
        %5538 = vmatprep.subr.bf16.mxu0 0
        %5539 = vmatpush1.bf16.msra.mxu0 0
        %5540 = vmatprep.subr.bf16.mxu0 0
        %5541 = vmatpush1.bf16.msra.mxu0 0
        %5542 = vmatprep.subr.bf16.mxu0 0
        %5543 = vmatpush1.bf16.msra.mxu0 0
        %5544 = vmatprep.subr.bf16.mxu0 0
        %5545 = vmatpush1.bf16.msra.mxu0 0
        %5546 = vmatprep.subr.bf16.mxu0 0
        %5547 = vmatpush1.bf16.msra.mxu0 0
        %5548 = vmatprep.subr.bf16.mxu0 0
        %5549 = vmatpush1.bf16.msra.mxu0 0
        %5550 = vmatprep.subr.bf16.mxu0 0
        %5551 = vmatpush1.bf16.msra.mxu0 0
        %5552 = vmatprep.subr.bf16.mxu0 0
        %5553 = vmatpush1.bf16.msra.mxu0 0
        %5554 = vmatprep.subr.bf16.mxu0 0
        %5555 = vmatpush1.bf16.msra.mxu0 0
        %5556 = vmatprep.subr.bf16.mxu0 0
        %5557 = vmatpush1.bf16.msra.mxu0 0
        %5558 = vmatprep.subr.bf16.mxu0 0
        %5559 = vmatpush1.bf16.msra.mxu0 0
        %5560 = vmatprep.subr.bf16.mxu0 0
        %5561 = vmatpush1.bf16.msra.mxu0 0
        %5562 = vmatprep.subr.bf16.mxu0 0
        %5563 = vmatpush1.bf16.msra.mxu0 0
        %5564 = vmatprep.mubr.bf16.mxu0 0
        %5565 = vmatmul.mubr.bf16.gmra.mrb[0].mxu0 %v5524
        %v5566 = vpop.f32.mrb[0].mxu0
        %v5567 = vadd.f32 0.0, %v5566
        %v5568 = vpop.f32.mrb[0].mxu0
        %v5569 = vpop.f32.mrb[0].mxu0
        %v5570 = vadd.f32 0.0, %v5569
        %v5571 = vpop.f32.mrb[0].mxu0
        %5572 = vmatprep.mubr.bf16.mxu0 0
        %5573 = vmatmul.mubr.bf16.gmra.mrb[0].mxu0 %v5527
        %v5574 = vpop.f32.mrb[0].mxu0
        %v5575 = vadd.f32 0.0, %v5574
        %v5576 = vpop.f32.mrb[0].mxu0
        %v5577 = vpop.f32.mrb[0].mxu0
        %v5578 = vpop.f32.mrb[0].mxu0
        %5579 = vdwg.mxu0
        %5582 = vrot.lane.b32.xlu0 %v5171, 96
        %v5583 = vpop.permute.xlu0 %5582
        %5584 = vrot.lane.b32.xlu0 %v5172, 96
        %v5585 = vpop.permute.xlu0 %5584
        %v5588 = vsel %vm1894, %v5514, 0
        %v5591 = vsel %vm1894, %v5515, 0
        %v5594 = vsel %vm1975, %v5585, 0
        %5596 = vmatprep.subr.bf16.mxu0 0
        %5597 = vmatpush1.bf16.msra.mxu0 %v5583
        %5598 = vmatprep.subr.bf16.mxu0 0
        %5599 = vmatpush1.bf16.msra.mxu0 %v5594
        %5600 = vmatprep.subr.bf16.mxu0 0
        %5601 = vmatpush1.bf16.msra.mxu0 0
        %5602 = vmatprep.subr.bf16.mxu0 0
        %5603 = vmatpush1.bf16.msra.mxu0 0
        %5604 = vmatprep.subr.bf16.mxu0 0
        %5605 = vmatpush1.bf16.msra.mxu0 0
        %5606 = vmatprep.subr.bf16.mxu0 0
        %5607 = vmatpush1.bf16.msra.mxu0 0
        %5608 = vmatprep.subr.bf16.mxu0 0
        %5609 = vmatpush1.bf16.msra.mxu0 0
        %5610 = vmatprep.subr.bf16.mxu0 0
        %5611 = vmatpush1.bf16.msra.mxu0 0
        %5612 = vmatprep.subr.bf16.mxu0 0
        %5613 = vmatpush1.bf16.msra.mxu0 0
        %5614 = vmatprep.subr.bf16.mxu0 0
        %5615 = vmatpush1.bf16.msra.mxu0 0
        %5616 = vmatprep.subr.bf16.mxu0 0
        %5617 = vmatpush1.bf16.msra.mxu0 0
        %5618 = vmatprep.subr.bf16.mxu0 0
        %5619 = vmatpush1.bf16.msra.mxu0 0
        %5620 = vmatprep.subr.bf16.mxu0 0
        %5621 = vmatpush1.bf16.msra.mxu0 0
        %5622 = vmatprep.subr.bf16.mxu0 0
        %5623 = vmatpush1.bf16.msra.mxu0 0
        %5624 = vmatprep.subr.bf16.mxu0 0
        %5625 = vmatpush1.bf16.msra.mxu0 0
        %5626 = vmatprep.subr.bf16.mxu0 0
        %5627 = vmatpush1.bf16.msra.mxu0 0
        %5628 = vmatprep.mubr.bf16.mxu0 0
        %5629 = vmatmul.mubr.bf16.gmra.mrb[0].mxu0 %v5588
        %v5630 = vpop.f32.mrb[0].mxu0
        %v5631 = vadd.f32 0.0, %v5630
        %v5632 = vpop.f32.mrb[0].mxu0
        %v5633 = vpop.f32.mrb[0].mxu0
        %v5634 = vadd.f32 0.0, %v5633
        %v5635 = vpop.f32.mrb[0].mxu0
        %5636 = vmatprep.mubr.bf16.mxu0 0
        %5637 = vmatmul.mubr.bf16.gmra.mrb[0].mxu0 %v5591
        %v5638 = vpop.f32.mrb[0].mxu0
        %v5639 = vadd.f32 0.0, %v5638
        %v5640 = vpop.f32.mrb[0].mxu0
        %v5641 = vpop.f32.mrb[0].mxu0
        %v5642 = vpop.f32.mrb[0].mxu0
        %5643 = vdwg.mxu0
        %v5644 = vpack.c.bf16 %v5570, %v5567
        %v5645 = vpack.c.bf16 %v5631, %v5575
        %v5646 = vpack.c.bf16 %v5639, %v5634
        %v5651 = vunpack.c.l.b16 %v4947
        %v5652 = vunpack.c.l.b16 %v4948
        %v5653 = vunpack.c.l.b16 %v4949
        %v5654 = vunpack.c.l.b16 %v4950
        %v5655 = vpack.c.b16 %v5652, %v5651
        %v5656 = vpack.c.b16 %v5654, %v5653
        %v5660 = vsel %vm1761, %v5644, 0
        %v5663 = vsel %vm1761, %v5645, 0
        %v5666 = vsel %vm1761, %v5646, 0
        %5668 = vmatprep.subr.bf16.mxu0 0
        %5669 = vmatpush1.bf16.msra.mxu0 %v5655
        %5670 = vmatprep.subr.bf16.mxu0 0
        %5671 = vmatpush1.bf16.msra.mxu0 %v5656
        %5672 = vmatprep.subr.bf16.mxu0 0
        %5673 = vmatpush1.bf16.msra.mxu0 0
        %5674 = vmatprep.subr.bf16.mxu0 0
        %5675 = vmatpush1.bf16.msra.mxu0 0
        %5676 = vmatprep.subr.bf16.mxu0 0
        %5677 = vmatpush1.bf16.msra.mxu0 0
        %5678 = vmatprep.subr.bf16.mxu0 0
        %5679 = vmatpush1.bf16.msra.mxu0 0
        %5680 = vmatprep.subr.bf16.mxu0 0
        %5681 = vmatpush1.bf16.msra.mxu0 0
        %5682 = vmatprep.subr.bf16.mxu0 0
        %5683 = vmatpush1.bf16.msra.mxu0 0
        %5684 = vmatprep.subr.bf16.mxu0 0
        %5685 = vmatpush1.bf16.msra.mxu0 0
        %5686 = vmatprep.subr.bf16.mxu0 0
        %5687 = vmatpush1.bf16.msra.mxu0 0
        %5688 = vmatprep.subr.bf16.mxu0 0
        %5689 = vmatpush1.bf16.msra.mxu0 0
        %5690 = vmatprep.subr.bf16.mxu0 0
        %5691 = vmatpush1.bf16.msra.mxu0 0
        %5692 = vmatprep.subr.bf16.mxu0 0
        %5693 = vmatpush1.bf16.msra.mxu0 0
        %5694 = vmatprep.subr.bf16.mxu0 0
        %5695 = vmatpush1.bf16.msra.mxu0 0
        %5696 = vmatprep.subr.bf16.mxu0 0
        %5697 = vmatpush1.bf16.msra.mxu0 0
        %5698 = vmatprep.subr.bf16.mxu0 0
        %5699 = vmatpush1.bf16.msra.mxu0 0
        %5700 = vmatprep.mubr.bf16.mxu0 0
        %5701 = vmatmul.mubr.bf16.gmra.mrb[0].mxu0 %v5660
        %v5702 = vpop.f32.mrb[0].mxu0
        %v5703 = vadd.f32 0.0, %v5702
        %v5704 = vpop.f32.mrb[0].mxu0
        %v5705 = vpop.f32.mrb[0].mxu0
        %v5706 = vadd.f32 0.0, %v5705
        %v5707 = vpop.f32.mrb[0].mxu0
        %5708 = vmatprep.mubr.bf16.mxu0 0
        %5709 = vmatmul.mubr.bf16.gmra.mrb[0].mxu0 %v5663
        %v5710 = vpop.f32.mrb[0].mxu0
        %v5711 = vadd.f32 0.0, %v5710
        %v5712 = vpop.f32.mrb[0].mxu0
        %v5713 = vpop.f32.mrb[0].mxu0
        %v5714 = vadd.f32 0.0, %v5713
        %v5715 = vpop.f32.mrb[0].mxu0
        %5716 = vmatprep.mubr.bf16.mxu0 0
        %5717 = vmatmul.mubr.bf16.gmra.mrb[0].mxu0 %v5666
        %v5718 = vpop.f32.mrb[0].mxu0
        %v5719 = vadd.f32 0.0, %v5718
        %v5720 = vpop.f32.mrb[0].mxu0
        %v5721 = vpop.f32.mrb[0].mxu0
        %v5722 = vadd.f32 0.0, %v5721
        %v5723 = vpop.f32.mrb[0].mxu0
        %5724 = vdwg.mxu0
        %v5729 = vunpack.c.l.b16 %v4943
        %v5730 = vunpack.c.l.b16 %v4944
        %v5731 = vunpack.c.l.b16 %v4945
        %v5732 = vunpack.c.l.b16 %v4946
        %v5733 = vpack.c.b16 %v5730, %v5729
        %v5734 = vpack.c.b16 %v5732, %v5731
        %v5738 = vsel %vm1761, %v5287, 0
        %v5741 = vsel %vm1761, %v5288, 0
        %v5744 = vsel %vm1761, %v5289, 0
        %5746 = vmatprep.subr.bf16.mxu0 0
        %5747 = vmatpush1.bf16.msra.mxu0 %v5733
        %5748 = vmatprep.subr.bf16.mxu0 0
        %5749 = vmatpush1.bf16.msra.mxu0 %v5734
        %5750 = vmatprep.subr.bf16.mxu0 0
        %5751 = vmatpush1.bf16.msra.mxu0 0
        %5752 = vmatprep.subr.bf16.mxu0 0
        %5753 = vmatpush1.bf16.msra.mxu0 0
        %5754 = vmatprep.subr.bf16.mxu0 0
        %5755 = vmatpush1.bf16.msra.mxu0 0
        %5756 = vmatprep.subr.bf16.mxu0 0
        %5757 = vmatpush1.bf16.msra.mxu0 0
        %5758 = vmatprep.subr.bf16.mxu0 0
        %5759 = vmatpush1.bf16.msra.mxu0 0
        %5760 = vmatprep.subr.bf16.mxu0 0
        %5761 = vmatpush1.bf16.msra.mxu0 0
        %5762 = vmatprep.subr.bf16.mxu0 0
        %5763 = vmatpush1.bf16.msra.mxu0 0
        %5764 = vmatprep.subr.bf16.mxu0 0
        %5765 = vmatpush1.bf16.msra.mxu0 0
        %5766 = vmatprep.subr.bf16.mxu0 0
        %5767 = vmatpush1.bf16.msra.mxu0 0
        %5768 = vmatprep.subr.bf16.mxu0 0
        %5769 = vmatpush1.bf16.msra.mxu0 0
        %5770 = vmatprep.subr.bf16.mxu0 0
        %5771 = vmatpush1.bf16.msra.mxu0 0
        %5772 = vmatprep.subr.bf16.mxu0 0
        %5773 = vmatpush1.bf16.msra.mxu0 0
        %5774 = vmatprep.subr.bf16.mxu0 0
        %5775 = vmatpush1.bf16.msra.mxu0 0
        %5776 = vmatprep.subr.bf16.mxu0 0
        %5777 = vmatpush1.bf16.msra.mxu0 0
        %5778 = vmatprep.mubr.bf16.mxu0 0
        %5779 = vmatmul.mubr.bf16.gmra.mrb[0].mxu0 %v5738
        %v5780 = vpop.f32.mrb[0].mxu0
        %v5781 = vadd.f32 %v5703, %v5780
        %v5782 = vpop.f32.mrb[0].mxu0
        %v5783 = vpop.f32.mrb[0].mxu0
        %v5784 = vadd.f32 %v5706, %v5783
        %v5785 = vpop.f32.mrb[0].mxu0
        %5786 = vmatprep.mubr.bf16.mxu0 0
        %5787 = vmatmul.mubr.bf16.gmra.mrb[0].mxu0 %v5741
        %v5788 = vpop.f32.mrb[0].mxu0
        %v5789 = vadd.f32 %v5711, %v5788
        %v5790 = vpop.f32.mrb[0].mxu0
        %v5791 = vpop.f32.mrb[0].mxu0
        %v5792 = vadd.f32 %v5714, %v5791
        %v5793 = vpop.f32.mrb[0].mxu0
        %5794 = vmatprep.mubr.bf16.mxu0 0
        %5795 = vmatmul.mubr.bf16.gmra.mrb[0].mxu0 %v5744
        %v5796 = vpop.f32.mrb[0].mxu0
        %v5797 = vadd.f32 %v5719, %v5796
        %v5798 = vpop.f32.mrb[0].mxu0
        %v5799 = vpop.f32.mrb[0].mxu0
        %v5800 = vadd.f32 %v5722, %v5799
        %v5801 = vpop.f32.mrb[0].mxu0
        %5802 = vdwg.mxu0
        %5803 = vrot.lane.b32.xlu0 %v4959, 64
        %v5804 = vpop.permute.xlu0 %5803
        %5805 = vrot.lane.b32.xlu0 %v4960, 64
        %v5806 = vpop.permute.xlu0 %5805
        %5807 = vrot.lane.b32.xlu0 %v4963, 64
        %v5808 = vpop.permute.xlu0 %5807
        %5809 = vrot.lane.b32.xlu0 %v4964, 64
        %v5810 = vpop.permute.xlu0 %5809
        %v5812 = vsel %vm1761, %v5804, 0
        %v5815 = vsel %vm1761, %v5806, 0
        %v5818 = vsel %vm1761, %v5808, 0
        %v5821 = vsel %vm1761, %v5810, 0
        %5823 = vmatprep.subr.bf16.mxu0 0
        %5824 = vmatpush1.bf16.xpose.msra.mxu0 %v5818
        %5825 = vmatprep.subr.bf16.mxu0 0
        %5826 = vmatpush1.bf16.xpose.msra.mxu0 %v5821
        %5827 = vmatprep.subr.bf16.mxu0 0
        %5828 = vmatpush1.bf16.xpose.msra.mxu0 0
        %5829 = vmatprep.subr.bf16.mxu0 0
        %5830 = vmatpush1.bf16.xpose.msra.mxu0 0
        %5831 = vmatprep.subr.bf16.mxu0 0
        %5832 = vmatpush1.bf16.xpose.msra.mxu0 0
        %5833 = vmatprep.subr.bf16.mxu0 0
        %5834 = vmatpush1.bf16.xpose.msra.mxu0 0
        %5835 = vmatprep.subr.bf16.mxu0 0
        %5836 = vmatpush1.bf16.xpose.msra.mxu0 0
        %5837 = vmatprep.subr.bf16.mxu0 0
        %5838 = vmatpush1.bf16.xpose.msra.mxu0 0
        %5839 = vmatprep.subr.bf16.mxu0 0
        %5840 = vmatpush1.bf16.xpose.msra.mxu0 0
        %5841 = vmatprep.subr.bf16.mxu0 0
        %5842 = vmatpush1.bf16.xpose.msra.mxu0 0
        %5843 = vmatprep.subr.bf16.mxu0 0
        %5844 = vmatpush1.bf16.xpose.msra.mxu0 0
        %5845 = vmatprep.subr.bf16.mxu0 0
        %5846 = vmatpush1.bf16.xpose.msra.mxu0 0
        %5847 = vmatprep.subr.bf16.mxu0 0
        %5848 = vmatpush1.bf16.xpose.msra.mxu0 0
        %5849 = vmatprep.subr.bf16.mxu0 0
        %5850 = vmatpush1.bf16.xpose.msra.mxu0 0
        %5851 = vmatprep.subr.bf16.mxu0 0
        %5852 = vmatpush1.bf16.xpose.msra.mxu0 0
        %5853 = vmatprep.subr.bf16.mxu0 0
        %5854 = vmatpush1.bf16.xpose.msra.mxu0 0
        %5855 = vmatprep.mubr.bf16.mxu0 0
        %5856 = vmatmul.mubr.bf16.gmra.mrb[0].mxu0 %v5812
        %v5857 = vpop.f32.mrb[0].mxu0
        %v5858 = vadd.f32 0.0, %v5857
        %v5859 = vpop.f32.mrb[0].mxu0
        %v5860 = vpop.f32.mrb[0].mxu0
        %v5861 = vadd.f32 0.0, %v5860
        %v5862 = vpop.f32.mrb[0].mxu0
        %5863 = vmatprep.mubr.bf16.mxu0 0
        %5864 = vmatmul.mubr.bf16.gmra.mrb[0].mxu0 %v5815
        %v5865 = vpop.f32.mrb[0].mxu0
        %v5866 = vadd.f32 0.0, %v5865
        %v5867 = vpop.f32.mrb[0].mxu0
        %v5868 = vpop.f32.mrb[0].mxu0
        %v5869 = vpop.f32.mrb[0].mxu0
        %5870 = vdwg.mxu0
        %5871 = vrot.lane.b32.xlu0 %v4961, 64
        %v5872 = vpop.permute.xlu0 %5871
        %5873 = vrot.lane.b32.xlu0 %v4962, 64
        %v5874 = vpop.permute.xlu0 %5873
        %5875 = vrot.lane.b32.xlu0 %v4965, 64
        %v5876 = vpop.permute.xlu0 %5875
        %5877 = vrot.lane.b32.xlu0 %v4966, 64
        %v5878 = vpop.permute.xlu0 %5877
        %v5880 = vsel %vm1761, %v5872, 0
        %v5883 = vsel %vm1761, %v5874, 0
        %v5886 = vsel %vm1761, %v5876, 0
        %v5889 = vsel %vm1761, %v5878, 0
        %5891 = vmatprep.subr.bf16.mxu0 0
        %5892 = vmatpush1.bf16.xpose.msra.mxu0 %v5886
        %5893 = vmatprep.subr.bf16.mxu0 0
        %5894 = vmatpush1.bf16.xpose.msra.mxu0 %v5889
        %5895 = vmatprep.subr.bf16.mxu0 0
        %5896 = vmatpush1.bf16.xpose.msra.mxu0 0
        %5897 = vmatprep.subr.bf16.mxu0 0
        %5898 = vmatpush1.bf16.xpose.msra.mxu0 0
        %5899 = vmatprep.subr.bf16.mxu0 0
        %5900 = vmatpush1.bf16.xpose.msra.mxu0 0
        %5901 = vmatprep.subr.bf16.mxu0 0
        %5902 = vmatpush1.bf16.xpose.msra.mxu0 0
        %5903 = vmatprep.subr.bf16.mxu0 0
        %5904 = vmatpush1.bf16.xpose.msra.mxu0 0
        %5905 = vmatprep.subr.bf16.mxu0 0
        %5906 = vmatpush1.bf16.xpose.msra.mxu0 0
        %5907 = vmatprep.subr.bf16.mxu0 0
        %5908 = vmatpush1.bf16.xpose.msra.mxu0 0
        %5909 = vmatprep.subr.bf16.mxu0 0
        %5910 = vmatpush1.bf16.xpose.msra.mxu0 0
        %5911 = vmatprep.subr.bf16.mxu0 0
        %5912 = vmatpush1.bf16.xpose.msra.mxu0 0
        %5913 = vmatprep.subr.bf16.mxu0 0
        %5914 = vmatpush1.bf16.xpose.msra.mxu0 0
        %5915 = vmatprep.subr.bf16.mxu0 0
        %5916 = vmatpush1.bf16.xpose.msra.mxu0 0
        %5917 = vmatprep.subr.bf16.mxu0 0
        %5918 = vmatpush1.bf16.xpose.msra.mxu0 0
        %5919 = vmatprep.subr.bf16.mxu0 0
        %5920 = vmatpush1.bf16.xpose.msra.mxu0 0
        %5921 = vmatprep.subr.bf16.mxu0 0
        %5922 = vmatpush1.bf16.xpose.msra.mxu0 0
        %5923 = vmatprep.mubr.bf16.mxu0 0
        %5924 = vmatmul.mubr.bf16.gmra.mrb[0].mxu0 %v5880
        %v5925 = vpop.f32.mrb[0].mxu0
        %v5926 = vadd.f32 0.0, %v5925
        %v5927 = vpop.f32.mrb[0].mxu0
        %v5928 = vpop.f32.mrb[0].mxu0
        %v5929 = vadd.f32 0.0, %v5928
        %v5930 = vpop.f32.mrb[0].mxu0
        %5931 = vmatprep.mubr.bf16.mxu0 0
        %5932 = vmatmul.mubr.bf16.gmra.mrb[0].mxu0 %v5883
        %v5933 = vpop.f32.mrb[0].mxu0
        %v5934 = vadd.f32 0.0, %v5933
        %v5935 = vpop.f32.mrb[0].mxu0
        %v5936 = vpop.f32.mrb[0].mxu0
        %v5937 = vpop.f32.mrb[0].mxu0
        %5938 = vdwg.mxu0
        %v5939 = vmul.f32 %v5858, 0.17677669
        %v5940 = vmul.f32 %v5861, 0.17677669
        %v5941 = vmul.f32 %v5866, 0.17677669
        %v5942 = vmul.f32 %v5926, 0.17677669
        %v5943 = vmul.f32 %v5929, 0.17677669
        %v5944 = vmul.f32 %v5934, 0.17677669
        %v5945 = vadd.f32 %v5939, %v1342
        %v5946 = vadd.f32 %v5940, %v1342
        %v5947 = vadd.f32 %v5941, %v1342
        %v5948 = vadd.f32 %v5942, %v1342
        %v5949 = vadd.f32 %v5943, %v1342
        %v5950 = vadd.f32 %v5944, %v1342
        %v5951 = vsel %vm1894, %v5945, -inf
        %5952 = vmax.xlane.f32.xlu0 %v5951
        %v5953 = vpop.xlane.xlu0 %5952
        %v5954 = vsel %vm1894, %v5946, -inf
        %5955 = vmax.xlane.f32.xlu0 %v5954
        %v5956 = vpop.xlane.xlu0 %5955
        %v5957 = vsel %vm1894, %v5947, -inf
        %5958 = vmax.xlane.f32.xlu0 %v5957
        %v5959 = vpop.xlane.xlu0 %5958
        %v5960 = vsel %vm1894, %v5948, -inf
        %5961 = vmax.xlane.f32.xlu0 %v5960
        %v5962 = vpop.xlane.xlu0 %5961
        %v5963 = vsel %vm1894, %v5949, -inf
        %5964 = vmax.xlane.f32.xlu0 %v5963
        %v5965 = vpop.xlane.xlu0 %5964
        %v5966 = vsel %vm1894, %v5950, -inf
        %5967 = vmax.xlane.f32.xlu0 %v5966
        %v5968 = vpop.xlane.xlu0 %5967
        %v5969 = vsub.f32 %v5945, %v5953
        %v5970 = vsub.f32 %v5946, %v5956
        %v5971 = vsub.f32 %v5947, %v5959
        %v5972 = vsub.f32 %v5948, %v5962
        %v5973 = vsub.f32 %v5949, %v5965
        %v5974 = vsub.f32 %v5950, %v5968
        %v5975 = vmul.f32 %v5969, 1.442695
        %v5976 = vpow.pop %v5975
        %v5977 = vmul.f32 %v5970, 1.442695
        %v5978 = vpow.pop %v5977
        %v5979 = vmul.f32 %v5971, 1.442695
        %v5980 = vpow.pop %v5979
        %v5981 = vmul.f32 %v5972, 1.442695
        %v5982 = vpow.pop %v5981
        %v5983 = vmul.f32 %v5973, 1.442695
        %v5984 = vpow.pop %v5983
        %v5985 = vmul.f32 %v5974, 1.442695
        %v5986 = vpow.pop %v5985
        %v5987 = vsel %vm1894, %v5976, 0.0
        %5988 = vadd.xlane.f32.xlu0 %v5987
        %v5989 = vpop.xlane.xlu0 %5988
        %v5990 = vsel %vm1894, %v5978, 0.0
        %5991 = vadd.xlane.f32.xlu0 %v5990
        %v5992 = vpop.xlane.xlu0 %5991
        %v5993 = vsel %vm1894, %v5980, 0.0
        %5994 = vadd.xlane.f32.xlu0 %v5993
        %v5995 = vpop.xlane.xlu0 %5994
        %v5996 = vsel %vm1894, %v5982, 0.0
        %5997 = vadd.xlane.f32.xlu0 %v5996
        %v5998 = vpop.xlane.xlu0 %5997
        %v5999 = vsel %vm1894, %v5984, 0.0
        %6000 = vadd.xlane.f32.xlu0 %v5999
        %v6001 = vpop.xlane.xlu0 %6000
        %v6002 = vsel %vm1894, %v5986, 0.0
        %6003 = vadd.xlane.f32.xlu0 %v6002
        %v6004 = vpop.xlane.xlu0 %6003
        %v6005 = vrcp.pop %v5989
        %v6006 = vrcp.pop %v5992
        %v6007 = vrcp.pop %v5995
        %v6008 = vrcp.pop %v5998
        %v6009 = vrcp.pop %v6001
        %v6010 = vrcp.pop %v6004
        %v6011 = vmul.f32 %v5976, %v6005
        %v6012 = vmul.f32 %v5978, %v6006
        %v6013 = vmul.f32 %v5980, %v6007
        %v6014 = vmul.f32 %v5982, %v6008
        %v6015 = vmul.f32 %v5984, %v6009
        %v6016 = vmul.f32 %v5986, %v6010
        %v6017 = vpack.c.bf16 %v6012, %v6011
        %v6018 = vpack.c.bf16 %v6013, %v6013
        %v6019 = vpack.c.bf16 %v6015, %v6014
        %v6020 = vpack.c.bf16 %v6016, %v6016
        %6021 = vrot.lane.b32.xlu0 %v5169, 64
        %v6022 = vpop.permute.xlu0 %6021
        %6023 = vrot.lane.b32.xlu0 %v5170, 64
        %v6024 = vpop.permute.xlu0 %6023
        %v6027 = vsel %vm1894, %v6017, 0
        %v6030 = vsel %vm1894, %v6018, 0
        %v6033 = vsel %vm1975, %v6024, 0
        %6035 = vmatprep.subr.bf16.mxu0 0
        %6036 = vmatpush1.bf16.msra.mxu0 %v6022
        %6037 = vmatprep.subr.bf16.mxu0 0
        %6038 = vmatpush1.bf16.msra.mxu0 %v6033
        %6039 = vmatprep.subr.bf16.mxu0 0
        %6040 = vmatpush1.bf16.msra.mxu0 0
        %6041 = vmatprep.subr.bf16.mxu0 0
        %6042 = vmatpush1.bf16.msra.mxu0 0
        %6043 = vmatprep.subr.bf16.mxu0 0
        %6044 = vmatpush1.bf16.msra.mxu0 0
        %6045 = vmatprep.subr.bf16.mxu0 0
        %6046 = vmatpush1.bf16.msra.mxu0 0
        %6047 = vmatprep.subr.bf16.mxu0 0
        %6048 = vmatpush1.bf16.msra.mxu0 0
        %6049 = vmatprep.subr.bf16.mxu0 0
        %6050 = vmatpush1.bf16.msra.mxu0 0
        %6051 = vmatprep.subr.bf16.mxu0 0
        %6052 = vmatpush1.bf16.msra.mxu0 0
        %6053 = vmatprep.subr.bf16.mxu0 0
        %6054 = vmatpush1.bf16.msra.mxu0 0
        %6055 = vmatprep.subr.bf16.mxu0 0
        %6056 = vmatpush1.bf16.msra.mxu0 0
        %6057 = vmatprep.subr.bf16.mxu0 0
        %6058 = vmatpush1.bf16.msra.mxu0 0
        %6059 = vmatprep.subr.bf16.mxu0 0
        %6060 = vmatpush1.bf16.msra.mxu0 0
        %6061 = vmatprep.subr.bf16.mxu0 0
        %6062 = vmatpush1.bf16.msra.mxu0 0
        %6063 = vmatprep.subr.bf16.mxu0 0
        %6064 = vmatpush1.bf16.msra.mxu0 0
        %6065 = vmatprep.subr.bf16.mxu0 0
        %6066 = vmatpush1.bf16.msra.mxu0 0
        %6067 = vmatprep.mubr.bf16.mxu0 0
        %6068 = vmatmul.mubr.bf16.gmra.mrb[0].mxu0 %v6027
        %v6069 = vpop.f32.mrb[0].mxu0
        %v6070 = vadd.f32 0.0, %v6069
        %v6071 = vpop.f32.mrb[0].mxu0
        %v6072 = vpop.f32.mrb[0].mxu0
        %v6073 = vadd.f32 0.0, %v6072
        %v6074 = vpop.f32.mrb[0].mxu0
        %6075 = vmatprep.mubr.bf16.mxu0 0
        %6076 = vmatmul.mubr.bf16.gmra.mrb[0].mxu0 %v6030
        %v6077 = vpop.f32.mrb[0].mxu0
        %v6078 = vadd.f32 0.0, %v6077
        %v6079 = vpop.f32.mrb[0].mxu0
        %v6080 = vpop.f32.mrb[0].mxu0
        %v6081 = vpop.f32.mrb[0].mxu0
        %6082 = vdwg.mxu0
        %6083 = vrot.lane.b32.xlu0 %v5171, 64
        %v6084 = vpop.permute.xlu0 %6083
        %6085 = vrot.lane.b32.xlu0 %v5172, 64
        %v6086 = vpop.permute.xlu0 %6085
        %v6089 = vsel %vm1894, %v6019, 0
        %v6092 = vsel %vm1894, %v6020, 0
        %v6095 = vsel %vm1975, %v6086, 0
        %6097 = vmatprep.subr.bf16.mxu0 0
        %6098 = vmatpush1.bf16.msra.mxu0 %v6084
        %6099 = vmatprep.subr.bf16.mxu0 0
        %6100 = vmatpush1.bf16.msra.mxu0 %v6095
        %6101 = vmatprep.subr.bf16.mxu0 0
        %6102 = vmatpush1.bf16.msra.mxu0 0
        %6103 = vmatprep.subr.bf16.mxu0 0
        %6104 = vmatpush1.bf16.msra.mxu0 0
        %6105 = vmatprep.subr.bf16.mxu0 0
        %6106 = vmatpush1.bf16.msra.mxu0 0
        %6107 = vmatprep.subr.bf16.mxu0 0
        %6108 = vmatpush1.bf16.msra.mxu0 0
        %6109 = vmatprep.subr.bf16.mxu0 0
        %6110 = vmatpush1.bf16.msra.mxu0 0
        %6111 = vmatprep.subr.bf16.mxu0 0
        %6112 = vmatpush1.bf16.msra.mxu0 0
        %6113 = vmatprep.subr.bf16.mxu0 0
        %6114 = vmatpush1.bf16.msra.mxu0 0
        %6115 = vmatprep.subr.bf16.mxu0 0
        %6116 = vmatpush1.bf16.msra.mxu0 0
        %6117 = vmatprep.subr.bf16.mxu0 0
        %6118 = vmatpush1.bf16.msra.mxu0 0
        %6119 = vmatprep.subr.bf16.mxu0 0
        %6120 = vmatpush1.bf16.msra.mxu0 0
        %6121 = vmatprep.subr.bf16.mxu0 0
        %6122 = vmatpush1.bf16.msra.mxu0 0
        %6123 = vmatprep.subr.bf16.mxu0 0
        %6124 = vmatpush1.bf16.msra.mxu0 0
        %6125 = vmatprep.subr.bf16.mxu0 0
        %6126 = vmatpush1.bf16.msra.mxu0 0
        %6127 = vmatprep.subr.bf16.mxu0 0
        %6128 = vmatpush1.bf16.msra.mxu0 0
        %6129 = vmatprep.mubr.bf16.mxu0 0
        %6130 = vmatmul.mubr.bf16.gmra.mrb[0].mxu0 %v6089
        %v6131 = vpop.f32.mrb[0].mxu0
        %v6132 = vadd.f32 0.0, %v6131
        %v6133 = vpop.f32.mrb[0].mxu0
        %v6134 = vpop.f32.mrb[0].mxu0
        %v6135 = vadd.f32 0.0, %v6134
        %v6136 = vpop.f32.mrb[0].mxu0
        %6137 = vmatprep.mubr.bf16.mxu0 0
        %6138 = vmatmul.mubr.bf16.gmra.mrb[0].mxu0 %v6092
        %v6139 = vpop.f32.mrb[0].mxu0
        %v6140 = vadd.f32 0.0, %v6139
        %v6141 = vpop.f32.mrb[0].mxu0
        %v6142 = vpop.f32.mrb[0].mxu0
        %v6143 = vpop.f32.mrb[0].mxu0
        %6144 = vdwg.mxu0
        %v6145 = vpack.c.bf16 %v6073, %v6070
        %v6146 = vpack.c.bf16 %v6132, %v6078
        %v6147 = vpack.c.bf16 %v6140, %v6135
        %v6152 = vunpack.c.l.b16 %v4951
        %v6153 = vunpack.c.l.b16 %v4952
        %v6154 = vunpack.c.l.b16 %v4953
        %v6155 = vunpack.c.l.b16 %v4954
        %v6156 = vpack.c.b16 %v6153, %v6152
        %v6157 = vpack.c.b16 %v6155, %v6154
        %v6161 = vsel %vm1761, %v6145, 0
        %v6164 = vsel %vm1761, %v6146, 0
        %v6167 = vsel %vm1761, %v6147, 0
        %6169 = vmatprep.subr.bf16.mxu0 0
        %6170 = vmatpush1.bf16.msra.mxu0 %v6156
        %6171 = vmatprep.subr.bf16.mxu0 0
        %6172 = vmatpush1.bf16.msra.mxu0 %v6157
        %6173 = vmatprep.subr.bf16.mxu0 0
        %6174 = vmatpush1.bf16.msra.mxu0 0
        %6175 = vmatprep.subr.bf16.mxu0 0
        %6176 = vmatpush1.bf16.msra.mxu0 0
        %6177 = vmatprep.subr.bf16.mxu0 0
        %6178 = vmatpush1.bf16.msra.mxu0 0
        %6179 = vmatprep.subr.bf16.mxu0 0
        %6180 = vmatpush1.bf16.msra.mxu0 0
        %6181 = vmatprep.subr.bf16.mxu0 0
        %6182 = vmatpush1.bf16.msra.mxu0 0
        %6183 = vmatprep.subr.bf16.mxu0 0
        %6184 = vmatpush1.bf16.msra.mxu0 0
        %6185 = vmatprep.subr.bf16.mxu0 0
        %6186 = vmatpush1.bf16.msra.mxu0 0
        %6187 = vmatprep.subr.bf16.mxu0 0
        %6188 = vmatpush1.bf16.msra.mxu0 0
        %6189 = vmatprep.subr.bf16.mxu0 0
        %6190 = vmatpush1.bf16.msra.mxu0 0
        %6191 = vmatprep.subr.bf16.mxu0 0
        %6192 = vmatpush1.bf16.msra.mxu0 0
        %6193 = vmatprep.subr.bf16.mxu0 0
        %6194 = vmatpush1.bf16.msra.mxu0 0
        %6195 = vmatprep.subr.bf16.mxu0 0
        %6196 = vmatpush1.bf16.msra.mxu0 0
        %6197 = vmatprep.subr.bf16.mxu0 0
        %6198 = vmatpush1.bf16.msra.mxu0 0
        %6199 = vmatprep.subr.bf16.mxu0 0
        %6200 = vmatpush1.bf16.msra.mxu0 0
        %6201 = vmatprep.mubr.bf16.mxu0 0
        %6202 = vmatmul.mubr.bf16.gmra.mrb[0].mxu0 %v6161
        %v6203 = vpop.f32.mrb[0].mxu0
        %v6204 = vadd.f32 0.0, %v6203
        %v6205 = vpop.f32.mrb[0].mxu0
        %v6206 = vpop.f32.mrb[0].mxu0
        %v6207 = vadd.f32 0.0, %v6206
        %v6208 = vpop.f32.mrb[0].mxu0
        %6209 = vmatprep.mubr.bf16.mxu0 0
        %6210 = vmatmul.mubr.bf16.gmra.mrb[0].mxu0 %v6164
        %v6211 = vpop.f32.mrb[0].mxu0
        %v6212 = vadd.f32 0.0, %v6211
        %v6213 = vpop.f32.mrb[0].mxu0
        %v6214 = vpop.f32.mrb[0].mxu0
        %v6215 = vadd.f32 0.0, %v6214
        %v6216 = vpop.f32.mrb[0].mxu0
        %6217 = vmatprep.mubr.bf16.mxu0 0
        %6218 = vmatmul.mubr.bf16.gmra.mrb[0].mxu0 %v6167
        %v6219 = vpop.f32.mrb[0].mxu0
        %v6220 = vadd.f32 0.0, %v6219
        %v6221 = vpop.f32.mrb[0].mxu0
        %v6222 = vpop.f32.mrb[0].mxu0
        %v6223 = vadd.f32 0.0, %v6222
        %v6224 = vpop.f32.mrb[0].mxu0
        %6225 = vdwg.mxu0
        %v6226 = vadd.f32 %v5781, %v6204
        %v6227 = vadd.f32 %v5784, %v6207
        %v6228 = vadd.f32 %v5789, %v6212
        %v6229 = vadd.f32 %v5792, %v6215
        %v6230 = vadd.f32 %v5797, %v6220
        %v6231 = vadd.f32 %v5800, %v6223
        %6232 = vrot.lane.b32.xlu0 %v4959, 32
        %v6233 = vpop.permute.xlu0 %6232
        %6234 = vrot.lane.b32.xlu0 %v4960, 32
        %v6235 = vpop.permute.xlu0 %6234
        %6236 = vrot.lane.b32.xlu0 %v4963, 32
        %v6237 = vpop.permute.xlu0 %6236
        %6238 = vrot.lane.b32.xlu0 %v4964, 32
        %v6239 = vpop.permute.xlu0 %6238
        %v6241 = vsel %vm1761, %v6233, 0
        %v6244 = vsel %vm1761, %v6235, 0
        %v6247 = vsel %vm1761, %v6237, 0
        %v6250 = vsel %vm1761, %v6239, 0
        %6252 = vmatprep.subr.bf16.mxu0 0
        %6253 = vmatpush1.bf16.xpose.msra.mxu0 %v6247
        %6254 = vmatprep.subr.bf16.mxu0 0
        %6255 = vmatpush1.bf16.xpose.msra.mxu0 %v6250
        %6256 = vmatprep.subr.bf16.mxu0 0
        %6257 = vmatpush1.bf16.xpose.msra.mxu0 0
        %6258 = vmatprep.subr.bf16.mxu0 0
        %6259 = vmatpush1.bf16.xpose.msra.mxu0 0
        %6260 = vmatprep.subr.bf16.mxu0 0
        %6261 = vmatpush1.bf16.xpose.msra.mxu0 0
        %6262 = vmatprep.subr.bf16.mxu0 0
        %6263 = vmatpush1.bf16.xpose.msra.mxu0 0
        %6264 = vmatprep.subr.bf16.mxu0 0
        %6265 = vmatpush1.bf16.xpose.msra.mxu0 0
        %6266 = vmatprep.subr.bf16.mxu0 0
        %6267 = vmatpush1.bf16.xpose.msra.mxu0 0
        %6268 = vmatprep.subr.bf16.mxu0 0
        %6269 = vmatpush1.bf16.xpose.msra.mxu0 0
        %6270 = vmatprep.subr.bf16.mxu0 0
        %6271 = vmatpush1.bf16.xpose.msra.mxu0 0
        %6272 = vmatprep.subr.bf16.mxu0 0
        %6273 = vmatpush1.bf16.xpose.msra.mxu0 0
        %6274 = vmatprep.subr.bf16.mxu0 0
        %6275 = vmatpush1.bf16.xpose.msra.mxu0 0
        %6276 = vmatprep.subr.bf16.mxu0 0
        %6277 = vmatpush1.bf16.xpose.msra.mxu0 0
        %6278 = vmatprep.subr.bf16.mxu0 0
        %6279 = vmatpush1.bf16.xpose.msra.mxu0 0
        %6280 = vmatprep.subr.bf16.mxu0 0
        %6281 = vmatpush1.bf16.xpose.msra.mxu0 0
        %6282 = vmatprep.subr.bf16.mxu0 0
        %6283 = vmatpush1.bf16.xpose.msra.mxu0 0
        %6284 = vmatprep.mubr.bf16.mxu0 0
        %6285 = vmatmul.mubr.bf16.gmra.mrb[0].mxu0 %v6241
        %v6286 = vpop.f32.mrb[0].mxu0
        %v6287 = vadd.f32 0.0, %v6286
        %v6288 = vpop.f32.mrb[0].mxu0
        %v6289 = vpop.f32.mrb[0].mxu0
        %v6290 = vadd.f32 0.0, %v6289
        %v6291 = vpop.f32.mrb[0].mxu0
        %6292 = vmatprep.mubr.bf16.mxu0 0
        %6293 = vmatmul.mubr.bf16.gmra.mrb[0].mxu0 %v6244
        %v6294 = vpop.f32.mrb[0].mxu0
        %v6295 = vadd.f32 0.0, %v6294
        %v6296 = vpop.f32.mrb[0].mxu0
        %v6297 = vpop.f32.mrb[0].mxu0
        %v6298 = vpop.f32.mrb[0].mxu0
        %6299 = vdwg.mxu0
        %6300 = vrot.lane.b32.xlu0 %v4961, 32
        %v6301 = vpop.permute.xlu0 %6300
        %6302 = vrot.lane.b32.xlu0 %v4962, 32
        %v6303 = vpop.permute.xlu0 %6302
        %6304 = vrot.lane.b32.xlu0 %v4965, 32
        %v6305 = vpop.permute.xlu0 %6304
        %6306 = vrot.lane.b32.xlu0 %v4966, 32
        %v6307 = vpop.permute.xlu0 %6306
        %v6309 = vsel %vm1761, %v6301, 0
        %v6312 = vsel %vm1761, %v6303, 0
        %v6315 = vsel %vm1761, %v6305, 0
        %v6318 = vsel %vm1761, %v6307, 0
        %6320 = vmatprep.subr.bf16.mxu0 0
        %6321 = vmatpush1.bf16.xpose.msra.mxu0 %v6315
        %6322 = vmatprep.subr.bf16.mxu0 0
        %6323 = vmatpush1.bf16.xpose.msra.mxu0 %v6318
        %6324 = vmatprep.subr.bf16.mxu0 0
        %6325 = vmatpush1.bf16.xpose.msra.mxu0 0
        %6326 = vmatprep.subr.bf16.mxu0 0
        %6327 = vmatpush1.bf16.xpose.msra.mxu0 0
        %6328 = vmatprep.subr.bf16.mxu0 0
        %6329 = vmatpush1.bf16.xpose.msra.mxu0 0
        %6330 = vmatprep.subr.bf16.mxu0 0
        %6331 = vmatpush1.bf16.xpose.msra.mxu0 0
        %6332 = vmatprep.subr.bf16.mxu0 0
        %6333 = vmatpush1.bf16.xpose.msra.mxu0 0
        %6334 = vmatprep.subr.bf16.mxu0 0
        %6335 = vmatpush1.bf16.xpose.msra.mxu0 0
        %6336 = vmatprep.subr.bf16.mxu0 0
        %6337 = vmatpush1.bf16.xpose.msra.mxu0 0
        %6338 = vmatprep.subr.bf16.mxu0 0
        %6339 = vmatpush1.bf16.xpose.msra.mxu0 0
        %6340 = vmatprep.subr.bf16.mxu0 0
        %6341 = vmatpush1.bf16.xpose.msra.mxu0 0
        %6342 = vmatprep.subr.bf16.mxu0 0
        %6343 = vmatpush1.bf16.xpose.msra.mxu0 0
        %6344 = vmatprep.subr.bf16.mxu0 0
        %6345 = vmatpush1.bf16.xpose.msra.mxu0 0
        %6346 = vmatprep.subr.bf16.mxu0 0
        %6347 = vmatpush1.bf16.xpose.msra.mxu0 0
        %6348 = vmatprep.subr.bf16.mxu0 0
        %6349 = vmatpush1.bf16.xpose.msra.mxu0 0
        %6350 = vmatprep.subr.bf16.mxu0 0
        %6351 = vmatpush1.bf16.xpose.msra.mxu0 0
        %6352 = vmatprep.mubr.bf16.mxu0 0
        %6353 = vmatmul.mubr.bf16.gmra.mrb[0].mxu0 %v6309
        %v6354 = vpop.f32.mrb[0].mxu0
        %v6355 = vadd.f32 0.0, %v6354
        %v6356 = vpop.f32.mrb[0].mxu0
        %v6357 = vpop.f32.mrb[0].mxu0
        %v6358 = vadd.f32 0.0, %v6357
        %v6359 = vpop.f32.mrb[0].mxu0
        %6360 = vmatprep.mubr.bf16.mxu0 0
        %6361 = vmatmul.mubr.bf16.gmra.mrb[0].mxu0 %v6312
        %v6362 = vpop.f32.mrb[0].mxu0
        %v6363 = vadd.f32 0.0, %v6362
        %v6364 = vpop.f32.mrb[0].mxu0
        %v6365 = vpop.f32.mrb[0].mxu0
        %v6366 = vpop.f32.mrb[0].mxu0
        %6367 = vdwg.mxu0
        %v6368 = vmul.f32 %v6287, 0.17677669
        %v6369 = vmul.f32 %v6290, 0.17677669
        %v6370 = vmul.f32 %v6295, 0.17677669
        %v6371 = vmul.f32 %v6355, 0.17677669
        %v6372 = vmul.f32 %v6358, 0.17677669
        %v6373 = vmul.f32 %v6363, 0.17677669
        %v6374 = vadd.f32 %v6368, %v1342
        %v6375 = vadd.f32 %v6369, %v1342
        %v6376 = vadd.f32 %v6370, %v1342
        %v6377 = vadd.f32 %v6371, %v1342
        %v6378 = vadd.f32 %v6372, %v1342
        %v6379 = vadd.f32 %v6373, %v1342
        %v6380 = vsel %vm1894, %v6374, -inf
        %6381 = vmax.xlane.f32.xlu0 %v6380
        %v6382 = vpop.xlane.xlu0 %6381
        %v6383 = vsel %vm1894, %v6375, -inf
        %6384 = vmax.xlane.f32.xlu0 %v6383
        %v6385 = vpop.xlane.xlu0 %6384
        %v6386 = vsel %vm1894, %v6376, -inf
        %6387 = vmax.xlane.f32.xlu0 %v6386
        %v6388 = vpop.xlane.xlu0 %6387
        %v6389 = vsel %vm1894, %v6377, -inf
        %6390 = vmax.xlane.f32.xlu0 %v6389
        %v6391 = vpop.xlane.xlu0 %6390
        %v6392 = vsel %vm1894, %v6378, -inf
        %6393 = vmax.xlane.f32.xlu0 %v6392
        %v6394 = vpop.xlane.xlu0 %6393
        %v6395 = vsel %vm1894, %v6379, -inf
        %6396 = vmax.xlane.f32.xlu0 %v6395
        %v6397 = vpop.xlane.xlu0 %6396
        %v6398 = vsub.f32 %v6374, %v6382
        %v6399 = vsub.f32 %v6375, %v6385
        %v6400 = vsub.f32 %v6376, %v6388
        %v6401 = vsub.f32 %v6377, %v6391
        %v6402 = vsub.f32 %v6378, %v6394
        %v6403 = vsub.f32 %v6379, %v6397
        %v6404 = vmul.f32 %v6398, 1.442695
        %v6405 = vpow.pop %v6404
        %v6406 = vmul.f32 %v6399, 1.442695
        %v6407 = vpow.pop %v6406
        %v6408 = vmul.f32 %v6400, 1.442695
        %v6409 = vpow.pop %v6408
        %v6410 = vmul.f32 %v6401, 1.442695
        %v6411 = vpow.pop %v6410
        %v6412 = vmul.f32 %v6402, 1.442695
        %v6413 = vpow.pop %v6412
        %v6414 = vmul.f32 %v6403, 1.442695
        %v6415 = vpow.pop %v6414
        %v6416 = vsel %vm1894, %v6405, 0.0
        %6417 = vadd.xlane.f32.xlu0 %v6416
        %v6418 = vpop.xlane.xlu0 %6417
        %v6419 = vsel %vm1894, %v6407, 0.0
        %6420 = vadd.xlane.f32.xlu0 %v6419
        %v6421 = vpop.xlane.xlu0 %6420
        %v6422 = vsel %vm1894, %v6409, 0.0
        %6423 = vadd.xlane.f32.xlu0 %v6422
        %v6424 = vpop.xlane.xlu0 %6423
        %v6425 = vsel %vm1894, %v6411, 0.0
        %6426 = vadd.xlane.f32.xlu0 %v6425
        %v6427 = vpop.xlane.xlu0 %6426
        %v6428 = vsel %vm1894, %v6413, 0.0
        %6429 = vadd.xlane.f32.xlu0 %v6428
        %v6430 = vpop.xlane.xlu0 %6429
        %v6431 = vsel %vm1894, %v6415, 0.0
        %6432 = vadd.xlane.f32.xlu0 %v6431
        %v6433 = vpop.xlane.xlu0 %6432
        %v6434 = vrcp.pop %v6418
        %v6435 = vrcp.pop %v6421
        %v6436 = vrcp.pop %v6424
        %v6437 = vrcp.pop %v6427
        %v6438 = vrcp.pop %v6430
        %v6439 = vrcp.pop %v6433
        %v6440 = vmul.f32 %v6405, %v6434
        %v6441 = vmul.f32 %v6407, %v6435
        %v6442 = vmul.f32 %v6409, %v6436
        %v6443 = vmul.f32 %v6411, %v6437
        %v6444 = vmul.f32 %v6413, %v6438
        %v6445 = vmul.f32 %v6415, %v6439
        %v6446 = vpack.c.bf16 %v6441, %v6440
        %v6447 = vpack.c.bf16 %v6442, %v6442
        %v6448 = vpack.c.bf16 %v6444, %v6443
        %v6449 = vpack.c.bf16 %v6445, %v6445
        %6450 = vrot.lane.b32.xlu0 %v5169, 32
        %v6451 = vpop.permute.xlu0 %6450
        %6452 = vrot.lane.b32.xlu0 %v5170, 32
        %v6453 = vpop.permute.xlu0 %6452
        %v6456 = vsel %vm1894, %v6446, 0
        %v6459 = vsel %vm1894, %v6447, 0
        %v6462 = vsel %vm1975, %v6453, 0
        %6464 = vmatprep.subr.bf16.mxu0 0
        %6465 = vmatpush1.bf16.msra.mxu0 %v6451
        %6466 = vmatprep.subr.bf16.mxu0 0
        %6467 = vmatpush1.bf16.msra.mxu0 %v6462
        %6468 = vmatprep.subr.bf16.mxu0 0
        %6469 = vmatpush1.bf16.msra.mxu0 0
        %6470 = vmatprep.subr.bf16.mxu0 0
        %6471 = vmatpush1.bf16.msra.mxu0 0
        %6472 = vmatprep.subr.bf16.mxu0 0
        %6473 = vmatpush1.bf16.msra.mxu0 0
        %6474 = vmatprep.subr.bf16.mxu0 0
        %6475 = vmatpush1.bf16.msra.mxu0 0
        %6476 = vmatprep.subr.bf16.mxu0 0
        %6477 = vmatpush1.bf16.msra.mxu0 0
        %6478 = vmatprep.subr.bf16.mxu0 0
        %6479 = vmatpush1.bf16.msra.mxu0 0
        %6480 = vmatprep.subr.bf16.mxu0 0
        %6481 = vmatpush1.bf16.msra.mxu0 0
        %6482 = vmatprep.subr.bf16.mxu0 0
        %6483 = vmatpush1.bf16.msra.mxu0 0
        %6484 = vmatprep.subr.bf16.mxu0 0
        %6485 = vmatpush1.bf16.msra.mxu0 0
        %6486 = vmatprep.subr.bf16.mxu0 0
        %6487 = vmatpush1.bf16.msra.mxu0 0
        %6488 = vmatprep.subr.bf16.mxu0 0
        %6489 = vmatpush1.bf16.msra.mxu0 0
        %6490 = vmatprep.subr.bf16.mxu0 0
        %6491 = vmatpush1.bf16.msra.mxu0 0
        %6492 = vmatprep.subr.bf16.mxu0 0
        %6493 = vmatpush1.bf16.msra.mxu0 0
        %6494 = vmatprep.subr.bf16.mxu0 0
        %6495 = vmatpush1.bf16.msra.mxu0 0
        %6496 = vmatprep.mubr.bf16.mxu0 0
        %6497 = vmatmul.mubr.bf16.gmra.mrb[0].mxu0 %v6456
        %v6498 = vpop.f32.mrb[0].mxu0
        %v6499 = vadd.f32 0.0, %v6498
        %v6500 = vpop.f32.mrb[0].mxu0
        %v6501 = vpop.f32.mrb[0].mxu0
        %v6502 = vadd.f32 0.0, %v6501
        %v6503 = vpop.f32.mrb[0].mxu0
        %6504 = vmatprep.mubr.bf16.mxu0 0
        %6505 = vmatmul.mubr.bf16.gmra.mrb[0].mxu0 %v6459
        %v6506 = vpop.f32.mrb[0].mxu0
        %v6507 = vadd.f32 0.0, %v6506
        %v6508 = vpop.f32.mrb[0].mxu0
        %v6509 = vpop.f32.mrb[0].mxu0
        %v6510 = vpop.f32.mrb[0].mxu0
        %6511 = vdwg.mxu0
        %6512 = vrot.lane.b32.xlu0 %v5171, 32
        %v6513 = vpop.permute.xlu0 %6512
        %6514 = vrot.lane.b32.xlu0 %v5172, 32
        %v6515 = vpop.permute.xlu0 %6514
        %v6518 = vsel %vm1894, %v6448, 0
        %v6521 = vsel %vm1894, %v6449, 0
        %v6524 = vsel %vm1975, %v6515, 0
        %6526 = vmatprep.subr.bf16.mxu0 0
        %6527 = vmatpush1.bf16.msra.mxu0 %v6513
        %6528 = vmatprep.subr.bf16.mxu0 0
        %6529 = vmatpush1.bf16.msra.mxu0 %v6524
        %6530 = vmatprep.subr.bf16.mxu0 0
        %6531 = vmatpush1.bf16.msra.mxu0 0
        %6532 = vmatprep.subr.bf16.mxu0 0
        %6533 = vmatpush1.bf16.msra.mxu0 0
        %6534 = vmatprep.subr.bf16.mxu0 0
        %6535 = vmatpush1.bf16.msra.mxu0 0
        %6536 = vmatprep.subr.bf16.mxu0 0
        %6537 = vmatpush1.bf16.msra.mxu0 0
        %6538 = vmatprep.subr.bf16.mxu0 0
        %6539 = vmatpush1.bf16.msra.mxu0 0
        %6540 = vmatprep.subr.bf16.mxu0 0
        %6541 = vmatpush1.bf16.msra.mxu0 0
        %6542 = vmatprep.subr.bf16.mxu0 0
        %6543 = vmatpush1.bf16.msra.mxu0 0
        %6544 = vmatprep.subr.bf16.mxu0 0
        %6545 = vmatpush1.bf16.msra.mxu0 0
        %6546 = vmatprep.subr.bf16.mxu0 0
        %6547 = vmatpush1.bf16.msra.mxu0 0
        %6548 = vmatprep.subr.bf16.mxu0 0
        %6549 = vmatpush1.bf16.msra.mxu0 0
        %6550 = vmatprep.subr.bf16.mxu0 0
        %6551 = vmatpush1.bf16.msra.mxu0 0
        %6552 = vmatprep.subr.bf16.mxu0 0
        %6553 = vmatpush1.bf16.msra.mxu0 0
        %6554 = vmatprep.subr.bf16.mxu0 0
        %6555 = vmatpush1.bf16.msra.mxu0 0
        %6556 = vmatprep.subr.bf16.mxu0 0
        %6557 = vmatpush1.bf16.msra.mxu0 0
        %6558 = vmatprep.mubr.bf16.mxu0 0
        %6559 = vmatmul.mubr.bf16.gmra.mrb[0].mxu0 %v6518
        %v6560 = vpop.f32.mrb[0].mxu0
        %v6561 = vadd.f32 0.0, %v6560
        %v6562 = vpop.f32.mrb[0].mxu0
        %v6563 = vpop.f32.mrb[0].mxu0
        %v6564 = vadd.f32 0.0, %v6563
        %v6565 = vpop.f32.mrb[0].mxu0
        %6566 = vmatprep.mubr.bf16.mxu0 0
        %6567 = vmatmul.mubr.bf16.gmra.mrb[0].mxu0 %v6521
        %v6568 = vpop.f32.mrb[0].mxu0
        %v6569 = vadd.f32 0.0, %v6568
        %v6570 = vpop.f32.mrb[0].mxu0
        %v6571 = vpop.f32.mrb[0].mxu0
        %v6572 = vpop.f32.mrb[0].mxu0
        %6573 = vdwg.mxu0
        %v6574 = vpack.c.bf16 %v6502, %v6499
        %v6575 = vpack.c.bf16 %v6561, %v6507
        %v6576 = vpack.c.bf16 %v6569, %v6564
        %v6581 = vunpack.c.l.b16 %v4955
        %v6582 = vunpack.c.l.b16 %v4956
        %v6583 = vunpack.c.l.b16 %v4957
        %v6584 = vunpack.c.l.b16 %v4958
        %v6585 = vpack.c.b16 %v6582, %v6581
        %v6586 = vpack.c.b16 %v6584, %v6583
        %v6590 = vsel %vm1761, %v6574, 0
        %v6593 = vsel %vm1761, %v6575, 0
        %v6596 = vsel %vm1761, %v6576, 0
        %6598 = vmatprep.subr.bf16.mxu0 0
        %6599 = vmatpush1.bf16.msra.mxu0 %v6585
        %6600 = vmatprep.subr.bf16.mxu0 0
        %6601 = vmatpush1.bf16.msra.mxu0 %v6586
        %6602 = vmatprep.subr.bf16.mxu0 0
        %6603 = vmatpush1.bf16.msra.mxu0 0
        %6604 = vmatprep.subr.bf16.mxu0 0
        %6605 = vmatpush1.bf16.msra.mxu0 0
        %6606 = vmatprep.subr.bf16.mxu0 0
        %6607 = vmatpush1.bf16.msra.mxu0 0
        %6608 = vmatprep.subr.bf16.mxu0 0
        %6609 = vmatpush1.bf16.msra.mxu0 0
        %6610 = vmatprep.subr.bf16.mxu0 0
        %6611 = vmatpush1.bf16.msra.mxu0 0
        %6612 = vmatprep.subr.bf16.mxu0 0
        %6613 = vmatpush1.bf16.msra.mxu0 0
        %6614 = vmatprep.subr.bf16.mxu0 0
        %6615 = vmatpush1.bf16.msra.mxu0 0
        %6616 = vmatprep.subr.bf16.mxu0 0
        %6617 = vmatpush1.bf16.msra.mxu0 0
        %6618 = vmatprep.subr.bf16.mxu0 0
        %6619 = vmatpush1.bf16.msra.mxu0 0
        %6620 = vmatprep.subr.bf16.mxu0 0
        %6621 = vmatpush1.bf16.msra.mxu0 0
        %6622 = vmatprep.subr.bf16.mxu0 0
        %6623 = vmatpush1.bf16.msra.mxu0 0
        %6624 = vmatprep.subr.bf16.mxu0 0
        %6625 = vmatpush1.bf16.msra.mxu0 0
        %6626 = vmatprep.subr.bf16.mxu0 0
        %6627 = vmatpush1.bf16.msra.mxu0 0
        %6628 = vmatprep.subr.bf16.mxu0 0
        %6629 = vmatpush1.bf16.msra.mxu0 0
        %6630 = vmatprep.mubr.bf16.mxu0 0
        %6631 = vmatmul.mubr.bf16.gmra.mrb[0].mxu0 %v6590
        %v6632 = vpop.f32.mrb[0].mxu0
        %v6633 = vadd.f32 0.0, %v6632
        %v6634 = vpop.f32.mrb[0].mxu0
        %v6635 = vpop.f32.mrb[0].mxu0
        %v6636 = vadd.f32 0.0, %v6635
        %v6637 = vpop.f32.mrb[0].mxu0
        %6638 = vmatprep.mubr.bf16.mxu0 0
        %6639 = vmatmul.mubr.bf16.gmra.mrb[0].mxu0 %v6593
        %v6640 = vpop.f32.mrb[0].mxu0
        %v6641 = vadd.f32 0.0, %v6640
        %v6642 = vpop.f32.mrb[0].mxu0
        %v6643 = vpop.f32.mrb[0].mxu0
        %v6644 = vadd.f32 0.0, %v6643
        %v6645 = vpop.f32.mrb[0].mxu0
        %6646 = vmatprep.mubr.bf16.mxu0 0
        %6647 = vmatmul.mubr.bf16.gmra.mrb[0].mxu0 %v6596
        %v6648 = vpop.f32.mrb[0].mxu0
        %v6649 = vadd.f32 0.0, %v6648
        %v6650 = vpop.f32.mrb[0].mxu0
        %v6651 = vpop.f32.mrb[0].mxu0
        %v6652 = vadd.f32 0.0, %v6651
        %v6653 = vpop.f32.mrb[0].mxu0
        %6654 = vdwg.mxu0
        %v6655 = vadd.f32 %v6226, %v6633
        %v6656 = vadd.f32 %v6227, %v6636
        %v6657 = vadd.f32 %v6228, %v6641
        %v6658 = vadd.f32 %v6229, %v6644
        %v6659 = vadd.f32 %v6230, %v6649
        %v6660 = vadd.f32 %v6231, %v6652
        %v6661 = vadd.f32 %v4517, %v6655
        %v6662 = vadd.f32 %v4518, %v6656
        %v6663 = vadd.f32 %v4519, %v6657
        %v6664 = vadd.f32 %v4520, %v6658
        %v6665 = vadd.f32 %v4521, %v6659
        %v6666 = vadd.f32 %v4522, %v6660
        %s6667 = scalar_lea.vmem %s997, 1 [#allocation14]
        %v6668 = vld [vmem:[%s6667] sm:$0x1]
        %v6670 = vlaneseq
        %v6671 = vshrl.u32 %v6670, 7
        %v6672 = vsub.s32 0, %v6671
        %v6673 = vrot.slane %v6668, %v6672
        %v6675 = vadd.f32 %v6661, %v6673
        %v6676 = vadd.f32 %v6662, %v6673
        %v6677 = vadd.f32 %v6663, %v6673
        %v6678 = vadd.f32 %v6664, %v6673
        %v6679 = vadd.f32 %v6665, %v6673
        %v6680 = vadd.f32 %v6666, %v6673
        %s6681 = scalar_lea.vmem %s1006, 1 [#allocation15]
        %v6682 = vld [vmem:[%s6681] sm:$0x1]
        %s6683 = scalar_lea.vmem %s1015, 1 [#allocation16]
        %v6684 = vld [vmem:[%s6683] sm:$0x1]
        %6685 = vadd.xlane.f32.xlu0 %v6675
        %v6686 = vpop.xlane.xlu0 %6685
        %6687 = vadd.xlane.f32.xlu0 %v6676
        %v6688 = vpop.xlane.xlu0 %6687
        %6689 = vadd.xlane.f32.xlu0 %v6677
        %v6690 = vpop.xlane.xlu0 %6689
        %6691 = vadd.xlane.f32.xlu0 %v6678
        %v6692 = vpop.xlane.xlu0 %6691
        %6693 = vadd.xlane.f32.xlu0 %v6679
        %v6694 = vpop.xlane.xlu0 %6693
        %6695 = vadd.xlane.f32.xlu0 %v6680
        %v6696 = vpop.xlane.xlu0 %6695
        %v6697 = vmul.f32 %v6686, %v1358
        %v6698 = vmul.f32 %v6688, %v1358
        %v6699 = vmul.f32 %v6690, %v1358
        %v6700 = vmul.f32 %v6692, %v1358
        %v6701 = vmul.f32 %v6694, %v1358
        %v6702 = vmul.f32 %v6696, %v1358
        %v6703 = vsub.f32 %v6675, %v6697
        %v6704 = vsub.f32 %v6676, %v6698
        %v6705 = vsub.f32 %v6677, %v6699
        %v6706 = vsub.f32 %v6678, %v6700
        %v6707 = vsub.f32 %v6679, %v6701
        %v6708 = vsub.f32 %v6680, %v6702
        %v6709 = vmul.f32 %v6703, %v6703
        %v6710 = vmul.f32 %v6704, %v6704
        %v6711 = vmul.f32 %v6705, %v6705
        %v6712 = vmul.f32 %v6706, %v6706
        %v6713 = vmul.f32 %v6707, %v6707
        %v6714 = vmul.f32 %v6708, %v6708
        %6715 = vadd.xlane.f32.xlu0 %v6709
        %v6716 = vpop.xlane.xlu0 %6715
        %6717 = vadd.xlane.f32.xlu0 %v6710
        %v6718 = vpop.xlane.xlu0 %6717
        %6719 = vadd.xlane.f32.xlu0 %v6711
        %v6720 = vpop.xlane.xlu0 %6719
        %6721 = vadd.xlane.f32.xlu0 %v6712
        %v6722 = vpop.xlane.xlu0 %6721
        %6723 = vadd.xlane.f32.xlu0 %v6713
        %v6724 = vpop.xlane.xlu0 %6723
        %6725 = vadd.xlane.f32.xlu0 %v6714
        %v6726 = vpop.xlane.xlu0 %6725
        %v6727 = vmul.f32 %v6716, %v1358
        %v6728 = vmul.f32 %v6718, %v1358
        %v6729 = vmul.f32 %v6720, %v1358
        %v6730 = vmul.f32 %v6722, %v1358
        %v6731 = vmul.f32 %v6724, %v1358
        %v6732 = vmul.f32 %v6726, %v1358
        %v6733 = vadd.f32 %v6727, 1e-06
        %v6734 = vadd.f32 %v6728, 1e-06
        %v6735 = vadd.f32 %v6729, 1e-06
        %v6736 = vadd.f32 %v6730, 1e-06
        %v6737 = vadd.f32 %v6731, 1e-06
        %v6738 = vadd.f32 %v6732, 1e-06
        %v6739 = vrsqrt.pop %v6733
        %v6740 = vrsqrt.pop %v6734
        %v6741 = vrsqrt.pop %v6735
        %v6742 = vrsqrt.pop %v6736
        %v6743 = vrsqrt.pop %v6737
        %v6744 = vrsqrt.pop %v6738
        %v6745 = vmul.f32 %v6703, %v6739
        %v6746 = vmul.f32 %v6704, %v6740
        %v6747 = vmul.f32 %v6705, %v6741
        %v6748 = vmul.f32 %v6706, %v6742
        %v6749 = vmul.f32 %v6707, %v6743
        %v6750 = vmul.f32 %v6708, %v6744
        %v6752 = vlaneseq
        %v6753 = vshrl.u32 %v6752, 7
        %v6754 = vsub.s32 0, %v6753
        %v6755 = vrot.slane %v6682, %v6754
        %v6757 = vmul.f32 %v6745, %v6755
        %v6758 = vmul.f32 %v6746, %v6755
        %v6759 = vmul.f32 %v6747, %v6755
        %v6760 = vmul.f32 %v6748, %v6755
        %v6761 = vmul.f32 %v6749, %v6755
        %v6762 = vmul.f32 %v6750, %v6755
        %v6764 = vlaneseq
        %v6765 = vshrl.u32 %v6764, 7
        %v6766 = vsub.s32 0, %v6765
        %v6767 = vrot.slane %v6684, %v6766
        %v6769 = vadd.f32 %v6757, %v6767
        %v6770 = vadd.f32 %v6758, %v6767
        %v6771 = vadd.f32 %v6759, %v6767
        %v6772 = vadd.f32 %v6760, %v6767
        %v6773 = vadd.f32 %v6761, %v6767
        %v6774 = vadd.f32 %v6762, %v6767
        %v6775 = vpack.c.bf16 %v6770, %v6769
        %v6776 = vpack.c.bf16 %v6772, %v6771
        %v6777 = vpack.c.bf16 %v6774, %v6773
        %s6778 = scalar_lea.vmem %s1024, 256 [#allocation17]
        %v6779 = vld [vmem:[%s6778] sm:$0xff]
        %v6780 = vld [vmem:[%s6778 + $0x8] sm:$0xff]
        %v6781 = vld [vmem:[%s6778 + $0x10] sm:$0xff]
        %v6782 = vld [vmem:[%s6778 + $0x18] sm:$0xff]
        %v6783 = vld [vmem:[%s6778 + $0x20] sm:$0xff]
        %v6784 = vld [vmem:[%s6778 + $0x28] sm:$0xff]
        %v6785 = vld [vmem:[%s6778 + $0x30] sm:$0xff]
        %v6786 = vld [vmem:[%s6778 + $0x38] sm:$0xff]
        %v6787 = vld [vmem:[%s6778 + $0x40] sm:$0xff]
        %v6788 = vld [vmem:[%s6778 + $0x48] sm:$0xff]
        %v6789 = vld [vmem:[%s6778 + $0x50] sm:$0xff]
        %v6790 = vld [vmem:[%s6778 + $0x58] sm:$0xff]
        %v6791 = vld [vmem:[%s6778 + $0x60] sm:$0xff]
        %v6792 = vld [vmem:[%s6778 + $0x68] sm:$0xff]
        %v6793 = vld [vmem:[%s6778 + $0x70] sm:$0xff]
        %v6794 = vld [vmem:[%s6778 + $0x78] sm:$0xff]
        %v6795 = vld [vmem:[%s6778 + $0x80] sm:$0xff]
        %v6796 = vld [vmem:[%s6778 + $0x88] sm:$0xff]
        %v6797 = vld [vmem:[%s6778 + $0x90] sm:$0xff]
        %v6798 = vld [vmem:[%s6778 + $0x98] sm:$0xff]
        %v6799 = vld [vmem:[%s6778 + $0xa0] sm:$0xff]
        %v6800 = vld [vmem:[%s6778 + $0xa8] sm:$0xff]
        %v6801 = vld [vmem:[%s6778 + $0xb0] sm:$0xff]
        %v6802 = vld [vmem:[%s6778 + $0xb8] sm:$0xff]
        %v6803 = vld [vmem:[%s6778 + $0xc0] sm:$0xff]
        %v6804 = vld [vmem:[%s6778 + $0xc8] sm:$0xff]
        %v6805 = vld [vmem:[%s6778 + $0xd0] sm:$0xff]
        %v6806 = vld [vmem:[%s6778 + $0xd8] sm:$0xff]
        %v6807 = vld [vmem:[%s6778 + $0xe0] sm:$0xff]
        %v6808 = vld [vmem:[%s6778 + $0xe8] sm:$0xff]
        %v6809 = vld [vmem:[%s6778 + $0xf0] sm:$0xff]
        %v6810 = vld [vmem:[%s6778 + $0xf8] sm:$0xff]
        %s6811 = scalar_lea.vmem %s1033, 4 [#allocation18]
        %v6812 = vld [vmem:[%s6811] sm:$0xf]
        %v6814 = vlaneseq
        %v6815 = vshrl.u32 %v6814, 7
        %v6816 = vsub.s32 0, %v6815
        %v6817 = vrot.slane %v6812, %v6816
        %v6818 = vlaneseq
        %v6819 = vshrl.u32 %v6818, 7
        %v6820 = vsub.s32 1, %v6819
        %v6821 = vrot.slane %v6812, %v6820
        %v6822 = vlaneseq
        %v6823 = vshrl.u32 %v6822, 7
        %v6824 = vsub.s32 2, %v6823
        %v6825 = vrot.slane %v6812, %v6824
        %v6826 = vlaneseq
        %v6827 = vshrl.u32 %v6826, 7
        %v6828 = vsub.s32 3, %v6827
        %v6829 = vrot.slane %v6812, %v6828
        %v6866 = vunpack.c.l.b16 %v6779
        %v6867 = vunpack.c.h.b16 %v6779
        %v6868 = vunpack.c.l.b16 %v6780
        %v6869 = vunpack.c.h.b16 %v6780
        %v6870 = vunpack.c.l.b16 %v6781
        %v6871 = vunpack.c.h.b16 %v6781
        %v6872 = vunpack.c.l.b16 %v6782
        %v6873 = vunpack.c.h.b16 %v6782
        %v6874 = vunpack.c.l.b16 %v6783
        %v6875 = vunpack.c.h.b16 %v6783
        %v6876 = vunpack.c.l.b16 %v6784
        %v6877 = vunpack.c.h.b16 %v6784
        %v6878 = vunpack.c.l.b16 %v6785
        %v6879 = vunpack.c.h.b16 %v6785
        %v6880 = vunpack.c.l.b16 %v6786
        %v6881 = vunpack.c.h.b16 %v6786
        %v6882 = vunpack.c.l.b16 %v6787
        %v6883 = vunpack.c.h.b16 %v6787
        %v6884 = vunpack.c.l.b16 %v6788
        %v6885 = vunpack.c.h.b16 %v6788
        %v6886 = vunpack.c.l.b16 %v6789
        %v6887 = vunpack.c.h.b16 %v6789
        %v6888 = vunpack.c.l.b16 %v6790
        %v6889 = vunpack.c.h.b16 %v6790
        %v6890 = vunpack.c.l.b16 %v6791
        %v6891 = vunpack.c.h.b16 %v6791
        %v6892 = vunpack.c.l.b16 %v6792
        %v6893 = vunpack.c.h.b16 %v6792
        %v6894 = vunpack.c.l.b16 %v6793
        %v6895 = vunpack.c.h.b16 %v6793
        %v6896 = vunpack.c.l.b16 %v6794
        %v6897 = vunpack.c.h.b16 %v6794
        %v6898 = vunpack.c.l.b16 %v6795
        %v6899 = vunpack.c.h.b16 %v6795
        %v6900 = vunpack.c.l.b16 %v6796
        %v6901 = vunpack.c.h.b16 %v6796
        %v6902 = vunpack.c.l.b16 %v6797
        %v6903 = vunpack.c.h.b16 %v6797
        %v6904 = vunpack.c.l.b16 %v6798
        %v6905 = vunpack.c.h.b16 %v6798
        %v6906 = vunpack.c.l.b16 %v6799
        %v6907 = vunpack.c.h.b16 %v6799
        %v6908 = vunpack.c.l.b16 %v6800
        %v6909 = vunpack.c.h.b16 %v6800
        %v6910 = vunpack.c.l.b16 %v6801
        %v6911 = vunpack.c.h.b16 %v6801
        %v6912 = vunpack.c.l.b16 %v6802
        %v6913 = vunpack.c.h.b16 %v6802
        %v6914 = vunpack.c.l.b16 %v6803
        %v6915 = vunpack.c.h.b16 %v6803
        %v6916 = vunpack.c.l.b16 %v6804
        %v6917 = vunpack.c.h.b16 %v6804
        %v6918 = vunpack.c.l.b16 %v6805
        %v6919 = vunpack.c.h.b16 %v6805
        %v6920 = vunpack.c.l.b16 %v6806
        %v6921 = vunpack.c.h.b16 %v6806
        %v6922 = vunpack.c.l.b16 %v6807
        %v6923 = vunpack.c.h.b16 %v6807
        %v6924 = vunpack.c.l.b16 %v6808
        %v6925 = vunpack.c.h.b16 %v6808
        %v6926 = vunpack.c.l.b16 %v6809
        %v6927 = vunpack.c.h.b16 %v6809
        %v6928 = vunpack.c.l.b16 %v6810
        %v6929 = vunpack.c.h.b16 %v6810
        %v6930 = vpack.c.b16 %v6870, %v6866
        %v6931 = vpack.c.b16 %v6871, %v6867
        %v6932 = vpack.c.b16 %v6872, %v6868
        %v6933 = vpack.c.b16 %v6873, %v6869
        %v6934 = vpack.c.b16 %v6878, %v6874
        %v6935 = vpack.c.b16 %v6879, %v6875
        %v6936 = vpack.c.b16 %v6880, %v6876
        %v6937 = vpack.c.b16 %v6881, %v6877
        %v6938 = vpack.c.b16 %v6886, %v6882
        %v6939 = vpack.c.b16 %v6887, %v6883
        %v6940 = vpack.c.b16 %v6888, %v6884
        %v6941 = vpack.c.b16 %v6889, %v6885
        %v6942 = vpack.c.b16 %v6894, %v6890
        %v6943 = vpack.c.b16 %v6895, %v6891
        %v6944 = vpack.c.b16 %v6896, %v6892
        %v6945 = vpack.c.b16 %v6897, %v6893
        %v6946 = vpack.c.b16 %v6902, %v6898
        %v6947 = vpack.c.b16 %v6903, %v6899
        %v6948 = vpack.c.b16 %v6904, %v6900
        %v6949 = vpack.c.b16 %v6905, %v6901
        %v6950 = vpack.c.b16 %v6910, %v6906
        %v6951 = vpack.c.b16 %v6911, %v6907
        %v6952 = vpack.c.b16 %v6912, %v6908
        %v6953 = vpack.c.b16 %v6913, %v6909
        %v6954 = vpack.c.b16 %v6918, %v6914
        %v6955 = vpack.c.b16 %v6919, %v6915
        %v6956 = vpack.c.b16 %v6920, %v6916
        %v6957 = vpack.c.b16 %v6921, %v6917
        %v6958 = vpack.c.b16 %v6926, %v6922
        %v6959 = vpack.c.b16 %v6927, %v6923
        %v6960 = vpack.c.b16 %v6928, %v6924
        %v6961 = vpack.c.b16 %v6929, %v6925
        %6994 = vmatprep.subr.bf16.mxu0 %v6931
        %6995 = vmatpush1.bf16.msra.mxu0 %v6930
        %6996 = vmatprep.subr.bf16.mxu0 %v6935
        %6997 = vmatpush1.bf16.msra.mxu0 %v6934
        %6998 = vmatprep.subr.bf16.mxu0 %v6939
        %6999 = vmatpush1.bf16.msra.mxu0 %v6938
        %7000 = vmatprep.subr.bf16.mxu0 %v6943
        %7001 = vmatpush1.bf16.msra.mxu0 %v6942
        %7002 = vmatprep.subr.bf16.mxu0 %v6947
        %7003 = vmatpush1.bf16.msra.mxu0 %v6946
        %7004 = vmatprep.subr.bf16.mxu0 %v6951
        %7005 = vmatpush1.bf16.msra.mxu0 %v6950
        %7006 = vmatprep.subr.bf16.mxu0 %v6955
        %7007 = vmatpush1.bf16.msra.mxu0 %v6954
        %7008 = vmatprep.subr.bf16.mxu0 %v6959
        %7009 = vmatpush1.bf16.msra.mxu0 %v6958
        %7010 = vmatprep.subr.bf16.mxu0 0
        %7011 = vmatpush1.bf16.msra.mxu0 0
        %7012 = vmatprep.subr.bf16.mxu0 0
        %7013 = vmatpush1.bf16.msra.mxu0 0
        %7014 = vmatprep.subr.bf16.mxu0 0
        %7015 = vmatpush1.bf16.msra.mxu0 0
        %7016 = vmatprep.subr.bf16.mxu0 0
        %7017 = vmatpush1.bf16.msra.mxu0 0
        %7018 = vmatprep.subr.bf16.mxu0 0
        %7019 = vmatpush1.bf16.msra.mxu0 0
        %7020 = vmatprep.subr.bf16.mxu0 0
        %7021 = vmatpush1.bf16.msra.mxu0 0
        %7022 = vmatprep.subr.bf16.mxu0 0
        %7023 = vmatpush1.bf16.msra.mxu0 0
        %7024 = vmatprep.subr.bf16.mxu0 0
        %7025 = vmatpush1.bf16.msra.mxu0 0
        %7026 = vmatprep.mubr.bf16.mxu0 0
        %7027 = vmatmul.mubr.bf16.gmra.mrb[0].mxu0 %v6775
        %v7028 = vpop.f32.mrb[0].mxu0
        %v7029 = vadd.f32 %v6817, %v7028
        %v7030 = vpop.f32.mrb[0].mxu0
        %v7031 = vadd.f32 %v6821, %v7030
        %v7032 = vpop.f32.mrb[0].mxu0
        %v7033 = vadd.f32 %v6817, %v7032
        %v7034 = vpop.f32.mrb[0].mxu0
        %v7035 = vadd.f32 %v6821, %v7034
        %7036 = vmatprep.mubr.bf16.mxu0 0
        %7037 = vmatmul.mubr.bf16.gmra.mrb[0].mxu0 %v6776
        %v7038 = vpop.f32.mrb[0].mxu0
        %v7039 = vadd.f32 %v6817, %v7038
        %v7040 = vpop.f32.mrb[0].mxu0
        %v7041 = vadd.f32 %v6821, %v7040
        %v7042 = vpop.f32.mrb[0].mxu0
        %v7043 = vadd.f32 %v6817, %v7042
        %v7044 = vpop.f32.mrb[0].mxu0
        %v7045 = vadd.f32 %v6821, %v7044
        %7046 = vmatprep.mubr.bf16.mxu0 0
        %7047 = vmatmul.mubr.bf16.gmra.mrb[0].mxu0 %v6777
        %v7048 = vpop.f32.mrb[0].mxu0
        %v7049 = vadd.f32 %v6817, %v7048
        %v7050 = vpop.f32.mrb[0].mxu0
        %v7051 = vadd.f32 %v6821, %v7050
        %v7052 = vpop.f32.mrb[0].mxu0
        %v7053 = vadd.f32 %v6817, %v7052
        %v7054 = vpop.f32.mrb[0].mxu0
        %v7055 = vadd.f32 %v6821, %v7054
        %7056 = vdwg.mxu0
        %7057 = vmatprep.subr.bf16.mxu0 %v6933
        %7058 = vmatpush1.bf16.msra.mxu0 %v6932
        %7059 = vmatprep.subr.bf16.mxu0 %v6937
        %7060 = vmatpush1.bf16.msra.mxu0 %v6936
        %7061 = vmatprep.subr.bf16.mxu0 %v6941
        %7062 = vmatpush1.bf16.msra.mxu0 %v6940
        %7063 = vmatprep.subr.bf16.mxu0 %v6945
        %7064 = vmatpush1.bf16.msra.mxu0 %v6944
        %7065 = vmatprep.subr.bf16.mxu0 %v6949
        %7066 = vmatpush1.bf16.msra.mxu0 %v6948
        %7067 = vmatprep.subr.bf16.mxu0 %v6953
        %7068 = vmatpush1.bf16.msra.mxu0 %v6952
        %7069 = vmatprep.subr.bf16.mxu0 %v6957
        %7070 = vmatpush1.bf16.msra.mxu0 %v6956
        %7071 = vmatprep.subr.bf16.mxu0 %v6961
        %7072 = vmatpush1.bf16.msra.mxu0 %v6960
        %7073 = vmatprep.subr.bf16.mxu0 0
        %7074 = vmatpush1.bf16.msra.mxu0 0
        %7075 = vmatprep.subr.bf16.mxu0 0
        %7076 = vmatpush1.bf16.msra.mxu0 0
        %7077 = vmatprep.subr.bf16.mxu0 0
        %7078 = vmatpush1.bf16.msra.mxu0 0
        %7079 = vmatprep.subr.bf16.mxu0 0
        %7080 = vmatpush1.bf16.msra.mxu0 0
        %7081 = vmatprep.subr.bf16.mxu0 0
        %7082 = vmatpush1.bf16.msra.mxu0 0
        %7083 = vmatprep.subr.bf16.mxu0 0
        %7084 = vmatpush1.bf16.msra.mxu0 0
        %7085 = vmatprep.subr.bf16.mxu0 0
        %7086 = vmatpush1.bf16.msra.mxu0 0
        %7087 = vmatprep.subr.bf16.mxu0 0
        %7088 = vmatpush1.bf16.msra.mxu0 0
        %7089 = vmatprep.mubr.bf16.mxu0 0
        %7090 = vmatmul.mubr.bf16.gmra.mrb[0].mxu0 %v6775
        %v7091 = vpop.f32.mrb[0].mxu0
        %v7092 = vadd.f32 %v6825, %v7091
        %v7093 = vpop.f32.mrb[0].mxu0
        %v7094 = vadd.f32 %v6829, %v7093
        %v7095 = vpop.f32.mrb[0].mxu0
        %v7096 = vadd.f32 %v6825, %v7095
        %v7097 = vpop.f32.mrb[0].mxu0
        %v7098 = vadd.f32 %v6829, %v7097
        %7099 = vmatprep.mubr.bf16.mxu0 0
        %7100 = vmatmul.mubr.bf16.gmra.mrb[0].mxu0 %v6776
        %v7101 = vpop.f32.mrb[0].mxu0
        %v7102 = vadd.f32 %v6825, %v7101
        %v7103 = vpop.f32.mrb[0].mxu0
        %v7104 = vadd.f32 %v6829, %v7103
        %v7105 = vpop.f32.mrb[0].mxu0
        %v7106 = vadd.f32 %v6825, %v7105
        %v7107 = vpop.f32.mrb[0].mxu0
        %v7108 = vadd.f32 %v6829, %v7107
        %7109 = vmatprep.mubr.bf16.mxu0 0
        %7110 = vmatmul.mubr.bf16.gmra.mrb[0].mxu0 %v6777
        %v7111 = vpop.f32.mrb[0].mxu0
        %v7112 = vadd.f32 %v6825, %v7111
        %v7113 = vpop.f32.mrb[0].mxu0
        %v7114 = vadd.f32 %v6829, %v7113
        %v7115 = vpop.f32.mrb[0].mxu0
        %v7116 = vadd.f32 %v6825, %v7115
        %v7117 = vpop.f32.mrb[0].mxu0
        %v7118 = vadd.f32 %v6829, %v7117
        %7119 = vdwg.mxu0
        %v7120 = vmul.f32 %v7029, %v7029
        %v7121 = vmul.f32 %v7031, %v7031
        %v7122 = vmul.f32 %v7092, %v7092
        %v7123 = vmul.f32 %v7094, %v7094
        %v7124 = vmul.f32 %v7033, %v7033
        %v7125 = vmul.f32 %v7035, %v7035
        %v7126 = vmul.f32 %v7096, %v7096
        %v7127 = vmul.f32 %v7098, %v7098
        %v7128 = vmul.f32 %v7039, %v7039
        %v7129 = vmul.f32 %v7041, %v7041
        %v7130 = vmul.f32 %v7102, %v7102
        %v7131 = vmul.f32 %v7104, %v7104
        %v7132 = vmul.f32 %v7043, %v7043
        %v7133 = vmul.f32 %v7045, %v7045
        %v7134 = vmul.f32 %v7106, %v7106
        %v7135 = vmul.f32 %v7108, %v7108
        %v7136 = vmul.f32 %v7049, %v7049
        %v7137 = vmul.f32 %v7051, %v7051
        %v7138 = vmul.f32 %v7112, %v7112
        %v7139 = vmul.f32 %v7114, %v7114
        %v7140 = vmul.f32 %v7053, %v7053
        %v7141 = vmul.f32 %v7055, %v7055
        %v7142 = vmul.f32 %v7116, %v7116
        %v7143 = vmul.f32 %v7118, %v7118
        %v7144 = vmul.f32 %v7029, %v7120
        %v7145 = vmul.f32 %v7031, %v7121
        %v7146 = vmul.f32 %v7092, %v7122
        %v7147 = vmul.f32 %v7094, %v7123
        %v7148 = vmul.f32 %v7033, %v7124
        %v7149 = vmul.f32 %v7035, %v7125
        %v7150 = vmul.f32 %v7096, %v7126
        %v7151 = vmul.f32 %v7098, %v7127
        %v7152 = vmul.f32 %v7039, %v7128
        %v7153 = vmul.f32 %v7041, %v7129
        %v7154 = vmul.f32 %v7102, %v7130
        %v7155 = vmul.f32 %v7104, %v7131
        %v7156 = vmul.f32 %v7043, %v7132
        %v7157 = vmul.f32 %v7045, %v7133
        %v7158 = vmul.f32 %v7106, %v7134
        %v7159 = vmul.f32 %v7108, %v7135
        %v7160 = vmul.f32 %v7049, %v7136
        %v7161 = vmul.f32 %v7051, %v7137
        %v7162 = vmul.f32 %v7112, %v7138
        %v7163 = vmul.f32 %v7114, %v7139
        %v7164 = vmul.f32 %v7053, %v7140
        %v7165 = vmul.f32 %v7055, %v7141
        %v7166 = vmul.f32 %v7116, %v7142
        %v7167 = vmul.f32 %v7118, %v7143
        %v7168 = vmul.f32 %v7144, 0.044715
        %v7169 = vmul.f32 %v7145, 0.044715
        %v7170 = vmul.f32 %v7146, 0.044715
        %v7171 = vmul.f32 %v7147, 0.044715
        %v7172 = vmul.f32 %v7148, 0.044715
        %v7173 = vmul.f32 %v7149, 0.044715
        %v7174 = vmul.f32 %v7150, 0.044715
        %v7175 = vmul.f32 %v7151, 0.044715
        %v7176 = vmul.f32 %v7152, 0.044715
        %v7177 = vmul.f32 %v7153, 0.044715
        %v7178 = vmul.f32 %v7154, 0.044715
        %v7179 = vmul.f32 %v7155, 0.044715
        %v7180 = vmul.f32 %v7156, 0.044715
        %v7181 = vmul.f32 %v7157, 0.044715
        %v7182 = vmul.f32 %v7158, 0.044715
        %v7183 = vmul.f32 %v7159, 0.044715
        %v7184 = vmul.f32 %v7160, 0.044715
        %v7185 = vmul.f32 %v7161, 0.044715
        %v7186 = vmul.f32 %v7162, 0.044715
        %v7187 = vmul.f32 %v7163, 0.044715
        %v7188 = vmul.f32 %v7164, 0.044715
        %v7189 = vmul.f32 %v7165, 0.044715
        %v7190 = vmul.f32 %v7166, 0.044715
        %v7191 = vmul.f32 %v7167, 0.044715
        %v7192 = vadd.f32 %v7029, %v7168
        %v7193 = vadd.f32 %v7031, %v7169
        %v7194 = vadd.f32 %v7092, %v7170
        %v7195 = vadd.f32 %v7094, %v7171
        %v7196 = vadd.f32 %v7033, %v7172
        %v7197 = vadd.f32 %v7035, %v7173
        %v7198 = vadd.f32 %v7096, %v7174
        %v7199 = vadd.f32 %v7098, %v7175
        %v7200 = vadd.f32 %v7039, %v7176
        %v7201 = vadd.f32 %v7041, %v7177
        %v7202 = vadd.f32 %v7102, %v7178
        %v7203 = vadd.f32 %v7104, %v7179
        %v7204 = vadd.f32 %v7043, %v7180
        %v7205 = vadd.f32 %v7045, %v7181
        %v7206 = vadd.f32 %v7106, %v7182
        %v7207 = vadd.f32 %v7108, %v7183
        %v7208 = vadd.f32 %v7049, %v7184
        %v7209 = vadd.f32 %v7051, %v7185
        %v7210 = vadd.f32 %v7112, %v7186
        %v7211 = vadd.f32 %v7114, %v7187
        %v7212 = vadd.f32 %v7053, %v7188
        %v7213 = vadd.f32 %v7055, %v7189
        %v7214 = vadd.f32 %v7116, %v7190
        %v7215 = vadd.f32 %v7118, %v7191
        %v7216 = vmul.f32 %v7192, 0.7978846
        %v7217 = vmul.f32 %v7193, 0.7978846
        %v7218 = vmul.f32 %v7194, 0.7978846
        %v7219 = vmul.f32 %v7195, 0.7978846
        %v7220 = vmul.f32 %v7196, 0.7978846
        %v7221 = vmul.f32 %v7197, 0.7978846
        %v7222 = vmul.f32 %v7198, 0.7978846
        %v7223 = vmul.f32 %v7199, 0.7978846
        %v7224 = vmul.f32 %v7200, 0.7978846
        %v7225 = vmul.f32 %v7201, 0.7978846
        %v7226 = vmul.f32 %v7202, 0.7978846
        %v7227 = vmul.f32 %v7203, 0.7978846
        %v7228 = vmul.f32 %v7204, 0.7978846
        %v7229 = vmul.f32 %v7205, 0.7978846
        %v7230 = vmul.f32 %v7206, 0.7978846
        %v7231 = vmul.f32 %v7207, 0.7978846
        %v7232 = vmul.f32 %v7208, 0.7978846
        %v7233 = vmul.f32 %v7209, 0.7978846
        %v7234 = vmul.f32 %v7210, 0.7978846
        %v7235 = vmul.f32 %v7211, 0.7978846
        %v7236 = vmul.f32 %v7212, 0.7978846
        %v7237 = vmul.f32 %v7213, 0.7978846
        %v7238 = vmul.f32 %v7214, 0.7978846
        %v7239 = vmul.f32 %v7215, 0.7978846
        %v7240 = vtanh.pop %v7216
        %v7241 = vtanh.pop %v7217
        %v7242 = vtanh.pop %v7218
        %v7243 = vtanh.pop %v7219
        %v7244 = vtanh.pop %v7220
        %v7245 = vtanh.pop %v7221
        %v7246 = vtanh.pop %v7222
        %v7247 = vtanh.pop %v7223
        %v7248 = vtanh.pop %v7224
        %v7249 = vtanh.pop %v7225
        %v7250 = vtanh.pop %v7226
        %v7251 = vtanh.pop %v7227
        %v7252 = vtanh.pop %v7228
        %v7253 = vtanh.pop %v7229
        %v7254 = vtanh.pop %v7230
        %v7255 = vtanh.pop %v7231
        %v7256 = vtanh.pop %v7232
        %v7257 = vtanh.pop %v7233
        %v7258 = vtanh.pop %v7234
        %v7259 = vtanh.pop %v7235
        %v7260 = vtanh.pop %v7236
        %v7261 = vtanh.pop %v7237
        %v7262 = vtanh.pop %v7238
        %v7263 = vtanh.pop %v7239
        %v7264 = vadd.f32 %v7240, 1.0
        %v7265 = vadd.f32 %v7241, 1.0
        %v7266 = vadd.f32 %v7242, 1.0
        %v7267 = vadd.f32 %v7243, 1.0
        %v7268 = vadd.f32 %v7244, 1.0
        %v7269 = vadd.f32 %v7245, 1.0
        %v7270 = vadd.f32 %v7246, 1.0
        %v7271 = vadd.f32 %v7247, 1.0
        %v7272 = vadd.f32 %v7248, 1.0
        %v7273 = vadd.f32 %v7249, 1.0
        %v7274 = vadd.f32 %v7250, 1.0
        %v7275 = vadd.f32 %v7251, 1.0
        %v7276 = vadd.f32 %v7252, 1.0
        %v7277 = vadd.f32 %v7253, 1.0
        %v7278 = vadd.f32 %v7254, 1.0
        %v7279 = vadd.f32 %v7255, 1.0
        %v7280 = vadd.f32 %v7256, 1.0
        %v7281 = vadd.f32 %v7257, 1.0
        %v7282 = vadd.f32 %v7258, 1.0
        %v7283 = vadd.f32 %v7259, 1.0
        %v7284 = vadd.f32 %v7260, 1.0
        %v7285 = vadd.f32 %v7261, 1.0
        %v7286 = vadd.f32 %v7262, 1.0
        %v7287 = vadd.f32 %v7263, 1.0
        %v7288 = vmul.f32 %v7264, 0.5
        %v7289 = vmul.f32 %v7265, 0.5
        %v7290 = vmul.f32 %v7266, 0.5
        %v7291 = vmul.f32 %v7267, 0.5
        %v7292 = vmul.f32 %v7268, 0.5
        %v7293 = vmul.f32 %v7269, 0.5
        %v7294 = vmul.f32 %v7270, 0.5
        %v7295 = vmul.f32 %v7271, 0.5
        %v7296 = vmul.f32 %v7272, 0.5
        %v7297 = vmul.f32 %v7273, 0.5
        %v7298 = vmul.f32 %v7274, 0.5
        %v7299 = vmul.f32 %v7275, 0.5
        %v7300 = vmul.f32 %v7276, 0.5
        %v7301 = vmul.f32 %v7277, 0.5
        %v7302 = vmul.f32 %v7278, 0.5
        %v7303 = vmul.f32 %v7279, 0.5
        %v7304 = vmul.f32 %v7280, 0.5
        %v7305 = vmul.f32 %v7281, 0.5
        %v7306 = vmul.f32 %v7282, 0.5
        %v7307 = vmul.f32 %v7283, 0.5
        %v7308 = vmul.f32 %v7284, 0.5
        %v7309 = vmul.f32 %v7285, 0.5
        %v7310 = vmul.f32 %v7286, 0.5
        %v7311 = vmul.f32 %v7287, 0.5
        %v7312 = vmul.f32 %v7029, %v7288
        %v7313 = vmul.f32 %v7031, %v7289
        %v7314 = vmul.f32 %v7092, %v7290
        %v7315 = vmul.f32 %v7094, %v7291
        %v7316 = vmul.f32 %v7033, %v7292
        %v7317 = vmul.f32 %v7035, %v7293
        %v7318 = vmul.f32 %v7096, %v7294
        %v7319 = vmul.f32 %v7098, %v7295
        %v7320 = vmul.f32 %v7039, %v7296
        %v7321 = vmul.f32 %v7041, %v7297
        %v7322 = vmul.f32 %v7102, %v7298
        %v7323 = vmul.f32 %v7104, %v7299
        %v7324 = vmul.f32 %v7043, %v7300
        %v7325 = vmul.f32 %v7045, %v7301
        %v7326 = vmul.f32 %v7106, %v7302
        %v7327 = vmul.f32 %v7108, %v7303
        %v7328 = vmul.f32 %v7049, %v7304
        %v7329 = vmul.f32 %v7051, %v7305
        %v7330 = vmul.f32 %v7112, %v7306
        %v7331 = vmul.f32 %v7114, %v7307
        %v7332 = vmul.f32 %v7053, %v7308
        %v7333 = vmul.f32 %v7055, %v7309
        %v7334 = vmul.f32 %v7116, %v7310
        %v7335 = vmul.f32 %v7118, %v7311
        %v7336 = vpack.c.bf16 %v7316, %v7312
        %v7337 = vpack.c.bf16 %v7317, %v7313
        %v7338 = vpack.c.bf16 %v7318, %v7314
        %v7339 = vpack.c.bf16 %v7319, %v7315
        %v7340 = vpack.c.bf16 %v7324, %v7320
        %v7341 = vpack.c.bf16 %v7325, %v7321
        %v7342 = vpack.c.bf16 %v7326, %v7322
        %v7343 = vpack.c.bf16 %v7327, %v7323
        %v7344 = vpack.c.bf16 %v7332, %v7328
        %v7345 = vpack.c.bf16 %v7333, %v7329
        %v7346 = vpack.c.bf16 %v7334, %v7330
        %v7347 = vpack.c.bf16 %v7335, %v7331
        %s7348 = scalar_lea.vmem %s1042, 256 [#allocation19]
        %v7349 = vld [vmem:[%s7348] sm:$0xf]
        %v7350 = vld [vmem:[%s7348 + $0x4] sm:$0xf]
        %v7351 = vld [vmem:[%s7348 + $0x8] sm:$0xf]
        %v7352 = vld [vmem:[%s7348 + $0xc] sm:$0xf]
        %v7353 = vld [vmem:[%s7348 + $0x10] sm:$0xf]
        %v7354 = vld [vmem:[%s7348 + $0x14] sm:$0xf]
        %v7355 = vld [vmem:[%s7348 + $0x18] sm:$0xf]
        %v7356 = vld [vmem:[%s7348 + $0x1c] sm:$0xf]
        %v7357 = vld [vmem:[%s7348 + $0x20] sm:$0xf]
        %v7358 = vld [vmem:[%s7348 + $0x24] sm:$0xf]
        %v7359 = vld [vmem:[%s7348 + $0x28] sm:$0xf]
        %v7360 = vld [vmem:[%s7348 + $0x2c] sm:$0xf]
        %v7361 = vld [vmem:[%s7348 + $0x30] sm:$0xf]
        %v7362 = vld [vmem:[%s7348 + $0x34] sm:$0xf]
        %v7363 = vld [vmem:[%s7348 + $0x38] sm:$0xf]
        %v7364 = vld [vmem:[%s7348 + $0x3c] sm:$0xf]
        %v7365 = vld [vmem:[%s7348 + $0x40] sm:$0xf]
        %v7366 = vld [vmem:[%s7348 + $0x44] sm:$0xf]
        %v7367 = vld [vmem:[%s7348 + $0x48] sm:$0xf]
        %v7368 = vld [vmem:[%s7348 + $0x4c] sm:$0xf]
        %v7369 = vld [vmem:[%s7348 + $0x50] sm:$0xf]
        %v7370 = vld [vmem:[%s7348 + $0x54] sm:$0xf]
        %v7371 = vld [vmem:[%s7348 + $0x58] sm:$0xf]
        %v7372 = vld [vmem:[%s7348 + $0x5c] sm:$0xf]
        %v7373 = vld [vmem:[%s7348 + $0x60] sm:$0xf]
        %v7374 = vld [vmem:[%s7348 + $0x64] sm:$0xf]
        %v7375 = vld [vmem:[%s7348 + $0x68] sm:$0xf]
        %v7376 = vld [vmem:[%s7348 + $0x6c] sm:$0xf]
        %v7377 = vld [vmem:[%s7348 + $0x70] sm:$0xf]
        %v7378 = vld [vmem:[%s7348 + $0x74] sm:$0xf]
        %v7379 = vld [vmem:[%s7348 + $0x78] sm:$0xf]
        %v7380 = vld [vmem:[%s7348 + $0x7c] sm:$0xf]
        %v7381 = vld [vmem:[%s7348 + $0x80] sm:$0xf]
        %v7382 = vld [vmem:[%s7348 + $0x84] sm:$0xf]
        %v7383 = vld [vmem:[%s7348 + $0x88] sm:$0xf]
        %v7384 = vld [vmem:[%s7348 + $0x8c] sm:$0xf]
        %v7385 = vld [vmem:[%s7348 + $0x90] sm:$0xf]
        %v7386 = vld [vmem:[%s7348 + $0x94] sm:$0xf]
        %v7387 = vld [vmem:[%s7348 + $0x98] sm:$0xf]
        %v7388 = vld [vmem:[%s7348 + $0x9c] sm:$0xf]
        %v7389 = vld [vmem:[%s7348 + $0xa0] sm:$0xf]
        %v7390 = vld [vmem:[%s7348 + $0xa4] sm:$0xf]
        %v7391 = vld [vmem:[%s7348 + $0xa8] sm:$0xf]
        %v7392 = vld [vmem:[%s7348 + $0xac] sm:$0xf]
        %v7393 = vld [vmem:[%s7348 + $0xb0] sm:$0xf]
        %v7394 = vld [vmem:[%s7348 + $0xb4] sm:$0xf]
        %v7395 = vld [vmem:[%s7348 + $0xb8] sm:$0xf]
        %v7396 = vld [vmem:[%s7348 + $0xbc] sm:$0xf]
        %v7397 = vld [vmem:[%s7348 + $0xc0] sm:$0xf]
        %v7398 = vld [vmem:[%s7348 + $0xc4] sm:$0xf]
        %v7399 = vld [vmem:[%s7348 + $0xc8] sm:$0xf]
        %v7400 = vld [vmem:[%s7348 + $0xcc] sm:$0xf]
        %v7401 = vld [vmem:[%s7348 + $0xd0] sm:$0xf]
        %v7402 = vld [vmem:[%s7348 + $0xd4] sm:$0xf]
        %v7403 = vld [vmem:[%s7348 + $0xd8] sm:$0xf]
        %v7404 = vld [vmem:[%s7348 + $0xdc] sm:$0xf]
        %v7405 = vld [vmem:[%s7348 + $0xe0] sm:$0xf]
        %v7406 = vld [vmem:[%s7348 + $0xe4] sm:$0xf]
        %v7407 = vld [vmem:[%s7348 + $0xe8] sm:$0xf]
        %v7408 = vld [vmem:[%s7348 + $0xec] sm:$0xf]
        %v7409 = vld [vmem:[%s7348 + $0xf0] sm:$0xf]
        %v7410 = vld [vmem:[%s7348 + $0xf4] sm:$0xf]
        %v7411 = vld [vmem:[%s7348 + $0xf8] sm:$0xf]
        %v7412 = vld [vmem:[%s7348 + $0xfc] sm:$0xf]
        %s7413 = scalar_lea.vmem %s1051, 1 [#allocation20]
        %v7414 = vld [vmem:[%s7413] sm:$0x1]
        %v7416 = vlaneseq
        %v7417 = vshrl.u32 %v7416, 7
        %v7418 = vsub.s32 0, %v7417
        %v7419 = vrot.slane %v7414, %v7418
        %v7485 = vunpack.c.l.b16 %v7349
        %v7486 = vunpack.c.l.b16 %v7350
        %v7487 = vunpack.c.l.b16 %v7351
        %v7488 = vunpack.c.l.b16 %v7352
        %v7489 = vunpack.c.l.b16 %v7353
        %v7490 = vunpack.c.l.b16 %v7354
        %v7491 = vunpack.c.l.b16 %v7355
        %v7492 = vunpack.c.l.b16 %v7356
        %v7493 = vunpack.c.l.b16 %v7357
        %v7494 = vunpack.c.l.b16 %v7358
        %v7495 = vunpack.c.l.b16 %v7359
        %v7496 = vunpack.c.l.b16 %v7360
        %v7497 = vunpack.c.l.b16 %v7361
        %v7498 = vunpack.c.l.b16 %v7362
        %v7499 = vunpack.c.l.b16 %v7363
        %v7500 = vunpack.c.l.b16 %v7364
        %v7501 = vunpack.c.l.b16 %v7365
        %v7502 = vunpack.c.l.b16 %v7366
        %v7503 = vunpack.c.l.b16 %v7367
        %v7504 = vunpack.c.l.b16 %v7368
        %v7505 = vunpack.c.l.b16 %v7369
        %v7506 = vunpack.c.l.b16 %v7370
        %v7507 = vunpack.c.l.b16 %v7371
        %v7508 = vunpack.c.l.b16 %v7372
        %v7509 = vunpack.c.l.b16 %v7373
        %v7510 = vunpack.c.l.b16 %v7374
        %v7511 = vunpack.c.l.b16 %v7375
        %v7512 = vunpack.c.l.b16 %v7376
        %v7513 = vunpack.c.l.b16 %v7377
        %v7514 = vunpack.c.l.b16 %v7378
        %v7515 = vunpack.c.l.b16 %v7379
        %v7516 = vunpack.c.l.b16 %v7380
        %v7517 = vunpack.c.l.b16 %v7381
        %v7518 = vunpack.c.l.b16 %v7382
        %v7519 = vunpack.c.l.b16 %v7383
        %v7520 = vunpack.c.l.b16 %v7384
        %v7521 = vunpack.c.l.b16 %v7385
        %v7522 = vunpack.c.l.b16 %v7386
        %v7523 = vunpack.c.l.b16 %v7387
        %v7524 = vunpack.c.l.b16 %v7388
        %v7525 = vunpack.c.l.b16 %v7389
        %v7526 = vunpack.c.l.b16 %v7390
        %v7527 = vunpack.c.l.b16 %v7391
        %v7528 = vunpack.c.l.b16 %v7392
        %v7529 = vunpack.c.l.b16 %v7393
        %v7530 = vunpack.c.l.b16 %v7394
        %v7531 = vunpack.c.l.b16 %v7395
        %v7532 = vunpack.c.l.b16 %v7396
        %v7533 = vunpack.c.l.b16 %v7397
        %v7534 = vunpack.c.l.b16 %v7398
        %v7535 = vunpack.c.l.b16 %v7399
        %v7536 = vunpack.c.l.b16 %v7400
        %v7537 = vunpack.c.l.b16 %v7401
        %v7538 = vunpack.c.l.b16 %v7402
        %v7539 = vunpack.c.l.b16 %v7403
        %v7540 = vunpack.c.l.b16 %v7404
        %v7541 = vunpack.c.l.b16 %v7405
        %v7542 = vunpack.c.l.b16 %v7406
        %v7543 = vunpack.c.l.b16 %v7407
        %v7544 = vunpack.c.l.b16 %v7408
        %v7545 = vunpack.c.l.b16 %v7409
        %v7546 = vunpack.c.l.b16 %v7410
        %v7547 = vunpack.c.l.b16 %v7411
        %v7548 = vunpack.c.l.b16 %v7412
        %v7549 = vpack.c.b16 %v7486, %v7485
        %v7550 = vpack.c.b16 %v7488, %v7487
        %v7551 = vpack.c.b16 %v7490, %v7489
        %v7552 = vpack.c.b16 %v7492, %v7491
        %v7553 = vpack.c.b16 %v7494, %v7493
        %v7554 = vpack.c.b16 %v7496, %v7495
        %v7555 = vpack.c.b16 %v7498, %v7497
        %v7556 = vpack.c.b16 %v7500, %v7499
        %v7557 = vpack.c.b16 %v7502, %v7501
        %v7558 = vpack.c.b16 %v7504, %v7503
        %v7559 = vpack.c.b16 %v7506, %v7505
        %v7560 = vpack.c.b16 %v7508, %v7507
        %v7561 = vpack.c.b16 %v7510, %v7509
        %v7562 = vpack.c.b16 %v7512, %v7511
        %v7563 = vpack.c.b16 %v7514, %v7513
        %v7564 = vpack.c.b16 %v7516, %v7515
        %v7565 = vpack.c.b16 %v7518, %v7517
        %v7566 = vpack.c.b16 %v7520, %v7519
        %v7567 = vpack.c.b16 %v7522, %v7521
        %v7568 = vpack.c.b16 %v7524, %v7523
        %v7569 = vpack.c.b16 %v7526, %v7525
        %v7570 = vpack.c.b16 %v7528, %v7527
        %v7571 = vpack.c.b16 %v7530, %v7529
        %v7572 = vpack.c.b16 %v7532, %v7531
        %v7573 = vpack.c.b16 %v7534, %v7533
        %v7574 = vpack.c.b16 %v7536, %v7535
        %v7575 = vpack.c.b16 %v7538, %v7537
        %v7576 = vpack.c.b16 %v7540, %v7539
        %v7577 = vpack.c.b16 %v7542, %v7541
        %v7578 = vpack.c.b16 %v7544, %v7543
        %v7579 = vpack.c.b16 %v7546, %v7545
        %v7580 = vpack.c.b16 %v7548, %v7547
        %7613 = vmatprep.subr.bf16.mxu0 0
        %7614 = vmatpush1.bf16.msra.mxu0 %v7549
        %7615 = vmatprep.subr.bf16.mxu0 0
        %7616 = vmatpush1.bf16.msra.mxu0 %v7550
        %7617 = vmatprep.subr.bf16.mxu0 0
        %7618 = vmatpush1.bf16.msra.mxu0 %v7551
        %7619 = vmatprep.subr.bf16.mxu0 0
        %7620 = vmatpush1.bf16.msra.mxu0 %v7552
        %7621 = vmatprep.subr.bf16.mxu0 0
        %7622 = vmatpush1.bf16.msra.mxu0 %v7553
        %7623 = vmatprep.subr.bf16.mxu0 0
        %7624 = vmatpush1.bf16.msra.mxu0 %v7554
        %7625 = vmatprep.subr.bf16.mxu0 0
        %7626 = vmatpush1.bf16.msra.mxu0 %v7555
        %7627 = vmatprep.subr.bf16.mxu0 0
        %7628 = vmatpush1.bf16.msra.mxu0 %v7556
        %7629 = vmatprep.subr.bf16.mxu0 0
        %7630 = vmatpush1.bf16.msra.mxu0 %v7557
        %7631 = vmatprep.subr.bf16.mxu0 0
        %7632 = vmatpush1.bf16.msra.mxu0 %v7558
        %7633 = vmatprep.subr.bf16.mxu0 0
        %7634 = vmatpush1.bf16.msra.mxu0 %v7559
        %7635 = vmatprep.subr.bf16.mxu0 0
        %7636 = vmatpush1.bf16.msra.mxu0 %v7560
        %7637 = vmatprep.subr.bf16.mxu0 0
        %7638 = vmatpush1.bf16.msra.mxu0 %v7561
        %7639 = vmatprep.subr.bf16.mxu0 0
        %7640 = vmatpush1.bf16.msra.mxu0 %v7562
        %7641 = vmatprep.subr.bf16.mxu0 0
        %7642 = vmatpush1.bf16.msra.mxu0 %v7563
        %7643 = vmatprep.subr.bf16.mxu0 0
        %7644 = vmatpush1.bf16.msra.mxu0 %v7564
        %7645 = vmatprep.mubr.bf16.mxu0 %v7337
        %7646 = vmatmul.mubr.bf16.gmra.mrb[0].mxu0 %v7336
        %v7647 = vpop.f32.mrb[0].mxu0
        %v7648 = vadd.f32 %v7419, %v7647
        %v7649 = vpop.f32.mrb[0].mxu0
        %v7650 = vpop.f32.mrb[0].mxu0
        %v7651 = vadd.f32 %v7419, %v7650
        %v7652 = vpop.f32.mrb[0].mxu0
        %7653 = vmatprep.mubr.bf16.mxu0 %v7341
        %7654 = vmatmul.mubr.bf16.gmra.mrb[0].mxu0 %v7340
        %v7655 = vpop.f32.mrb[0].mxu0
        %v7656 = vadd.f32 %v7419, %v7655
        %v7657 = vpop.f32.mrb[0].mxu0
        %v7658 = vpop.f32.mrb[0].mxu0
        %v7659 = vadd.f32 %v7419, %v7658
        %v7660 = vpop.f32.mrb[0].mxu0
        %7661 = vmatprep.mubr.bf16.mxu0 %v7345
        %7662 = vmatmul.mubr.bf16.gmra.mrb[0].mxu0 %v7344
        %v7663 = vpop.f32.mrb[0].mxu0
        %v7664 = vadd.f32 %v7419, %v7663
        %v7665 = vpop.f32.mrb[0].mxu0
        %v7666 = vpop.f32.mrb[0].mxu0
        %v7667 = vadd.f32 %v7419, %v7666
        %v7668 = vpop.f32.mrb[0].mxu0
        %7669 = vdwg.mxu0
        %7670 = vmatprep.subr.bf16.mxu0 0
        %7671 = vmatpush1.bf16.msra.mxu0 %v7565
        %7672 = vmatprep.subr.bf16.mxu0 0
        %7673 = vmatpush1.bf16.msra.mxu0 %v7566
        %7674 = vmatprep.subr.bf16.mxu0 0
        %7675 = vmatpush1.bf16.msra.mxu0 %v7567
        %7676 = vmatprep.subr.bf16.mxu0 0
        %7677 = vmatpush1.bf16.msra.mxu0 %v7568
        %7678 = vmatprep.subr.bf16.mxu0 0
        %7679 = vmatpush1.bf16.msra.mxu0 %v7569
        %7680 = vmatprep.subr.bf16.mxu0 0
        %7681 = vmatpush1.bf16.msra.mxu0 %v7570
        %7682 = vmatprep.subr.bf16.mxu0 0
        %7683 = vmatpush1.bf16.msra.mxu0 %v7571
        %7684 = vmatprep.subr.bf16.mxu0 0
        %7685 = vmatpush1.bf16.msra.mxu0 %v7572
        %7686 = vmatprep.subr.bf16.mxu0 0
        %7687 = vmatpush1.bf16.msra.mxu0 %v7573
        %7688 = vmatprep.subr.bf16.mxu0 0
        %7689 = vmatpush1.bf16.msra.mxu0 %v7574
        %7690 = vmatprep.subr.bf16.mxu0 0
        %7691 = vmatpush1.bf16.msra.mxu0 %v7575
        %7692 = vmatprep.subr.bf16.mxu0 0
        %7693 = vmatpush1.bf16.msra.mxu0 %v7576
        %7694 = vmatprep.subr.bf16.mxu0 0
        %7695 = vmatpush1.bf16.msra.mxu0 %v7577
        %7696 = vmatprep.subr.bf16.mxu0 0
        %7697 = vmatpush1.bf16.msra.mxu0 %v7578
        %7698 = vmatprep.subr.bf16.mxu0 0
        %7699 = vmatpush1.bf16.msra.mxu0 %v7579
        %7700 = vmatprep.subr.bf16.mxu0 0
        %7701 = vmatpush1.bf16.msra.mxu0 %v7580
        %7702 = vmatprep.mubr.bf16.mxu0 %v7339
        %7703 = vmatmul.mubr.bf16.gmra.mrb[0].mxu0 %v7338
        %v7704 = vpop.f32.mrb[0].mxu0
        %v7705 = vadd.f32 %v7648, %v7704
        %v7706 = vpop.f32.mrb[0].mxu0
        %v7707 = vpop.f32.mrb[0].mxu0
        %v7708 = vadd.f32 %v7651, %v7707
        %v7709 = vpop.f32.mrb[0].mxu0
        %7710 = vmatprep.mubr.bf16.mxu0 %v7343
        %7711 = vmatmul.mubr.bf16.gmra.mrb[0].mxu0 %v7342
        %v7712 = vpop.f32.mrb[0].mxu0
        %v7713 = vadd.f32 %v7656, %v7712
        %v7714 = vpop.f32.mrb[0].mxu0
        %v7715 = vpop.f32.mrb[0].mxu0
        %v7716 = vadd.f32 %v7659, %v7715
        %v7717 = vpop.f32.mrb[0].mxu0
        %7718 = vmatprep.mubr.bf16.mxu0 %v7347
        %7719 = vmatmul.mubr.bf16.gmra.mrb[0].mxu0 %v7346
        %v7720 = vpop.f32.mrb[0].mxu0
        %v7721 = vadd.f32 %v7664, %v7720
        %v7722 = vpop.f32.mrb[0].mxu0
        %v7723 = vpop.f32.mrb[0].mxu0
        %v7724 = vadd.f32 %v7667, %v7723
        %v7725 = vpop.f32.mrb[0].mxu0
        %7726 = vdwg.mxu0
        %v7727 = vadd.f32 %v6675, %v7705
        %v7728 = vadd.f32 %v6676, %v7708
        %v7729 = vadd.f32 %v6677, %v7713
        %v7730 = vadd.f32 %v6678, %v7716
        %v7731 = vadd.f32 %v6679, %v7721
        %v7732 = vadd.f32 %v6680, %v7724
        %p7733 = scmp.eq.s32.totalorder %s4545, 2
        // Predicated region
        $region189: #{vit_forward.1} parent=103 // pred_check
          %p7734 = pneg %p7733
        $region190: #{vit_forward.1} parent=103 // pred_check_branch
          %7736 = sbr.rel (%p7734) target = $region192
        $region191: #{vit_forward.1} parent=103 // pred_region
          %s7737 = scalar_lea.vmem [#allocation2], 48
          %7738 = vst [vmem:[%s7737] sm:$0xff] %v7727
          %7739 = vst [vmem:[%s7737 + $0x8] sm:$0xff] %v7728
          %7740 = vst [vmem:[%s7737 + $0x10] sm:$0xff] %v7729
          %7741 = vst [vmem:[%s7737 + $0x18] sm:$0xff] %v7730
          %7742 = vst [vmem:[%s7737 + $0x20] sm:$0xff] %v7731
          %7743 = vst [vmem:[%s7737 + $0x28] sm:$0xff] %v7732
        $region192: #{vit_forward.1} parent=103 // pred_fallthru
          _
        %p7744 = scmp.eq.s32.totalorder %s4545, 4
        // Predicated region
        $region193: #{vit_forward.1} parent=103 // pred_check
          %p7745 = pneg %p7744
        $region194: #{vit_forward.1} parent=103 // pred_check_branch
          %7747 = sbr.rel (%p7745) target = $region196
        $region195: #{vit_forward.1} parent=103 // pred_region
          %s7748 = scalar_lea.vmem [#allocation2], 96
          %7749 = vst [vmem:[%s7748] sm:$0xff] %v7727
          %7750 = vst [vmem:[%s7748 + $0x8] sm:$0xff] %v7728
          %7751 = vst [vmem:[%s7748 + $0x10] sm:$0xff] %v7729
          %7752 = vst [vmem:[%s7748 + $0x18] sm:$0xff] %v7730
          %7753 = vst [vmem:[%s7748 + $0x20] sm:$0xff] %v7731
          %7754 = vst [vmem:[%s7748 + $0x28] sm:$0xff] %v7732
        $region196: #{vit_forward.1} parent=103 // pred_fallthru
          _
        %7755 = vst [vmem:[%s1332] sm:$0xff] %v7727
        %7756 = vst [vmem:[%s1332 + $0x8] sm:$0xff] %v7728
        %7757 = vst [vmem:[%s1332 + $0x10] sm:$0xff] %v7729
        %7758 = vst [vmem:[%s1332 + $0x18] sm:$0xff] %v7730
        %7759 = vst [vmem:[%s1332 + $0x20] sm:$0xff] %v7731
        %7760 = vst [vmem:[%s1332 + $0x28] sm:$0xff] %v7732
        %p7761 = scmp.eq.s32.totalorder %s38, 4
        // Predicated region
        $region197: #{vit_forward.1} parent=103 // pred_check
          %p7762 = pneg %p7761
        $region198: #{vit_forward.1} parent=103 // pred_check_branch
          %7764 = sbr.rel (%p7762) target = $region200
        $region199: #{vit_forward.1} parent=103 // pred_region
          %v7765 = vld [vmem:[#allocation2] sm:$0xff]
          %v7766 = vld [vmem:[#allocation2 + $0x18] sm:$0xff]
          %v7767 = vld [vmem:[#allocation21] sm:$0x1]
          %v7768 = vld [vmem:[#allocation22] sm:$0x1]
          %7769 = vadd.xlane.f32.xlu0 %v7765
          %v7770 = vpop.xlane.xlu0 %7769
          %7771 = vadd.xlane.f32.xlu0 %v7766
          %v7772 = vpop.xlane.xlu0 %7771
          %v7773 = vmul.f32 %v7770, %v1358
          %v7774 = vmul.f32 %v7772, %v1358
          %v7775 = vsub.f32 %v7765, %v7773
          %v7776 = vsub.f32 %v7766, %v7774
          %v7777 = vmul.f32 %v7775, %v7775
          %v7778 = vmul.f32 %v7776, %v7776
          %7779 = vadd.xlane.f32.xlu0 %v7777
          %v7780 = vpop.xlane.xlu0 %7779
          %7781 = vadd.xlane.f32.xlu0 %v7778
          %v7782 = vpop.xlane.xlu0 %7781
          %v7783 = vmul.f32 %v7780, %v1358
          %v7784 = vmul.f32 %v7782, %v1358
          %v7785 = vadd.f32 %v7783, 1e-06
          %v7786 = vadd.f32 %v7784, 1e-06
          %v7787 = vrsqrt.pop %v7785
          %v7788 = vrsqrt.pop %v7786
          %v7789 = vmul.f32 %v7775, %v7787
          %v7790 = vmul.f32 %v7776, %v7788
          %v7792 = vlaneseq
          %v7793 = vshrl.u32 %v7792, 7
          %v7794 = vsub.s32 0, %v7793
          %v7795 = vrot.slane %v7767, %v7794
          %v7797 = vmul.f32 %v7789, %v7795
          %v7798 = vmul.f32 %v7790, %v7795
          %v7800 = vlaneseq
          %v7801 = vshrl.u32 %v7800, 7
          %v7802 = vsub.s32 0, %v7801
          %v7803 = vrot.slane %v7768, %v7802
          %v7805 = vadd.f32 %v7797, %v7803
          %v7806 = vadd.f32 %v7798, %v7803
          %v7809 = vrot.slane %v7806, 7
          %vm7810 = vcmask 1041409
          %v7811 = vsel %vm7810, %v7809, %v7805
          %7813 = vst [vmem:[%s22] sm:$0x3] %v7811
          %v7814 = vpack.c.bf16 %v7805, %v7805
          %v7815 = vpack.c.bf16 %v7806, %v7806
          %v7816 = vld [vmem:[%s19] sm:$0xf]
          %v7817 = vld [vmem:[%s19 + $0x4] sm:$0xf]
          %v7818 = vld [vmem:[%s19 + $0x8] sm:$0xf]
          %v7819 = vld [vmem:[%s19 + $0xc] sm:$0xf]
          %v7820 = vld [vmem:[%s19 + $0x10] sm:$0xf]
          %v7821 = vld [vmem:[%s19 + $0x14] sm:$0xf]
          %v7822 = vld [vmem:[%s19 + $0x18] sm:$0xf]
          %v7823 = vld [vmem:[%s19 + $0x1c] sm:$0xf]
          %v7824 = vld [vmem:[%s19 + $0x20] sm:$0xf]
          %v7825 = vld [vmem:[%s19 + $0x24] sm:$0xf]
          %v7826 = vld [vmem:[%s19 + $0x28] sm:$0xf]
          %v7827 = vld [vmem:[%s19 + $0x2c] sm:$0xf]
          %v7828 = vld [vmem:[%s19 + $0x30] sm:$0xf]
          %v7829 = vld [vmem:[%s19 + $0x34] sm:$0xf]
          %v7830 = vld [vmem:[%s19 + $0x38] sm:$0xf]
          %v7831 = vld [vmem:[%s19 + $0x3c] sm:$0xf]
          %v7832 = vld [vmem:[#allocation23] sm:$0x1]
          %v7834 = vlaneseq
          %v7835 = vshrl.u32 %v7834, 7
          %v7836 = vsub.s32 0, %v7835
          %v7837 = vrot.slane %v7832, %v7836
          %v7841 = vunpack.c.l.b16 %v7814
          %v7842 = vunpack.c.l.b16 %v7815
          %v7843 = vrot.slane %v7842, 7
          %v7844 = vsel %vm7810, %v7843, %v7841
          %v7845 = vpack.c.b16 %v7844, %v7844
          %v7863 = vunpack.c.l.b16 %v7816
          %v7864 = vunpack.c.l.b16 %v7817
          %v7865 = vunpack.c.l.b16 %v7818
          %v7866 = vunpack.c.l.b16 %v7819
          %v7867 = vunpack.c.l.b16 %v7820
          %v7868 = vunpack.c.l.b16 %v7821
          %v7869 = vunpack.c.l.b16 %v7822
          %v7870 = vunpack.c.l.b16 %v7823
          %v7871 = vunpack.c.l.b16 %v7824
          %v7872 = vunpack.c.l.b16 %v7825
          %v7873 = vunpack.c.l.b16 %v7826
          %v7874 = vunpack.c.l.b16 %v7827
          %v7875 = vunpack.c.l.b16 %v7828
          %v7876 = vunpack.c.l.b16 %v7829
          %v7877 = vunpack.c.l.b16 %v7830
          %v7878 = vunpack.c.l.b16 %v7831
          %v7879 = vpack.c.b16 %v7864, %v7863
          %v7880 = vpack.c.b16 %v7866, %v7865
          %v7881 = vpack.c.b16 %v7868, %v7867
          %v7882 = vpack.c.b16 %v7870, %v7869
          %v7883 = vpack.c.b16 %v7872, %v7871
          %v7884 = vpack.c.b16 %v7874, %v7873
          %v7885 = vpack.c.b16 %v7876, %v7875
          %v7886 = vpack.c.b16 %v7878, %v7877
          %7895 = vmatprep.subr.bf16.mxu0 0
          %7896 = vmatpush1.bf16.msra.mxu0 %v7879
          %7897 = vmatprep.subr.bf16.mxu0 0
          %7898 = vmatpush1.bf16.msra.mxu0 %v7880
          %7899 = vmatprep.subr.bf16.mxu0 0
          %7900 = vmatpush1.bf16.msra.mxu0 %v7881
          %7901 = vmatprep.subr.bf16.mxu0 0
          %7902 = vmatpush1.bf16.msra.mxu0 %v7882
          %7903 = vmatprep.subr.bf16.mxu0 0
          %7904 = vmatpush1.bf16.msra.mxu0 %v7883
          %7905 = vmatprep.subr.bf16.mxu0 0
          %7906 = vmatpush1.bf16.msra.mxu0 %v7884
          %7907 = vmatprep.subr.bf16.mxu0 0
          %7908 = vmatpush1.bf16.msra.mxu0 %v7885
          %7909 = vmatprep.subr.bf16.mxu0 0
          %7910 = vmatpush1.bf16.msra.mxu0 %v7886
          %7911 = vmatprep.subr.bf16.mxu0 0
          %7912 = vmatpush1.bf16.msra.mxu0 0
          %7913 = vmatprep.subr.bf16.mxu0 0
          %7914 = vmatpush1.bf16.msra.mxu0 0
          %7915 = vmatprep.subr.bf16.mxu0 0
          %7916 = vmatpush1.bf16.msra.mxu0 0
          %7917 = vmatprep.subr.bf16.mxu0 0
          %7918 = vmatpush1.bf16.msra.mxu0 0
          %7919 = vmatprep.subr.bf16.mxu0 0
          %7920 = vmatpush1.bf16.msra.mxu0 0
          %7921 = vmatprep.subr.bf16.mxu0 0
          %7922 = vmatpush1.bf16.msra.mxu0 0
          %7923 = vmatprep.subr.bf16.mxu0 0
          %7924 = vmatpush1.bf16.msra.mxu0 0
          %7925 = vmatprep.subr.bf16.mxu0 0
          %7926 = vmatpush1.bf16.msra.mxu0 0
          %7927 = vmatprep.mubr.bf16.mxu0 0
          %7928 = vmatmul.mubr.bf16.gmra.mrb[0].mxu0 %v7845
          %v7929 = vpop.f32.mrb[0].mxu0
          %v7930 = vadd.f32 %v7837, %v7929
          %v7931 = vpop.f32.mrb[0].mxu0
          %v7932 = vpop.f32.mrb[0].mxu0
          %v7933 = vpop.f32.mrb[0].mxu0
          %7934 = vdwg.mxu0
          %vm7935 = vcmask 517120
          %7936 = vst.msk [vmem:[%s21] sm:$0x3] %vm7935, %v7930
          %s7937 = scalar_lea.vmem [#allocation2], 48
          %v7938 = vld [vmem:[%s7937] sm:$0xff]
          %v7939 = vld [vmem:[%s7937 + $0x18] sm:$0xff]
          %s7940 = scalar_lea.vmem [#allocation21], 1
          %v7941 = vld [vmem:[%s7940] sm:$0x1]
          %s7942 = scalar_lea.vmem [#allocation22], 1
          %v7943 = vld [vmem:[%s7942] sm:$0x1]
          %7944 = vadd.xlane.f32.xlu0 %v7938
          %v7945 = vpop.xlane.xlu0 %7944
          %7946 = vadd.xlane.f32.xlu0 %v7939
          %v7947 = vpop.xlane.xlu0 %7946
          %v7948 = vmul.f32 %v7945, %v1358
          %v7949 = vmul.f32 %v7947, %v1358
          %v7950 = vsub.f32 %v7938, %v7948
          %v7951 = vsub.f32 %v7939, %v7949
          %v7952 = vmul.f32 %v7950, %v7950
          %v7953 = vmul.f32 %v7951, %v7951
          %7954 = vadd.xlane.f32.xlu0 %v7952
          %v7955 = vpop.xlane.xlu0 %7954
          %7956 = vadd.xlane.f32.xlu0 %v7953
          %v7957 = vpop.xlane.xlu0 %7956
          %v7958 = vmul.f32 %v7955, %v1358
          %v7959 = vmul.f32 %v7957, %v1358
          %v7960 = vadd.f32 %v7958, 1e-06
          %v7961 = vadd.f32 %v7959, 1e-06
          %v7962 = vrsqrt.pop %v7960
          %v7963 = vrsqrt.pop %v7961
          %v7964 = vmul.f32 %v7950, %v7962
          %v7965 = vmul.f32 %v7951, %v7963
          %v7967 = vlaneseq
          %v7968 = vshrl.u32 %v7967, 7
          %v7969 = vsub.s32 0, %v7968
          %v7970 = vrot.slane %v7941, %v7969
          %v7972 = vmul.f32 %v7964, %v7970
          %v7973 = vmul.f32 %v7965, %v7970
          %v7975 = vlaneseq
          %v7976 = vshrl.u32 %v7975, 7
          %v7977 = vsub.s32 0, %v7976
          %v7978 = vrot.slane %v7943, %v7977
          %v7980 = vadd.f32 %v7972, %v7978
          %v7981 = vadd.f32 %v7973, %v7978
          %v7984 = vrot.slane %v7981, 7
          %v7985 = vsel %vm7810, %v7984, %v7980
          %s7987 = scalar_lea.vmem %s22, 2
          %7988 = vst [vmem:[%s7987] sm:$0x3] %v7985
          %v7989 = vpack.c.bf16 %v7980, %v7980
          %v7990 = vpack.c.bf16 %v7981, %v7981
          %s7991 = scalar_lea.vmem %s19, 64
          %v7992 = vld [vmem:[%s7991] sm:$0xf]
          %v7993 = vld [vmem:[%s7991 + $0x4] sm:$0xf]
          %v7994 = vld [vmem:[%s7991 + $0x8] sm:$0xf]
          %v7995 = vld [vmem:[%s7991 + $0xc] sm:$0xf]
          %v7996 = vld [vmem:[%s7991 + $0x10] sm:$0xf]
          %v7997 = vld [vmem:[%s7991 + $0x14] sm:$0xf]
          %v7998 = vld [vmem:[%s7991 + $0x18] sm:$0xf]
          %v7999 = vld [vmem:[%s7991 + $0x1c] sm:$0xf]
          %v8000 = vld [vmem:[%s7991 + $0x20] sm:$0xf]
          %v8001 = vld [vmem:[%s7991 + $0x24] sm:$0xf]
          %v8002 = vld [vmem:[%s7991 + $0x28] sm:$0xf]
          %v8003 = vld [vmem:[%s7991 + $0x2c] sm:$0xf]
          %v8004 = vld [vmem:[%s7991 + $0x30] sm:$0xf]
          %v8005 = vld [vmem:[%s7991 + $0x34] sm:$0xf]
          %v8006 = vld [vmem:[%s7991 + $0x38] sm:$0xf]
          %v8007 = vld [vmem:[%s7991 + $0x3c] sm:$0xf]
          %s8008 = scalar_lea.vmem [#allocation23], 1
          %v8009 = vld [vmem:[%s8008] sm:$0x1]
          %v8011 = vlaneseq
          %v8012 = vshrl.u32 %v8011, 7
          %v8013 = vsub.s32 0, %v8012
          %v8014 = vrot.slane %v8009, %v8013
          %v8018 = vunpack.c.l.b16 %v7989
          %v8019 = vunpack.c.l.b16 %v7990
          %v8020 = vrot.slane %v8019, 7
          %v8021 = vsel %vm7810, %v8020, %v8018
          %v8022 = vpack.c.b16 %v8021, %v8021
          %v8040 = vunpack.c.l.b16 %v7992
          %v8041 = vunpack.c.l.b16 %v7993
          %v8042 = vunpack.c.l.b16 %v7994
          %v8043 = vunpack.c.l.b16 %v7995
          %v8044 = vunpack.c.l.b16 %v7996
          %v8045 = vunpack.c.l.b16 %v7997
          %v8046 = vunpack.c.l.b16 %v7998
          %v8047 = vunpack.c.l.b16 %v7999
          %v8048 = vunpack.c.l.b16 %v8000
          %v8049 = vunpack.c.l.b16 %v8001
          %v8050 = vunpack.c.l.b16 %v8002
          %v8051 = vunpack.c.l.b16 %v8003
          %v8052 = vunpack.c.l.b16 %v8004
          %v8053 = vunpack.c.l.b16 %v8005
          %v8054 = vunpack.c.l.b16 %v8006
          %v8055 = vunpack.c.l.b16 %v8007
          %v8056 = vpack.c.b16 %v8041, %v8040
          %v8057 = vpack.c.b16 %v8043, %v8042
          %v8058 = vpack.c.b16 %v8045, %v8044
          %v8059 = vpack.c.b16 %v8047, %v8046
          %v8060 = vpack.c.b16 %v8049, %v8048
          %v8061 = vpack.c.b16 %v8051, %v8050
          %v8062 = vpack.c.b16 %v8053, %v8052
          %v8063 = vpack.c.b16 %v8055, %v8054
          %8072 = vmatprep.subr.bf16.mxu0 0
          %8073 = vmatpush1.bf16.msra.mxu0 %v8056
          %8074 = vmatprep.subr.bf16.mxu0 0
          %8075 = vmatpush1.bf16.msra.mxu0 %v8057
          %8076 = vmatprep.subr.bf16.mxu0 0
          %8077 = vmatpush1.bf16.msra.mxu0 %v8058
          %8078 = vmatprep.subr.bf16.mxu0 0
          %8079 = vmatpush1.bf16.msra.mxu0 %v8059
          %8080 = vmatprep.subr.bf16.mxu0 0
          %8081 = vmatpush1.bf16.msra.mxu0 %v8060
          %8082 = vmatprep.subr.bf16.mxu0 0
          %8083 = vmatpush1.bf16.msra.mxu0 %v8061
          %8084 = vmatprep.subr.bf16.mxu0 0
          %8085 = vmatpush1.bf16.msra.mxu0 %v8062
          %8086 = vmatprep.subr.bf16.mxu0 0
          %8087 = vmatpush1.bf16.msra.mxu0 %v8063
          %8088 = vmatprep.subr.bf16.mxu0 0
          %8089 = vmatpush1.bf16.msra.mxu0 0
          %8090 = vmatprep.subr.bf16.mxu0 0
          %8091 = vmatpush1.bf16.msra.mxu0 0
          %8092 = vmatprep.subr.bf16.mxu0 0
          %8093 = vmatpush1.bf16.msra.mxu0 0
          %8094 = vmatprep.subr.bf16.mxu0 0
          %8095 = vmatpush1.bf16.msra.mxu0 0
          %8096 = vmatprep.subr.bf16.mxu0 0
          %8097 = vmatpush1.bf16.msra.mxu0 0
          %8098 = vmatprep.subr.bf16.mxu0 0
          %8099 = vmatpush1.bf16.msra.mxu0 0
          %8100 = vmatprep.subr.bf16.mxu0 0
          %8101 = vmatpush1.bf16.msra.mxu0 0
          %8102 = vmatprep.subr.bf16.mxu0 0
          %8103 = vmatpush1.bf16.msra.mxu0 0
          %8104 = vmatprep.mubr.bf16.mxu0 0
          %8105 = vmatmul.mubr.bf16.gmra.mrb[0].mxu0 %v8022
          %v8106 = vpop.f32.mrb[0].mxu0
          %v8107 = vadd.f32 %v8014, %v8106
          %v8108 = vpop.f32.mrb[0].mxu0
          %v8109 = vpop.f32.mrb[0].mxu0
          %v8110 = vpop.f32.mrb[0].mxu0
          %8111 = vdwg.mxu0
          %s8112 = scalar_lea.vmem %s21, 2
          %8113 = vst.msk [vmem:[%s8112] sm:$0x3] %vm7935, %v8107
          %s8114 = scalar_lea.vmem [#allocation2], 96
          %v8115 = vld [vmem:[%s8114] sm:$0xff]
          %v8116 = vld [vmem:[%s8114 + $0x18] sm:$0xff]
          %s8117 = scalar_lea.vmem [#allocation21], 2
          %v8118 = vld [vmem:[%s8117] sm:$0x1]
          %s8119 = scalar_lea.vmem [#allocation22], 2
          %v8120 = vld [vmem:[%s8119] sm:$0x1]
          %8121 = vadd.xlane.f32.xlu0 %v8115
          %v8122 = vpop.xlane.xlu0 %8121
          %8123 = vadd.xlane.f32.xlu0 %v8116
          %v8124 = vpop.xlane.xlu0 %8123
          %v8125 = vmul.f32 %v8122, %v1358
          %v8126 = vmul.f32 %v8124, %v1358
          %v8127 = vsub.f32 %v8115, %v8125
          %v8128 = vsub.f32 %v8116, %v8126
          %v8129 = vmul.f32 %v8127, %v8127
          %v8130 = vmul.f32 %v8128, %v8128
          %8131 = vadd.xlane.f32.xlu0 %v8129
          %v8132 = vpop.xlane.xlu0 %8131
          %8133 = vadd.xlane.f32.xlu0 %v8130
          %v8134 = vpop.xlane.xlu0 %8133
          %v8135 = vmul.f32 %v8132, %v1358
          %v8136 = vmul.f32 %v8134, %v1358
          %v8137 = vadd.f32 %v8135, 1e-06
          %v8138 = vadd.f32 %v8136, 1e-06
          %v8139 = vrsqrt.pop %v8137
          %v8140 = vrsqrt.pop %v8138
          %v8141 = vmul.f32 %v8127, %v8139
          %v8142 = vmul.f32 %v8128, %v8140
          %v8144 = vlaneseq
          %v8145 = vshrl.u32 %v8144, 7
          %v8146 = vsub.s32 0, %v8145
          %v8147 = vrot.slane %v8118, %v8146
          %v8149 = vmul.f32 %v8141, %v8147
          %v8150 = vmul.f32 %v8142, %v8147
          %v8152 = vlaneseq
          %v8153 = vshrl.u32 %v8152, 7
          %v8154 = vsub.s32 0, %v8153
          %v8155 = vrot.slane %v8120, %v8154
          %v8157 = vadd.f32 %v8149, %v8155
          %v8158 = vadd.f32 %v8150, %v8155
          %v8161 = vrot.slane %v8158, 7
          %v8162 = vsel %vm7810, %v8161, %v8157
          %s8164 = scalar_lea.vmem %s22, 4
          %8165 = vst [vmem:[%s8164] sm:$0x3] %v8162
          %v8166 = vpack.c.bf16 %v8157, %v8157
          %v8167 = vpack.c.bf16 %v8158, %v8158
          %s8168 = scalar_lea.vmem %s19, 128
          %v8169 = vld [vmem:[%s8168] sm:$0xf]
          %v8170 = vld [vmem:[%s8168 + $0x4] sm:$0xf]
          %v8171 = vld [vmem:[%s8168 + $0x8] sm:$0xf]
          %v8172 = vld [vmem:[%s8168 + $0xc] sm:$0xf]
          %v8173 = vld [vmem:[%s8168 + $0x10] sm:$0xf]
          %v8174 = vld [vmem:[%s8168 + $0x14] sm:$0xf]
          %v8175 = vld [vmem:[%s8168 + $0x18] sm:$0xf]
          %v8176 = vld [vmem:[%s8168 + $0x1c] sm:$0xf]
          %v8177 = vld [vmem:[%s8168 + $0x20] sm:$0xf]
          %v8178 = vld [vmem:[%s8168 + $0x24] sm:$0xf]
          %v8179 = vld [vmem:[%s8168 + $0x28] sm:$0xf]
          %v8180 = vld [vmem:[%s8168 + $0x2c] sm:$0xf]
          %v8181 = vld [vmem:[%s8168 + $0x30] sm:$0xf]
          %v8182 = vld [vmem:[%s8168 + $0x34] sm:$0xf]
          %v8183 = vld [vmem:[%s8168 + $0x38] sm:$0xf]
          %v8184 = vld [vmem:[%s8168 + $0x3c] sm:$0xf]
          %s8185 = scalar_lea.vmem [#allocation23], 2
          %v8186 = vld [vmem:[%s8185] sm:$0x1]
          %v8188 = vlaneseq
          %v8189 = vshrl.u32 %v8188, 7
          %v8190 = vsub.s32 0, %v8189
          %v8191 = vrot.slane %v8186, %v8190
          %v8195 = vunpack.c.l.b16 %v8166
          %v8196 = vunpack.c.l.b16 %v8167
          %v8197 = vrot.slane %v8196, 7
          %v8198 = vsel %vm7810, %v8197, %v8195
          %v8199 = vpack.c.b16 %v8198, %v8198
          %v8217 = vunpack.c.l.b16 %v8169
          %v8218 = vunpack.c.l.b16 %v8170
          %v8219 = vunpack.c.l.b16 %v8171
          %v8220 = vunpack.c.l.b16 %v8172
          %v8221 = vunpack.c.l.b16 %v8173
          %v8222 = vunpack.c.l.b16 %v8174
          %v8223 = vunpack.c.l.b16 %v8175
          %v8224 = vunpack.c.l.b16 %v8176
          %v8225 = vunpack.c.l.b16 %v8177
          %v8226 = vunpack.c.l.b16 %v8178
          %v8227 = vunpack.c.l.b16 %v8179
          %v8228 = vunpack.c.l.b16 %v8180
          %v8229 = vunpack.c.l.b16 %v8181
          %v8230 = vunpack.c.l.b16 %v8182
          %v8231 = vunpack.c.l.b16 %v8183
          %v8232 = vunpack.c.l.b16 %v8184
          %v8233 = vpack.c.b16 %v8218, %v8217
          %v8234 = vpack.c.b16 %v8220, %v8219
          %v8235 = vpack.c.b16 %v8222, %v8221
          %v8236 = vpack.c.b16 %v8224, %v8223
          %v8237 = vpack.c.b16 %v8226, %v8225
          %v8238 = vpack.c.b16 %v8228, %v8227
          %v8239 = vpack.c.b16 %v8230, %v8229
          %v8240 = vpack.c.b16 %v8232, %v8231
          %8249 = vmatprep.subr.bf16.mxu0 0
          %8250 = vmatpush1.bf16.msra.mxu0 %v8233
          %8251 = vmatprep.subr.bf16.mxu0 0
          %8252 = vmatpush1.bf16.msra.mxu0 %v8234
          %8253 = vmatprep.subr.bf16.mxu0 0
          %8254 = vmatpush1.bf16.msra.mxu0 %v8235
          %8255 = vmatprep.subr.bf16.mxu0 0
          %8256 = vmatpush1.bf16.msra.mxu0 %v8236
          %8257 = vmatprep.subr.bf16.mxu0 0
          %8258 = vmatpush1.bf16.msra.mxu0 %v8237
          %8259 = vmatprep.subr.bf16.mxu0 0
          %8260 = vmatpush1.bf16.msra.mxu0 %v8238
          %8261 = vmatprep.subr.bf16.mxu0 0
          %8262 = vmatpush1.bf16.msra.mxu0 %v8239
          %8263 = vmatprep.subr.bf16.mxu0 0
          %8264 = vmatpush1.bf16.msra.mxu0 %v8240
          %8265 = vmatprep.subr.bf16.mxu0 0
          %8266 = vmatpush1.bf16.msra.mxu0 0
          %8267 = vmatprep.subr.bf16.mxu0 0
          %8268 = vmatpush1.bf16.msra.mxu0 0
          %8269 = vmatprep.subr.bf16.mxu0 0
          %8270 = vmatpush1.bf16.msra.mxu0 0
          %8271 = vmatprep.subr.bf16.mxu0 0
          %8272 = vmatpush1.bf16.msra.mxu0 0
          %8273 = vmatprep.subr.bf16.mxu0 0
          %8274 = vmatpush1.bf16.msra.mxu0 0
          %8275 = vmatprep.subr.bf16.mxu0 0
          %8276 = vmatpush1.bf16.msra.mxu0 0
          %8277 = vmatprep.subr.bf16.mxu0 0
          %8278 = vmatpush1.bf16.msra.mxu0 0
          %8279 = vmatprep.subr.bf16.mxu0 0
          %8280 = vmatpush1.bf16.msra.mxu0 0
          %8281 = vmatprep.mubr.bf16.mxu0 0
          %8282 = vmatmul.mubr.bf16.gmra.mrb[0].mxu0 %v8199
          %v8283 = vpop.f32.mrb[0].mxu0
          %v8284 = vadd.f32 %v8191, %v8283
          %v8285 = vpop.f32.mrb[0].mxu0
          %v8286 = vpop.f32.mrb[0].mxu0
          %v8287 = vpop.f32.mrb[0].mxu0
          %8288 = vdwg.mxu0
          %s8289 = scalar_lea.vmem %s21, 4
          %8290 = vst.msk [vmem:[%s8289] sm:$0x3] %vm7935, %v8284
        $region200: #{vit_forward.1} parent=103 // pred_fallthru
          _
        // Predicated region
        $region201: #{vit_forward.1} parent=103 // pred_check
          %p8291 = pneg %p552
        $region202: #{vit_forward.1} parent=103 // pred_check_branch
          %8293 = sbr.rel (%p8291) target = $region204
        $region203: #{vit_forward.1} parent=103 // pred_region
          _
        $region204: #{vit_forward.1} parent=103 // pred_fallthru
          _
        // Predicated region
        $region205: #{vit_forward.1} parent=103 // pred_check
          %p8294 = pneg %p573
        $region206: #{vit_forward.1} parent=103 // pred_check_branch
          %8296 = sbr.rel (%p8294) target = $region208
        $region207: #{vit_forward.1} parent=103 // pred_region
          _
        $region208: #{vit_forward.1} parent=103 // pred_fallthru
          _
        // Predicated region
        $region209: #{vit_forward.1} parent=103 // pred_check
          %p8297 = pneg %p552
        $region210: #{vit_forward.1} parent=103 // pred_check_branch
          %8299 = sbr.rel (%p8297) target = $region212
        $region211: #{vit_forward.1} parent=103 // pred_region
          _
        $region212: #{vit_forward.1} parent=103 // pred_fallthru
          _
        // Predicated region
        $region213: #{vit_forward.1} parent=103 // pred_check
          %p8300 = pneg %p573
        $region214: #{vit_forward.1} parent=103 // pred_check_branch
          %8302 = sbr.rel (%p8300) target = $region216
        $region215: #{vit_forward.1} parent=103 // pred_region
          _
        $region216: #{vit_forward.1} parent=103 // pred_fallthru
          _
      $region104: #{vit_forward.1} parent=5 // pred_fallthru
        _
      %p8303 = scmp.le.s32.totalorder 2, %s33
      // Predicated region
      $region217: #{vit_forward.1} parent=5 // pred_check
        %p8304 = pneg %p8303
      $region218: #{vit_forward.1} parent=5 // pred_check_branch
        %8306 = sbr.rel (%p8304) target = $region220
      $region219: #{vit_forward.1} parent=5 // pred_region
        %s8307 = ssub.s32 %s33, 2
      $region220: #{vit_forward.1} parent=5 // pred_fallthru
        _
    $region6: #{vit_forward.1} parent=1 // loop_footer
      %s37 = sadd.s32 1, %s33
    $region7: #{vit_forward.1} parent=1 // loop_footer_branch
      %32 = sbr.rel target = $region3
    $region8: #{vit_forward.1} parent=1 // loop_exit
      _
    %8308 = vsyncpa [#allocation4], 1
    %s8309 = scalar_lea.sflag [#allocation4], 1
    %8310 = vsyncpa %s8309, 1
    %8311 = vsyncpa [#allocation6], 1
    %8312 = vsyncpa [#allocation9], 1
    %8313 = vsyncpa [#allocation24], 1

</llo_original>
